<compile_context>
chip_gen: v7x
topology: tpu7x:2x2x1
jax: 0.10.0
libtpu: 0.0.40
codegen_flags: <defaults>
</compile_context>

<pallas_src>
import jax
import jax.numpy as jnp
from jax.experimental import pallas as pl
from jax.experimental.pallas import tpu as pltpu


_LANES = 128
_TM_MAX = 512                       # rows (n*h*w of the sub-grid) per grid step
_VMEM_LIMIT = 48 * 1024 * 1024      # safe on v5e/v6e (128 MiB) and v7x (64 MiB)


def _round_up(x, m):
    return (x + m - 1) // m * m


# ----------------------------------------------------------------------------
# Fused conv kernel: [prev-layer BN affine + ReLU] -> matmul -> [stats|sigmoid]
# ----------------------------------------------------------------------------

def _make_conv_kernel(tm, cp, m_real, mp, *, has_in_affine, want_stats,
                      want_sigmoid):
    """Fused per-block kernel:
         x = relu(x * in_scale + in_bias)   (optional: previous layer's BN+ReLU)
         y = x @ w                          (MXU, bf16 in / f32 accumulate)
         stats = column sum / sum-of-sq     (optional: feeds this layer's BN)
         y = sigmoid(y)                     (optional: final layer)
    """
    # Padded M rows are all-zero in x_col; they only become non-zero after the
    # input affine (relu(bias)), which would corrupt the column statistics, so
    # mask them — only compiled when padding actually exists.
    need_mask = has_in_affine and want_stats and (mp != m_real)

    def kernel(*refs):
        if has_in_affine:
            x_ref, s_ref, b_ref, w_ref = refs[:4]
            rest = refs[4:]
        else:
            x_ref, w_ref = refs[:2]
            rest = refs[2:]
        if want_stats:
            y_ref, stats_ref = rest
        else:
            (y_ref,) = rest

        x = x_ref[...]
        if has_in_affine:
            xf = jnp.maximum(x.astype(jnp.float32) * s_ref[...] + b_ref[...],
                             0.0)
            if need_mask:
                rows = (pl.program_id(0) * tm
                        + jax.lax.broadcasted_iota(jnp.int32, (tm, 1), 0))
                xf = jnp.where(rows < m_real, xf, 0.0)
            x = xf.astype(jnp.bfloat16)

        y = jnp.dot(x, w_ref[...], preferred_element_type=jnp.float32)

        if want_stats:
            s = jnp.sum(y, axis=0, keepdims=True)
            ss = jnp.sum(y * y, axis=0, keepdims=True)
            # rows 2..7 are zero filler so the store stays one full (8, Cp)
            # unmasked block.
            stats_ref[...] = jnp.concatenate(
                [s, ss, jnp.zeros((6, cp), jnp.float32)], axis=0)
        if want_sigmoid:
            y = jax.nn.sigmoid(y)
        y_ref[...] = y.astype(y_ref.dtype)

    return kernel


def _conv_matmul(x_col, w_col, in_scale_cols, in_bias_cols, *,
                 tm, m_real, want_stats, want_sigmoid):
    Mp, Kp = x_col.shape
    Cp = w_col.shape[1]
    nblk = Mp // tm
    has_aff = in_scale_cols is not None

    kernel = _make_conv_kernel(tm, Cp, m_real, Mp,
                               has_in_affine=has_aff,
                               want_stats=want_stats,
                               want_sigmoid=want_sigmoid)

    in_specs = [pl.BlockSpec((tm, Kp), lambda i: (i, 0))]
    args = [x_col]
    if has_aff:
        in_specs += [pl.BlockSpec((1, Kp), lambda i: (0, 0)),
                     pl.BlockSpec((1, Kp), lambda i: (0, 0))]
        args += [in_scale_cols.reshape(1, Kp), in_bias_cols.reshape(1, Kp)]
    in_specs.append(pl.BlockSpec((Kp, Cp), lambda i: (0, 0)))
    args.append(w_col)

    if want_stats:
        out_shape = (jax.ShapeDtypeStruct((Mp, Cp), jnp.bfloat16),
                     jax.ShapeDtypeStruct((nblk * 8, Cp), jnp.float32))
        out_specs = (pl.BlockSpec((tm, Cp), lambda i: (i, 0)),
                     pl.BlockSpec((8, Cp), lambda i: (i, 0)))
    else:
        out_shape = jax.ShapeDtypeStruct((Mp, Cp), jnp.bfloat16)
        out_specs = pl.BlockSpec((tm, Cp), lambda i: (i, 0))

    return pl.pallas_call(
        kernel, out_shape=out_shape, grid=(nblk,),
        in_specs=in_specs, out_specs=out_specs,
        compiler_params=pltpu.CompilerParams(
            dimension_semantics=("parallel",),
            vmem_limit_bytes=_VMEM_LIMIT),
    )(*args)


# ----------------------------------------------------------------------------
# Sub-pixel ConvTranspose2d decomposition
# ----------------------------------------------------------------------------
# out[oy] = sum_iy x[iy] * w[ky],  oy = iy*s - p + ky.
# For each residue r = (oy+p) mod s the outputs form a stride-1 convolution of
# the un-dilated input with the sub-sampled kernel ky = r + s*t; taps land in a
# small contiguous window iy = m + d, d in [d_min, d_max] shared by all
# residues, so one im2col (D*D*Cin columns) feeds all s*s sub-kernels at once.

def _subpixel_geometry(k, s, p):
    oy_min, q0, T = [], [], []
    for r in range(s):
        om = (r - p) % s
        oy_min.append(om)
        q0.append((om + p - r) // s)
        T.append(-(-(k - r) // s))           # ceil((k - r) / s)
    d_min = min(q0[r] - (T[r] - 1) for r in range(s))
    d_max = max(q0[r] for r in range(s))
    return oy_min, q0, T, d_min, d_max


def _pack_layer(weight, k, s, p):
    """PyTorch weight (Cin, Cout, k, k) -> padded bf16 (Kp, Cp) matrix.
    Rows ordered (dy, dx, cin); columns ordered (ry, rx, cout)."""
    Cin, Cout = int(weight.shape[0]), int(weight.shape[1])
    oy_min, q0, T, d_min, d_max = _subpixel_geometry(k, s, p)
    D = d_max - d_min + 1
    w6 = jnp.zeros((D, D, Cin, s, s, Cout), jnp.float32)
    for ry in range(s):
        for dy in range(D):
            ty = q0[ry] - (d_min + dy)
            if not (0 <= ty < T[ry]):
                continue
            ky = ry + s * ty
            for rx in range(s):
                for dx in range(D):
                    tx = q0[rx] - (d_min + dx)
                    if not (0 <= tx < T[rx]):
                        continue
                    kx = rx + s * tx
                    w6 = w6.at[dy, dx, :, ry, rx, :].set(weight[:, :, ky, kx])
    K, C = D * D * Cin, s * s * Cout
    Kp, Cp = _round_up(K, _LANES), _round_up(C, _LANES)
    w_col = jnp.pad(w6.reshape(K, C), ((0, Kp - K), (0, Cp - C)))
    return dict(w_col=w_col.astype(jnp.bfloat16), k=k, s=s, p=p, D=D,
                d_min=d_min, d_max=d_max, oy_min=oy_min, cin=Cin, cout=Cout,
                K=K, C=C)


def conv_transpose_layer(x_nhwc, packed, in_scale=None, in_bias=None,
                         gamma=None, beta=None, eps=1e-5):
    """One ConvTranspose2d layer over the RAW (pre-BN) output of the previous
    layer.  If (in_scale, in_bias) is given, the previous layer's BatchNorm
    affine + ReLU is applied *inside* the matmul kernel per im2col column
    (elementwise, so it commutes with the gather) — no extra HBM pass.

    Returns (out_nhwc, bn_scale, bn_bias):
      * BN layer   (gamma given): out is the raw conv output, bn_scale/bias
        fold this layer's training-mode BatchNorm for the next layer.
      * final layer (gamma None): out is sigmoid(conv), bn_scale/bias = None.
    """
    w_col = packed["w_col"]
    k, s, p = packed["k"], packed["s"], packed["p"]
    D, d_min, d_max = packed["D"], packed["d_min"], packed["d_max"]
    oy_min, Cout = packed["oy_min"], packed["cout"]
    K, C = packed["K"], packed["C"]
    Kp, Cp = w_col.shape

    N, H, W, Cin = x_nhwc.shape
    Hout = (H - 1) * s - 2 * p + k
    Wout = (W - 1) * s - 2 * p + k
    M_sub = -(-(Hout - oy_min[0]) // s)
    for r in range(s):                       # all residue sub-grids equal sized
        assert -(-(Hout - oy_min[r]) // s) == M_sub
    assert s * M_sub == Hout and Hout == Wout

    # im2col over the union tap window (pure data movement, no zero rows).
    # TODO(synk): gather the D*D taps inside the kernel (extra grid axis over
    # taps + pl.ANY input) to avoid materializing x_col in HBM at D*D*Cin width.
    pad_b = max(0, -d_min)
    pad_a = max(0, (M_sub - 1) + d_max - (H - 1))
    off = d_min + pad_b
    xp = jnp.pad(x_nhwc, ((0, 0), (pad_b, pad_a), (pad_b, pad_a), (0, 0)))
    patches = [xp[:, off + dy: off + dy + M_sub, off + dx: off + dx + M_sub, :]
               for dy in range(D) for dx in range(D)]
    M_real = N * M_sub * M_sub
    x_col = jnp.stack(patches, axis=3).reshape(M_real, K).astype(jnp.bfloat16)

    tm = min(_TM_MAX, _round_up(M_real, 8))
    Mp = _round_up(M_real, tm)
    x_col = jnp.pad(x_col, ((0, Mp - M_real), (0, Kp - K)))

    # Previous layer's BN affine, expanded per im2col column (dy, dx, cin).
    if in_scale is not None:
        col_scale_in = jnp.pad(jnp.tile(in_scale, D * D), (0, Kp - K))
        col_bias_in = jnp.pad(jnp.tile(in_bias, D * D), (0, Kp - K))
    else:
        col_scale_in = col_bias_in = None

    if gamma is not None:
        y, stats = _conv_matmul(x_col, w_col, col_scale_in, col_bias_in,
                                tm=tm, m_real=M_real,
                                want_stats=True, want_sigmoid=False)
        stats = stats.reshape(Mp // tm, 8, Cp)
        col_sum = jnp.sum(stats[:, 0, :], axis=0)
        col_ssq = jnp.sum(stats[:, 1, :], axis=0)
        ch_sum = col_sum[:C].reshape(s * s, Cout).sum(axis=0)
        ch_ssq = col_ssq[:C].reshape(s * s, Cout).sum(axis=0)
        count = float(N * Hout * Wout)
        mean = ch_sum / count
        var = jnp.maximum(ch_ssq / count - mean * mean, 0.0)  # clamp cancellation
        out_scale = gamma * jax.lax.rsqrt(var + eps)
        out_bias = beta - mean * out_scale
    else:                                    # final layer: sigmoid fused, no stats
        y = _conv_matmul(x_col, w_col, col_scale_in, col_bias_in,
                         tm=tm, m_real=M_real,
                         want_stats=False, want_sigmoid=True)
        out_scale = out_bias = None

    # pixel-shuffle the (ry, rx) sub-images into the full output
    y6 = y[:M_real, :C].reshape(N, M_sub, M_sub, s, s, Cout)
    perm = [0] * s
    for r in range(s):
        perm[oy_min[r]] = r
    if perm != list(range(s)):
        pidx = jnp.asarray(perm)
        y6 = y6[:, :, :, pidx, :, :][:, :, :, :, pidx, :]
    out = y6.transpose(0, 1, 3, 2, 4, 5).reshape(N, Hout, Wout, Cout)
    return out, out_scale, out_bias


# ----------------------------------------------------------------------------
# DCGAN model
# ----------------------------------------------------------------------------

class DCGANPallas:
    def __init__(self, nz, ngf=64, output_size=(256, 256), nc=3,
                 num_measurements=1000, key=None):
        del num_measurements                       # unused in forward
        self.nc = nc
        self.output_size = output_size
        if key is None:
            key = jax.random.PRNGKey(0)

        # (cin, cout, kernel, stride, padding) exactly as in the PyTorch module
        cfg = [
            (nz,      8 * ngf, 4, 1, 0),
            (8 * ngf, 4 * ngf, 6, 2, 2),
            (4 * ngf, 4 * ngf, 6, 2, 2),
            (4 * ngf, 4 * ngf, 6, 2, 2),
            (4 * ngf, 4 * ngf, 6, 2, 2),
            (4 * ngf, 4 * ngf, 6, 2, 2),
            (4 * ngf, 4 * ngf, 4, 2, 1),
            (4 * ngf, nc,      4, 2, 1),
        ]
        self.cfg = cfg
        self.layers, self.gammas, self.betas = [], [], []
        for li, (cin, cout, k, s, p) in enumerate(cfg):
            key, wk = jax.random.split(key)
            w = 0.02 * jax.random.normal(wk, (cin, cout, k, k), jnp.float32)
            self.layers.append(_pack_layer(w, k, s, p))
            if li < 7:     # bn1..bn7 (fresh nn.BatchNorm2d: gamma=1, beta=0)
                self.gammas.append(jnp.ones((cout,), jnp.float32))
                self.betas.append(jnp.zeros((cout,), jnp.float32))
        self._fwd = jax.jit(self._forward_impl)

    def _forward_impl(self, z_nchw):
        x = jnp.transpose(z_nchw, (0, 2, 3, 1)).astype(jnp.bfloat16)  # NCHW->NHWC
        scale = bias = None
        n_layers = len(self.cfg)
        for li in range(n_layers):
            is_last = li == n_layers - 1
            g = None if is_last else self.gammas[li]
            b = None if is_last else self.betas[li]
            # BN(li) + ReLU are folded into layer li+1's kernel via (scale, bias)
            x, scale, bias = conv_transpose_layer(
                x, self.layers[li], in_scale=scale, in_bias=bias,
                gamma=g, beta=b)
        # sigmoid already applied elementwise in-kernel; crop commutes with it
        x = x[:, :self.output_size[0], :self.output_size[1], :]
        return jnp.transpose(x, (0, 3, 1, 2)).astype(jnp.float32)    # -> NCHW

    def forward(self, z):
        return self._fwd(z)


# ----------------------------------------------------------------------------
# Demo
# ----------------------------------------------------------------------------

if __name__ == "__main__":
    key = jax.random.PRNGKey(0)
    batch, nz, ngf, nc = 2, 8, 2, 3           # small channel counts; spatial
    output_size = (256, 256)                  # progression fixed by architecture

    model = DCGANPallas(nz=nz, ngf=ngf, output_size=output_size, nc=nc,
                        key=jax.random.fold_in(key, 1))
    z = jax.random.normal(jax.random.fold_in(key, 2), (batch, nz, 1, 1),
                          jnp.float32)

    out = jax.block_until_ready(model.forward(z))
    assert out.shape == (batch, nc, output_size[0], output_size[1]), out.shape
    assert bool(jnp.all(jnp.isfinite(out)))
    assert bool(jnp.all((out >= 0.0) & (out <= 1.0)))  # sigmoid range
    print("KERNEL_OK")
</pallas_src>

<mosaic_0001>
module attributes {stable_mosaic.version = 11 : i64} {
  func.func @kernel(%arg0: i32, %arg1: memref<32x128xbf16, #tpu.memory_space<vmem>>, %arg2: memref<128x128xbf16, #tpu.memory_space<vmem>>, %arg3: memref<32x128xbf16, #tpu.memory_space<vmem>>, %arg4: memref<8x128xf32, #tpu.memory_space<vmem>>) attributes {dimension_semantics = [#tpu.dimension_semantics<parallel>], iteration_bounds = array<i64: 1>, scalar_prefetch = 0 : i64, scratch_operands = 0 : i64, tpu.core_type = #tpu.core_type<tc>, window_params = [{transform_indices = @transform_0, window_bounds = array<i64: 32, 128>}, {pipeline_mode = #tpu.pipeline_mode<synchronous>, transform_indices = @transform_1, window_bounds = array<i64: 128, 128>}, {transform_indices = @transform_2, window_bounds = array<i64: 32, 128>}, {transform_indices = @transform_3, window_bounds = array<i64: 8, 128>}]} {
    %c0 = arith.constant 0 : index
    %c0_0 = arith.constant 0 : index
    %0 = vector.load %arg1[%c0, %c0_0] : memref<32x128xbf16, #tpu.memory_space<vmem>>, vector<32x128xbf16>
    %c0_1 = arith.constant 0 : index
    %c0_2 = arith.constant 0 : index
    %1 = vector.load %arg2[%c0_1, %c0_2] : memref<128x128xbf16, #tpu.memory_space<vmem>>, vector<128x128xbf16>
    %cst = arith.constant dense<0.000000e+00> : vector<32x128xf32>
    %2 = tpu.matmul %0, %1, %cst {dimension_numbers = #tpu.dot_dimension_numbers<[1], [0], [0], [1], [0, 0, 1, 1], [], []>} : vector<32x128xbf16>, vector<128x128xbf16>, vector<32x128xf32> -> vector<32x128xf32>
    %cst_3 = arith.constant dense<0.000000e+00> : vector<128xf32>
    %3 = vector.multi_reduction <add>, %2, %cst_3 [0] : vector<32x128xf32> to vector<128xf32>
    %4 = vector.shape_cast %3 : vector<128xf32> to vector<1x128xf32>
    %5 = arith.mulf %2, %2 : vector<32x128xf32>
    %cst_4 = arith.constant dense<0.000000e+00> : vector<128xf32>
    %6 = vector.multi_reduction <add>, %5, %cst_4 [0] : vector<32x128xf32> to vector<128xf32>
    %7 = vector.shape_cast %6 : vector<128xf32> to vector<1x128xf32>
    %cst_5 = arith.constant 0.000000e+00 : f32
    %8 = vector.broadcast %cst_5 : f32 to vector<6x128xf32>
    %9 = tpu.concatenate %4, %7, %8 in 0 : vector<1x128xf32>, vector<1x128xf32>, vector<6x128xf32> -> vector<8x128xf32>
    %c0_6 = arith.constant 0 : index
    %c0_7 = arith.constant 0 : index
    %10 = vector.load %arg4[%c0_6, %c0_7] : memref<8x128xf32, #tpu.memory_space<vmem>>, vector<8x128xf32>
    tpu.vector_store %arg4[%c0_6, %c0_7], %9 {strides = array<i32>} : memref<8x128xf32, #tpu.memory_space<vmem>>, vector<8x128xf32>,
    %11 = arith.truncf %2 : vector<32x128xf32> to vector<32x128xbf16>
    %c0_8 = arith.constant 0 : index
    %c0_9 = arith.constant 0 : index
    %12 = vector.load %arg3[%c0_8, %c0_9] : memref<32x128xbf16, #tpu.memory_space<vmem>>, vector<32x128xbf16>
    tpu.vector_store %arg3[%c0_8, %c0_9], %11 {strides = array<i32>} : memref<32x128xbf16, #tpu.memory_space<vmem>>, vector<32x128xbf16>,
    return
  }
  func.func @transform_0(%arg0: i32) -> (i32, i32) {
    %c0_i32 = arith.constant 0 : i32
    %c0_i32_0 = arith.constant 0 : i32
    return %arg0, %c0_i32 : i32, i32
  }
  func.func @transform_1(%arg0: i32) -> (i32, i32) {
    %c0_i32 = arith.constant 0 : i32
    %c0_i32_0 = arith.constant 0 : i32
    %c0_i32_1 = arith.constant 0 : i32
    return %c0_i32, %c0_i32_0 : i32, i32
  }
  func.func @transform_2(%arg0: i32) -> (i32, i32) {
    %c0_i32 = arith.constant 0 : i32
    %c0_i32_0 = arith.constant 0 : i32
    return %arg0, %c0_i32 : i32, i32
  }
  func.func @transform_3(%arg0: i32) -> (i32, i32) {
    %c0_i32 = arith.constant 0 : i32
    %c0_i32_0 = arith.constant 0 : i32
    return %arg0, %c0_i32 : i32, i32
  }
}

module attributes {stable_mosaic.version = 11 : i64} {
  func.func @kernel(%arg0: i32, %arg1: memref<32x256xbf16, #tpu.memory_space<vmem>>, %arg2: memref<1x256xf32, #tpu.memory_space<vmem>>, %arg3: memref<1x256xf32, #tpu.memory_space<vmem>>, %arg4: memref<256x128xbf16, #tpu.memory_space<vmem>>, %arg5: memref<32x128xbf16, #tpu.memory_space<vmem>>, %arg6: memref<8x128xf32, #tpu.memory_space<vmem>>) attributes {dimension_semantics = [#tpu.dimension_semantics<parallel>], iteration_bounds = array<i64: 1>, scalar_prefetch = 0 : i64, scratch_operands = 0 : i64, tpu.core_type = #tpu.core_type<tc>, window_params = [{transform_indices = @transform_0, window_bounds = array<i64: 32, 256>}, {pipeline_mode = #tpu.pipeline_mode<synchronous>, transform_indices = @transform_1, window_bounds = array<i64: 1, 256>}, {pipeline_mode = #tpu.pipeline_mode<synchronous>, transform_indices = @transform_2, window_bounds = array<i64: 1, 256>}, {pipeline_mode = #tpu.pipeline_mode<synchronous>, transform_indices = @transform_3, window_bounds = array<i64: 256, 128>}, {transform_indices = @transform_4, window_bounds = array<i64: 32, 128>}, {transform_indices = @transform_5, window_bounds = array<i64: 8, 128>}]} {
    %c0 = arith.constant 0 : index
    %c0_0 = arith.constant 0 : index
    %0 = vector.load %arg1[%c0, %c0_0] : memref<32x256xbf16, #tpu.memory_space<vmem>>, vector<32x256xbf16>
    %1 = arith.extf %0 : vector<32x256xbf16> to vector<32x256xf32>
    %c0_1 = arith.constant 0 : index
    %c0_2 = arith.constant 0 : index
    %2 = vector.load %arg2[%c0_1, %c0_2] : memref<1x256xf32, #tpu.memory_space<vmem>>, vector<1x256xf32>
    %3 = vector.broadcast %2 : vector<1x256xf32> to vector<32x256xf32>
    %4 = arith.mulf %1, %3 : vector<32x256xf32>
    %c0_3 = arith.constant 0 : index
    %c0_4 = arith.constant 0 : index
    %5 = vector.load %arg3[%c0_3, %c0_4] : memref<1x256xf32, #tpu.memory_space<vmem>>, vector<1x256xf32>
    %6 = vector.broadcast %5 : vector<1x256xf32> to vector<32x256xf32>
    %7 = arith.addf %4, %6 : vector<32x256xf32>
    %cst = arith.constant 0.000000e+00 : f32
    %8 = vector.broadcast %cst : f32 to vector<32x256xf32>
    %9 = arith.maximumf %7, %8 : vector<32x256xf32>
    %10 = arith.truncf %9 : vector<32x256xf32> to vector<32x256xbf16>
    %c0_5 = arith.constant 0 : index
    %c0_6 = arith.constant 0 : index
    %11 = vector.load %arg4[%c0_5, %c0_6] : memref<256x128xbf16, #tpu.memory_space<vmem>>, vector<256x128xbf16>
    %cst_7 = arith.constant dense<0.000000e+00> : vector<32x128xf32>
    %12 = tpu.matmul %10, %11, %cst_7 {dimension_numbers = #tpu.dot_dimension_numbers<[1], [0], [0], [1], [0, 0, 1, 1], [], []>} : vector<32x256xbf16>, vector<256x128xbf16>, vector<32x128xf32> -> vector<32x128xf32>
    %cst_8 = arith.constant dense<0.000000e+00> : vector<128xf32>
    %13 = vector.multi_reduction <add>, %12, %cst_8 [0] : vector<32x128xf32> to vector<128xf32>
    %14 = vector.shape_cast %13 : vector<128xf32> to vector<1x128xf32>
    %15 = arith.mulf %12, %12 : vector<32x128xf32>
    %cst_9 = arith.constant dense<0.000000e+00> : vector<128xf32>
    %16 = vector.multi_reduction <add>, %15, %cst_9 [0] : vector<32x128xf32> to vector<128xf32>
    %17 = vector.shape_cast %16 : vector<128xf32> to vector<1x128xf32>
    %cst_10 = arith.constant 0.000000e+00 : f32
    %18 = vector.broadcast %cst_10 : f32 to vector<6x128xf32>
    %19 = tpu.concatenate %14, %17, %18 in 0 : vector<1x128xf32>, vector<1x128xf32>, vector<6x128xf32> -> vector<8x128xf32>
    %c0_11 = arith.constant 0 : index
    %c0_12 = arith.constant 0 : index
    %20 = vector.load %arg6[%c0_11, %c0_12] : memref<8x128xf32, #tpu.memory_space<vmem>>, vector<8x128xf32>
    tpu.vector_store %arg6[%c0_11, %c0_12], %19 {strides = array<i32>} : memref<8x128xf32, #tpu.memory_space<vmem>>, vector<8x128xf32>,
    %21 = arith.truncf %12 : vector<32x128xf32> to vector<32x128xbf16>
    %c0_13 = arith.constant 0 : index
    %c0_14 = arith.constant 0 : index
    %22 = vector.load %arg5[%c0_13, %c0_14] : memref<32x128xbf16, #tpu.memory_space<vmem>>, vector<32x128xbf16>
    tpu.vector_store %arg5[%c0_13, %c0_14], %21 {strides = array<i32>} : memref<32x128xbf16, #tpu.memory_space<vmem>>, vector<32x128xbf16>,
    return
  }
  func.func @transform_0(%arg0: i32) -> (i32, i32) {
    %c0_i32 = arith.constant 0 : i32
    %c0_i32_0 = arith.constant 0 : i32
    return %arg0, %c0_i32 : i32, i32
  }
  func.func @transform_1(%arg0: i32) -> (i32, i32) {
    %c0_i32 = arith.constant 0 : i32
    %c0_i32_0 = arith.constant 0 : i32
    %c0_i32_1 = arith.constant 0 : i32
    return %c0_i32, %c0_i32_0 : i32, i32
  }
  func.func @transform_2(%arg0: i32) -> (i32, i32) {
    %c0_i32 = arith.constant 0 : i32
    %c0_i32_0 = arith.constant 0 : i32
    %c0_i32_1 = arith.constant 0 : i32
    return %c0_i32, %c0_i32_0 : i32, i32
  }
  func.func @transform_3(%arg0: i32) -> (i32, i32) {
    %c0_i32 = arith.constant 0 : i32
    %c0_i32_0 = arith.constant 0 : i32
    %c0_i32_1 = arith.constant 0 : i32
    return %c0_i32, %c0_i32_0 : i32, i32
  }
  func.func @transform_4(%arg0: i32) -> (i32, i32) {
    %c0_i32 = arith.constant 0 : i32
    %c0_i32_0 = arith.constant 0 : i32
    return %arg0, %c0_i32 : i32, i32
  }
  func.func @transform_5(%arg0: i32) -> (i32, i32) {
    %c0_i32 = arith.constant 0 : i32
    %c0_i32_0 = arith.constant 0 : i32
    return %arg0, %c0_i32 : i32, i32
  }
}

module attributes {stable_mosaic.version = 11 : i64} {
  func.func @kernel(%arg0: i32, %arg1: memref<128x128xbf16, #tpu.memory_space<vmem>>, %arg2: memref<1x128xf32, #tpu.memory_space<vmem>>, %arg3: memref<1x128xf32, #tpu.memory_space<vmem>>, %arg4: memref<128x128xbf16, #tpu.memory_space<vmem>>, %arg5: memref<128x128xbf16, #tpu.memory_space<vmem>>, %arg6: memref<8x128xf32, #tpu.memory_space<vmem>>) attributes {dimension_semantics = [#tpu.dimension_semantics<parallel>], iteration_bounds = array<i64: 1>, scalar_prefetch = 0 : i64, scratch_operands = 0 : i64, tpu.core_type = #tpu.core_type<tc>, window_params = [{transform_indices = @transform_0, window_bounds = array<i64: 128, 128>}, {pipeline_mode = #tpu.pipeline_mode<synchronous>, transform_indices = @transform_1, window_bounds = array<i64: 1, 128>}, {pipeline_mode = #tpu.pipeline_mode<synchronous>, transform_indices = @transform_2, window_bounds = array<i64: 1, 128>}, {pipeline_mode = #tpu.pipeline_mode<synchronous>, transform_indices = @transform_3, window_bounds = array<i64: 128, 128>}, {transform_indices = @transform_4, window_bounds = array<i64: 128, 128>}, {transform_indices = @transform_5, window_bounds = array<i64: 8, 128>}]} {
    %c0 = arith.constant 0 : index
    %c0_0 = arith.constant 0 : index
    %0 = vector.load %arg1[%c0, %c0_0] : memref<128x128xbf16, #tpu.memory_space<vmem>>, vector<128x128xbf16>
    %1 = arith.extf %0 : vector<128x128xbf16> to vector<128x128xf32>
    %c0_1 = arith.constant 0 : index
    %c0_2 = arith.constant 0 : index
    %2 = vector.load %arg2[%c0_1, %c0_2] : memref<1x128xf32, #tpu.memory_space<vmem>>, vector<1x128xf32>
    %3 = vector.broadcast %2 : vector<1x128xf32> to vector<128x128xf32>
    %4 = arith.mulf %1, %3 : vector<128x128xf32>
    %c0_3 = arith.constant 0 : index
    %c0_4 = arith.constant 0 : index
    %5 = vector.load %arg3[%c0_3, %c0_4] : memref<1x128xf32, #tpu.memory_space<vmem>>, vector<1x128xf32>
    %6 = vector.broadcast %5 : vector<1x128xf32> to vector<128x128xf32>
    %7 = arith.addf %4, %6 : vector<128x128xf32>
    %cst = arith.constant 0.000000e+00 : f32
    %8 = vector.broadcast %cst : f32 to vector<128x128xf32>
    %9 = arith.maximumf %7, %8 : vector<128x128xf32>
    %10 = arith.truncf %9 : vector<128x128xf32> to vector<128x128xbf16>
    %c0_5 = arith.constant 0 : index
    %c0_6 = arith.constant 0 : index
    %11 = vector.load %arg4[%c0_5, %c0_6] : memref<128x128xbf16, #tpu.memory_space<vmem>>, vector<128x128xbf16>
    %cst_7 = arith.constant dense<0.000000e+00> : vector<128x128xf32>
    %12 = tpu.matmul %10, %11, %cst_7 {dimension_numbers = #tpu.dot_dimension_numbers<[1], [0], [0], [1], [0, 0, 1, 1], [], []>} : vector<128x128xbf16>, vector<128x128xbf16>, vector<128x128xf32> -> vector<128x128xf32>
    %cst_8 = arith.constant dense<0.000000e+00> : vector<128xf32>
    %13 = vector.multi_reduction <add>, %12, %cst_8 [0] : vector<128x128xf32> to vector<128xf32>
    %14 = vector.shape_cast %13 : vector<128xf32> to vector<1x128xf32>
    %15 = arith.mulf %12, %12 : vector<128x128xf32>
    %cst_9 = arith.constant dense<0.000000e+00> : vector<128xf32>
    %16 = vector.multi_reduction <add>, %15, %cst_9 [0] : vector<128x128xf32> to vector<128xf32>
    %17 = vector.shape_cast %16 : vector<128xf32> to vector<1x128xf32>
    %cst_10 = arith.constant 0.000000e+00 : f32
    %18 = vector.broadcast %cst_10 : f32 to vector<6x128xf32>
    %19 = tpu.concatenate %14, %17, %18 in 0 : vector<1x128xf32>, vector<1x128xf32>, vector<6x128xf32> -> vector<8x128xf32>
    %c0_11 = arith.constant 0 : index
    %c0_12 = arith.constant 0 : index
    %20 = vector.load %arg6[%c0_11, %c0_12] : memref<8x128xf32, #tpu.memory_space<vmem>>, vector<8x128xf32>
    tpu.vector_store %arg6[%c0_11, %c0_12], %19 {strides = array<i32>} : memref<8x128xf32, #tpu.memory_space<vmem>>, vector<8x128xf32>,
    %21 = arith.truncf %12 : vector<128x128xf32> to vector<128x128xbf16>
    %c0_13 = arith.constant 0 : index
    %c0_14 = arith.constant 0 : index
    %22 = vector.load %arg5[%c0_13, %c0_14] : memref<128x128xbf16, #tpu.memory_space<vmem>>, vector<128x128xbf16>
    tpu.vector_store %arg5[%c0_13, %c0_14], %21 {strides = array<i32>} : memref<128x128xbf16, #tpu.memory_space<vmem>>, vector<128x128xbf16>,
    return
  }
  func.func @transform_0(%arg0: i32) -> (i32, i32) {
    %c0_i32 = arith.constant 0 : i32
    %c0_i32_0 = arith.constant 0 : i32
    return %arg0, %c0_i32 : i32, i32
  }
  func.func @transform_1(%arg0: i32) -> (i32, i32) {
    %c0_i32 = arith.constant 0 : i32
    %c0_i32_0 = arith.constant 0 : i32
    %c0_i32_1 = arith.constant 0 : i32
    return %c0_i32, %c0_i32_0 : i32, i32
  }
  func.func @transform_2(%arg0: i32) -> (i32, i32) {
    %c0_i32 = arith.constant 0 : i32
    %c0_i32_0 = arith.constant 0 : i32
    %c0_i32_1 = arith.constant 0 : i32
    return %c0_i32, %c0_i32_0 : i32, i32
  }
  func.func @transform_3(%arg0: i32) -> (i32, i32) {
    %c0_i32 = arith.constant 0 : i32
    %c0_i32_0 = arith.constant 0 : i32
    %c0_i32_1 = arith.constant 0 : i32
    return %c0_i32, %c0_i32_0 : i32, i32
  }
  func.func @transform_4(%arg0: i32) -> (i32, i32) {
    %c0_i32 = arith.constant 0 : i32
    %c0_i32_0 = arith.constant 0 : i32
    return %arg0, %c0_i32 : i32, i32
  }
  func.func @transform_5(%arg0: i32) -> (i32, i32) {
    %c0_i32 = arith.constant 0 : i32
    %c0_i32_0 = arith.constant 0 : i32
    return %arg0, %c0_i32 : i32, i32
  }
}

module attributes {stable_mosaic.version = 11 : i64} {
  func.func @kernel(%arg0: i32, %arg1: memref<512x128xbf16, #tpu.memory_space<vmem>>, %arg2: memref<1x128xf32, #tpu.memory_space<vmem>>, %arg3: memref<1x128xf32, #tpu.memory_space<vmem>>, %arg4: memref<128x128xbf16, #tpu.memory_space<vmem>>, %arg5: memref<512x128xbf16, #tpu.memory_space<vmem>>, %arg6: memref<8x128xf32, #tpu.memory_space<vmem>>) attributes {dimension_semantics = [#tpu.dimension_semantics<parallel>], iteration_bounds = array<i64: 1>, scalar_prefetch = 0 : i64, scratch_operands = 0 : i64, tpu.core_type = #tpu.core_type<tc>, window_params = [{transform_indices = @transform_0, window_bounds = array<i64: 512, 128>}, {pipeline_mode = #tpu.pipeline_mode<synchronous>, transform_indices = @transform_1, window_bounds = array<i64: 1, 128>}, {pipeline_mode = #tpu.pipeline_mode<synchronous>, transform_indices = @transform_2, window_bounds = array<i64: 1, 128>}, {pipeline_mode = #tpu.pipeline_mode<synchronous>, transform_indices = @transform_3, window_bounds = array<i64: 128, 128>}, {transform_indices = @transform_4, window_bounds = array<i64: 512, 128>}, {transform_indices = @transform_5, window_bounds = array<i64: 8, 128>}]} {
    %c0 = arith.constant 0 : index
    %c0_0 = arith.constant 0 : index
    %0 = vector.load %arg1[%c0, %c0_0] : memref<512x128xbf16, #tpu.memory_space<vmem>>, vector<512x128xbf16>
    %1 = arith.extf %0 : vector<512x128xbf16> to vector<512x128xf32>
    %c0_1 = arith.constant 0 : index
    %c0_2 = arith.constant 0 : index
    %2 = vector.load %arg2[%c0_1, %c0_2] : memref<1x128xf32, #tpu.memory_space<vmem>>, vector<1x128xf32>
    %3 = vector.broadcast %2 : vector<1x128xf32> to vector<512x128xf32>
    %4 = arith.mulf %1, %3 : vector<512x128xf32>
    %c0_3 = arith.constant 0 : index
    %c0_4 = arith.constant 0 : index
    %5 = vector.load %arg3[%c0_3, %c0_4] : memref<1x128xf32, #tpu.memory_space<vmem>>, vector<1x128xf32>
    %6 = vector.broadcast %5 : vector<1x128xf32> to vector<512x128xf32>
    %7 = arith.addf %4, %6 : vector<512x128xf32>
    %cst = arith.constant 0.000000e+00 : f32
    %8 = vector.broadcast %cst : f32 to vector<512x128xf32>
    %9 = arith.maximumf %7, %8 : vector<512x128xf32>
    %10 = arith.truncf %9 : vector<512x128xf32> to vector<512x128xbf16>
    %c0_5 = arith.constant 0 : index
    %c0_6 = arith.constant 0 : index
    %11 = vector.load %arg4[%c0_5, %c0_6] : memref<128x128xbf16, #tpu.memory_space<vmem>>, vector<128x128xbf16>
    %cst_7 = arith.constant dense<0.000000e+00> : vector<512x128xf32>
    %12 = tpu.matmul %10, %11, %cst_7 {dimension_numbers = #tpu.dot_dimension_numbers<[1], [0], [0], [1], [0, 0, 1, 1], [], []>} : vector<512x128xbf16>, vector<128x128xbf16>, vector<512x128xf32> -> vector<512x128xf32>
    %cst_8 = arith.constant dense<0.000000e+00> : vector<128xf32>
    %13 = vector.multi_reduction <add>, %12, %cst_8 [0] : vector<512x128xf32> to vector<128xf32>
    %14 = vector.shape_cast %13 : vector<128xf32> to vector<1x128xf32>
    %15 = arith.mulf %12, %12 : vector<512x128xf32>
    %cst_9 = arith.constant dense<0.000000e+00> : vector<128xf32>
    %16 = vector.multi_reduction <add>, %15, %cst_9 [0] : vector<512x128xf32> to vector<128xf32>
    %17 = vector.shape_cast %16 : vector<128xf32> to vector<1x128xf32>
    %cst_10 = arith.constant 0.000000e+00 : f32
    %18 = vector.broadcast %cst_10 : f32 to vector<6x128xf32>
    %19 = tpu.concatenate %14, %17, %18 in 0 : vector<1x128xf32>, vector<1x128xf32>, vector<6x128xf32> -> vector<8x128xf32>
    %c0_11 = arith.constant 0 : index
    %c0_12 = arith.constant 0 : index
    %20 = vector.load %arg6[%c0_11, %c0_12] : memref<8x128xf32, #tpu.memory_space<vmem>>, vector<8x128xf32>
    tpu.vector_store %arg6[%c0_11, %c0_12], %19 {strides = array<i32>} : memref<8x128xf32, #tpu.memory_space<vmem>>, vector<8x128xf32>,
    %21 = arith.truncf %12 : vector<512x128xf32> to vector<512x128xbf16>
    %c0_13 = arith.constant 0 : index
    %c0_14 = arith.constant 0 : index
    %22 = vector.load %arg5[%c0_13, %c0_14] : memref<512x128xbf16, #tpu.memory_space<vmem>>, vector<512x128xbf16>
    tpu.vector_store %arg5[%c0_13, %c0_14], %21 {strides = array<i32>} : memref<512x128xbf16, #tpu.memory_space<vmem>>, vector<512x128xbf16>,
    return
  }
  func.func @transform_0(%arg0: i32) -> (i32, i32) {
    %c0_i32 = arith.constant 0 : i32
    %c0_i32_0 = arith.constant 0 : i32
    return %arg0, %c0_i32 : i32, i32
  }
  func.func @transform_1(%arg0: i32) -> (i32, i32) {
    %c0_i32 = arith.constant 0 : i32
    %c0_i32_0 = arith.constant 0 : i32
    %c0_i32_1 = arith.constant 0 : i32
    return %c0_i32, %c0_i32_0 : i32, i32
  }
  func.func @transform_2(%arg0: i32) -> (i32, i32) {
    %c0_i32 = arith.constant 0 : i32
    %c0_i32_0 = arith.constant 0 : i32
    %c0_i32_1 = arith.constant 0 : i32
    return %c0_i32, %c0_i32_0 : i32, i32
  }
  func.func @transform_3(%arg0: i32) -> (i32, i32) {
    %c0_i32 = arith.constant 0 : i32
    %c0_i32_0 = arith.constant 0 : i32
    %c0_i32_1 = arith.constant 0 : i32
    return %c0_i32, %c0_i32_0 : i32, i32
  }
  func.func @transform_4(%arg0: i32) -> (i32, i32) {
    %c0_i32 = arith.constant 0 : i32
    %c0_i32_0 = arith.constant 0 : i32
    return %arg0, %c0_i32 : i32, i32
  }
  func.func @transform_5(%arg0: i32) -> (i32, i32) {
    %c0_i32 = arith.constant 0 : i32
    %c0_i32_0 = arith.constant 0 : i32
    return %arg0, %c0_i32 : i32, i32
  }
}

module attributes {stable_mosaic.version = 11 : i64} {
  func.func @kernel(%arg0: i32, %arg1: memref<512x128xbf16, #tpu.memory_space<vmem>>, %arg2: memref<1x128xf32, #tpu.memory_space<vmem>>, %arg3: memref<1x128xf32, #tpu.memory_space<vmem>>, %arg4: memref<128x128xbf16, #tpu.memory_space<vmem>>, %arg5: memref<512x128xbf16, #tpu.memory_space<vmem>>, %arg6: memref<8x128xf32, #tpu.memory_space<vmem>>) attributes {dimension_semantics = [#tpu.dimension_semantics<parallel>], iteration_bounds = array<i64: 4>, scalar_prefetch = 0 : i64, scratch_operands = 0 : i64, tpu.core_type = #tpu.core_type<tc>, window_params = [{transform_indices = @transform_0, window_bounds = array<i64: 512, 128>}, {pipeline_mode = #tpu.pipeline_mode<synchronous>, transform_indices = @transform_1, window_bounds = array<i64: 1, 128>}, {pipeline_mode = #tpu.pipeline_mode<synchronous>, transform_indices = @transform_2, window_bounds = array<i64: 1, 128>}, {pipeline_mode = #tpu.pipeline_mode<synchronous>, transform_indices = @transform_3, window_bounds = array<i64: 128, 128>}, {transform_indices = @transform_4, window_bounds = array<i64: 512, 128>}, {transform_indices = @transform_5, window_bounds = array<i64: 8, 128>}]} {
    %c0 = arith.constant 0 : index
    %c0_0 = arith.constant 0 : index
    %0 = vector.load %arg1[%c0, %c0_0] : memref<512x128xbf16, #tpu.memory_space<vmem>>, vector<512x128xbf16>
    %1 = arith.extf %0 : vector<512x128xbf16> to vector<512x128xf32>
    %c0_1 = arith.constant 0 : index
    %c0_2 = arith.constant 0 : index
    %2 = vector.load %arg2[%c0_1, %c0_2] : memref<1x128xf32, #tpu.memory_space<vmem>>, vector<1x128xf32>
    %3 = vector.broadcast %2 : vector<1x128xf32> to vector<512x128xf32>
    %4 = arith.mulf %1, %3 : vector<512x128xf32>
    %c0_3 = arith.constant 0 : index
    %c0_4 = arith.constant 0 : index
    %5 = vector.load %arg3[%c0_3, %c0_4] : memref<1x128xf32, #tpu.memory_space<vmem>>, vector<1x128xf32>
    %6 = vector.broadcast %5 : vector<1x128xf32> to vector<512x128xf32>
    %7 = arith.addf %4, %6 : vector<512x128xf32>
    %cst = arith.constant 0.000000e+00 : f32
    %8 = vector.broadcast %cst : f32 to vector<512x128xf32>
    %9 = arith.maximumf %7, %8 : vector<512x128xf32>
    %10 = arith.truncf %9 : vector<512x128xf32> to vector<512x128xbf16>
    %c0_5 = arith.constant 0 : index
    %c0_6 = arith.constant 0 : index
    %11 = vector.load %arg4[%c0_5, %c0_6] : memref<128x128xbf16, #tpu.memory_space<vmem>>, vector<128x128xbf16>
    %cst_7 = arith.constant dense<0.000000e+00> : vector<512x128xf32>
    %12 = tpu.matmul %10, %11, %cst_7 {dimension_numbers = #tpu.dot_dimension_numbers<[1], [0], [0], [1], [0, 0, 1, 1], [], []>} : vector<512x128xbf16>, vector<128x128xbf16>, vector<512x128xf32> -> vector<512x128xf32>
    %cst_8 = arith.constant dense<0.000000e+00> : vector<128xf32>
    %13 = vector.multi_reduction <add>, %12, %cst_8 [0] : vector<512x128xf32> to vector<128xf32>
    %14 = vector.shape_cast %13 : vector<128xf32> to vector<1x128xf32>
    %15 = arith.mulf %12, %12 : vector<512x128xf32>
    %cst_9 = arith.constant dense<0.000000e+00> : vector<128xf32>
    %16 = vector.multi_reduction <add>, %15, %cst_9 [0] : vector<512x128xf32> to vector<128xf32>
    %17 = vector.shape_cast %16 : vector<128xf32> to vector<1x128xf32>
    %cst_10 = arith.constant 0.000000e+00 : f32
    %18 = vector.broadcast %cst_10 : f32 to vector<6x128xf32>
    %19 = tpu.concatenate %14, %17, %18 in 0 : vector<1x128xf32>, vector<1x128xf32>, vector<6x128xf32> -> vector<8x128xf32>
    %c0_11 = arith.constant 0 : index
    %c0_12 = arith.constant 0 : index
    %20 = vector.load %arg6[%c0_11, %c0_12] : memref<8x128xf32, #tpu.memory_space<vmem>>, vector<8x128xf32>
    tpu.vector_store %arg6[%c0_11, %c0_12], %19 {strides = array<i32>} : memref<8x128xf32, #tpu.memory_space<vmem>>, vector<8x128xf32>,
    %21 = arith.truncf %12 : vector<512x128xf32> to vector<512x128xbf16>
    %c0_13 = arith.constant 0 : index
    %c0_14 = arith.constant 0 : index
    %22 = vector.load %arg5[%c0_13, %c0_14] : memref<512x128xbf16, #tpu.memory_space<vmem>>, vector<512x128xbf16>
    tpu.vector_store %arg5[%c0_13, %c0_14], %21 {strides = array<i32>} : memref<512x128xbf16, #tpu.memory_space<vmem>>, vector<512x128xbf16>,
    return
  }
  func.func @transform_0(%arg0: i32) -> (i32, i32) {
    %c0_i32 = arith.constant 0 : i32
    %c0_i32_0 = arith.constant 0 : i32
    return %arg0, %c0_i32 : i32, i32
  }
  func.func @transform_1(%arg0: i32) -> (i32, i32) {
    %c0_i32 = arith.constant 0 : i32
    %c0_i32_0 = arith.constant 0 : i32
    %c0_i32_1 = arith.constant 0 : i32
    return %c0_i32, %c0_i32_0 : i32, i32
  }
  func.func @transform_2(%arg0: i32) -> (i32, i32) {
    %c0_i32 = arith.constant 0 : i32
    %c0_i32_0 = arith.constant 0 : i32
    %c0_i32_1 = arith.constant 0 : i32
    return %c0_i32, %c0_i32_0 : i32, i32
  }
  func.func @transform_3(%arg0: i32) -> (i32, i32) {
    %c0_i32 = arith.constant 0 : i32
    %c0_i32_0 = arith.constant 0 : i32
    %c0_i32_1 = arith.constant 0 : i32
    return %c0_i32, %c0_i32_0 : i32, i32
  }
  func.func @transform_4(%arg0: i32) -> (i32, i32) {
    %c0_i32 = arith.constant 0 : i32
    %c0_i32_0 = arith.constant 0 : i32
    return %arg0, %c0_i32 : i32, i32
  }
  func.func @transform_5(%arg0: i32) -> (i32, i32) {
    %c0_i32 = arith.constant 0 : i32
    %c0_i32_0 = arith.constant 0 : i32
    return %arg0, %c0_i32 : i32, i32
  }
}

module attributes {stable_mosaic.version = 11 : i64} {
  func.func @kernel(%arg0: i32, %arg1: memref<512x128xbf16, #tpu.memory_space<vmem>>, %arg2: memref<1x128xf32, #tpu.memory_space<vmem>>, %arg3: memref<1x128xf32, #tpu.memory_space<vmem>>, %arg4: memref<128x128xbf16, #tpu.memory_space<vmem>>, %arg5: memref<512x128xbf16, #tpu.memory_space<vmem>>, %arg6: memref<8x128xf32, #tpu.memory_space<vmem>>) attributes {dimension_semantics = [#tpu.dimension_semantics<parallel>], iteration_bounds = array<i64: 16>, scalar_prefetch = 0 : i64, scratch_operands = 0 : i64, tpu.core_type = #tpu.core_type<tc>, window_params = [{transform_indices = @transform_0, window_bounds = array<i64: 512, 128>}, {pipeline_mode = #tpu.pipeline_mode<synchronous>, transform_indices = @transform_1, window_bounds = array<i64: 1, 128>}, {pipeline_mode = #tpu.pipeline_mode<synchronous>, transform_indices = @transform_2, window_bounds = array<i64: 1, 128>}, {pipeline_mode = #tpu.pipeline_mode<synchronous>, transform_indices = @transform_3, window_bounds = array<i64: 128, 128>}, {transform_indices = @transform_4, window_bounds = array<i64: 512, 128>}, {transform_indices = @transform_5, window_bounds = array<i64: 8, 128>}]} {
    %c0 = arith.constant 0 : index
    %c0_0 = arith.constant 0 : index
    %0 = vector.load %arg1[%c0, %c0_0] : memref<512x128xbf16, #tpu.memory_space<vmem>>, vector<512x128xbf16>
    %1 = arith.extf %0 : vector<512x128xbf16> to vector<512x128xf32>
    %c0_1 = arith.constant 0 : index
    %c0_2 = arith.constant 0 : index
    %2 = vector.load %arg2[%c0_1, %c0_2] : memref<1x128xf32, #tpu.memory_space<vmem>>, vector<1x128xf32>
    %3 = vector.broadcast %2 : vector<1x128xf32> to vector<512x128xf32>
    %4 = arith.mulf %1, %3 : vector<512x128xf32>
    %c0_3 = arith.constant 0 : index
    %c0_4 = arith.constant 0 : index
    %5 = vector.load %arg3[%c0_3, %c0_4] : memref<1x128xf32, #tpu.memory_space<vmem>>, vector<1x128xf32>
    %6 = vector.broadcast %5 : vector<1x128xf32> to vector<512x128xf32>
    %7 = arith.addf %4, %6 : vector<512x128xf32>
    %cst = arith.constant 0.000000e+00 : f32
    %8 = vector.broadcast %cst : f32 to vector<512x128xf32>
    %9 = arith.maximumf %7, %8 : vector<512x128xf32>
    %10 = arith.truncf %9 : vector<512x128xf32> to vector<512x128xbf16>
    %c0_5 = arith.constant 0 : index
    %c0_6 = arith.constant 0 : index
    %11 = vector.load %arg4[%c0_5, %c0_6] : memref<128x128xbf16, #tpu.memory_space<vmem>>, vector<128x128xbf16>
    %cst_7 = arith.constant dense<0.000000e+00> : vector<512x128xf32>
    %12 = tpu.matmul %10, %11, %cst_7 {dimension_numbers = #tpu.dot_dimension_numbers<[1], [0], [0], [1], [0, 0, 1, 1], [], []>} : vector<512x128xbf16>, vector<128x128xbf16>, vector<512x128xf32> -> vector<512x128xf32>
    %cst_8 = arith.constant dense<0.000000e+00> : vector<128xf32>
    %13 = vector.multi_reduction <add>, %12, %cst_8 [0] : vector<512x128xf32> to vector<128xf32>
    %14 = vector.shape_cast %13 : vector<128xf32> to vector<1x128xf32>
    %15 = arith.mulf %12, %12 : vector<512x128xf32>
    %cst_9 = arith.constant dense<0.000000e+00> : vector<128xf32>
    %16 = vector.multi_reduction <add>, %15, %cst_9 [0] : vector<512x128xf32> to vector<128xf32>
    %17 = vector.shape_cast %16 : vector<128xf32> to vector<1x128xf32>
    %cst_10 = arith.constant 0.000000e+00 : f32
    %18 = vector.broadcast %cst_10 : f32 to vector<6x128xf32>
    %19 = tpu.concatenate %14, %17, %18 in 0 : vector<1x128xf32>, vector<1x128xf32>, vector<6x128xf32> -> vector<8x128xf32>
    %c0_11 = arith.constant 0 : index
    %c0_12 = arith.constant 0 : index
    %20 = vector.load %arg6[%c0_11, %c0_12] : memref<8x128xf32, #tpu.memory_space<vmem>>, vector<8x128xf32>
    tpu.vector_store %arg6[%c0_11, %c0_12], %19 {strides = array<i32>} : memref<8x128xf32, #tpu.memory_space<vmem>>, vector<8x128xf32>,
    %21 = arith.truncf %12 : vector<512x128xf32> to vector<512x128xbf16>
    %c0_13 = arith.constant 0 : index
    %c0_14 = arith.constant 0 : index
    %22 = vector.load %arg5[%c0_13, %c0_14] : memref<512x128xbf16, #tpu.memory_space<vmem>>, vector<512x128xbf16>
    tpu.vector_store %arg5[%c0_13, %c0_14], %21 {strides = array<i32>} : memref<512x128xbf16, #tpu.memory_space<vmem>>, vector<512x128xbf16>,
    return
  }
  func.func @transform_0(%arg0: i32) -> (i32, i32) {
    %c0_i32 = arith.constant 0 : i32
    %c0_i32_0 = arith.constant 0 : i32
    return %arg0, %c0_i32 : i32, i32
  }
  func.func @transform_1(%arg0: i32) -> (i32, i32) {
    %c0_i32 = arith.constant 0 : i32
    %c0_i32_0 = arith.constant 0 : i32
    %c0_i32_1 = arith.constant 0 : i32
    return %c0_i32, %c0_i32_0 : i32, i32
  }
  func.func @transform_2(%arg0: i32) -> (i32, i32) {
    %c0_i32 = arith.constant 0 : i32
    %c0_i32_0 = arith.constant 0 : i32
    %c0_i32_1 = arith.constant 0 : i32
    return %c0_i32, %c0_i32_0 : i32, i32
  }
  func.func @transform_3(%arg0: i32) -> (i32, i32) {
    %c0_i32 = arith.constant 0 : i32
    %c0_i32_0 = arith.constant 0 : i32
    %c0_i32_1 = arith.constant 0 : i32
    return %c0_i32, %c0_i32_0 : i32, i32
  }
  func.func @transform_4(%arg0: i32) -> (i32, i32) {
    %c0_i32 = arith.constant 0 : i32
    %c0_i32_0 = arith.constant 0 : i32
    return %arg0, %c0_i32 : i32, i32
  }
  func.func @transform_5(%arg0: i32) -> (i32, i32) {
    %c0_i32 = arith.constant 0 : i32
    %c0_i32_0 = arith.constant 0 : i32
    return %arg0, %c0_i32 : i32, i32
  }
}

module attributes {stable_mosaic.version = 11 : i64} {
  func.func @kernel(%arg0: i32, %arg1: memref<512x128xbf16, #tpu.memory_space<vmem>>, %arg2: memref<1x128xf32, #tpu.memory_space<vmem>>, %arg3: memref<1x128xf32, #tpu.memory_space<vmem>>, %arg4: memref<128x128xbf16, #tpu.memory_space<vmem>>, %arg5: memref<512x128xbf16, #tpu.memory_space<vmem>>, %arg6: memref<8x128xf32, #tpu.memory_space<vmem>>) attributes {dimension_semantics = [#tpu.dimension_semantics<parallel>], iteration_bounds = array<i64: 64>, scalar_prefetch = 0 : i64, scratch_operands = 0 : i64, tpu.core_type = #tpu.core_type<tc>, window_params = [{transform_indices = @transform_0, window_bounds = array<i64: 512, 128>}, {pipeline_mode = #tpu.pipeline_mode<synchronous>, transform_indices = @transform_1, window_bounds = array<i64: 1, 128>}, {pipeline_mode = #tpu.pipeline_mode<synchronous>, transform_indices = @transform_2, window_bounds = array<i64: 1, 128>}, {pipeline_mode = #tpu.pipeline_mode<synchronous>, transform_indices = @transform_3, window_bounds = array<i64: 128, 128>}, {transform_indices = @transform_4, window_bounds = array<i64: 512, 128>}, {transform_indices = @transform_5, window_bounds = array<i64: 8, 128>}]} {
    %c0 = arith.constant 0 : index
    %c0_0 = arith.constant 0 : index
    %0 = vector.load %arg1[%c0, %c0_0] : memref<512x128xbf16, #tpu.memory_space<vmem>>, vector<512x128xbf16>
    %1 = arith.extf %0 : vector<512x128xbf16> to vector<512x128xf32>
    %c0_1 = arith.constant 0 : index
    %c0_2 = arith.constant 0 : index
    %2 = vector.load %arg2[%c0_1, %c0_2] : memref<1x128xf32, #tpu.memory_space<vmem>>, vector<1x128xf32>
    %3 = vector.broadcast %2 : vector<1x128xf32> to vector<512x128xf32>
    %4 = arith.mulf %1, %3 : vector<512x128xf32>
    %c0_3 = arith.constant 0 : index
    %c0_4 = arith.constant 0 : index
    %5 = vector.load %arg3[%c0_3, %c0_4] : memref<1x128xf32, #tpu.memory_space<vmem>>, vector<1x128xf32>
    %6 = vector.broadcast %5 : vector<1x128xf32> to vector<512x128xf32>
    %7 = arith.addf %4, %6 : vector<512x128xf32>
    %cst = arith.constant 0.000000e+00 : f32
    %8 = vector.broadcast %cst : f32 to vector<512x128xf32>
    %9 = arith.maximumf %7, %8 : vector<512x128xf32>
    %10 = arith.truncf %9 : vector<512x128xf32> to vector<512x128xbf16>
    %c0_5 = arith.constant 0 : index
    %c0_6 = arith.constant 0 : index
    %11 = vector.load %arg4[%c0_5, %c0_6] : memref<128x128xbf16, #tpu.memory_space<vmem>>, vector<128x128xbf16>
    %cst_7 = arith.constant dense<0.000000e+00> : vector<512x128xf32>
    %12 = tpu.matmul %10, %11, %cst_7 {dimension_numbers = #tpu.dot_dimension_numbers<[1], [0], [0], [1], [0, 0, 1, 1], [], []>} : vector<512x128xbf16>, vector<128x128xbf16>, vector<512x128xf32> -> vector<512x128xf32>
    %cst_8 = arith.constant dense<0.000000e+00> : vector<128xf32>
    %13 = vector.multi_reduction <add>, %12, %cst_8 [0] : vector<512x128xf32> to vector<128xf32>
    %14 = vector.shape_cast %13 : vector<128xf32> to vector<1x128xf32>
    %15 = arith.mulf %12, %12 : vector<512x128xf32>
    %cst_9 = arith.constant dense<0.000000e+00> : vector<128xf32>
    %16 = vector.multi_reduction <add>, %15, %cst_9 [0] : vector<512x128xf32> to vector<128xf32>
    %17 = vector.shape_cast %16 : vector<128xf32> to vector<1x128xf32>
    %cst_10 = arith.constant 0.000000e+00 : f32
    %18 = vector.broadcast %cst_10 : f32 to vector<6x128xf32>
    %19 = tpu.concatenate %14, %17, %18 in 0 : vector<1x128xf32>, vector<1x128xf32>, vector<6x128xf32> -> vector<8x128xf32>
    %c0_11 = arith.constant 0 : index
    %c0_12 = arith.constant 0 : index
    %20 = vector.load %arg6[%c0_11, %c0_12] : memref<8x128xf32, #tpu.memory_space<vmem>>, vector<8x128xf32>
    tpu.vector_store %arg6[%c0_11, %c0_12], %19 {strides = array<i32>} : memref<8x128xf32, #tpu.memory_space<vmem>>, vector<8x128xf32>,
    %21 = arith.truncf %12 : vector<512x128xf32> to vector<512x128xbf16>
    %c0_13 = arith.constant 0 : index
    %c0_14 = arith.constant 0 : index
    %22 = vector.load %arg5[%c0_13, %c0_14] : memref<512x128xbf16, #tpu.memory_space<vmem>>, vector<512x128xbf16>
    tpu.vector_store %arg5[%c0_13, %c0_14], %21 {strides = array<i32>} : memref<512x128xbf16, #tpu.memory_space<vmem>>, vector<512x128xbf16>,
    return
  }
  func.func @transform_0(%arg0: i32) -> (i32, i32) {
    %c0_i32 = arith.constant 0 : i32
    %c0_i32_0 = arith.constant 0 : i32
    return %arg0, %c0_i32 : i32, i32
  }
  func.func @transform_1(%arg0: i32) -> (i32, i32) {
    %c0_i32 = arith.constant 0 : i32
    %c0_i32_0 = arith.constant 0 : i32
    %c0_i32_1 = arith.constant 0 : i32
    return %c0_i32, %c0_i32_0 : i32, i32
  }
  func.func @transform_2(%arg0: i32) -> (i32, i32) {
    %c0_i32 = arith.constant 0 : i32
    %c0_i32_0 = arith.constant 0 : i32
    %c0_i32_1 = arith.constant 0 : i32
    return %c0_i32, %c0_i32_0 : i32, i32
  }
  func.func @transform_3(%arg0: i32) -> (i32, i32) {
    %c0_i32 = arith.constant 0 : i32
    %c0_i32_0 = arith.constant 0 : i32
    %c0_i32_1 = arith.constant 0 : i32
    return %c0_i32, %c0_i32_0 : i32, i32
  }
  func.func @transform_4(%arg0: i32) -> (i32, i32) {
    %c0_i32 = arith.constant 0 : i32
    %c0_i32_0 = arith.constant 0 : i32
    return %arg0, %c0_i32 : i32, i32
  }
  func.func @transform_5(%arg0: i32) -> (i32, i32) {
    %c0_i32 = arith.constant 0 : i32
    %c0_i32_0 = arith.constant 0 : i32
    return %arg0, %c0_i32 : i32, i32
  }
}

module attributes {stable_mosaic.version = 11 : i64} {
  func.func @kernel(%arg0: i32, %arg1: memref<512x128xbf16, #tpu.memory_space<vmem>>, %arg2: memref<1x128xf32, #tpu.memory_space<vmem>>, %arg3: memref<1x128xf32, #tpu.memory_space<vmem>>, %arg4: memref<128x128xbf16, #tpu.memory_space<vmem>>, %arg5: memref<512x128xbf16, #tpu.memory_space<vmem>>) attributes {dimension_semantics = [#tpu.dimension_semantics<parallel>], iteration_bounds = array<i64: 256>, scalar_prefetch = 0 : i64, scratch_operands = 0 : i64, tpu.core_type = #tpu.core_type<tc>, window_params = [{transform_indices = @transform_0, window_bounds = array<i64: 512, 128>}, {pipeline_mode = #tpu.pipeline_mode<synchronous>, transform_indices = @transform_1, window_bounds = array<i64: 1, 128>}, {pipeline_mode = #tpu.pipeline_mode<synchronous>, transform_indices = @transform_2, window_bounds = array<i64: 1, 128>}, {pipeline_mode = #tpu.pipeline_mode<synchronous>, transform_indices = @transform_3, window_bounds = array<i64: 128, 128>}, {transform_indices = @transform_4, window_bounds = array<i64: 512, 128>}]} {
    %c0 = arith.constant 0 : index
    %c0_0 = arith.constant 0 : index
    %0 = vector.load %arg1[%c0, %c0_0] : memref<512x128xbf16, #tpu.memory_space<vmem>>, vector<512x128xbf16>
    %1 = arith.extf %0 : vector<512x128xbf16> to vector<512x128xf32>
    %c0_1 = arith.constant 0 : index
    %c0_2 = arith.constant 0 : index
    %2 = vector.load %arg2[%c0_1, %c0_2] : memref<1x128xf32, #tpu.memory_space<vmem>>, vector<1x128xf32>
    %3 = vector.broadcast %2 : vector<1x128xf32> to vector<512x128xf32>
    %4 = arith.mulf %1, %3 : vector<512x128xf32>
    %c0_3 = arith.constant 0 : index
    %c0_4 = arith.constant 0 : index
    %5 = vector.load %arg3[%c0_3, %c0_4] : memref<1x128xf32, #tpu.memory_space<vmem>>, vector<1x128xf32>
    %6 = vector.broadcast %5 : vector<1x128xf32> to vector<512x128xf32>
    %7 = arith.addf %4, %6 : vector<512x128xf32>
    %cst = arith.constant 0.000000e+00 : f32
    %8 = vector.broadcast %cst : f32 to vector<512x128xf32>
    %9 = arith.maximumf %7, %8 : vector<512x128xf32>
    %10 = arith.truncf %9 : vector<512x128xf32> to vector<512x128xbf16>
    %c0_5 = arith.constant 0 : index
    %c0_6 = arith.constant 0 : index
    %11 = vector.load %arg4[%c0_5, %c0_6] : memref<128x128xbf16, #tpu.memory_space<vmem>>, vector<128x128xbf16>
    %cst_7 = arith.constant dense<0.000000e+00> : vector<512x128xf32>
    %12 = tpu.matmul %10, %11, %cst_7 {dimension_numbers = #tpu.dot_dimension_numbers<[1], [0], [0], [1], [0, 0, 1, 1], [], []>} : vector<512x128xbf16>, vector<128x128xbf16>, vector<512x128xf32> -> vector<512x128xf32>
    %13 = arith.negf %12 : vector<512x128xf32>
    %14 = math.exp %13 : vector<512x128xf32>
    %cst_8 = arith.constant 1.000000e+00 : f32
    %15 = vector.broadcast %cst_8 : f32 to vector<512x128xf32>
    %16 = arith.addf %15, %14 : vector<512x128xf32>
    %17 = arith.divf %15, %16 : vector<512x128xf32>
    %18 = arith.truncf %17 : vector<512x128xf32> to vector<512x128xbf16>
    %c0_9 = arith.constant 0 : index
    %c0_10 = arith.constant 0 : index
    %19 = vector.load %arg5[%c0_9, %c0_10] : memref<512x128xbf16, #tpu.memory_space<vmem>>, vector<512x128xbf16>
    tpu.vector_store %arg5[%c0_9, %c0_10], %18 {strides = array<i32>} : memref<512x128xbf16, #tpu.memory_space<vmem>>, vector<512x128xbf16>,
    return
  }
  func.func @transform_0(%arg0: i32) -> (i32, i32) {
    %c0_i32 = arith.constant 0 : i32
    %c0_i32_0 = arith.constant 0 : i32
    return %arg0, %c0_i32 : i32, i32
  }
  func.func @transform_1(%arg0: i32) -> (i32, i32) {
    %c0_i32 = arith.constant 0 : i32
    %c0_i32_0 = arith.constant 0 : i32
    %c0_i32_1 = arith.constant 0 : i32
    return %c0_i32, %c0_i32_0 : i32, i32
  }
  func.func @transform_2(%arg0: i32) -> (i32, i32) {
    %c0_i32 = arith.constant 0 : i32
    %c0_i32_0 = arith.constant 0 : i32
    %c0_i32_1 = arith.constant 0 : i32
    return %c0_i32, %c0_i32_0 : i32, i32
  }
  func.func @transform_3(%arg0: i32) -> (i32, i32) {
    %c0_i32 = arith.constant 0 : i32
    %c0_i32_0 = arith.constant 0 : i32
    %c0_i32_1 = arith.constant 0 : i32
    return %c0_i32, %c0_i32_0 : i32, i32
  }
  func.func @transform_4(%arg0: i32) -> (i32, i32) {
    %c0_i32 = arith.constant 0 : i32
    %c0_i32_0 = arith.constant 0 : i32
    return %arg0, %c0_i32 : i32, i32
  }
}

</mosaic_0001>

<llo_original>
// kernel: tile.73
$region0: #{tile.73}
  #allocation0 [shape = 's32[1]{0}', space=sflag, size = 0x4, scoped, tag = 'scoped memory for tile.73']
  %s0 = inlined_call_operand.vmem [shape: f32[16], index: 0, kind: input, shape index: {}]
  %s1 = inlined_call_operand.vmem [shape: f32[9,16], index: 1, kind: output, shape index: {}]
  // Predicated region
  $region2: #{tile.73} parent=0 // pred_check
    _
  $region3: #{tile.73} parent=0 // pred_check_branch
    %3 = sbr.rel (0) target = $region5
  $region4: #{tile.73} parent=0 // pred_region
    _
  $region5: #{tile.73} parent=0 // pred_fallthru
    _
  %v4 = vld [vmem:[%s0] ss:$0 sm:$0xff]
  %5 = vst [vmem:[%s1] sm:$0xff] %v4
  %s6 = scalar_lea.vmem %s1, 8
  %7 = vst [vmem:[%s6] sm:$0xff] %v4

// kernel: tile.74
$region0: #{tile.74}
  %s0 = inlined_call_operand.vmem [shape: f32[9,16], index: 0, kind: input, shape index: {}]
  %s1 = inlined_call_operand.vmem [shape: f32[144], index: 1, kind: output, shape index: {}]
  $region1: #{tile.74} parent=0
    #allocation0 [shape = 'u8[4096]{0}', space=vmem, size = 0x1000, scoped, tag = 'scoped mem for output reshape']
    %s2 = smov 3
    %v3 = vld [vmem:[%s0] ss:$8 sm:%s2]
    %vm4 = vcmask 130048
    %5 = vst.msk [vmem:[#allocation0] sm:$0x3] %vm4, %v3
    %s6 = scalar_lea.vmem %s0, 7
    %v7 = vld [vmem:[%s6] sm:$0x1]
    %8 = vrot.lane.b32.xlu0 %v7, 112
    %v9 = vpop.permute.xlu0 %8
    %vm10 = vcmask 1048448
    %11 = vst.msk [vmem:[#allocation0] sm:$0x1] %vm10, %v9
    %s12 = scalar_lea.vmem %s0, 6
    %v13 = vld [vmem:[%s12] sm:$0x1]
    %14 = vrot.lane.b32.xlu0 %v13, 96
    %v15 = vpop.permute.xlu0 %14
    %vm16 = vcmask 917248
    %17 = vst.msk [vmem:[#allocation0] sm:$0x1] %vm16, %v15
    %s18 = scalar_lea.vmem %s0, 5
    %v19 = vld [vmem:[%s18] sm:$0x1]
    %20 = vrot.lane.b32.xlu0 %v19, 80
    %v21 = vpop.permute.xlu0 %20
    %vm22 = vcmask 786048
    %23 = vst.msk [vmem:[#allocation0] sm:$0x1] %vm22, %v21
    %s24 = scalar_lea.vmem %s0, 4
    %v25 = vld [vmem:[%s24] sm:$0x1]
    %26 = vrot.lane.b32.xlu0 %v25, 64
    %v27 = vpop.permute.xlu0 %26
    %vm28 = vcmask 654848
    %29 = vst.msk [vmem:[#allocation0] sm:$0x1] %vm28, %v27
    %s30 = scalar_lea.vmem %s0, 3
    %v31 = vld [vmem:[%s30] sm:$0x1]
    %32 = vrot.lane.b32.xlu0 %v31, 48
    %v33 = vpop.permute.xlu0 %32
    %vm34 = vcmask 523648
    %35 = vst.msk [vmem:[#allocation0] sm:$0x1] %vm34, %v33
    %s36 = scalar_lea.vmem %s0, 2
    %v37 = vld [vmem:[%s36] sm:$0x1]
    %38 = vrot.lane.b32.xlu0 %v37, 32
    %v39 = vpop.permute.xlu0 %38
    %vm40 = vcmask 392448
    %41 = vst.msk [vmem:[#allocation0] sm:$0x1] %vm40, %v39
    %s42 = scalar_lea.vmem %s0, 1
    %v43 = vld [vmem:[%s42] sm:$0x1]
    %44 = vrot.lane.b32.xlu0 %v43, 16
    %v45 = vpop.permute.xlu0 %44
    %vm46 = vcmask 261248
    %47 = vst.msk [vmem:[#allocation0] sm:$0x1] %vm46, %v45
    %s49 = sshllo.u32 0, 2
    %v51 = vld [vmem:[#allocation0] sm:%s49]
    %s52 = sshllo.u32 0, 2
    %53 = vst [vmem:[%s1] sm:%s52] %v51

// kernel: _forward_impl.8
$region0: #{_forward_impl.8}
  #allocation0 [shape = 'u32[]', space=smem, size = 0x4, offset = 0x4, fixed_abs, tag = 'smem constant byte address 0x4 - core index']
  #allocation1 [shape = 'u32[144,128]{1,0:T(1,128)}', space=vmem, size = 0x12000, scoped, tag = 'internal scratch']
  %s0 = inlined_call_operand.vmem [shape: bf16[32,128], index: 0, kind: input, shape index: {}]
  %s1 = inlined_call_operand.hbm [shape: bf16[128,128], index: 1, kind: input, shape index: {}]
  %s2 = inlined_call_operand.vmem [shape: bf16[32,128], index: 2, kind: output, shape index: {0}]
  %s3 = inlined_call_operand.vmem [shape: f32[8,128], index: 3, kind: output, shape index: {1}]
  %4 = xla_tuple %s2, %s3
  %s5 = sld [smem:[#allocation0]]
  $region30: #{_forward_impl.8} parent=0
    _
  %s7 = ssub.s32 1, %s5
  %s8 = scalar_select 0, %s7, %s5
  $region1: #{_forward_impl.8} parent=0
    #allocation2 [shape = 'u8[32768]{0}', space=vmem, size = 0x8000, scoped, tag = 'input window, operand 1, single buffered']
    #allocation3 [shape = 's32[1]{0}', space=sflag, size = 0x4, scoped, tag = 'scoped memory for _forward_impl.8']
    %9 = vsyncpa [#allocation3], 0
    // Predicated region
    $region2: #{_forward_impl.8} parent=1 // pred_check
      _
    $region3: #{_forward_impl.8} parent=1 // pred_check_branch
      %11 = sbr.rel (0) target = $region5
    $region4: #{_forward_impl.8} parent=1 // pred_region
      _
    $region5: #{_forward_impl.8} parent=1 // pred_fallthru
      _
    // Predicated region
    $region6: #{_forward_impl.8} parent=1 // pred_check
      _
    $region7: #{_forward_impl.8} parent=1 // pred_check_branch
      %13 = sbr.rel (0) target = $region9
    $region8: #{_forward_impl.8} parent=1 // pred_region
      %s15 = ssub.s32 1024, 1024
      %16 = vsyncadd [#allocation3], %s15
      %s17 = sshll.u32 [#allocation2], 4
      %s18 = int_to_ptr.vmem [resolvable:$true] %s17
      %23 = dma.hbm_to_vmem [thread:$0]  %s1, 1024, %s18, [#allocation3], 64, 64, 4
    $region9: #{_forward_impl.8} parent=1 // pred_fallthru
      _
    // Predicated region
    $region10: #{_forward_impl.8} parent=1 // pred_check
      _
    $region11: #{_forward_impl.8} parent=1 // pred_check_branch
      %25 = sbr.rel (0) target = $region13
    $region12: #{_forward_impl.8} parent=1 // pred_region
      %26 = dma.done [#allocation3], 1024
    $region13: #{_forward_impl.8} parent=1 // pred_fallthru
      _
    %v28 = vld [vmem:[%s0] sm:$0xf]
    %v29 = vld [vmem:[%s0 + $0x4] sm:$0xf]
    %v30 = vld [vmem:[%s0 + $0x8] sm:$0xf]
    %v31 = vld [vmem:[%s0 + $0xc] sm:$0xf]
    %v32 = vld [vmem:[#allocation2] sm:$0xf]
    %v33 = vld [vmem:[#allocation2 + $0x4] sm:$0xf]
    %v34 = vld [vmem:[#allocation2 + $0x8] sm:$0xf]
    %v35 = vld [vmem:[#allocation2 + $0xc] sm:$0xf]
    %v36 = vld [vmem:[#allocation2 + $0x10] sm:$0xf]
    %v37 = vld [vmem:[#allocation2 + $0x14] sm:$0xf]
    %v38 = vld [vmem:[#allocation2 + $0x18] sm:$0xf]
    %v39 = vld [vmem:[#allocation2 + $0x1c] sm:$0xf]
    %v40 = vld [vmem:[#allocation2 + $0x20] sm:$0xf]
    %v41 = vld [vmem:[#allocation2 + $0x24] sm:$0xf]
    %v42 = vld [vmem:[#allocation2 + $0x28] sm:$0xf]
    %v43 = vld [vmem:[#allocation2 + $0x2c] sm:$0xf]
    %v44 = vld [vmem:[#allocation2 + $0x30] sm:$0xf]
    %v45 = vld [vmem:[#allocation2 + $0x34] sm:$0xf]
    %v46 = vld [vmem:[#allocation2 + $0x38] sm:$0xf]
    %v47 = vld [vmem:[#allocation2 + $0x3c] sm:$0xf]
    %v52 = vunpack.c.l.b16 %v28
    %v53 = vunpack.c.l.b16 %v29
    %v54 = vunpack.c.l.b16 %v30
    %v55 = vunpack.c.l.b16 %v31
    %v56 = vpack.c.b16 %v53, %v52
    %v57 = vpack.c.b16 %v55, %v54
    %v76 = vunpack.c.l.b16 %v32
    %v77 = vunpack.c.l.b16 %v33
    %v78 = vunpack.c.l.b16 %v34
    %v79 = vunpack.c.l.b16 %v35
    %v80 = vunpack.c.l.b16 %v36
    %v81 = vunpack.c.l.b16 %v37
    %v82 = vunpack.c.l.b16 %v38
    %v83 = vunpack.c.l.b16 %v39
    %v84 = vunpack.c.l.b16 %v40
    %v85 = vunpack.c.l.b16 %v41
    %v86 = vunpack.c.l.b16 %v42
    %v87 = vunpack.c.l.b16 %v43
    %v88 = vunpack.c.l.b16 %v44
    %v89 = vunpack.c.l.b16 %v45
    %v90 = vunpack.c.l.b16 %v46
    %v91 = vunpack.c.l.b16 %v47
    %v92 = vpack.c.b16 %v77, %v76
    %v93 = vpack.c.b16 %v79, %v78
    %v94 = vpack.c.b16 %v81, %v80
    %v95 = vpack.c.b16 %v83, %v82
    %v96 = vpack.c.b16 %v85, %v84
    %v97 = vpack.c.b16 %v87, %v86
    %v98 = vpack.c.b16 %v89, %v88
    %v99 = vpack.c.b16 %v91, %v90
    %108 = vmatprep.subr.bf16.mxu0 0
    %109 = vmatpush1.bf16.msra.mxu0 %v92
    %110 = vmatprep.subr.bf16.mxu0 0
    %111 = vmatpush1.bf16.msra.mxu0 %v93
    %112 = vmatprep.subr.bf16.mxu0 0
    %113 = vmatpush1.bf16.msra.mxu0 %v94
    %114 = vmatprep.subr.bf16.mxu0 0
    %115 = vmatpush1.bf16.msra.mxu0 %v95
    %116 = vmatprep.subr.bf16.mxu0 0
    %117 = vmatpush1.bf16.msra.mxu0 %v96
    %118 = vmatprep.subr.bf16.mxu0 0
    %119 = vmatpush1.bf16.msra.mxu0 %v97
    %120 = vmatprep.subr.bf16.mxu0 0
    %121 = vmatpush1.bf16.msra.mxu0 %v98
    %122 = vmatprep.subr.bf16.mxu0 0
    %123 = vmatpush1.bf16.msra.mxu0 %v99
    %124 = vmatprep.subr.bf16.mxu0 0
    %125 = vmatpush1.bf16.msra.mxu0 0
    %126 = vmatprep.subr.bf16.mxu0 0
    %127 = vmatpush1.bf16.msra.mxu0 0
    %128 = vmatprep.subr.bf16.mxu0 0
    %129 = vmatpush1.bf16.msra.mxu0 0
    %130 = vmatprep.subr.bf16.mxu0 0
    %131 = vmatpush1.bf16.msra.mxu0 0
    %132 = vmatprep.subr.bf16.mxu0 0
    %133 = vmatpush1.bf16.msra.mxu0 0
    %134 = vmatprep.subr.bf16.mxu0 0
    %135 = vmatpush1.bf16.msra.mxu0 0
    %136 = vmatprep.subr.bf16.mxu0 0
    %137 = vmatpush1.bf16.msra.mxu0 0
    %138 = vmatprep.subr.bf16.mxu0 0
    %139 = vmatpush1.bf16.msra.mxu0 0
    %140 = vmatprep.mubr.bf16.mxu0 0
    %141 = vmatmul.mubr.bf16.gmra.mrb[0].mxu0 %v56
    %v142 = vpop.f32.mrb[0].mxu0
    %v143 = vadd.f32 0.0, %v142
    %v144 = vpop.f32.mrb[0].mxu0
    %v145 = vpop.f32.mrb[0].mxu0
    %v146 = vadd.f32 0.0, %v145
    %v147 = vpop.f32.mrb[0].mxu0
    %148 = vmatprep.mubr.bf16.mxu0 0
    %149 = vmatmul.mubr.bf16.gmra.mrb[0].mxu0 %v57
    %v150 = vpop.f32.mrb[0].mxu0
    %v151 = vadd.f32 0.0, %v150
    %v152 = vpop.f32.mrb[0].mxu0
    %v153 = vpop.f32.mrb[0].mxu0
    %v154 = vadd.f32 0.0, %v153
    %v155 = vpop.f32.mrb[0].mxu0
    %156 = vdwg.mxu0
    %v157 = vadd.f32 %v143, %v146
    %v158 = vadd.f32 %v157, %v151
    %v159 = vadd.f32 %v158, %v154
    %v160 = vrot.slane %v159, 4
    %v161 = vadd.f32 %v159, %v160
    %v162 = vrot.slane %v161, 2
    %v163 = vadd.f32 %v161, %v162
    %v164 = vrot.slane %v163, 1
    %v165 = vadd.f32 %v163, %v164
    %v166 = vmul.f32 %v143, %v143
    %v167 = vmul.f32 %v146, %v146
    %v168 = vmul.f32 %v151, %v151
    %v169 = vmul.f32 %v154, %v154
    %v170 = vadd.f32 %v166, %v167
    %v171 = vadd.f32 %v170, %v168
    %v172 = vadd.f32 %v171, %v169
    %v173 = vrot.slane %v172, 4
    %v174 = vadd.f32 %v172, %v173
    %v175 = vrot.slane %v174, 2
    %v176 = vadd.f32 %v174, %v175
    %v177 = vrot.slane %v176, 1
    %v178 = vadd.f32 %v176, %v177
    %vm179 = vcmask 1040384
    %v180 = vsel %vm179, %v165, %v178
    %vm181 = vcmask 1041408
    %v182 = vsel %vm181, %v180, 0.0
    %183 = vst [vmem:[%s3] sm:$0xff] %v182
    %v184 = vpack.c.bf16 %v146, %v143
    %v185 = vpack.c.bf16 %v154, %v151
    %v188 = vunpack.c.l.b16 %v184
    %v189 = vunpack.c.h.b16 %v184
    %v190 = vunpack.c.l.b16 %v185
    %v191 = vunpack.c.h.b16 %v185
    %v192 = vpack.c.b16 %v188, %v188
    %v193 = vpack.c.b16 %v189, %v189
    %v194 = vpack.c.b16 %v190, %v190
    %v195 = vpack.c.b16 %v191, %v191
    %200 = vst [vmem:[%s2] sm:$0xf] %v192
    %201 = vst [vmem:[%s2 + $0x4] sm:$0xf] %v193
    %202 = vst [vmem:[%s2 + $0x8] sm:$0xf] %v194
    %203 = vst [vmem:[%s2 + $0xc] sm:$0xf] %v195
    // Predicated region
    $region14: #{_forward_impl.8} parent=1 // pred_check
      _
    $region15: #{_forward_impl.8} parent=1 // pred_check_branch
      %205 = sbr.rel (0) target = $region17
    $region16: #{_forward_impl.8} parent=1 // pred_region
      _
    $region17: #{_forward_impl.8} parent=1 // pred_fallthru
      _
    // Predicated region
    $region18: #{_forward_impl.8} parent=1 // pred_check
      _
    $region19: #{_forward_impl.8} parent=1 // pred_check_branch
      %207 = sbr.rel (0) target = $region21
    $region20: #{_forward_impl.8} parent=1 // pred_region
      _
    $region21: #{_forward_impl.8} parent=1 // pred_fallthru
      _
    // Predicated region
    $region22: #{_forward_impl.8} parent=1 // pred_check
      _
    $region23: #{_forward_impl.8} parent=1 // pred_check_branch
      %209 = sbr.rel (0) target = $region25
    $region24: #{_forward_impl.8} parent=1 // pred_region
      _
    $region25: #{_forward_impl.8} parent=1 // pred_fallthru
      _
    // Predicated region
    $region26: #{_forward_impl.8} parent=1 // pred_check
      _
    $region27: #{_forward_impl.8} parent=1 // pred_check_branch
      %211 = sbr.rel (0) target = $region29
    $region28: #{_forward_impl.8} parent=1 // pred_region
      _
    $region29: #{_forward_impl.8} parent=1 // pred_fallthru
      _
    %212 = vsyncpa [#allocation3], 1

// kernel: tile.88
$region0: #{tile.88}
  #allocation0 [shape = 's32[1]{0}', space=sflag, size = 0x4, scoped, tag = 'scoped memory for tile.88']
  %s0 = inlined_call_operand.vmem [shape: f32[8], index: 0, kind: input, shape index: {}]
  %s1 = inlined_call_operand.vmem [shape: f32[9,8], index: 1, kind: output, shape index: {}]
  // Predicated region
  $region2: #{tile.88} parent=0 // pred_check
    _
  $region3: #{tile.88} parent=0 // pred_check_branch
    %3 = sbr.rel (0) target = $region5
  $region4: #{tile.88} parent=0 // pred_region
    _
  $region5: #{tile.88} parent=0 // pred_fallthru
    _
  %v4 = vld [vmem:[%s0] ss:$0 sm:$0xff]
  %5 = vst [vmem:[%s1] sm:$0xff] %v4
  %s6 = scalar_lea.vmem %s1, 8
  %7 = vst [vmem:[%s6] sm:$0xff] %v4

// kernel: tile.89
$region0: #{tile.89}
  %s0 = inlined_call_operand.vmem [shape: f32[9,8], index: 0, kind: input, shape index: {}]
  %s1 = inlined_call_operand.vmem [shape: f32[72], index: 1, kind: output, shape index: {}]
  $region1: #{tile.89} parent=0
    #allocation0 [shape = 'u8[4096]{0}', space=vmem, size = 0x1000, scoped, tag = 'scoped mem for output reshape']
    %v2 = vld [vmem:[%s0] sm:$0x1]
    %vm3 = vcmask 64512
    %4 = vst.msk [vmem:[#allocation0] sm:$0x1] %vm3, %v2
    %s5 = scalar_lea.vmem %s0, 8
    %v6 = vld [vmem:[%s5] sm:$0x1]
    %7 = vrot.lane.b32.xlu0 %v6, 64
    %v8 = vpop.permute.xlu0 %7
    %vm9 = vcmask 589312
    %10 = vst.msk [vmem:[#allocation0] sm:$0x1] %vm9, %v8
    %s11 = scalar_lea.vmem %s0, 7
    %v12 = vld [vmem:[%s11] sm:$0x1]
    %13 = vrot.lane.b32.xlu0 %v12, 56
    %v14 = vpop.permute.xlu0 %13
    %vm15 = vcmask 523712
    %16 = vst.msk [vmem:[#allocation0] sm:$0x1] %vm15, %v14
    %s17 = scalar_lea.vmem %s0, 6
    %v18 = vld [vmem:[%s17] sm:$0x1]
    %19 = vrot.lane.b32.xlu0 %v18, 48
    %v20 = vpop.permute.xlu0 %19
    %vm21 = vcmask 458112
    %22 = vst.msk [vmem:[#allocation0] sm:$0x1] %vm21, %v20
    %s23 = scalar_lea.vmem %s0, 5
    %v24 = vld [vmem:[%s23] sm:$0x1]
    %25 = vrot.lane.b32.xlu0 %v24, 40
    %v26 = vpop.permute.xlu0 %25
    %vm27 = vcmask 392512
    %28 = vst.msk [vmem:[#allocation0] sm:$0x1] %vm27, %v26
    %s29 = scalar_lea.vmem %s0, 4
    %v30 = vld [vmem:[%s29] sm:$0x1]
    %31 = vrot.lane.b32.xlu0 %v30, 32
    %v32 = vpop.permute.xlu0 %31
    %vm33 = vcmask 326912
    %34 = vst.msk [vmem:[#allocation0] sm:$0x1] %vm33, %v32
    %s35 = scalar_lea.vmem %s0, 3
    %v36 = vld [vmem:[%s35] sm:$0x1]
    %37 = vrot.lane.b32.xlu0 %v36, 24
    %v38 = vpop.permute.xlu0 %37
    %vm39 = vcmask 261312
    %40 = vst.msk [vmem:[#allocation0] sm:$0x1] %vm39, %v38
    %s41 = scalar_lea.vmem %s0, 2
    %v42 = vld [vmem:[%s41] sm:$0x1]
    %43 = vrot.lane.b32.xlu0 %v42, 16
    %v44 = vpop.permute.xlu0 %43
    %vm45 = vcmask 195712
    %46 = vst.msk [vmem:[#allocation0] sm:$0x1] %vm45, %v44
    %s47 = scalar_lea.vmem %s0, 1
    %v48 = vld [vmem:[%s47] sm:$0x1]
    %49 = vrot.lane.b32.xlu0 %v48, 8
    %v50 = vpop.permute.xlu0 %49
    %vm51 = vcmask 130112
    %52 = vst.msk [vmem:[#allocation0] sm:$0x1] %vm51, %v50
    %s54 = sshllo.u32 0, 1
    %v56 = vld [vmem:[#allocation0] sm:%s54]
    %s57 = sshllo.u32 0, 1
    %58 = vst [vmem:[%s1] sm:%s57] %v56

// kernel: _forward_impl.9
$region0: #{_forward_impl.9}
  #allocation0 [shape = 'u32[]', space=smem, size = 0x4, offset = 0x4, fixed_abs, tag = 'smem constant byte address 0x4 - core index']
  #allocation1 [shape = 'u32[144,128]{1,0:T(1,128)}', space=vmem, size = 0x12000, scoped, tag = 'internal scratch']
  %s0 = inlined_call_operand.vmem [shape: bf16[32,256], index: 0, kind: input, shape index: {}]
  %s1 = inlined_call_operand.vmem [shape: f32[1,256], index: 1, kind: input, shape index: {}]
  %s2 = inlined_call_operand.vmem [shape: f32[1,256], index: 2, kind: input, shape index: {}]
  %s3 = inlined_call_operand.hbm [shape: bf16[256,128], index: 3, kind: input, shape index: {}]
  %s4 = inlined_call_operand.vmem [shape: bf16[32,128], index: 4, kind: output, shape index: {0}]
  %s5 = inlined_call_operand.vmem [shape: f32[8,128], index: 5, kind: output, shape index: {1}]
  %6 = xla_tuple %s4, %s5
  %s7 = sld [smem:[#allocation0]]
  $region38: #{_forward_impl.9} parent=0
    _
  %s9 = ssub.s32 1, %s7
  %s10 = scalar_select 0, %s9, %s7
  $region1: #{_forward_impl.9} parent=0
    #allocation2 [shape = 'u8[65536]{0}', space=vmem, size = 0x10000, scoped, tag = 'input window, operand 3, single buffered']
    #allocation3 [shape = 's32[1]{0}', space=sflag, size = 0x4, scoped, tag = 'scoped memory for _forward_impl.9']
    %11 = vsyncpa [#allocation3], 0
    // Predicated region
    $region2: #{_forward_impl.9} parent=1 // pred_check
      _
    $region3: #{_forward_impl.9} parent=1 // pred_check_branch
      %13 = sbr.rel (0) target = $region5
    $region4: #{_forward_impl.9} parent=1 // pred_region
      _
    $region5: #{_forward_impl.9} parent=1 // pred_fallthru
      _
    // Predicated region
    $region6: #{_forward_impl.9} parent=1 // pred_check
      _
    $region7: #{_forward_impl.9} parent=1 // pred_check_branch
      %15 = sbr.rel (0) target = $region9
    $region8: #{_forward_impl.9} parent=1 // pred_region
      _
    $region9: #{_forward_impl.9} parent=1 // pred_fallthru
      _
    // Predicated region
    $region10: #{_forward_impl.9} parent=1 // pred_check
      _
    $region11: #{_forward_impl.9} parent=1 // pred_check_branch
      %17 = sbr.rel (0) target = $region13
    $region12: #{_forward_impl.9} parent=1 // pred_region
      _
    $region13: #{_forward_impl.9} parent=1 // pred_fallthru
      _
    // Predicated region
    $region14: #{_forward_impl.9} parent=1 // pred_check
      _
    $region15: #{_forward_impl.9} parent=1 // pred_check_branch
      %19 = sbr.rel (0) target = $region17
    $region16: #{_forward_impl.9} parent=1 // pred_region
      %s21 = ssub.s32 2048, 2048
      %22 = vsyncadd [#allocation3], %s21
      %s23 = sshll.u32 [#allocation2], 4
      %s24 = int_to_ptr.vmem [resolvable:$true] %s23
      %29 = dma.hbm_to_vmem [thread:$0]  %s3, 2048, %s24, [#allocation3], 64, 64, 4
    $region17: #{_forward_impl.9} parent=1 // pred_fallthru
      _
    // Predicated region
    $region18: #{_forward_impl.9} parent=1 // pred_check
      _
    $region19: #{_forward_impl.9} parent=1 // pred_check_branch
      %31 = sbr.rel (0) target = $region21
    $region20: #{_forward_impl.9} parent=1 // pred_region
      %32 = dma.done [#allocation3], 2048
    $region21: #{_forward_impl.9} parent=1 // pred_fallthru
      _
    %v34 = vld [vmem:[%s0] sm:$0xff]
    %v35 = vld [vmem:[%s0 + $0x8] sm:$0xff]
    %v36 = vld [vmem:[%s0 + $0x10] sm:$0xff]
    %v37 = vld [vmem:[%s0 + $0x18] sm:$0xff]
    %v38 = vunpack.c.l.bf16 %v34
    %v39 = vunpack.c.h.bf16 %v34
    %v40 = vunpack.c.l.bf16 %v35
    %v41 = vunpack.c.h.bf16 %v35
    %v42 = vunpack.c.l.bf16 %v36
    %v43 = vunpack.c.h.bf16 %v36
    %v44 = vunpack.c.l.bf16 %v37
    %v45 = vunpack.c.h.bf16 %v37
    %v46 = vld [vmem:[%s1] sm:$0x3]
    %v48 = vlaneseq
    %v49 = vshrl.u32 %v48, 7
    %v50 = vsub.s32 0, %v49
    %v51 = vrot.slane %v46, %v50
    %v52 = vlaneseq
    %v53 = vshrl.u32 %v52, 7
    %v54 = vsub.s32 1, %v53
    %v55 = vrot.slane %v46, %v54
    %v58 = vmul.f32 %v38, %v51
    %v59 = vmul.f32 %v39, %v55
    %v60 = vmul.f32 %v40, %v51
    %v61 = vmul.f32 %v41, %v55
    %v62 = vmul.f32 %v42, %v51
    %v63 = vmul.f32 %v43, %v55
    %v64 = vmul.f32 %v44, %v51
    %v65 = vmul.f32 %v45, %v55
    %v66 = vld [vmem:[%s2] sm:$0x3]
    %v68 = vlaneseq
    %v69 = vshrl.u32 %v68, 7
    %v70 = vsub.s32 0, %v69
    %v71 = vrot.slane %v66, %v70
    %v72 = vlaneseq
    %v73 = vshrl.u32 %v72, 7
    %v74 = vsub.s32 1, %v73
    %v75 = vrot.slane %v66, %v74
    %v78 = vadd.f32 %v58, %v71
    %v79 = vadd.f32 %v59, %v75
    %v80 = vadd.f32 %v60, %v71
    %v81 = vadd.f32 %v61, %v75
    %v82 = vadd.f32 %v62, %v71
    %v83 = vadd.f32 %v63, %v75
    %v84 = vadd.f32 %v64, %v71
    %v85 = vadd.f32 %v65, %v75
    %v86 = vmax.f32 %v78, 0.0
    %v87 = vmax.f32 %v79, 0.0
    %v88 = vmax.f32 %v80, 0.0
    %v89 = vmax.f32 %v81, 0.0
    %v90 = vmax.f32 %v82, 0.0
    %v91 = vmax.f32 %v83, 0.0
    %v92 = vmax.f32 %v84, 0.0
    %v93 = vmax.f32 %v85, 0.0
    %v94 = vpack.c.bf16 %v88, %v86
    %v95 = vpack.c.bf16 %v89, %v87
    %v96 = vpack.c.bf16 %v92, %v90
    %v97 = vpack.c.bf16 %v93, %v91
    %v98 = vld [vmem:[#allocation2] sm:$0xf]
    %v99 = vld [vmem:[#allocation2 + $0x4] sm:$0xf]
    %v100 = vld [vmem:[#allocation2 + $0x8] sm:$0xf]
    %v101 = vld [vmem:[#allocation2 + $0xc] sm:$0xf]
    %v102 = vld [vmem:[#allocation2 + $0x10] sm:$0xf]
    %v103 = vld [vmem:[#allocation2 + $0x14] sm:$0xf]
    %v104 = vld [vmem:[#allocation2 + $0x18] sm:$0xf]
    %v105 = vld [vmem:[#allocation2 + $0x1c] sm:$0xf]
    %v106 = vld [vmem:[#allocation2 + $0x20] sm:$0xf]
    %v107 = vld [vmem:[#allocation2 + $0x24] sm:$0xf]
    %v108 = vld [vmem:[#allocation2 + $0x28] sm:$0xf]
    %v109 = vld [vmem:[#allocation2 + $0x2c] sm:$0xf]
    %v110 = vld [vmem:[#allocation2 + $0x30] sm:$0xf]
    %v111 = vld [vmem:[#allocation2 + $0x34] sm:$0xf]
    %v112 = vld [vmem:[#allocation2 + $0x38] sm:$0xf]
    %v113 = vld [vmem:[#allocation2 + $0x3c] sm:$0xf]
    %v114 = vld [vmem:[#allocation2 + $0x40] sm:$0xf]
    %v115 = vld [vmem:[#allocation2 + $0x44] sm:$0xf]
    %v116 = vld [vmem:[#allocation2 + $0x48] sm:$0xf]
    %v117 = vld [vmem:[#allocation2 + $0x4c] sm:$0xf]
    %v118 = vld [vmem:[#allocation2 + $0x50] sm:$0xf]
    %v119 = vld [vmem:[#allocation2 + $0x54] sm:$0xf]
    %v120 = vld [vmem:[#allocation2 + $0x58] sm:$0xf]
    %v121 = vld [vmem:[#allocation2 + $0x5c] sm:$0xf]
    %v122 = vld [vmem:[#allocation2 + $0x60] sm:$0xf]
    %v123 = vld [vmem:[#allocation2 + $0x64] sm:$0xf]
    %v124 = vld [vmem:[#allocation2 + $0x68] sm:$0xf]
    %v125 = vld [vmem:[#allocation2 + $0x6c] sm:$0xf]
    %v126 = vld [vmem:[#allocation2 + $0x70] sm:$0xf]
    %v127 = vld [vmem:[#allocation2 + $0x74] sm:$0xf]
    %v128 = vld [vmem:[#allocation2 + $0x78] sm:$0xf]
    %v129 = vld [vmem:[#allocation2 + $0x7c] sm:$0xf]
    %v162 = vunpack.c.l.b16 %v98
    %v163 = vunpack.c.l.b16 %v99
    %v164 = vunpack.c.l.b16 %v100
    %v165 = vunpack.c.l.b16 %v101
    %v166 = vunpack.c.l.b16 %v102
    %v167 = vunpack.c.l.b16 %v103
    %v168 = vunpack.c.l.b16 %v104
    %v169 = vunpack.c.l.b16 %v105
    %v170 = vunpack.c.l.b16 %v106
    %v171 = vunpack.c.l.b16 %v107
    %v172 = vunpack.c.l.b16 %v108
    %v173 = vunpack.c.l.b16 %v109
    %v174 = vunpack.c.l.b16 %v110
    %v175 = vunpack.c.l.b16 %v111
    %v176 = vunpack.c.l.b16 %v112
    %v177 = vunpack.c.l.b16 %v113
    %v178 = vunpack.c.l.b16 %v114
    %v179 = vunpack.c.l.b16 %v115
    %v180 = vunpack.c.l.b16 %v116
    %v181 = vunpack.c.l.b16 %v117
    %v182 = vunpack.c.l.b16 %v118
    %v183 = vunpack.c.l.b16 %v119
    %v184 = vunpack.c.l.b16 %v120
    %v185 = vunpack.c.l.b16 %v121
    %v186 = vunpack.c.l.b16 %v122
    %v187 = vunpack.c.l.b16 %v123
    %v188 = vunpack.c.l.b16 %v124
    %v189 = vunpack.c.l.b16 %v125
    %v190 = vunpack.c.l.b16 %v126
    %v191 = vunpack.c.l.b16 %v127
    %v192 = vunpack.c.l.b16 %v128
    %v193 = vunpack.c.l.b16 %v129
    %v194 = vpack.c.b16 %v163, %v162
    %v195 = vpack.c.b16 %v165, %v164
    %v196 = vpack.c.b16 %v167, %v166
    %v197 = vpack.c.b16 %v169, %v168
    %v198 = vpack.c.b16 %v171, %v170
    %v199 = vpack.c.b16 %v173, %v172
    %v200 = vpack.c.b16 %v175, %v174
    %v201 = vpack.c.b16 %v177, %v176
    %v202 = vpack.c.b16 %v179, %v178
    %v203 = vpack.c.b16 %v181, %v180
    %v204 = vpack.c.b16 %v183, %v182
    %v205 = vpack.c.b16 %v185, %v184
    %v206 = vpack.c.b16 %v187, %v186
    %v207 = vpack.c.b16 %v189, %v188
    %v208 = vpack.c.b16 %v191, %v190
    %v209 = vpack.c.b16 %v193, %v192
    %226 = vmatprep.subr.bf16.mxu0 0
    %227 = vmatpush1.bf16.msra.mxu0 %v194
    %228 = vmatprep.subr.bf16.mxu0 0
    %229 = vmatpush1.bf16.msra.mxu0 %v195
    %230 = vmatprep.subr.bf16.mxu0 0
    %231 = vmatpush1.bf16.msra.mxu0 %v196
    %232 = vmatprep.subr.bf16.mxu0 0
    %233 = vmatpush1.bf16.msra.mxu0 %v197
    %234 = vmatprep.subr.bf16.mxu0 0
    %235 = vmatpush1.bf16.msra.mxu0 %v198
    %236 = vmatprep.subr.bf16.mxu0 0
    %237 = vmatpush1.bf16.msra.mxu0 %v199
    %238 = vmatprep.subr.bf16.mxu0 0
    %239 = vmatpush1.bf16.msra.mxu0 %v200
    %240 = vmatprep.subr.bf16.mxu0 0
    %241 = vmatpush1.bf16.msra.mxu0 %v201
    %242 = vmatprep.subr.bf16.mxu0 0
    %243 = vmatpush1.bf16.msra.mxu0 %v202
    %244 = vmatprep.subr.bf16.mxu0 0
    %245 = vmatpush1.bf16.msra.mxu0 %v203
    %246 = vmatprep.subr.bf16.mxu0 0
    %247 = vmatpush1.bf16.msra.mxu0 %v204
    %248 = vmatprep.subr.bf16.mxu0 0
    %249 = vmatpush1.bf16.msra.mxu0 %v205
    %250 = vmatprep.subr.bf16.mxu0 0
    %251 = vmatpush1.bf16.msra.mxu0 %v206
    %252 = vmatprep.subr.bf16.mxu0 0
    %253 = vmatpush1.bf16.msra.mxu0 %v207
    %254 = vmatprep.subr.bf16.mxu0 0
    %255 = vmatpush1.bf16.msra.mxu0 %v208
    %256 = vmatprep.subr.bf16.mxu0 0
    %257 = vmatpush1.bf16.msra.mxu0 %v209
    %258 = vmatprep.mubr.bf16.mxu0 %v95
    %259 = vmatmul.mubr.bf16.gmra.mrb[0].mxu0 %v94
    %v260 = vpop.f32.mrb[0].mxu0
    %v261 = vadd.f32 0.0, %v260
    %v262 = vpop.f32.mrb[0].mxu0
    %v263 = vpop.f32.mrb[0].mxu0
    %v264 = vadd.f32 0.0, %v263
    %v265 = vpop.f32.mrb[0].mxu0
    %266 = vmatprep.mubr.bf16.mxu0 %v97
    %267 = vmatmul.mubr.bf16.gmra.mrb[0].mxu0 %v96
    %v268 = vpop.f32.mrb[0].mxu0
    %v269 = vadd.f32 0.0, %v268
    %v270 = vpop.f32.mrb[0].mxu0
    %v271 = vpop.f32.mrb[0].mxu0
    %v272 = vadd.f32 0.0, %v271
    %v273 = vpop.f32.mrb[0].mxu0
    %274 = vdwg.mxu0
    %v275 = vadd.f32 %v261, %v264
    %v276 = vadd.f32 %v275, %v269
    %v277 = vadd.f32 %v276, %v272
    %v278 = vrot.slane %v277, 4
    %v279 = vadd.f32 %v277, %v278
    %v280 = vrot.slane %v279, 2
    %v281 = vadd.f32 %v279, %v280
    %v282 = vrot.slane %v281, 1
    %v283 = vadd.f32 %v281, %v282
    %v284 = vmul.f32 %v261, %v261
    %v285 = vmul.f32 %v264, %v264
    %v286 = vmul.f32 %v269, %v269
    %v287 = vmul.f32 %v272, %v272
    %v288 = vadd.f32 %v284, %v285
    %v289 = vadd.f32 %v288, %v286
    %v290 = vadd.f32 %v289, %v287
    %v291 = vrot.slane %v290, 4
    %v292 = vadd.f32 %v290, %v291
    %v293 = vrot.slane %v292, 2
    %v294 = vadd.f32 %v292, %v293
    %v295 = vrot.slane %v294, 1
    %v296 = vadd.f32 %v294, %v295
    %vm297 = vcmask 1040384
    %v298 = vsel %vm297, %v283, %v296
    %vm299 = vcmask 1041408
    %v300 = vsel %vm299, %v298, 0.0
    %301 = vst [vmem:[%s5] sm:$0xff] %v300
    %v302 = vpack.c.bf16 %v264, %v261
    %v303 = vpack.c.bf16 %v272, %v269
    %v306 = vunpack.c.l.b16 %v302
    %v307 = vunpack.c.h.b16 %v302
    %v308 = vunpack.c.l.b16 %v303
    %v309 = vunpack.c.h.b16 %v303
    %v310 = vpack.c.b16 %v306, %v306
    %v311 = vpack.c.b16 %v307, %v307
    %v312 = vpack.c.b16 %v308, %v308
    %v313 = vpack.c.b16 %v309, %v309
    %318 = vst [vmem:[%s4] sm:$0xf] %v310
    %319 = vst [vmem:[%s4 + $0x4] sm:$0xf] %v311
    %320 = vst [vmem:[%s4 + $0x8] sm:$0xf] %v312
    %321 = vst [vmem:[%s4 + $0xc] sm:$0xf] %v313
    // Predicated region
    $region22: #{_forward_impl.9} parent=1 // pred_check
      _
    $region23: #{_forward_impl.9} parent=1 // pred_check_branch
      %323 = sbr.rel (0) target = $region25
    $region24: #{_forward_impl.9} parent=1 // pred_region
      _
    $region25: #{_forward_impl.9} parent=1 // pred_fallthru
      _
    // Predicated region
    $region26: #{_forward_impl.9} parent=1 // pred_check
      _
    $region27: #{_forward_impl.9} parent=1 // pred_check_branch
      %325 = sbr.rel (0) target = $region29
    $region28: #{_forward_impl.9} parent=1 // pred_region
      _
    $region29: #{_forward_impl.9} parent=1 // pred_fallthru
      _
    // Predicated region
    $region30: #{_forward_impl.9} parent=1 // pred_check
      _
    $region31: #{_forward_impl.9} parent=1 // pred_check_branch
      %327 = sbr.rel (0) target = $region33
    $region32: #{_forward_impl.9} parent=1 // pred_region
      _
    $region33: #{_forward_impl.9} parent=1 // pred_fallthru
      _
    // Predicated region
    $region34: #{_forward_impl.9} parent=1 // pred_check
      _
    $region35: #{_forward_impl.9} parent=1 // pred_check_branch
      %329 = sbr.rel (0) target = $region37
    $region36: #{_forward_impl.9} parent=1 // pred_region
      _
    $region37: #{_forward_impl.9} parent=1 // pred_fallthru
      _
    %330 = vsyncpa [#allocation3], 1

// kernel: _forward_impl.10
$region0: #{_forward_impl.10}
  #allocation0 [shape = 'u32[]', space=smem, size = 0x4, offset = 0x4, fixed_abs, tag = 'smem constant byte address 0x4 - core index']
  #allocation1 [shape = 'u32[144,128]{1,0:T(1,128)}', space=vmem, size = 0x12000, scoped, tag = 'internal scratch']
  %s0 = inlined_call_operand.vmem [shape: bf16[128,128], index: 0, kind: input, shape index: {}]
  %s1 = inlined_call_operand.vmem [shape: f32[1,128], index: 1, kind: input, shape index: {}]
  %s2 = inlined_call_operand.vmem [shape: f32[1,128], index: 2, kind: input, shape index: {}]
  %s3 = inlined_call_operand.hbm [shape: bf16[128,128], index: 3, kind: input, shape index: {}]
  %s4 = inlined_call_operand.vmem [shape: bf16[128,128], index: 4, kind: output, shape index: {0}]
  %s5 = inlined_call_operand.vmem [shape: f32[8,128], index: 5, kind: output, shape index: {1}]
  %6 = xla_tuple %s4, %s5
  %s7 = sld [smem:[#allocation0]]
  $region38: #{_forward_impl.10} parent=0
    _
  %s9 = ssub.s32 1, %s7
  %s10 = scalar_select 0, %s9, %s7
  $region1: #{_forward_impl.10} parent=0
    #allocation2 [shape = 'u8[32768]{0}', space=vmem, size = 0x8000, scoped, tag = 'input window, operand 3, single buffered']
    #allocation3 [shape = 's32[1]{0}', space=sflag, size = 0x4, scoped, tag = 'scoped memory for _forward_impl.10']
    %11 = vsyncpa [#allocation3], 0
    // Predicated region
    $region2: #{_forward_impl.10} parent=1 // pred_check
      _
    $region3: #{_forward_impl.10} parent=1 // pred_check_branch
      %13 = sbr.rel (0) target = $region5
    $region4: #{_forward_impl.10} parent=1 // pred_region
      _
    $region5: #{_forward_impl.10} parent=1 // pred_fallthru
      _
    // Predicated region
    $region6: #{_forward_impl.10} parent=1 // pred_check
      _
    $region7: #{_forward_impl.10} parent=1 // pred_check_branch
      %15 = sbr.rel (0) target = $region9
    $region8: #{_forward_impl.10} parent=1 // pred_region
      _
    $region9: #{_forward_impl.10} parent=1 // pred_fallthru
      _
    // Predicated region
    $region10: #{_forward_impl.10} parent=1 // pred_check
      _
    $region11: #{_forward_impl.10} parent=1 // pred_check_branch
      %17 = sbr.rel (0) target = $region13
    $region12: #{_forward_impl.10} parent=1 // pred_region
      _
    $region13: #{_forward_impl.10} parent=1 // pred_fallthru
      _
    // Predicated region
    $region14: #{_forward_impl.10} parent=1 // pred_check
      _
    $region15: #{_forward_impl.10} parent=1 // pred_check_branch
      %19 = sbr.rel (0) target = $region17
    $region16: #{_forward_impl.10} parent=1 // pred_region
      %s21 = ssub.s32 1024, 1024
      %22 = vsyncadd [#allocation3], %s21
      %s23 = sshll.u32 [#allocation2], 4
      %s24 = int_to_ptr.vmem [resolvable:$true] %s23
      %29 = dma.hbm_to_vmem [thread:$0]  %s3, 1024, %s24, [#allocation3], 64, 64, 4
    $region17: #{_forward_impl.10} parent=1 // pred_fallthru
      _
    // Predicated region
    $region18: #{_forward_impl.10} parent=1 // pred_check
      _
    $region19: #{_forward_impl.10} parent=1 // pred_check_branch
      %31 = sbr.rel (0) target = $region21
    $region20: #{_forward_impl.10} parent=1 // pred_region
      %32 = dma.done [#allocation3], 1024
    $region21: #{_forward_impl.10} parent=1 // pred_fallthru
      _
    %v34 = vld [vmem:[%s0] sm:$0xf]
    %v35 = vld [vmem:[%s0 + $0x4] sm:$0xf]
    %v36 = vld [vmem:[%s0 + $0x8] sm:$0xf]
    %v37 = vld [vmem:[%s0 + $0xc] sm:$0xf]
    %v38 = vld [vmem:[%s0 + $0x10] sm:$0xf]
    %v39 = vld [vmem:[%s0 + $0x14] sm:$0xf]
    %v40 = vld [vmem:[%s0 + $0x18] sm:$0xf]
    %v41 = vld [vmem:[%s0 + $0x1c] sm:$0xf]
    %v42 = vld [vmem:[%s0 + $0x20] sm:$0xf]
    %v43 = vld [vmem:[%s0 + $0x24] sm:$0xf]
    %v44 = vld [vmem:[%s0 + $0x28] sm:$0xf]
    %v45 = vld [vmem:[%s0 + $0x2c] sm:$0xf]
    %v46 = vld [vmem:[%s0 + $0x30] sm:$0xf]
    %v47 = vld [vmem:[%s0 + $0x34] sm:$0xf]
    %v48 = vld [vmem:[%s0 + $0x38] sm:$0xf]
    %v49 = vld [vmem:[%s0 + $0x3c] sm:$0xf]
    %v50 = vunpack.c.l.bf16 %v34
    %v51 = vunpack.c.l.bf16 %v35
    %v52 = vunpack.c.l.bf16 %v36
    %v53 = vunpack.c.l.bf16 %v37
    %v54 = vunpack.c.l.bf16 %v38
    %v55 = vunpack.c.l.bf16 %v39
    %v56 = vunpack.c.l.bf16 %v40
    %v57 = vunpack.c.l.bf16 %v41
    %v58 = vunpack.c.l.bf16 %v42
    %v59 = vunpack.c.l.bf16 %v43
    %v60 = vunpack.c.l.bf16 %v44
    %v61 = vunpack.c.l.bf16 %v45
    %v62 = vunpack.c.l.bf16 %v46
    %v63 = vunpack.c.l.bf16 %v47
    %v64 = vunpack.c.l.bf16 %v48
    %v65 = vunpack.c.l.bf16 %v49
    %v66 = vld [vmem:[%s1] sm:$0x1]
    %v68 = vlaneseq
    %v69 = vshrl.u32 %v68, 7
    %v70 = vsub.s32 0, %v69
    %v71 = vrot.slane %v66, %v70
    %v73 = vmul.f32 %v50, %v71
    %v74 = vmul.f32 %v51, %v71
    %v75 = vmul.f32 %v52, %v71
    %v76 = vmul.f32 %v53, %v71
    %v77 = vmul.f32 %v54, %v71
    %v78 = vmul.f32 %v55, %v71
    %v79 = vmul.f32 %v56, %v71
    %v80 = vmul.f32 %v57, %v71
    %v81 = vmul.f32 %v58, %v71
    %v82 = vmul.f32 %v59, %v71
    %v83 = vmul.f32 %v60, %v71
    %v84 = vmul.f32 %v61, %v71
    %v85 = vmul.f32 %v62, %v71
    %v86 = vmul.f32 %v63, %v71
    %v87 = vmul.f32 %v64, %v71
    %v88 = vmul.f32 %v65, %v71
    %v89 = vld [vmem:[%s2] sm:$0x1]
    %v91 = vlaneseq
    %v92 = vshrl.u32 %v91, 7
    %v93 = vsub.s32 0, %v92
    %v94 = vrot.slane %v89, %v93
    %v96 = vadd.f32 %v73, %v94
    %v97 = vadd.f32 %v74, %v94
    %v98 = vadd.f32 %v75, %v94
    %v99 = vadd.f32 %v76, %v94
    %v100 = vadd.f32 %v77, %v94
    %v101 = vadd.f32 %v78, %v94
    %v102 = vadd.f32 %v79, %v94
    %v103 = vadd.f32 %v80, %v94
    %v104 = vadd.f32 %v81, %v94
    %v105 = vadd.f32 %v82, %v94
    %v106 = vadd.f32 %v83, %v94
    %v107 = vadd.f32 %v84, %v94
    %v108 = vadd.f32 %v85, %v94
    %v109 = vadd.f32 %v86, %v94
    %v110 = vadd.f32 %v87, %v94
    %v111 = vadd.f32 %v88, %v94
    %v112 = vmax.f32 %v96, 0.0
    %v113 = vmax.f32 %v97, 0.0
    %v114 = vmax.f32 %v98, 0.0
    %v115 = vmax.f32 %v99, 0.0
    %v116 = vmax.f32 %v100, 0.0
    %v117 = vmax.f32 %v101, 0.0
    %v118 = vmax.f32 %v102, 0.0
    %v119 = vmax.f32 %v103, 0.0
    %v120 = vmax.f32 %v104, 0.0
    %v121 = vmax.f32 %v105, 0.0
    %v122 = vmax.f32 %v106, 0.0
    %v123 = vmax.f32 %v107, 0.0
    %v124 = vmax.f32 %v108, 0.0
    %v125 = vmax.f32 %v109, 0.0
    %v126 = vmax.f32 %v110, 0.0
    %v127 = vmax.f32 %v111, 0.0
    %v128 = vpack.c.bf16 %v113, %v112
    %v129 = vpack.c.bf16 %v115, %v114
    %v130 = vpack.c.bf16 %v117, %v116
    %v131 = vpack.c.bf16 %v119, %v118
    %v132 = vpack.c.bf16 %v121, %v120
    %v133 = vpack.c.bf16 %v123, %v122
    %v134 = vpack.c.bf16 %v125, %v124
    %v135 = vpack.c.bf16 %v127, %v126
    %v136 = vld [vmem:[#allocation2] sm:$0xf]
    %v137 = vld [vmem:[#allocation2 + $0x4] sm:$0xf]
    %v138 = vld [vmem:[#allocation2 + $0x8] sm:$0xf]
    %v139 = vld [vmem:[#allocation2 + $0xc] sm:$0xf]
    %v140 = vld [vmem:[#allocation2 + $0x10] sm:$0xf]
    %v141 = vld [vmem:[#allocation2 + $0x14] sm:$0xf]
    %v142 = vld [vmem:[#allocation2 + $0x18] sm:$0xf]
    %v143 = vld [vmem:[#allocation2 + $0x1c] sm:$0xf]
    %v144 = vld [vmem:[#allocation2 + $0x20] sm:$0xf]
    %v145 = vld [vmem:[#allocation2 + $0x24] sm:$0xf]
    %v146 = vld [vmem:[#allocation2 + $0x28] sm:$0xf]
    %v147 = vld [vmem:[#allocation2 + $0x2c] sm:$0xf]
    %v148 = vld [vmem:[#allocation2 + $0x30] sm:$0xf]
    %v149 = vld [vmem:[#allocation2 + $0x34] sm:$0xf]
    %v150 = vld [vmem:[#allocation2 + $0x38] sm:$0xf]
    %v151 = vld [vmem:[#allocation2 + $0x3c] sm:$0xf]
    %v168 = vunpack.c.l.b16 %v136
    %v169 = vunpack.c.l.b16 %v137
    %v170 = vunpack.c.l.b16 %v138
    %v171 = vunpack.c.l.b16 %v139
    %v172 = vunpack.c.l.b16 %v140
    %v173 = vunpack.c.l.b16 %v141
    %v174 = vunpack.c.l.b16 %v142
    %v175 = vunpack.c.l.b16 %v143
    %v176 = vunpack.c.l.b16 %v144
    %v177 = vunpack.c.l.b16 %v145
    %v178 = vunpack.c.l.b16 %v146
    %v179 = vunpack.c.l.b16 %v147
    %v180 = vunpack.c.l.b16 %v148
    %v181 = vunpack.c.l.b16 %v149
    %v182 = vunpack.c.l.b16 %v150
    %v183 = vunpack.c.l.b16 %v151
    %v184 = vpack.c.b16 %v169, %v168
    %v185 = vpack.c.b16 %v171, %v170
    %v186 = vpack.c.b16 %v173, %v172
    %v187 = vpack.c.b16 %v175, %v174
    %v188 = vpack.c.b16 %v177, %v176
    %v189 = vpack.c.b16 %v179, %v178
    %v190 = vpack.c.b16 %v181, %v180
    %v191 = vpack.c.b16 %v183, %v182
    %200 = vmatprep.subr.bf16.mxu0 0
    %201 = vmatpush1.bf16.msra.mxu0 %v184
    %202 = vmatprep.subr.bf16.mxu0 0
    %203 = vmatpush1.bf16.msra.mxu0 %v185
    %204 = vmatprep.subr.bf16.mxu0 0
    %205 = vmatpush1.bf16.msra.mxu0 %v186
    %206 = vmatprep.subr.bf16.mxu0 0
    %207 = vmatpush1.bf16.msra.mxu0 %v187
    %208 = vmatprep.subr.bf16.mxu0 0
    %209 = vmatpush1.bf16.msra.mxu0 %v188
    %210 = vmatprep.subr.bf16.mxu0 0
    %211 = vmatpush1.bf16.msra.mxu0 %v189
    %212 = vmatprep.subr.bf16.mxu0 0
    %213 = vmatpush1.bf16.msra.mxu0 %v190
    %214 = vmatprep.subr.bf16.mxu0 0
    %215 = vmatpush1.bf16.msra.mxu0 %v191
    %216 = vmatprep.subr.bf16.mxu0 0
    %217 = vmatpush1.bf16.msra.mxu0 0
    %218 = vmatprep.subr.bf16.mxu0 0
    %219 = vmatpush1.bf16.msra.mxu0 0
    %220 = vmatprep.subr.bf16.mxu0 0
    %221 = vmatpush1.bf16.msra.mxu0 0
    %222 = vmatprep.subr.bf16.mxu0 0
    %223 = vmatpush1.bf16.msra.mxu0 0
    %224 = vmatprep.subr.bf16.mxu0 0
    %225 = vmatpush1.bf16.msra.mxu0 0
    %226 = vmatprep.subr.bf16.mxu0 0
    %227 = vmatpush1.bf16.msra.mxu0 0
    %228 = vmatprep.subr.bf16.mxu0 0
    %229 = vmatpush1.bf16.msra.mxu0 0
    %230 = vmatprep.subr.bf16.mxu0 0
    %231 = vmatpush1.bf16.msra.mxu0 0
    %232 = vmatprep.mubr.bf16.mxu0 0
    %233 = vmatmul.mubr.bf16.gmra.mrb[0].mxu0 %v128
    %v234 = vpop.f32.mrb[0].mxu0
    %v235 = vadd.f32 0.0, %v234
    %v236 = vpop.f32.mrb[0].mxu0
    %v237 = vpop.f32.mrb[0].mxu0
    %v238 = vadd.f32 0.0, %v237
    %v239 = vpop.f32.mrb[0].mxu0
    %240 = vmatprep.mubr.bf16.mxu0 0
    %241 = vmatmul.mubr.bf16.gmra.mrb[0].mxu0 %v129
    %v242 = vpop.f32.mrb[0].mxu0
    %v243 = vadd.f32 0.0, %v242
    %v244 = vpop.f32.mrb[0].mxu0
    %v245 = vpop.f32.mrb[0].mxu0
    %v246 = vadd.f32 0.0, %v245
    %v247 = vpop.f32.mrb[0].mxu0
    %248 = vmatprep.mubr.bf16.mxu0 0
    %249 = vmatmul.mubr.bf16.gmra.mrb[0].mxu0 %v130
    %v250 = vpop.f32.mrb[0].mxu0
    %v251 = vadd.f32 0.0, %v250
    %v252 = vpop.f32.mrb[0].mxu0
    %v253 = vpop.f32.mrb[0].mxu0
    %v254 = vadd.f32 0.0, %v253
    %v255 = vpop.f32.mrb[0].mxu0
    %256 = vmatprep.mubr.bf16.mxu0 0
    %257 = vmatmul.mubr.bf16.gmra.mrb[0].mxu0 %v131
    %v258 = vpop.f32.mrb[0].mxu0
    %v259 = vadd.f32 0.0, %v258
    %v260 = vpop.f32.mrb[0].mxu0
    %v261 = vpop.f32.mrb[0].mxu0
    %v262 = vadd.f32 0.0, %v261
    %v263 = vpop.f32.mrb[0].mxu0
    %264 = vmatprep.mubr.bf16.mxu0 0
    %265 = vmatmul.mubr.bf16.gmra.mrb[0].mxu0 %v132
    %v266 = vpop.f32.mrb[0].mxu0
    %v267 = vadd.f32 0.0, %v266
    %v268 = vpop.f32.mrb[0].mxu0
    %v269 = vpop.f32.mrb[0].mxu0
    %v270 = vadd.f32 0.0, %v269
    %v271 = vpop.f32.mrb[0].mxu0
    %272 = vmatprep.mubr.bf16.mxu0 0
    %273 = vmatmul.mubr.bf16.gmra.mrb[0].mxu0 %v133
    %v274 = vpop.f32.mrb[0].mxu0
    %v275 = vadd.f32 0.0, %v274
    %v276 = vpop.f32.mrb[0].mxu0
    %v277 = vpop.f32.mrb[0].mxu0
    %v278 = vadd.f32 0.0, %v277
    %v279 = vpop.f32.mrb[0].mxu0
    %280 = vmatprep.mubr.bf16.mxu0 0
    %281 = vmatmul.mubr.bf16.gmra.mrb[0].mxu0 %v134
    %v282 = vpop.f32.mrb[0].mxu0
    %v283 = vadd.f32 0.0, %v282
    %v284 = vpop.f32.mrb[0].mxu0
    %v285 = vpop.f32.mrb[0].mxu0
    %v286 = vadd.f32 0.0, %v285
    %v287 = vpop.f32.mrb[0].mxu0
    %288 = vmatprep.mubr.bf16.mxu0 0
    %289 = vmatmul.mubr.bf16.gmra.mrb[0].mxu0 %v135
    %v290 = vpop.f32.mrb[0].mxu0
    %v291 = vadd.f32 0.0, %v290
    %v292 = vpop.f32.mrb[0].mxu0
    %v293 = vpop.f32.mrb[0].mxu0
    %v294 = vadd.f32 0.0, %v293
    %v295 = vpop.f32.mrb[0].mxu0
    %296 = vdwg.mxu0
    %v297 = vadd.f32 %v235, %v238
    %v298 = vadd.f32 %v297, %v243
    %v299 = vadd.f32 %v298, %v246
    %v300 = vadd.f32 %v299, %v251
    %v301 = vadd.f32 %v300, %v254
    %v302 = vadd.f32 %v301, %v259
    %v303 = vadd.f32 %v302, %v262
    %v304 = vadd.f32 %v303, %v267
    %v305 = vadd.f32 %v304, %v270
    %v306 = vadd.f32 %v305, %v275
    %v307 = vadd.f32 %v306, %v278
    %v308 = vadd.f32 %v307, %v283
    %v309 = vadd.f32 %v308, %v286
    %v310 = vadd.f32 %v309, %v291
    %v311 = vadd.f32 %v310, %v294
    %v312 = vrot.slane %v311, 4
    %v313 = vadd.f32 %v311, %v312
    %v314 = vrot.slane %v313, 2
    %v315 = vadd.f32 %v313, %v314
    %v316 = vrot.slane %v315, 1
    %v317 = vadd.f32 %v315, %v316
    %v318 = vmul.f32 %v235, %v235
    %v319 = vmul.f32 %v238, %v238
    %v320 = vmul.f32 %v243, %v243
    %v321 = vmul.f32 %v246, %v246
    %v322 = vmul.f32 %v251, %v251
    %v323 = vmul.f32 %v254, %v254
    %v324 = vmul.f32 %v259, %v259
    %v325 = vmul.f32 %v262, %v262
    %v326 = vmul.f32 %v267, %v267
    %v327 = vmul.f32 %v270, %v270
    %v328 = vmul.f32 %v275, %v275
    %v329 = vmul.f32 %v278, %v278
    %v330 = vmul.f32 %v283, %v283
    %v331 = vmul.f32 %v286, %v286
    %v332 = vmul.f32 %v291, %v291
    %v333 = vmul.f32 %v294, %v294
    %v334 = vadd.f32 %v318, %v319
    %v335 = vadd.f32 %v334, %v320
    %v336 = vadd.f32 %v335, %v321
    %v337 = vadd.f32 %v336, %v322
    %v338 = vadd.f32 %v337, %v323
    %v339 = vadd.f32 %v338, %v324
    %v340 = vadd.f32 %v339, %v325
    %v341 = vadd.f32 %v340, %v326
    %v342 = vadd.f32 %v341, %v327
    %v343 = vadd.f32 %v342, %v328
    %v344 = vadd.f32 %v343, %v329
    %v345 = vadd.f32 %v344, %v330
    %v346 = vadd.f32 %v345, %v331
    %v347 = vadd.f32 %v346, %v332
    %v348 = vadd.f32 %v347, %v333
    %v349 = vrot.slane %v348, 4
    %v350 = vadd.f32 %v348, %v349
    %v351 = vrot.slane %v350, 2
    %v352 = vadd.f32 %v350, %v351
    %v353 = vrot.slane %v352, 1
    %v354 = vadd.f32 %v352, %v353
    %vm355 = vcmask 1040384
    %v356 = vsel %vm355, %v317, %v354
    %vm357 = vcmask 1041408
    %v358 = vsel %vm357, %v356, 0.0
    %359 = vst [vmem:[%s5] sm:$0xff] %v358
    %v360 = vpack.c.bf16 %v238, %v235
    %v361 = vpack.c.bf16 %v246, %v243
    %v362 = vpack.c.bf16 %v254, %v251
    %v363 = vpack.c.bf16 %v262, %v259
    %v364 = vpack.c.bf16 %v270, %v267
    %v365 = vpack.c.bf16 %v278, %v275
    %v366 = vpack.c.bf16 %v286, %v283
    %v367 = vpack.c.bf16 %v294, %v291
    %v376 = vunpack.c.l.b16 %v360
    %v377 = vunpack.c.h.b16 %v360
    %v378 = vunpack.c.l.b16 %v361
    %v379 = vunpack.c.h.b16 %v361
    %v380 = vunpack.c.l.b16 %v362
    %v381 = vunpack.c.h.b16 %v362
    %v382 = vunpack.c.l.b16 %v363
    %v383 = vunpack.c.h.b16 %v363
    %v384 = vunpack.c.l.b16 %v364
    %v385 = vunpack.c.h.b16 %v364
    %v386 = vunpack.c.l.b16 %v365
    %v387 = vunpack.c.h.b16 %v365
    %v388 = vunpack.c.l.b16 %v366
    %v389 = vunpack.c.h.b16 %v366
    %v390 = vunpack.c.l.b16 %v367
    %v391 = vunpack.c.h.b16 %v367
    %v392 = vpack.c.b16 %v376, %v376
    %v393 = vpack.c.b16 %v377, %v377
    %v394 = vpack.c.b16 %v378, %v378
    %v395 = vpack.c.b16 %v379, %v379
    %v396 = vpack.c.b16 %v380, %v380
    %v397 = vpack.c.b16 %v381, %v381
    %v398 = vpack.c.b16 %v382, %v382
    %v399 = vpack.c.b16 %v383, %v383
    %v400 = vpack.c.b16 %v384, %v384
    %v401 = vpack.c.b16 %v385, %v385
    %v402 = vpack.c.b16 %v386, %v386
    %v403 = vpack.c.b16 %v387, %v387
    %v404 = vpack.c.b16 %v388, %v388
    %v405 = vpack.c.b16 %v389, %v389
    %v406 = vpack.c.b16 %v390, %v390
    %v407 = vpack.c.b16 %v391, %v391
    %424 = vst [vmem:[%s4] sm:$0xf] %v392
    %425 = vst [vmem:[%s4 + $0x4] sm:$0xf] %v393
    %426 = vst [vmem:[%s4 + $0x8] sm:$0xf] %v394
    %427 = vst [vmem:[%s4 + $0xc] sm:$0xf] %v395
    %428 = vst [vmem:[%s4 + $0x10] sm:$0xf] %v396
    %429 = vst [vmem:[%s4 + $0x14] sm:$0xf] %v397
    %430 = vst [vmem:[%s4 + $0x18] sm:$0xf] %v398
    %431 = vst [vmem:[%s4 + $0x1c] sm:$0xf] %v399
    %432 = vst [vmem:[%s4 + $0x20] sm:$0xf] %v400
    %433 = vst [vmem:[%s4 + $0x24] sm:$0xf] %v401
    %434 = vst [vmem:[%s4 + $0x28] sm:$0xf] %v402
    %435 = vst [vmem:[%s4 + $0x2c] sm:$0xf] %v403
    %436 = vst [vmem:[%s4 + $0x30] sm:$0xf] %v404
    %437 = vst [vmem:[%s4 + $0x34] sm:$0xf] %v405
    %438 = vst [vmem:[%s4 + $0x38] sm:$0xf] %v406
    %439 = vst [vmem:[%s4 + $0x3c] sm:$0xf] %v407
    // Predicated region
    $region22: #{_forward_impl.10} parent=1 // pred_check
      _
    $region23: #{_forward_impl.10} parent=1 // pred_check_branch
      %441 = sbr.rel (0) target = $region25
    $region24: #{_forward_impl.10} parent=1 // pred_region
      _
    $region25: #{_forward_impl.10} parent=1 // pred_fallthru
      _
    // Predicated region
    $region26: #{_forward_impl.10} parent=1 // pred_check
      _
    $region27: #{_forward_impl.10} parent=1 // pred_check_branch
      %443 = sbr.rel (0) target = $region29
    $region28: #{_forward_impl.10} parent=1 // pred_region
      _
    $region29: #{_forward_impl.10} parent=1 // pred_fallthru
      _
    // Predicated region
    $region30: #{_forward_impl.10} parent=1 // pred_check
      _
    $region31: #{_forward_impl.10} parent=1 // pred_check_branch
      %445 = sbr.rel (0) target = $region33
    $region32: #{_forward_impl.10} parent=1 // pred_region
      _
    $region33: #{_forward_impl.10} parent=1 // pred_fallthru
      _
    // Predicated region
    $region34: #{_forward_impl.10} parent=1 // pred_check
      _
    $region35: #{_forward_impl.10} parent=1 // pred_check_branch
      %447 = sbr.rel (0) target = $region37
    $region36: #{_forward_impl.10} parent=1 // pred_region
      _
    $region37: #{_forward_impl.10} parent=1 // pred_fallthru
      _
    %448 = vsyncpa [#allocation3], 1

// kernel: _forward_impl.11
$region0: #{_forward_impl.11}
  #allocation0 [shape = 'u32[]', space=smem, size = 0x4, offset = 0x4, fixed_abs, tag = 'smem constant byte address 0x4 - core index']
  #allocation1 [shape = 'u32[144,128]{1,0:T(1,128)}', space=vmem, size = 0x12000, scoped, tag = 'internal scratch']
  %s0 = inlined_call_operand.vmem [shape: bf16[512,128], index: 0, kind: input, shape index: {}]
  %s1 = inlined_call_operand.vmem [shape: f32[1,128], index: 1, kind: input, shape index: {}]
  %s2 = inlined_call_operand.vmem [shape: f32[1,128], index: 2, kind: input, shape index: {}]
  %s3 = inlined_call_operand.vmem [shape: bf16[128,128], index: 3, kind: input, shape index: {}]
  %s4 = inlined_call_operand.vmem [shape: bf16[512,128], index: 4, kind: output, shape index: {0}]
  %s5 = inlined_call_operand.vmem [shape: f32[8,128], index: 5, kind: output, shape index: {1}]
  %6 = xla_tuple %s4, %s5
  %s7 = sld [smem:[#allocation0]]
  $region34: #{_forward_impl.11} parent=0
    _
  %s9 = ssub.s32 1, %s7
  %s10 = scalar_select 0, %s9, %s7
  // Predicated region
  $region2: #{_forward_impl.11} parent=0 // pred_check
    _
  $region3: #{_forward_impl.11} parent=0 // pred_check_branch
    %12 = sbr.rel (0) target = $region5
  $region4: #{_forward_impl.11} parent=0 // pred_region
    _
  $region5: #{_forward_impl.11} parent=0 // pred_fallthru
    _
  // Predicated region
  $region6: #{_forward_impl.11} parent=0 // pred_check
    _
  $region7: #{_forward_impl.11} parent=0 // pred_check_branch
    %14 = sbr.rel (0) target = $region9
  $region8: #{_forward_impl.11} parent=0 // pred_region
    _
  $region9: #{_forward_impl.11} parent=0 // pred_fallthru
    _
  // Predicated region
  $region10: #{_forward_impl.11} parent=0 // pred_check
    _
  $region11: #{_forward_impl.11} parent=0 // pred_check_branch
    %16 = sbr.rel (0) target = $region13
  $region12: #{_forward_impl.11} parent=0 // pred_region
    _
  $region13: #{_forward_impl.11} parent=0 // pred_fallthru
    _
  // Predicated region
  $region14: #{_forward_impl.11} parent=0 // pred_check
    _
  $region15: #{_forward_impl.11} parent=0 // pred_check_branch
    %18 = sbr.rel (0) target = $region17
  $region16: #{_forward_impl.11} parent=0 // pred_region
    _
  $region17: #{_forward_impl.11} parent=0 // pred_fallthru
    _
  %v20 = vld [vmem:[%s0] sm:$0xf]
  %v21 = vld [vmem:[%s0 + $0x4] sm:$0xf]
  %v22 = vld [vmem:[%s0 + $0x8] sm:$0xf]
  %v23 = vld [vmem:[%s0 + $0xc] sm:$0xf]
  %v24 = vld [vmem:[%s0 + $0x10] sm:$0xf]
  %v25 = vld [vmem:[%s0 + $0x14] sm:$0xf]
  %v26 = vld [vmem:[%s0 + $0x18] sm:$0xf]
  %v27 = vld [vmem:[%s0 + $0x1c] sm:$0xf]
  %v28 = vld [vmem:[%s0 + $0x20] sm:$0xf]
  %v29 = vld [vmem:[%s0 + $0x24] sm:$0xf]
  %v30 = vld [vmem:[%s0 + $0x28] sm:$0xf]
  %v31 = vld [vmem:[%s0 + $0x2c] sm:$0xf]
  %v32 = vld [vmem:[%s0 + $0x30] sm:$0xf]
  %v33 = vld [vmem:[%s0 + $0x34] sm:$0xf]
  %v34 = vld [vmem:[%s0 + $0x38] sm:$0xf]
  %v35 = vld [vmem:[%s0 + $0x3c] sm:$0xf]
  %v36 = vld [vmem:[%s0 + $0x40] sm:$0xf]
  %v37 = vld [vmem:[%s0 + $0x44] sm:$0xf]
  %v38 = vld [vmem:[%s0 + $0x48] sm:$0xf]
  %v39 = vld [vmem:[%s0 + $0x4c] sm:$0xf]
  %v40 = vld [vmem:[%s0 + $0x50] sm:$0xf]
  %v41 = vld [vmem:[%s0 + $0x54] sm:$0xf]
  %v42 = vld [vmem:[%s0 + $0x58] sm:$0xf]
  %v43 = vld [vmem:[%s0 + $0x5c] sm:$0xf]
  %v44 = vld [vmem:[%s0 + $0x60] sm:$0xf]
  %v45 = vld [vmem:[%s0 + $0x64] sm:$0xf]
  %v46 = vld [vmem:[%s0 + $0x68] sm:$0xf]
  %v47 = vld [vmem:[%s0 + $0x6c] sm:$0xf]
  %v48 = vld [vmem:[%s0 + $0x70] sm:$0xf]
  %v49 = vld [vmem:[%s0 + $0x74] sm:$0xf]
  %v50 = vld [vmem:[%s0 + $0x78] sm:$0xf]
  %v51 = vld [vmem:[%s0 + $0x7c] sm:$0xf]
  %v52 = vld [vmem:[%s0 + $0x80] sm:$0xf]
  %v53 = vld [vmem:[%s0 + $0x84] sm:$0xf]
  %v54 = vld [vmem:[%s0 + $0x88] sm:$0xf]
  %v55 = vld [vmem:[%s0 + $0x8c] sm:$0xf]
  %v56 = vld [vmem:[%s0 + $0x90] sm:$0xf]
  %v57 = vld [vmem:[%s0 + $0x94] sm:$0xf]
  %v58 = vld [vmem:[%s0 + $0x98] sm:$0xf]
  %v59 = vld [vmem:[%s0 + $0x9c] sm:$0xf]
  %v60 = vld [vmem:[%s0 + $0xa0] sm:$0xf]
  %v61 = vld [vmem:[%s0 + $0xa4] sm:$0xf]
  %v62 = vld [vmem:[%s0 + $0xa8] sm:$0xf]
  %v63 = vld [vmem:[%s0 + $0xac] sm:$0xf]
  %v64 = vld [vmem:[%s0 + $0xb0] sm:$0xf]
  %v65 = vld [vmem:[%s0 + $0xb4] sm:$0xf]
  %v66 = vld [vmem:[%s0 + $0xb8] sm:$0xf]
  %v67 = vld [vmem:[%s0 + $0xbc] sm:$0xf]
  %v68 = vld [vmem:[%s0 + $0xc0] sm:$0xf]
  %v69 = vld [vmem:[%s0 + $0xc4] sm:$0xf]
  %v70 = vld [vmem:[%s0 + $0xc8] sm:$0xf]
  %v71 = vld [vmem:[%s0 + $0xcc] sm:$0xf]
  %v72 = vld [vmem:[%s0 + $0xd0] sm:$0xf]
  %v73 = vld [vmem:[%s0 + $0xd4] sm:$0xf]
  %v74 = vld [vmem:[%s0 + $0xd8] sm:$0xf]
  %v75 = vld [vmem:[%s0 + $0xdc] sm:$0xf]
  %v76 = vld [vmem:[%s0 + $0xe0] sm:$0xf]
  %v77 = vld [vmem:[%s0 + $0xe4] sm:$0xf]
  %v78 = vld [vmem:[%s0 + $0xe8] sm:$0xf]
  %v79 = vld [vmem:[%s0 + $0xec] sm:$0xf]
  %v80 = vld [vmem:[%s0 + $0xf0] sm:$0xf]
  %v81 = vld [vmem:[%s0 + $0xf4] sm:$0xf]
  %v82 = vld [vmem:[%s0 + $0xf8] sm:$0xf]
  %v83 = vld [vmem:[%s0 + $0xfc] sm:$0xf]
  %v84 = vunpack.c.l.bf16 %v20
  %v85 = vunpack.c.l.bf16 %v21
  %v86 = vunpack.c.l.bf16 %v22
  %v87 = vunpack.c.l.bf16 %v23
  %v88 = vunpack.c.l.bf16 %v24
  %v89 = vunpack.c.l.bf16 %v25
  %v90 = vunpack.c.l.bf16 %v26
  %v91 = vunpack.c.l.bf16 %v27
  %v92 = vunpack.c.l.bf16 %v28
  %v93 = vunpack.c.l.bf16 %v29
  %v94 = vunpack.c.l.bf16 %v30
  %v95 = vunpack.c.l.bf16 %v31
  %v96 = vunpack.c.l.bf16 %v32
  %v97 = vunpack.c.l.bf16 %v33
  %v98 = vunpack.c.l.bf16 %v34
  %v99 = vunpack.c.l.bf16 %v35
  %v100 = vunpack.c.l.bf16 %v36
  %v101 = vunpack.c.l.bf16 %v37
  %v102 = vunpack.c.l.bf16 %v38
  %v103 = vunpack.c.l.bf16 %v39
  %v104 = vunpack.c.l.bf16 %v40
  %v105 = vunpack.c.l.bf16 %v41
  %v106 = vunpack.c.l.bf16 %v42
  %v107 = vunpack.c.l.bf16 %v43
  %v108 = vunpack.c.l.bf16 %v44
  %v109 = vunpack.c.l.bf16 %v45
  %v110 = vunpack.c.l.bf16 %v46
  %v111 = vunpack.c.l.bf16 %v47
  %v112 = vunpack.c.l.bf16 %v48
  %v113 = vunpack.c.l.bf16 %v49
  %v114 = vunpack.c.l.bf16 %v50
  %v115 = vunpack.c.l.bf16 %v51
  %v116 = vunpack.c.l.bf16 %v52
  %v117 = vunpack.c.l.bf16 %v53
  %v118 = vunpack.c.l.bf16 %v54
  %v119 = vunpack.c.l.bf16 %v55
  %v120 = vunpack.c.l.bf16 %v56
  %v121 = vunpack.c.l.bf16 %v57
  %v122 = vunpack.c.l.bf16 %v58
  %v123 = vunpack.c.l.bf16 %v59
  %v124 = vunpack.c.l.bf16 %v60
  %v125 = vunpack.c.l.bf16 %v61
  %v126 = vunpack.c.l.bf16 %v62
  %v127 = vunpack.c.l.bf16 %v63
  %v128 = vunpack.c.l.bf16 %v64
  %v129 = vunpack.c.l.bf16 %v65
  %v130 = vunpack.c.l.bf16 %v66
  %v131 = vunpack.c.l.bf16 %v67
  %v132 = vunpack.c.l.bf16 %v68
  %v133 = vunpack.c.l.bf16 %v69
  %v134 = vunpack.c.l.bf16 %v70
  %v135 = vunpack.c.l.bf16 %v71
  %v136 = vunpack.c.l.bf16 %v72
  %v137 = vunpack.c.l.bf16 %v73
  %v138 = vunpack.c.l.bf16 %v74
  %v139 = vunpack.c.l.bf16 %v75
  %v140 = vunpack.c.l.bf16 %v76
  %v141 = vunpack.c.l.bf16 %v77
  %v142 = vunpack.c.l.bf16 %v78
  %v143 = vunpack.c.l.bf16 %v79
  %v144 = vunpack.c.l.bf16 %v80
  %v145 = vunpack.c.l.bf16 %v81
  %v146 = vunpack.c.l.bf16 %v82
  %v147 = vunpack.c.l.bf16 %v83
  %v148 = vld [vmem:[%s1] sm:$0x1]
  %v150 = vlaneseq
  %v151 = vshrl.u32 %v150, 7
  %v152 = vsub.s32 0, %v151
  %v153 = vrot.slane %v148, %v152
  %v155 = vmul.f32 %v84, %v153
  %v156 = vmul.f32 %v85, %v153
  %v157 = vmul.f32 %v86, %v153
  %v158 = vmul.f32 %v87, %v153
  %v159 = vmul.f32 %v88, %v153
  %v160 = vmul.f32 %v89, %v153
  %v161 = vmul.f32 %v90, %v153
  %v162 = vmul.f32 %v91, %v153
  %v163 = vmul.f32 %v92, %v153
  %v164 = vmul.f32 %v93, %v153
  %v165 = vmul.f32 %v94, %v153
  %v166 = vmul.f32 %v95, %v153
  %v167 = vmul.f32 %v96, %v153
  %v168 = vmul.f32 %v97, %v153
  %v169 = vmul.f32 %v98, %v153
  %v170 = vmul.f32 %v99, %v153
  %v171 = vmul.f32 %v100, %v153
  %v172 = vmul.f32 %v101, %v153
  %v173 = vmul.f32 %v102, %v153
  %v174 = vmul.f32 %v103, %v153
  %v175 = vmul.f32 %v104, %v153
  %v176 = vmul.f32 %v105, %v153
  %v177 = vmul.f32 %v106, %v153
  %v178 = vmul.f32 %v107, %v153
  %v179 = vmul.f32 %v108, %v153
  %v180 = vmul.f32 %v109, %v153
  %v181 = vmul.f32 %v110, %v153
  %v182 = vmul.f32 %v111, %v153
  %v183 = vmul.f32 %v112, %v153
  %v184 = vmul.f32 %v113, %v153
  %v185 = vmul.f32 %v114, %v153
  %v186 = vmul.f32 %v115, %v153
  %v187 = vmul.f32 %v116, %v153
  %v188 = vmul.f32 %v117, %v153
  %v189 = vmul.f32 %v118, %v153
  %v190 = vmul.f32 %v119, %v153
  %v191 = vmul.f32 %v120, %v153
  %v192 = vmul.f32 %v121, %v153
  %v193 = vmul.f32 %v122, %v153
  %v194 = vmul.f32 %v123, %v153
  %v195 = vmul.f32 %v124, %v153
  %v196 = vmul.f32 %v125, %v153
  %v197 = vmul.f32 %v126, %v153
  %v198 = vmul.f32 %v127, %v153
  %v199 = vmul.f32 %v128, %v153
  %v200 = vmul.f32 %v129, %v153
  %v201 = vmul.f32 %v130, %v153
  %v202 = vmul.f32 %v131, %v153
  %v203 = vmul.f32 %v132, %v153
  %v204 = vmul.f32 %v133, %v153
  %v205 = vmul.f32 %v134, %v153
  %v206 = vmul.f32 %v135, %v153
  %v207 = vmul.f32 %v136, %v153
  %v208 = vmul.f32 %v137, %v153
  %v209 = vmul.f32 %v138, %v153
  %v210 = vmul.f32 %v139, %v153
  %v211 = vmul.f32 %v140, %v153
  %v212 = vmul.f32 %v141, %v153
  %v213 = vmul.f32 %v142, %v153
  %v214 = vmul.f32 %v143, %v153
  %v215 = vmul.f32 %v144, %v153
  %v216 = vmul.f32 %v145, %v153
  %v217 = vmul.f32 %v146, %v153
  %v218 = vmul.f32 %v147, %v153
  %v219 = vld [vmem:[%s2] sm:$0x1]
  %v221 = vlaneseq
  %v222 = vshrl.u32 %v221, 7
  %v223 = vsub.s32 0, %v222
  %v224 = vrot.slane %v219, %v223
  %v226 = vadd.f32 %v155, %v224
  %v227 = vadd.f32 %v156, %v224
  %v228 = vadd.f32 %v157, %v224
  %v229 = vadd.f32 %v158, %v224
  %v230 = vadd.f32 %v159, %v224
  %v231 = vadd.f32 %v160, %v224
  %v232 = vadd.f32 %v161, %v224
  %v233 = vadd.f32 %v162, %v224
  %v234 = vadd.f32 %v163, %v224
  %v235 = vadd.f32 %v164, %v224
  %v236 = vadd.f32 %v165, %v224
  %v237 = vadd.f32 %v166, %v224
  %v238 = vadd.f32 %v167, %v224
  %v239 = vadd.f32 %v168, %v224
  %v240 = vadd.f32 %v169, %v224
  %v241 = vadd.f32 %v170, %v224
  %v242 = vadd.f32 %v171, %v224
  %v243 = vadd.f32 %v172, %v224
  %v244 = vadd.f32 %v173, %v224
  %v245 = vadd.f32 %v174, %v224
  %v246 = vadd.f32 %v175, %v224
  %v247 = vadd.f32 %v176, %v224
  %v248 = vadd.f32 %v177, %v224
  %v249 = vadd.f32 %v178, %v224
  %v250 = vadd.f32 %v179, %v224
  %v251 = vadd.f32 %v180, %v224
  %v252 = vadd.f32 %v181, %v224
  %v253 = vadd.f32 %v182, %v224
  %v254 = vadd.f32 %v183, %v224
  %v255 = vadd.f32 %v184, %v224
  %v256 = vadd.f32 %v185, %v224
  %v257 = vadd.f32 %v186, %v224
  %v258 = vadd.f32 %v187, %v224
  %v259 = vadd.f32 %v188, %v224
  %v260 = vadd.f32 %v189, %v224
  %v261 = vadd.f32 %v190, %v224
  %v262 = vadd.f32 %v191, %v224
  %v263 = vadd.f32 %v192, %v224
  %v264 = vadd.f32 %v193, %v224
  %v265 = vadd.f32 %v194, %v224
  %v266 = vadd.f32 %v195, %v224
  %v267 = vadd.f32 %v196, %v224
  %v268 = vadd.f32 %v197, %v224
  %v269 = vadd.f32 %v198, %v224
  %v270 = vadd.f32 %v199, %v224
  %v271 = vadd.f32 %v200, %v224
  %v272 = vadd.f32 %v201, %v224
  %v273 = vadd.f32 %v202, %v224
  %v274 = vadd.f32 %v203, %v224
  %v275 = vadd.f32 %v204, %v224
  %v276 = vadd.f32 %v205, %v224
  %v277 = vadd.f32 %v206, %v224
  %v278 = vadd.f32 %v207, %v224
  %v279 = vadd.f32 %v208, %v224
  %v280 = vadd.f32 %v209, %v224
  %v281 = vadd.f32 %v210, %v224
  %v282 = vadd.f32 %v211, %v224
  %v283 = vadd.f32 %v212, %v224
  %v284 = vadd.f32 %v213, %v224
  %v285 = vadd.f32 %v214, %v224
  %v286 = vadd.f32 %v215, %v224
  %v287 = vadd.f32 %v216, %v224
  %v288 = vadd.f32 %v217, %v224
  %v289 = vadd.f32 %v218, %v224
  %v290 = vmax.f32 %v226, 0.0
  %v291 = vmax.f32 %v227, 0.0
  %v292 = vmax.f32 %v228, 0.0
  %v293 = vmax.f32 %v229, 0.0
  %v294 = vmax.f32 %v230, 0.0
  %v295 = vmax.f32 %v231, 0.0
  %v296 = vmax.f32 %v232, 0.0
  %v297 = vmax.f32 %v233, 0.0
  %v298 = vmax.f32 %v234, 0.0
  %v299 = vmax.f32 %v235, 0.0
  %v300 = vmax.f32 %v236, 0.0
  %v301 = vmax.f32 %v237, 0.0
  %v302 = vmax.f32 %v238, 0.0
  %v303 = vmax.f32 %v239, 0.0
  %v304 = vmax.f32 %v240, 0.0
  %v305 = vmax.f32 %v241, 0.0
  %v306 = vmax.f32 %v242, 0.0
  %v307 = vmax.f32 %v243, 0.0
  %v308 = vmax.f32 %v244, 0.0
  %v309 = vmax.f32 %v245, 0.0
  %v310 = vmax.f32 %v246, 0.0
  %v311 = vmax.f32 %v247, 0.0
  %v312 = vmax.f32 %v248, 0.0
  %v313 = vmax.f32 %v249, 0.0
  %v314 = vmax.f32 %v250, 0.0
  %v315 = vmax.f32 %v251, 0.0
  %v316 = vmax.f32 %v252, 0.0
  %v317 = vmax.f32 %v253, 0.0
  %v318 = vmax.f32 %v254, 0.0
  %v319 = vmax.f32 %v255, 0.0
  %v320 = vmax.f32 %v256, 0.0
  %v321 = vmax.f32 %v257, 0.0
  %v322 = vmax.f32 %v258, 0.0
  %v323 = vmax.f32 %v259, 0.0
  %v324 = vmax.f32 %v260, 0.0
  %v325 = vmax.f32 %v261, 0.0
  %v326 = vmax.f32 %v262, 0.0
  %v327 = vmax.f32 %v263, 0.0
  %v328 = vmax.f32 %v264, 0.0
  %v329 = vmax.f32 %v265, 0.0
  %v330 = vmax.f32 %v266, 0.0
  %v331 = vmax.f32 %v267, 0.0
  %v332 = vmax.f32 %v268, 0.0
  %v333 = vmax.f32 %v269, 0.0
  %v334 = vmax.f32 %v270, 0.0
  %v335 = vmax.f32 %v271, 0.0
  %v336 = vmax.f32 %v272, 0.0
  %v337 = vmax.f32 %v273, 0.0
  %v338 = vmax.f32 %v274, 0.0
  %v339 = vmax.f32 %v275, 0.0
  %v340 = vmax.f32 %v276, 0.0
  %v341 = vmax.f32 %v277, 0.0
  %v342 = vmax.f32 %v278, 0.0
  %v343 = vmax.f32 %v279, 0.0
  %v344 = vmax.f32 %v280, 0.0
  %v345 = vmax.f32 %v281, 0.0
  %v346 = vmax.f32 %v282, 0.0
  %v347 = vmax.f32 %v283, 0.0
  %v348 = vmax.f32 %v284, 0.0
  %v349 = vmax.f32 %v285, 0.0
  %v350 = vmax.f32 %v286, 0.0
  %v351 = vmax.f32 %v287, 0.0
  %v352 = vmax.f32 %v288, 0.0
  %v353 = vmax.f32 %v289, 0.0
  %v354 = vpack.c.bf16 %v291, %v290
  %v355 = vpack.c.bf16 %v293, %v292
  %v356 = vpack.c.bf16 %v295, %v294
  %v357 = vpack.c.bf16 %v297, %v296
  %v358 = vpack.c.bf16 %v299, %v298
  %v359 = vpack.c.bf16 %v301, %v300
  %v360 = vpack.c.bf16 %v303, %v302
  %v361 = vpack.c.bf16 %v305, %v304
  %v362 = vpack.c.bf16 %v307, %v306
  %v363 = vpack.c.bf16 %v309, %v308
  %v364 = vpack.c.bf16 %v311, %v310
  %v365 = vpack.c.bf16 %v313, %v312
  %v366 = vpack.c.bf16 %v315, %v314
  %v367 = vpack.c.bf16 %v317, %v316
  %v368 = vpack.c.bf16 %v319, %v318
  %v369 = vpack.c.bf16 %v321, %v320
  %v370 = vpack.c.bf16 %v323, %v322
  %v371 = vpack.c.bf16 %v325, %v324
  %v372 = vpack.c.bf16 %v327, %v326
  %v373 = vpack.c.bf16 %v329, %v328
  %v374 = vpack.c.bf16 %v331, %v330
  %v375 = vpack.c.bf16 %v333, %v332
  %v376 = vpack.c.bf16 %v335, %v334
  %v377 = vpack.c.bf16 %v337, %v336
  %v378 = vpack.c.bf16 %v339, %v338
  %v379 = vpack.c.bf16 %v341, %v340
  %v380 = vpack.c.bf16 %v343, %v342
  %v381 = vpack.c.bf16 %v345, %v344
  %v382 = vpack.c.bf16 %v347, %v346
  %v383 = vpack.c.bf16 %v349, %v348
  %v384 = vpack.c.bf16 %v351, %v350
  %v385 = vpack.c.bf16 %v353, %v352
  %v386 = vld [vmem:[%s3] sm:$0xf]
  %v387 = vld [vmem:[%s3 + $0x4] sm:$0xf]
  %v388 = vld [vmem:[%s3 + $0x8] sm:$0xf]
  %v389 = vld [vmem:[%s3 + $0xc] sm:$0xf]
  %v390 = vld [vmem:[%s3 + $0x10] sm:$0xf]
  %v391 = vld [vmem:[%s3 + $0x14] sm:$0xf]
  %v392 = vld [vmem:[%s3 + $0x18] sm:$0xf]
  %v393 = vld [vmem:[%s3 + $0x1c] sm:$0xf]
  %v394 = vld [vmem:[%s3 + $0x20] sm:$0xf]
  %v395 = vld [vmem:[%s3 + $0x24] sm:$0xf]
  %v396 = vld [vmem:[%s3 + $0x28] sm:$0xf]
  %v397 = vld [vmem:[%s3 + $0x2c] sm:$0xf]
  %v398 = vld [vmem:[%s3 + $0x30] sm:$0xf]
  %v399 = vld [vmem:[%s3 + $0x34] sm:$0xf]
  %v400 = vld [vmem:[%s3 + $0x38] sm:$0xf]
  %v401 = vld [vmem:[%s3 + $0x3c] sm:$0xf]
  %v418 = vunpack.c.l.b16 %v386
  %v419 = vunpack.c.l.b16 %v387
  %v420 = vunpack.c.l.b16 %v388
  %v421 = vunpack.c.l.b16 %v389
  %v422 = vunpack.c.l.b16 %v390
  %v423 = vunpack.c.l.b16 %v391
  %v424 = vunpack.c.l.b16 %v392
  %v425 = vunpack.c.l.b16 %v393
  %v426 = vunpack.c.l.b16 %v394
  %v427 = vunpack.c.l.b16 %v395
  %v428 = vunpack.c.l.b16 %v396
  %v429 = vunpack.c.l.b16 %v397
  %v430 = vunpack.c.l.b16 %v398
  %v431 = vunpack.c.l.b16 %v399
  %v432 = vunpack.c.l.b16 %v400
  %v433 = vunpack.c.l.b16 %v401
  %v434 = vpack.c.b16 %v419, %v418
  %v435 = vpack.c.b16 %v421, %v420
  %v436 = vpack.c.b16 %v423, %v422
  %v437 = vpack.c.b16 %v425, %v424
  %v438 = vpack.c.b16 %v427, %v426
  %v439 = vpack.c.b16 %v429, %v428
  %v440 = vpack.c.b16 %v431, %v430
  %v441 = vpack.c.b16 %v433, %v432
  %450 = vmatprep.subr.bf16.mxu0 0
  %451 = vmatpush1.bf16.msra.mxu0 %v434
  %452 = vmatprep.subr.bf16.mxu0 0
  %453 = vmatpush1.bf16.msra.mxu0 %v435
  %454 = vmatprep.subr.bf16.mxu0 0
  %455 = vmatpush1.bf16.msra.mxu0 %v436
  %456 = vmatprep.subr.bf16.mxu0 0
  %457 = vmatpush1.bf16.msra.mxu0 %v437
  %458 = vmatprep.subr.bf16.mxu0 0
  %459 = vmatpush1.bf16.msra.mxu0 %v438
  %460 = vmatprep.subr.bf16.mxu0 0
  %461 = vmatpush1.bf16.msra.mxu0 %v439
  %462 = vmatprep.subr.bf16.mxu0 0
  %463 = vmatpush1.bf16.msra.mxu0 %v440
  %464 = vmatprep.subr.bf16.mxu0 0
  %465 = vmatpush1.bf16.msra.mxu0 %v441
  %466 = vmatprep.subr.bf16.mxu0 0
  %467 = vmatpush1.bf16.msra.mxu0 0
  %468 = vmatprep.subr.bf16.mxu0 0
  %469 = vmatpush1.bf16.msra.mxu0 0
  %470 = vmatprep.subr.bf16.mxu0 0
  %471 = vmatpush1.bf16.msra.mxu0 0
  %472 = vmatprep.subr.bf16.mxu0 0
  %473 = vmatpush1.bf16.msra.mxu0 0
  %474 = vmatprep.subr.bf16.mxu0 0
  %475 = vmatpush1.bf16.msra.mxu0 0
  %476 = vmatprep.subr.bf16.mxu0 0
  %477 = vmatpush1.bf16.msra.mxu0 0
  %478 = vmatprep.subr.bf16.mxu0 0
  %479 = vmatpush1.bf16.msra.mxu0 0
  %480 = vmatprep.subr.bf16.mxu0 0
  %481 = vmatpush1.bf16.msra.mxu0 0
  %482 = vmatprep.mubr.bf16.mxu0 0
  %483 = vmatmul.mubr.bf16.gmra.mrb[0].mxu0 %v354
  %v484 = vpop.f32.mrb[0].mxu0
  %v485 = vadd.f32 0.0, %v484
  %v486 = vpop.f32.mrb[0].mxu0
  %v487 = vpop.f32.mrb[0].mxu0
  %v488 = vadd.f32 0.0, %v487
  %v489 = vpop.f32.mrb[0].mxu0
  %490 = vmatprep.mubr.bf16.mxu0 0
  %491 = vmatmul.mubr.bf16.gmra.mrb[0].mxu0 %v355
  %v492 = vpop.f32.mrb[0].mxu0
  %v493 = vadd.f32 0.0, %v492
  %v494 = vpop.f32.mrb[0].mxu0
  %v495 = vpop.f32.mrb[0].mxu0
  %v496 = vadd.f32 0.0, %v495
  %v497 = vpop.f32.mrb[0].mxu0
  %498 = vmatprep.mubr.bf16.mxu0 0
  %499 = vmatmul.mubr.bf16.gmra.mrb[0].mxu0 %v356
  %v500 = vpop.f32.mrb[0].mxu0
  %v501 = vadd.f32 0.0, %v500
  %v502 = vpop.f32.mrb[0].mxu0
  %v503 = vpop.f32.mrb[0].mxu0
  %v504 = vadd.f32 0.0, %v503
  %v505 = vpop.f32.mrb[0].mxu0
  %506 = vmatprep.mubr.bf16.mxu0 0
  %507 = vmatmul.mubr.bf16.gmra.mrb[0].mxu0 %v357
  %v508 = vpop.f32.mrb[0].mxu0
  %v509 = vadd.f32 0.0, %v508
  %v510 = vpop.f32.mrb[0].mxu0
  %v511 = vpop.f32.mrb[0].mxu0
  %v512 = vadd.f32 0.0, %v511
  %v513 = vpop.f32.mrb[0].mxu0
  %514 = vmatprep.mubr.bf16.mxu0 0
  %515 = vmatmul.mubr.bf16.gmra.mrb[0].mxu0 %v358
  %v516 = vpop.f32.mrb[0].mxu0
  %v517 = vadd.f32 0.0, %v516
  %v518 = vpop.f32.mrb[0].mxu0
  %v519 = vpop.f32.mrb[0].mxu0
  %v520 = vadd.f32 0.0, %v519
  %v521 = vpop.f32.mrb[0].mxu0
  %522 = vmatprep.mubr.bf16.mxu0 0
  %523 = vmatmul.mubr.bf16.gmra.mrb[0].mxu0 %v359
  %v524 = vpop.f32.mrb[0].mxu0
  %v525 = vadd.f32 0.0, %v524
  %v526 = vpop.f32.mrb[0].mxu0
  %v527 = vpop.f32.mrb[0].mxu0
  %v528 = vadd.f32 0.0, %v527
  %v529 = vpop.f32.mrb[0].mxu0
  %530 = vmatprep.mubr.bf16.mxu0 0
  %531 = vmatmul.mubr.bf16.gmra.mrb[0].mxu0 %v360
  %v532 = vpop.f32.mrb[0].mxu0
  %v533 = vadd.f32 0.0, %v532
  %v534 = vpop.f32.mrb[0].mxu0
  %v535 = vpop.f32.mrb[0].mxu0
  %v536 = vadd.f32 0.0, %v535
  %v537 = vpop.f32.mrb[0].mxu0
  %538 = vmatprep.mubr.bf16.mxu0 0
  %539 = vmatmul.mubr.bf16.gmra.mrb[0].mxu0 %v361
  %v540 = vpop.f32.mrb[0].mxu0
  %v541 = vadd.f32 0.0, %v540
  %v542 = vpop.f32.mrb[0].mxu0
  %v543 = vpop.f32.mrb[0].mxu0
  %v544 = vadd.f32 0.0, %v543
  %v545 = vpop.f32.mrb[0].mxu0
  %546 = vmatprep.mubr.bf16.mxu0 0
  %547 = vmatmul.mubr.bf16.gmra.mrb[0].mxu0 %v362
  %v548 = vpop.f32.mrb[0].mxu0
  %v549 = vadd.f32 0.0, %v548
  %v550 = vpop.f32.mrb[0].mxu0
  %v551 = vpop.f32.mrb[0].mxu0
  %v552 = vadd.f32 0.0, %v551
  %v553 = vpop.f32.mrb[0].mxu0
  %554 = vmatprep.mubr.bf16.mxu0 0
  %555 = vmatmul.mubr.bf16.gmra.mrb[0].mxu0 %v363
  %v556 = vpop.f32.mrb[0].mxu0
  %v557 = vadd.f32 0.0, %v556
  %v558 = vpop.f32.mrb[0].mxu0
  %v559 = vpop.f32.mrb[0].mxu0
  %v560 = vadd.f32 0.0, %v559
  %v561 = vpop.f32.mrb[0].mxu0
  %562 = vmatprep.mubr.bf16.mxu0 0
  %563 = vmatmul.mubr.bf16.gmra.mrb[0].mxu0 %v364
  %v564 = vpop.f32.mrb[0].mxu0
  %v565 = vadd.f32 0.0, %v564
  %v566 = vpop.f32.mrb[0].mxu0
  %v567 = vpop.f32.mrb[0].mxu0
  %v568 = vadd.f32 0.0, %v567
  %v569 = vpop.f32.mrb[0].mxu0
  %570 = vmatprep.mubr.bf16.mxu0 0
  %571 = vmatmul.mubr.bf16.gmra.mrb[0].mxu0 %v365
  %v572 = vpop.f32.mrb[0].mxu0
  %v573 = vadd.f32 0.0, %v572
  %v574 = vpop.f32.mrb[0].mxu0
  %v575 = vpop.f32.mrb[0].mxu0
  %v576 = vadd.f32 0.0, %v575
  %v577 = vpop.f32.mrb[0].mxu0
  %578 = vmatprep.mubr.bf16.mxu0 0
  %579 = vmatmul.mubr.bf16.gmra.mrb[0].mxu0 %v366
  %v580 = vpop.f32.mrb[0].mxu0
  %v581 = vadd.f32 0.0, %v580
  %v582 = vpop.f32.mrb[0].mxu0
  %v583 = vpop.f32.mrb[0].mxu0
  %v584 = vadd.f32 0.0, %v583
  %v585 = vpop.f32.mrb[0].mxu0
  %586 = vmatprep.mubr.bf16.mxu0 0
  %587 = vmatmul.mubr.bf16.gmra.mrb[0].mxu0 %v367
  %v588 = vpop.f32.mrb[0].mxu0
  %v589 = vadd.f32 0.0, %v588
  %v590 = vpop.f32.mrb[0].mxu0
  %v591 = vpop.f32.mrb[0].mxu0
  %v592 = vadd.f32 0.0, %v591
  %v593 = vpop.f32.mrb[0].mxu0
  %594 = vmatprep.mubr.bf16.mxu0 0
  %595 = vmatmul.mubr.bf16.gmra.mrb[0].mxu0 %v368
  %v596 = vpop.f32.mrb[0].mxu0
  %v597 = vadd.f32 0.0, %v596
  %v598 = vpop.f32.mrb[0].mxu0
  %v599 = vpop.f32.mrb[0].mxu0
  %v600 = vadd.f32 0.0, %v599
  %v601 = vpop.f32.mrb[0].mxu0
  %602 = vmatprep.mubr.bf16.mxu0 0
  %603 = vmatmul.mubr.bf16.gmra.mrb[0].mxu0 %v369
  %v604 = vpop.f32.mrb[0].mxu0
  %v605 = vadd.f32 0.0, %v604
  %v606 = vpop.f32.mrb[0].mxu0
  %v607 = vpop.f32.mrb[0].mxu0
  %v608 = vadd.f32 0.0, %v607
  %v609 = vpop.f32.mrb[0].mxu0
  %610 = vmatprep.mubr.bf16.mxu0 0
  %611 = vmatmul.mubr.bf16.gmra.mrb[0].mxu0 %v370
  %v612 = vpop.f32.mrb[0].mxu0
  %v613 = vadd.f32 0.0, %v612
  %v614 = vpop.f32.mrb[0].mxu0
  %v615 = vpop.f32.mrb[0].mxu0
  %v616 = vadd.f32 0.0, %v615
  %v617 = vpop.f32.mrb[0].mxu0
  %618 = vmatprep.mubr.bf16.mxu0 0
  %619 = vmatmul.mubr.bf16.gmra.mrb[0].mxu0 %v371
  %v620 = vpop.f32.mrb[0].mxu0
  %v621 = vadd.f32 0.0, %v620
  %v622 = vpop.f32.mrb[0].mxu0
  %v623 = vpop.f32.mrb[0].mxu0
  %v624 = vadd.f32 0.0, %v623
  %v625 = vpop.f32.mrb[0].mxu0
  %626 = vmatprep.mubr.bf16.mxu0 0
  %627 = vmatmul.mubr.bf16.gmra.mrb[0].mxu0 %v372
  %v628 = vpop.f32.mrb[0].mxu0
  %v629 = vadd.f32 0.0, %v628
  %v630 = vpop.f32.mrb[0].mxu0
  %v631 = vpop.f32.mrb[0].mxu0
  %v632 = vadd.f32 0.0, %v631
  %v633 = vpop.f32.mrb[0].mxu0
  %634 = vmatprep.mubr.bf16.mxu0 0
  %635 = vmatmul.mubr.bf16.gmra.mrb[0].mxu0 %v373
  %v636 = vpop.f32.mrb[0].mxu0
  %v637 = vadd.f32 0.0, %v636
  %v638 = vpop.f32.mrb[0].mxu0
  %v639 = vpop.f32.mrb[0].mxu0
  %v640 = vadd.f32 0.0, %v639
  %v641 = vpop.f32.mrb[0].mxu0
  %642 = vmatprep.mubr.bf16.mxu0 0
  %643 = vmatmul.mubr.bf16.gmra.mrb[0].mxu0 %v374
  %v644 = vpop.f32.mrb[0].mxu0
  %v645 = vadd.f32 0.0, %v644
  %v646 = vpop.f32.mrb[0].mxu0
  %v647 = vpop.f32.mrb[0].mxu0
  %v648 = vadd.f32 0.0, %v647
  %v649 = vpop.f32.mrb[0].mxu0
  %650 = vmatprep.mubr.bf16.mxu0 0
  %651 = vmatmul.mubr.bf16.gmra.mrb[0].mxu0 %v375
  %v652 = vpop.f32.mrb[0].mxu0
  %v653 = vadd.f32 0.0, %v652
  %v654 = vpop.f32.mrb[0].mxu0
  %v655 = vpop.f32.mrb[0].mxu0
  %v656 = vadd.f32 0.0, %v655
  %v657 = vpop.f32.mrb[0].mxu0
  %658 = vmatprep.mubr.bf16.mxu0 0
  %659 = vmatmul.mubr.bf16.gmra.mrb[0].mxu0 %v376
  %v660 = vpop.f32.mrb[0].mxu0
  %v661 = vadd.f32 0.0, %v660
  %v662 = vpop.f32.mrb[0].mxu0
  %v663 = vpop.f32.mrb[0].mxu0
  %v664 = vadd.f32 0.0, %v663
  %v665 = vpop.f32.mrb[0].mxu0
  %666 = vmatprep.mubr.bf16.mxu0 0
  %667 = vmatmul.mubr.bf16.gmra.mrb[0].mxu0 %v377
  %v668 = vpop.f32.mrb[0].mxu0
  %v669 = vadd.f32 0.0, %v668
  %v670 = vpop.f32.mrb[0].mxu0
  %v671 = vpop.f32.mrb[0].mxu0
  %v672 = vadd.f32 0.0, %v671
  %v673 = vpop.f32.mrb[0].mxu0
  %674 = vmatprep.mubr.bf16.mxu0 0
  %675 = vmatmul.mubr.bf16.gmra.mrb[0].mxu0 %v378
  %v676 = vpop.f32.mrb[0].mxu0
  %v677 = vadd.f32 0.0, %v676
  %v678 = vpop.f32.mrb[0].mxu0
  %v679 = vpop.f32.mrb[0].mxu0
  %v680 = vadd.f32 0.0, %v679
  %v681 = vpop.f32.mrb[0].mxu0
  %682 = vmatprep.mubr.bf16.mxu0 0
  %683 = vmatmul.mubr.bf16.gmra.mrb[0].mxu0 %v379
  %v684 = vpop.f32.mrb[0].mxu0
  %v685 = vadd.f32 0.0, %v684
  %v686 = vpop.f32.mrb[0].mxu0
  %v687 = vpop.f32.mrb[0].mxu0
  %v688 = vadd.f32 0.0, %v687
  %v689 = vpop.f32.mrb[0].mxu0
  %690 = vmatprep.mubr.bf16.mxu0 0
  %691 = vmatmul.mubr.bf16.gmra.mrb[0].mxu0 %v380
  %v692 = vpop.f32.mrb[0].mxu0
  %v693 = vadd.f32 0.0, %v692
  %v694 = vpop.f32.mrb[0].mxu0
  %v695 = vpop.f32.mrb[0].mxu0
  %v696 = vadd.f32 0.0, %v695
  %v697 = vpop.f32.mrb[0].mxu0
  %698 = vmatprep.mubr.bf16.mxu0 0
  %699 = vmatmul.mubr.bf16.gmra.mrb[0].mxu0 %v381
  %v700 = vpop.f32.mrb[0].mxu0
  %v701 = vadd.f32 0.0, %v700
  %v702 = vpop.f32.mrb[0].mxu0
  %v703 = vpop.f32.mrb[0].mxu0
  %v704 = vadd.f32 0.0, %v703
  %v705 = vpop.f32.mrb[0].mxu0
  %706 = vmatprep.mubr.bf16.mxu0 0
  %707 = vmatmul.mubr.bf16.gmra.mrb[0].mxu0 %v382
  %v708 = vpop.f32.mrb[0].mxu0
  %v709 = vadd.f32 0.0, %v708
  %v710 = vpop.f32.mrb[0].mxu0
  %v711 = vpop.f32.mrb[0].mxu0
  %v712 = vadd.f32 0.0, %v711
  %v713 = vpop.f32.mrb[0].mxu0
  %714 = vmatprep.mubr.bf16.mxu0 0
  %715 = vmatmul.mubr.bf16.gmra.mrb[0].mxu0 %v383
  %v716 = vpop.f32.mrb[0].mxu0
  %v717 = vadd.f32 0.0, %v716
  %v718 = vpop.f32.mrb[0].mxu0
  %v719 = vpop.f32.mrb[0].mxu0
  %v720 = vadd.f32 0.0, %v719
  %v721 = vpop.f32.mrb[0].mxu0
  %722 = vmatprep.mubr.bf16.mxu0 0
  %723 = vmatmul.mubr.bf16.gmra.mrb[0].mxu0 %v384
  %v724 = vpop.f32.mrb[0].mxu0
  %v725 = vadd.f32 0.0, %v724
  %v726 = vpop.f32.mrb[0].mxu0
  %v727 = vpop.f32.mrb[0].mxu0
  %v728 = vadd.f32 0.0, %v727
  %v729 = vpop.f32.mrb[0].mxu0
  %730 = vmatprep.mubr.bf16.mxu0 0
  %731 = vmatmul.mubr.bf16.gmra.mrb[0].mxu0 %v385
  %v732 = vpop.f32.mrb[0].mxu0
  %v733 = vadd.f32 0.0, %v732
  %v734 = vpop.f32.mrb[0].mxu0
  %v735 = vpop.f32.mrb[0].mxu0
  %v736 = vadd.f32 0.0, %v735
  %v737 = vpop.f32.mrb[0].mxu0
  %738 = vdwg.mxu0
  %v739 = vadd.f32 %v485, %v488
  %v740 = vadd.f32 %v739, %v493
  %v741 = vadd.f32 %v740, %v496
  %v742 = vadd.f32 %v741, %v501
  %v743 = vadd.f32 %v742, %v504
  %v744 = vadd.f32 %v743, %v509
  %v745 = vadd.f32 %v744, %v512
  %v746 = vadd.f32 %v745, %v517
  %v747 = vadd.f32 %v746, %v520
  %v748 = vadd.f32 %v747, %v525
  %v749 = vadd.f32 %v748, %v528
  %v750 = vadd.f32 %v749, %v533
  %v751 = vadd.f32 %v750, %v536
  %v752 = vadd.f32 %v751, %v541
  %v753 = vadd.f32 %v752, %v544
  %v754 = vadd.f32 %v753, %v549
  %v755 = vadd.f32 %v754, %v552
  %v756 = vadd.f32 %v755, %v557
  %v757 = vadd.f32 %v756, %v560
  %v758 = vadd.f32 %v757, %v565
  %v759 = vadd.f32 %v758, %v568
  %v760 = vadd.f32 %v759, %v573
  %v761 = vadd.f32 %v760, %v576
  %v762 = vadd.f32 %v761, %v581
  %v763 = vadd.f32 %v762, %v584
  %v764 = vadd.f32 %v763, %v589
  %v765 = vadd.f32 %v764, %v592
  %v766 = vadd.f32 %v765, %v597
  %v767 = vadd.f32 %v766, %v600
  %v768 = vadd.f32 %v767, %v605
  %v769 = vadd.f32 %v768, %v608
  %v770 = vadd.f32 %v769, %v613
  %v771 = vadd.f32 %v770, %v616
  %v772 = vadd.f32 %v771, %v621
  %v773 = vadd.f32 %v772, %v624
  %v774 = vadd.f32 %v773, %v629
  %v775 = vadd.f32 %v774, %v632
  %v776 = vadd.f32 %v775, %v637
  %v777 = vadd.f32 %v776, %v640
  %v778 = vadd.f32 %v777, %v645
  %v779 = vadd.f32 %v778, %v648
  %v780 = vadd.f32 %v779, %v653
  %v781 = vadd.f32 %v780, %v656
  %v782 = vadd.f32 %v781, %v661
  %v783 = vadd.f32 %v782, %v664
  %v784 = vadd.f32 %v783, %v669
  %v785 = vadd.f32 %v784, %v672
  %v786 = vadd.f32 %v785, %v677
  %v787 = vadd.f32 %v786, %v680
  %v788 = vadd.f32 %v787, %v685
  %v789 = vadd.f32 %v788, %v688
  %v790 = vadd.f32 %v789, %v693
  %v791 = vadd.f32 %v790, %v696
  %v792 = vadd.f32 %v791, %v701
  %v793 = vadd.f32 %v792, %v704
  %v794 = vadd.f32 %v793, %v709
  %v795 = vadd.f32 %v794, %v712
  %v796 = vadd.f32 %v795, %v717
  %v797 = vadd.f32 %v796, %v720
  %v798 = vadd.f32 %v797, %v725
  %v799 = vadd.f32 %v798, %v728
  %v800 = vadd.f32 %v799, %v733
  %v801 = vadd.f32 %v800, %v736
  %v802 = vrot.slane %v801, 4
  %v803 = vadd.f32 %v801, %v802
  %v804 = vrot.slane %v803, 2
  %v805 = vadd.f32 %v803, %v804
  %v806 = vrot.slane %v805, 1
  %v807 = vadd.f32 %v805, %v806
  %v808 = vmul.f32 %v485, %v485
  %v809 = vmul.f32 %v488, %v488
  %v810 = vmul.f32 %v493, %v493
  %v811 = vmul.f32 %v496, %v496
  %v812 = vmul.f32 %v501, %v501
  %v813 = vmul.f32 %v504, %v504
  %v814 = vmul.f32 %v509, %v509
  %v815 = vmul.f32 %v512, %v512
  %v816 = vmul.f32 %v517, %v517
  %v817 = vmul.f32 %v520, %v520
  %v818 = vmul.f32 %v525, %v525
  %v819 = vmul.f32 %v528, %v528
  %v820 = vmul.f32 %v533, %v533
  %v821 = vmul.f32 %v536, %v536
  %v822 = vmul.f32 %v541, %v541
  %v823 = vmul.f32 %v544, %v544
  %v824 = vmul.f32 %v549, %v549
  %v825 = vmul.f32 %v552, %v552
  %v826 = vmul.f32 %v557, %v557
  %v827 = vmul.f32 %v560, %v560
  %v828 = vmul.f32 %v565, %v565
  %v829 = vmul.f32 %v568, %v568
  %v830 = vmul.f32 %v573, %v573
  %v831 = vmul.f32 %v576, %v576
  %v832 = vmul.f32 %v581, %v581
  %v833 = vmul.f32 %v584, %v584
  %v834 = vmul.f32 %v589, %v589
  %v835 = vmul.f32 %v592, %v592
  %v836 = vmul.f32 %v597, %v597
  %v837 = vmul.f32 %v600, %v600
  %v838 = vmul.f32 %v605, %v605
  %v839 = vmul.f32 %v608, %v608
  %v840 = vmul.f32 %v613, %v613
  %v841 = vmul.f32 %v616, %v616
  %v842 = vmul.f32 %v621, %v621
  %v843 = vmul.f32 %v624, %v624
  %v844 = vmul.f32 %v629, %v629
  %v845 = vmul.f32 %v632, %v632
  %v846 = vmul.f32 %v637, %v637
  %v847 = vmul.f32 %v640, %v640
  %v848 = vmul.f32 %v645, %v645
  %v849 = vmul.f32 %v648, %v648
  %v850 = vmul.f32 %v653, %v653
  %v851 = vmul.f32 %v656, %v656
  %v852 = vmul.f32 %v661, %v661
  %v853 = vmul.f32 %v664, %v664
  %v854 = vmul.f32 %v669, %v669
  %v855 = vmul.f32 %v672, %v672
  %v856 = vmul.f32 %v677, %v677
  %v857 = vmul.f32 %v680, %v680
  %v858 = vmul.f32 %v685, %v685
  %v859 = vmul.f32 %v688, %v688
  %v860 = vmul.f32 %v693, %v693
  %v861 = vmul.f32 %v696, %v696
  %v862 = vmul.f32 %v701, %v701
  %v863 = vmul.f32 %v704, %v704
  %v864 = vmul.f32 %v709, %v709
  %v865 = vmul.f32 %v712, %v712
  %v866 = vmul.f32 %v717, %v717
  %v867 = vmul.f32 %v720, %v720
  %v868 = vmul.f32 %v725, %v725
  %v869 = vmul.f32 %v728, %v728
  %v870 = vmul.f32 %v733, %v733
  %v871 = vmul.f32 %v736, %v736
  %v872 = vadd.f32 %v808, %v809
  %v873 = vadd.f32 %v872, %v810
  %v874 = vadd.f32 %v873, %v811
  %v875 = vadd.f32 %v874, %v812
  %v876 = vadd.f32 %v875, %v813
  %v877 = vadd.f32 %v876, %v814
  %v878 = vadd.f32 %v877, %v815
  %v879 = vadd.f32 %v878, %v816
  %v880 = vadd.f32 %v879, %v817
  %v881 = vadd.f32 %v880, %v818
  %v882 = vadd.f32 %v881, %v819
  %v883 = vadd.f32 %v882, %v820
  %v884 = vadd.f32 %v883, %v821
  %v885 = vadd.f32 %v884, %v822
  %v886 = vadd.f32 %v885, %v823
  %v887 = vadd.f32 %v886, %v824
  %v888 = vadd.f32 %v887, %v825
  %v889 = vadd.f32 %v888, %v826
  %v890 = vadd.f32 %v889, %v827
  %v891 = vadd.f32 %v890, %v828
  %v892 = vadd.f32 %v891, %v829
  %v893 = vadd.f32 %v892, %v830
  %v894 = vadd.f32 %v893, %v831
  %v895 = vadd.f32 %v894, %v832
  %v896 = vadd.f32 %v895, %v833
  %v897 = vadd.f32 %v896, %v834
  %v898 = vadd.f32 %v897, %v835
  %v899 = vadd.f32 %v898, %v836
  %v900 = vadd.f32 %v899, %v837
  %v901 = vadd.f32 %v900, %v838
  %v902 = vadd.f32 %v901, %v839
  %v903 = vadd.f32 %v902, %v840
  %v904 = vadd.f32 %v903, %v841
  %v905 = vadd.f32 %v904, %v842
  %v906 = vadd.f32 %v905, %v843
  %v907 = vadd.f32 %v906, %v844
  %v908 = vadd.f32 %v907, %v845
  %v909 = vadd.f32 %v908, %v846
  %v910 = vadd.f32 %v909, %v847
  %v911 = vadd.f32 %v910, %v848
  %v912 = vadd.f32 %v911, %v849
  %v913 = vadd.f32 %v912, %v850
  %v914 = vadd.f32 %v913, %v851
  %v915 = vadd.f32 %v914, %v852
  %v916 = vadd.f32 %v915, %v853
  %v917 = vadd.f32 %v916, %v854
  %v918 = vadd.f32 %v917, %v855
  %v919 = vadd.f32 %v918, %v856
  %v920 = vadd.f32 %v919, %v857
  %v921 = vadd.f32 %v920, %v858
  %v922 = vadd.f32 %v921, %v859
  %v923 = vadd.f32 %v922, %v860
  %v924 = vadd.f32 %v923, %v861
  %v925 = vadd.f32 %v924, %v862
  %v926 = vadd.f32 %v925, %v863
  %v927 = vadd.f32 %v926, %v864
  %v928 = vadd.f32 %v927, %v865
  %v929 = vadd.f32 %v928, %v866
  %v930 = vadd.f32 %v929, %v867
  %v931 = vadd.f32 %v930, %v868
  %v932 = vadd.f32 %v931, %v869
  %v933 = vadd.f32 %v932, %v870
  %v934 = vadd.f32 %v933, %v871
  %v935 = vrot.slane %v934, 4
  %v936 = vadd.f32 %v934, %v935
  %v937 = vrot.slane %v936, 2
  %v938 = vadd.f32 %v936, %v937
  %v939 = vrot.slane %v938, 1
  %v940 = vadd.f32 %v938, %v939
  %vm941 = vcmask 1040384
  %v942 = vsel %vm941, %v807, %v940
  %vm943 = vcmask 1041408
  %v944 = vsel %vm943, %v942, 0.0
  %945 = vst [vmem:[%s5] sm:$0xff] %v944
  %v946 = vpack.c.bf16 %v488, %v485
  %v947 = vpack.c.bf16 %v496, %v493
  %v948 = vpack.c.bf16 %v504, %v501
  %v949 = vpack.c.bf16 %v512, %v509
  %v950 = vpack.c.bf16 %v520, %v517
  %v951 = vpack.c.bf16 %v528, %v525
  %v952 = vpack.c.bf16 %v536, %v533
  %v953 = vpack.c.bf16 %v544, %v541
  %v954 = vpack.c.bf16 %v552, %v549
  %v955 = vpack.c.bf16 %v560, %v557
  %v956 = vpack.c.bf16 %v568, %v565
  %v957 = vpack.c.bf16 %v576, %v573
  %v958 = vpack.c.bf16 %v584, %v581
  %v959 = vpack.c.bf16 %v592, %v589
  %v960 = vpack.c.bf16 %v600, %v597
  %v961 = vpack.c.bf16 %v608, %v605
  %v962 = vpack.c.bf16 %v616, %v613
  %v963 = vpack.c.bf16 %v624, %v621
  %v964 = vpack.c.bf16 %v632, %v629
  %v965 = vpack.c.bf16 %v640, %v637
  %v966 = vpack.c.bf16 %v648, %v645
  %v967 = vpack.c.bf16 %v656, %v653
  %v968 = vpack.c.bf16 %v664, %v661
  %v969 = vpack.c.bf16 %v672, %v669
  %v970 = vpack.c.bf16 %v680, %v677
  %v971 = vpack.c.bf16 %v688, %v685
  %v972 = vpack.c.bf16 %v696, %v693
  %v973 = vpack.c.bf16 %v704, %v701
  %v974 = vpack.c.bf16 %v712, %v709
  %v975 = vpack.c.bf16 %v720, %v717
  %v976 = vpack.c.bf16 %v728, %v725
  %v977 = vpack.c.bf16 %v736, %v733
  %v1010 = vunpack.c.l.b16 %v946
  %v1011 = vunpack.c.h.b16 %v946
  %v1012 = vunpack.c.l.b16 %v947
  %v1013 = vunpack.c.h.b16 %v947
  %v1014 = vunpack.c.l.b16 %v948
  %v1015 = vunpack.c.h.b16 %v948
  %v1016 = vunpack.c.l.b16 %v949
  %v1017 = vunpack.c.h.b16 %v949
  %v1018 = vunpack.c.l.b16 %v950
  %v1019 = vunpack.c.h.b16 %v950
  %v1020 = vunpack.c.l.b16 %v951
  %v1021 = vunpack.c.h.b16 %v951
  %v1022 = vunpack.c.l.b16 %v952
  %v1023 = vunpack.c.h.b16 %v952
  %v1024 = vunpack.c.l.b16 %v953
  %v1025 = vunpack.c.h.b16 %v953
  %v1026 = vunpack.c.l.b16 %v954
  %v1027 = vunpack.c.h.b16 %v954
  %v1028 = vunpack.c.l.b16 %v955
  %v1029 = vunpack.c.h.b16 %v955
  %v1030 = vunpack.c.l.b16 %v956
  %v1031 = vunpack.c.h.b16 %v956
  %v1032 = vunpack.c.l.b16 %v957
  %v1033 = vunpack.c.h.b16 %v957
  %v1034 = vunpack.c.l.b16 %v958
  %v1035 = vunpack.c.h.b16 %v958
  %v1036 = vunpack.c.l.b16 %v959
  %v1037 = vunpack.c.h.b16 %v959
  %v1038 = vunpack.c.l.b16 %v960
  %v1039 = vunpack.c.h.b16 %v960
  %v1040 = vunpack.c.l.b16 %v961
  %v1041 = vunpack.c.h.b16 %v961
  %v1042 = vunpack.c.l.b16 %v962
  %v1043 = vunpack.c.h.b16 %v962
  %v1044 = vunpack.c.l.b16 %v963
  %v1045 = vunpack.c.h.b16 %v963
  %v1046 = vunpack.c.l.b16 %v964
  %v1047 = vunpack.c.h.b16 %v964
  %v1048 = vunpack.c.l.b16 %v965
  %v1049 = vunpack.c.h.b16 %v965
  %v1050 = vunpack.c.l.b16 %v966
  %v1051 = vunpack.c.h.b16 %v966
  %v1052 = vunpack.c.l.b16 %v967
  %v1053 = vunpack.c.h.b16 %v967
  %v1054 = vunpack.c.l.b16 %v968
  %v1055 = vunpack.c.h.b16 %v968
  %v1056 = vunpack.c.l.b16 %v969
  %v1057 = vunpack.c.h.b16 %v969
  %v1058 = vunpack.c.l.b16 %v970
  %v1059 = vunpack.c.h.b16 %v970
  %v1060 = vunpack.c.l.b16 %v971
  %v1061 = vunpack.c.h.b16 %v971
  %v1062 = vunpack.c.l.b16 %v972
  %v1063 = vunpack.c.h.b16 %v972
  %v1064 = vunpack.c.l.b16 %v973
  %v1065 = vunpack.c.h.b16 %v973
  %v1066 = vunpack.c.l.b16 %v974
  %v1067 = vunpack.c.h.b16 %v974
  %v1068 = vunpack.c.l.b16 %v975
  %v1069 = vunpack.c.h.b16 %v975
  %v1070 = vunpack.c.l.b16 %v976
  %v1071 = vunpack.c.h.b16 %v976
  %v1072 = vunpack.c.l.b16 %v977
  %v1073 = vunpack.c.h.b16 %v977
  %v1074 = vpack.c.b16 %v1010, %v1010
  %v1075 = vpack.c.b16 %v1011, %v1011
  %v1076 = vpack.c.b16 %v1012, %v1012
  %v1077 = vpack.c.b16 %v1013, %v1013
  %v1078 = vpack.c.b16 %v1014, %v1014
  %v1079 = vpack.c.b16 %v1015, %v1015
  %v1080 = vpack.c.b16 %v1016, %v1016
  %v1081 = vpack.c.b16 %v1017, %v1017
  %v1082 = vpack.c.b16 %v1018, %v1018
  %v1083 = vpack.c.b16 %v1019, %v1019
  %v1084 = vpack.c.b16 %v1020, %v1020
  %v1085 = vpack.c.b16 %v1021, %v1021
  %v1086 = vpack.c.b16 %v1022, %v1022
  %v1087 = vpack.c.b16 %v1023, %v1023
  %v1088 = vpack.c.b16 %v1024, %v1024
  %v1089 = vpack.c.b16 %v1025, %v1025
  %v1090 = vpack.c.b16 %v1026, %v1026
  %v1091 = vpack.c.b16 %v1027, %v1027
  %v1092 = vpack.c.b16 %v1028, %v1028
  %v1093 = vpack.c.b16 %v1029, %v1029
  %v1094 = vpack.c.b16 %v1030, %v1030
  %v1095 = vpack.c.b16 %v1031, %v1031
  %v1096 = vpack.c.b16 %v1032, %v1032
  %v1097 = vpack.c.b16 %v1033, %v1033
  %v1098 = vpack.c.b16 %v1034, %v1034
  %v1099 = vpack.c.b16 %v1035, %v1035
  %v1100 = vpack.c.b16 %v1036, %v1036
  %v1101 = vpack.c.b16 %v1037, %v1037
  %v1102 = vpack.c.b16 %v1038, %v1038
  %v1103 = vpack.c.b16 %v1039, %v1039
  %v1104 = vpack.c.b16 %v1040, %v1040
  %v1105 = vpack.c.b16 %v1041, %v1041
  %v1106 = vpack.c.b16 %v1042, %v1042
  %v1107 = vpack.c.b16 %v1043, %v1043
  %v1108 = vpack.c.b16 %v1044, %v1044
  %v1109 = vpack.c.b16 %v1045, %v1045
  %v1110 = vpack.c.b16 %v1046, %v1046
  %v1111 = vpack.c.b16 %v1047, %v1047
  %v1112 = vpack.c.b16 %v1048, %v1048
  %v1113 = vpack.c.b16 %v1049, %v1049
  %v1114 = vpack.c.b16 %v1050, %v1050
  %v1115 = vpack.c.b16 %v1051, %v1051
  %v1116 = vpack.c.b16 %v1052, %v1052
  %v1117 = vpack.c.b16 %v1053, %v1053
  %v1118 = vpack.c.b16 %v1054, %v1054
  %v1119 = vpack.c.b16 %v1055, %v1055
  %v1120 = vpack.c.b16 %v1056, %v1056
  %v1121 = vpack.c.b16 %v1057, %v1057
  %v1122 = vpack.c.b16 %v1058, %v1058
  %v1123 = vpack.c.b16 %v1059, %v1059
  %v1124 = vpack.c.b16 %v1060, %v1060
  %v1125 = vpack.c.b16 %v1061, %v1061
  %v1126 = vpack.c.b16 %v1062, %v1062
  %v1127 = vpack.c.b16 %v1063, %v1063
  %v1128 = vpack.c.b16 %v1064, %v1064
  %v1129 = vpack.c.b16 %v1065, %v1065
  %v1130 = vpack.c.b16 %v1066, %v1066
  %v1131 = vpack.c.b16 %v1067, %v1067
  %v1132 = vpack.c.b16 %v1068, %v1068
  %v1133 = vpack.c.b16 %v1069, %v1069
  %v1134 = vpack.c.b16 %v1070, %v1070
  %v1135 = vpack.c.b16 %v1071, %v1071
  %v1136 = vpack.c.b16 %v1072, %v1072
  %v1137 = vpack.c.b16 %v1073, %v1073
  %1202 = vst [vmem:[%s4] sm:$0xf] %v1074
  %1203 = vst [vmem:[%s4 + $0x4] sm:$0xf] %v1075
  %1204 = vst [vmem:[%s4 + $0x8] sm:$0xf] %v1076
  %1205 = vst [vmem:[%s4 + $0xc] sm:$0xf] %v1077
  %1206 = vst [vmem:[%s4 + $0x10] sm:$0xf] %v1078
  %1207 = vst [vmem:[%s4 + $0x14] sm:$0xf] %v1079
  %1208 = vst [vmem:[%s4 + $0x18] sm:$0xf] %v1080
  %1209 = vst [vmem:[%s4 + $0x1c] sm:$0xf] %v1081
  %1210 = vst [vmem:[%s4 + $0x20] sm:$0xf] %v1082
  %1211 = vst [vmem:[%s4 + $0x24] sm:$0xf] %v1083
  %1212 = vst [vmem:[%s4 + $0x28] sm:$0xf] %v1084
  %1213 = vst [vmem:[%s4 + $0x2c] sm:$0xf] %v1085
  %1214 = vst [vmem:[%s4 + $0x30] sm:$0xf] %v1086
  %1215 = vst [vmem:[%s4 + $0x34] sm:$0xf] %v1087
  %1216 = vst [vmem:[%s4 + $0x38] sm:$0xf] %v1088
  %1217 = vst [vmem:[%s4 + $0x3c] sm:$0xf] %v1089
  %1218 = vst [vmem:[%s4 + $0x40] sm:$0xf] %v1090
  %1219 = vst [vmem:[%s4 + $0x44] sm:$0xf] %v1091
  %1220 = vst [vmem:[%s4 + $0x48] sm:$0xf] %v1092
  %1221 = vst [vmem:[%s4 + $0x4c] sm:$0xf] %v1093
  %1222 = vst [vmem:[%s4 + $0x50] sm:$0xf] %v1094
  %1223 = vst [vmem:[%s4 + $0x54] sm:$0xf] %v1095
  %1224 = vst [vmem:[%s4 + $0x58] sm:$0xf] %v1096
  %1225 = vst [vmem:[%s4 + $0x5c] sm:$0xf] %v1097
  %1226 = vst [vmem:[%s4 + $0x60] sm:$0xf] %v1098
  %1227 = vst [vmem:[%s4 + $0x64] sm:$0xf] %v1099
  %1228 = vst [vmem:[%s4 + $0x68] sm:$0xf] %v1100
  %1229 = vst [vmem:[%s4 + $0x6c] sm:$0xf] %v1101
  %1230 = vst [vmem:[%s4 + $0x70] sm:$0xf] %v1102
  %1231 = vst [vmem:[%s4 + $0x74] sm:$0xf] %v1103
  %1232 = vst [vmem:[%s4 + $0x78] sm:$0xf] %v1104
  %1233 = vst [vmem:[%s4 + $0x7c] sm:$0xf] %v1105
  %1234 = vst [vmem:[%s4 + $0x80] sm:$0xf] %v1106
  %1235 = vst [vmem:[%s4 + $0x84] sm:$0xf] %v1107
  %1236 = vst [vmem:[%s4 + $0x88] sm:$0xf] %v1108
  %1237 = vst [vmem:[%s4 + $0x8c] sm:$0xf] %v1109
  %1238 = vst [vmem:[%s4 + $0x90] sm:$0xf] %v1110
  %1239 = vst [vmem:[%s4 + $0x94] sm:$0xf] %v1111
  %1240 = vst [vmem:[%s4 + $0x98] sm:$0xf] %v1112
  %1241 = vst [vmem:[%s4 + $0x9c] sm:$0xf] %v1113
  %1242 = vst [vmem:[%s4 + $0xa0] sm:$0xf] %v1114
  %1243 = vst [vmem:[%s4 + $0xa4] sm:$0xf] %v1115
  %1244 = vst [vmem:[%s4 + $0xa8] sm:$0xf] %v1116
  %1245 = vst [vmem:[%s4 + $0xac] sm:$0xf] %v1117
  %1246 = vst [vmem:[%s4 + $0xb0] sm:$0xf] %v1118
  %1247 = vst [vmem:[%s4 + $0xb4] sm:$0xf] %v1119
  %1248 = vst [vmem:[%s4 + $0xb8] sm:$0xf] %v1120
  %1249 = vst [vmem:[%s4 + $0xbc] sm:$0xf] %v1121
  %1250 = vst [vmem:[%s4 + $0xc0] sm:$0xf] %v1122
  %1251 = vst [vmem:[%s4 + $0xc4] sm:$0xf] %v1123
  %1252 = vst [vmem:[%s4 + $0xc8] sm:$0xf] %v1124
  %1253 = vst [vmem:[%s4 + $0xcc] sm:$0xf] %v1125
  %1254 = vst [vmem:[%s4 + $0xd0] sm:$0xf] %v1126
  %1255 = vst [vmem:[%s4 + $0xd4] sm:$0xf] %v1127
  %1256 = vst [vmem:[%s4 + $0xd8] sm:$0xf] %v1128
  %1257 = vst [vmem:[%s4 + $0xdc] sm:$0xf] %v1129
  %1258 = vst [vmem:[%s4 + $0xe0] sm:$0xf] %v1130
  %1259 = vst [vmem:[%s4 + $0xe4] sm:$0xf] %v1131
  %1260 = vst [vmem:[%s4 + $0xe8] sm:$0xf] %v1132
  %1261 = vst [vmem:[%s4 + $0xec] sm:$0xf] %v1133
  %1262 = vst [vmem:[%s4 + $0xf0] sm:$0xf] %v1134
  %1263 = vst [vmem:[%s4 + $0xf4] sm:$0xf] %v1135
  %1264 = vst [vmem:[%s4 + $0xf8] sm:$0xf] %v1136
  %1265 = vst [vmem:[%s4 + $0xfc] sm:$0xf] %v1137
  // Predicated region
  $region18: #{_forward_impl.11} parent=0 // pred_check
    _
  $region19: #{_forward_impl.11} parent=0 // pred_check_branch
    %1267 = sbr.rel (0) target = $region21
  $region20: #{_forward_impl.11} parent=0 // pred_region
    _
  $region21: #{_forward_impl.11} parent=0 // pred_fallthru
    _
  // Predicated region
  $region22: #{_forward_impl.11} parent=0 // pred_check
    _
  $region23: #{_forward_impl.11} parent=0 // pred_check_branch
    %1269 = sbr.rel (0) target = $region25
  $region24: #{_forward_impl.11} parent=0 // pred_region
    _
  $region25: #{_forward_impl.11} parent=0 // pred_fallthru
    _
  // Predicated region
  $region26: #{_forward_impl.11} parent=0 // pred_check
    _
  $region27: #{_forward_impl.11} parent=0 // pred_check_branch
    %1271 = sbr.rel (0) target = $region29
  $region28: #{_forward_impl.11} parent=0 // pred_region
    _
  $region29: #{_forward_impl.11} parent=0 // pred_fallthru
    _
  // Predicated region
  $region30: #{_forward_impl.11} parent=0 // pred_check
    _
  $region31: #{_forward_impl.11} parent=0 // pred_check_branch
    %1273 = sbr.rel (0) target = $region33
  $region32: #{_forward_impl.11} parent=0 // pred_region
    _
  $region33: #{_forward_impl.11} parent=0 // pred_fallthru
    _

// kernel: _forward_impl.12
$region0: #{_forward_impl.12}
  #allocation0 [shape = 'u32[]', space=smem, size = 0x4, offset = 0x4, fixed_abs, tag = 'smem constant byte address 0x4 - core index']
  #allocation1 [shape = 'u32[144,128]{1,0:T(1,128)}', space=vmem, size = 0x12000, scoped, tag = 'internal scratch']
  %s0 = inlined_call_operand.vmem [shape: bf16[2048,128], index: 0, kind: input, shape index: {}]
  %s1 = inlined_call_operand.vmem [shape: f32[1,128], index: 1, kind: input, shape index: {}]
  %s2 = inlined_call_operand.vmem [shape: f32[1,128], index: 2, kind: input, shape index: {}]
  %s3 = inlined_call_operand.vmem [shape: bf16[128,128], index: 3, kind: input, shape index: {}]
  %s4 = inlined_call_operand.vmem [shape: bf16[2048,128], index: 4, kind: output, shape index: {0}]
  %s5 = inlined_call_operand.vmem [shape: f32[32,128], index: 5, kind: output, shape index: {1}]
  %6 = xla_tuple %s4, %s5
  %s7 = sld [smem:[#allocation0]]
  $region57: #{_forward_impl.12} parent=0
    _
  %s9 = ssub.s32 1, %s7
  %s10 = scalar_select 0, %s9, %s7
  loop: start=0, step=1, limit=6
  $region2: #{_forward_impl.12} parent=0 // loop_pre_header
    _
  $region3: #{_forward_impl.12} parent=0 // loop_header
    %s12 = sphi 0, %s16
    %p13 = scmp.ge.s32.totalorder %s12, 6
    %s22 = sphi 0, %s24
    %s25 = sphi 0, %s22
    %s26 = sphi 0, %s25
    %s42 = sphi 0, %s26
    %s46 = sphi 0, %s46
    %s48 = sphi 0, %s46
    %s49 = sphi 0, %s48
    %s63 = sphi 0, %s49
    %s67 = sphi 0, %s67
    %s69 = sphi 0, %s67
    %s70 = sphi 0, %s69
    %s84 = sphi 0, %s70
    %s88 = sphi 0, %s88
    %s90 = sphi 0, %s88
    %s91 = sphi 0, %s90
    %s105 = sphi 0, %s91
    %s111 = sphi 0, %s113
    %s114 = sphi 0, %s111
    %s115 = sphi 0, %s114
    %s131 = sphi 0, %s115
    %s137 = sphi 0, %s139
    %s140 = sphi 0, %s137
    %s141 = sphi 0, %s140
    %s157 = sphi 0, %s141
  $region4: #{_forward_impl.12} parent=0 // loop_header_branch
    %15 = sbr.rel (%p13) target = $region8
  $region5: #{_forward_impl.12} parent=0 // loop_body
    %s17 = ssub.s32 %s12, 1
    %s18 = ssub.s32 %s12, 2
    %s19 = sadd.s32 %s12, 1
    %s20 = ssub.s32 %s12, %s19
    %p21 = scmp.eq.s32.totalorder %s20, 0
    %s23 = sadd.s32 %s22, 1
    %s24 = scalar_select %p21, %s22, %s23
    %p27 = pneg %p21
    %p28 = scmp.eq.s32.totalorder %s12, 3
    %p29 = por %p27, %p28
    %p30 = scmp.ne.s32.totalorder %s22, %s25
    %p31 = scmp.eq.s32.totalorder %s12, 0
    %p32 = por %p30, %p31
    %p33 = scmp.ne.s32.totalorder %s22, %s25
    %p34 = scmp.eq.s32.totalorder %s17, 3
    %p35 = por %p33, %p34
    %p36 = scmp.ne.s32.totalorder %s25, %s26
    %p37 = scmp.eq.s32.totalorder %s17, 0
    %p38 = por %p36, %p37
    %p39 = scmp.ne.s32.totalorder %s25, %s26
    %p40 = scmp.eq.s32.totalorder %s18, 3
    %p41 = por %p39, %p40
    %p43 = scmp.ne.s32.totalorder %s26, %s42
    %p44 = scmp.eq.s32.totalorder %s18, 0
    %p45 = por %p43, %p44
    %s47 = sadd.s32 %s46, 1
    %p50 = scmp.eq.s32.totalorder %s12, 3
    %p51 = scmp.ne.s32.totalorder %s46, %s48
    %p52 = scmp.eq.s32.totalorder %s12, 0
    %p53 = por %p51, %p52
    %p54 = scmp.ne.s32.totalorder %s46, %s48
    %p55 = scmp.eq.s32.totalorder %s17, 3
    %p56 = por %p54, %p55
    %p57 = scmp.ne.s32.totalorder %s48, %s49
    %p58 = scmp.eq.s32.totalorder %s17, 0
    %p59 = por %p57, %p58
    %p60 = scmp.ne.s32.totalorder %s48, %s49
    %p61 = scmp.eq.s32.totalorder %s18, 3
    %p62 = por %p60, %p61
    %p64 = scmp.ne.s32.totalorder %s49, %s63
    %p65 = scmp.eq.s32.totalorder %s18, 0
    %p66 = por %p64, %p65
    %s68 = sadd.s32 %s67, 1
    %p71 = scmp.eq.s32.totalorder %s12, 3
    %p72 = scmp.ne.s32.totalorder %s67, %s69
    %p73 = scmp.eq.s32.totalorder %s12, 0
    %p74 = por %p72, %p73
    %p75 = scmp.ne.s32.totalorder %s67, %s69
    %p76 = scmp.eq.s32.totalorder %s17, 3
    %p77 = por %p75, %p76
    %p78 = scmp.ne.s32.totalorder %s69, %s70
    %p79 = scmp.eq.s32.totalorder %s17, 0
    %p80 = por %p78, %p79
    %p81 = scmp.ne.s32.totalorder %s69, %s70
    %p82 = scmp.eq.s32.totalorder %s18, 3
    %p83 = por %p81, %p82
    %p85 = scmp.ne.s32.totalorder %s70, %s84
    %p86 = scmp.eq.s32.totalorder %s18, 0
    %p87 = por %p85, %p86
    %s89 = sadd.s32 %s88, 1
    %p92 = scmp.eq.s32.totalorder %s12, 3
    %p93 = scmp.ne.s32.totalorder %s88, %s90
    %p94 = scmp.eq.s32.totalorder %s12, 0
    %p95 = por %p93, %p94
    %p96 = scmp.ne.s32.totalorder %s88, %s90
    %p97 = scmp.eq.s32.totalorder %s17, 3
    %p98 = por %p96, %p97
    %p99 = scmp.ne.s32.totalorder %s90, %s91
    %p100 = scmp.eq.s32.totalorder %s17, 0
    %p101 = por %p99, %p100
    %p102 = scmp.ne.s32.totalorder %s90, %s91
    %p103 = scmp.eq.s32.totalorder %s18, 3
    %p104 = por %p102, %p103
    %p106 = scmp.ne.s32.totalorder %s91, %s105
    %p107 = scmp.eq.s32.totalorder %s18, 0
    %p108 = por %p106, %p107
    %s109 = ssub.s32 %s12, %s19
    %p110 = scmp.eq.s32.totalorder %s109, 0
    %s112 = sadd.s32 %s111, 1
    %s113 = scalar_select %p110, %s111, %s112
    %p116 = pneg %p110
    %p117 = scmp.eq.s32.totalorder %s12, 3
    %p118 = por %p116, %p117
    %p119 = scmp.ne.s32.totalorder %s111, %s114
    %p120 = scmp.eq.s32.totalorder %s12, 0
    %p121 = por %p119, %p120
    %p122 = scmp.ne.s32.totalorder %s111, %s114
    %p123 = scmp.eq.s32.totalorder %s17, 3
    %p124 = por %p122, %p123
    %p125 = scmp.ne.s32.totalorder %s114, %s115
    %p126 = scmp.eq.s32.totalorder %s17, 0
    %p127 = por %p125, %p126
    %p128 = scmp.ne.s32.totalorder %s114, %s115
    %p129 = scmp.eq.s32.totalorder %s18, 3
    %p130 = por %p128, %p129
    %p132 = scmp.ne.s32.totalorder %s115, %s131
    %p133 = scmp.eq.s32.totalorder %s18, 0
    %p134 = por %p132, %p133
    %s135 = ssub.s32 %s12, %s19
    %p136 = scmp.eq.s32.totalorder %s135, 0
    %s138 = sadd.s32 %s137, 1
    %s139 = scalar_select %p136, %s137, %s138
    %p142 = pneg %p136
    %p143 = scmp.eq.s32.totalorder %s12, 3
    %p144 = por %p142, %p143
    %p145 = scmp.ne.s32.totalorder %s137, %s140
    %p146 = scmp.eq.s32.totalorder %s12, 0
    %p147 = por %p145, %p146
    %p148 = scmp.ne.s32.totalorder %s137, %s140
    %p149 = scmp.eq.s32.totalorder %s17, 3
    %p150 = por %p148, %p149
    %p151 = scmp.ne.s32.totalorder %s140, %s141
    %p152 = scmp.eq.s32.totalorder %s17, 0
    %p153 = por %p151, %p152
    %p154 = scmp.ne.s32.totalorder %s140, %s141
    %p155 = scmp.eq.s32.totalorder %s18, 3
    %p156 = por %p154, %p155
    %p158 = scmp.ne.s32.totalorder %s141, %s157
    %p159 = scmp.eq.s32.totalorder %s18, 0
    %p160 = por %p158, %p159
    %p161 = scmp.le.s32.totalorder 1, %s12
    %p162 = scmp.lt.s32.totalorder %s12, 5
    %p163 = pnand %p161, %p162
    %p164 = pneg %p163
    // Predicated region
    $region9: #{_forward_impl.12} parent=5 // pred_check
      _
    $region10: #{_forward_impl.12} parent=5 // pred_check_branch
      %166 = sbr.rel (%p163) target = $region12
    $region11: #{_forward_impl.12} parent=5 // pred_region
      %s167 = ssub.s32 %s12, 1
      // Predicated region
      $region13: #{_forward_impl.12} parent=11 // pred_check
        %p168 = pneg %p59
      $region14: #{_forward_impl.12} parent=11 // pred_check_branch
        %170 = sbr.rel (%p168) target = $region16
      $region15: #{_forward_impl.12} parent=11 // pred_region
        _
      $region16: #{_forward_impl.12} parent=11 // pred_fallthru
        _
      // Predicated region
      $region17: #{_forward_impl.12} parent=11 // pred_check
        %p171 = pneg %p80
      $region18: #{_forward_impl.12} parent=11 // pred_check_branch
        %173 = sbr.rel (%p171) target = $region20
      $region19: #{_forward_impl.12} parent=11 // pred_region
        _
      $region20: #{_forward_impl.12} parent=11 // pred_fallthru
        _
      // Predicated region
      $region21: #{_forward_impl.12} parent=11 // pred_check
        %p174 = pneg %p101
      $region22: #{_forward_impl.12} parent=11 // pred_check_branch
        %176 = sbr.rel (%p174) target = $region24
      $region23: #{_forward_impl.12} parent=11 // pred_region
        _
      $region24: #{_forward_impl.12} parent=11 // pred_fallthru
        _
    $region12: #{_forward_impl.12} parent=5 // pred_fallthru
      _
    %p177 = scmp.lt.s32.totalorder %s12, 4
    // Predicated region
    $region25: #{_forward_impl.12} parent=5 // pred_check
      %p178 = pneg %p177
    $region26: #{_forward_impl.12} parent=5 // pred_check_branch
      %180 = sbr.rel (%p178) target = $region28
    $region27: #{_forward_impl.12} parent=5 // pred_region
      // Predicated region
      $region29: #{_forward_impl.12} parent=27 // pred_check
        %p181 = pneg %p32
      $region30: #{_forward_impl.12} parent=27 // pred_check_branch
        %183 = sbr.rel (%p181) target = $region32
      $region31: #{_forward_impl.12} parent=27 // pred_region
        %s184 = smul.u32 64, %s12
        %p185 = scmp.lt.s32.totalorder %s184, 255
        %s186 = scalar_select %p185, %s184, 255
        %s187 = smul.addr %s186, 4
        %s188 = scalar_lea.vmem %s0, %s187
        %s189 = smul.u32 64, %s12
      $region32: #{_forward_impl.12} parent=27 // pred_fallthru
        _
    $region28: #{_forward_impl.12} parent=5 // pred_fallthru
      _
    %p190 = scmp.le.s32.totalorder 1, %s12
    %p191 = scmp.lt.s32.totalorder %s12, 5
    %p192 = pnand %p190, %p191
    %p193 = pneg %p192
    // Predicated region
    $region33: #{_forward_impl.12} parent=5 // pred_check
      _
    $region34: #{_forward_impl.12} parent=5 // pred_check_branch
      %195 = sbr.rel (%p192) target = $region36
    $region35: #{_forward_impl.12} parent=5 // pred_region
      %s196 = ssub.s32 %s12, 1
      %s197 = smul.u32 64, %s17
      %p198 = scmp.lt.s32.totalorder %s197, 255
      %s199 = scalar_select %p198, %s197, 255
      %s200 = smul.addr %s199, 4
      %s201 = scalar_lea.vmem %s0, %s200
      %p202 = pneg %p38
      %p203 = pneg %p35
      %p204 = pneg %p59
      %p205 = pneg %p56
      %p206 = pneg %p80
      %p207 = pneg %p77
      %p208 = pneg %p101
      %p209 = pneg %p98
      %p210 = pneg %p127
      %p211 = pneg %p124
      %s212 = smul.u32 64, %s17
      %p213 = scmp.lt.s32.totalorder %s212, 255
      %s214 = scalar_select %p213, %s212, 255
      %s215 = smul.addr %s214, 4
      %s216 = scalar_lea.vmem %s4, %s215
      %p217 = pneg %p153
      %p218 = pneg %p150
      %p219 = scmp.lt.s32.totalorder %s17, 3
      %s220 = scalar_select %p219, %s17, 3
      %s221 = smul.addr %s220, 8
      %s222 = scalar_lea.vmem %s5, %s221
      %s223 = smul.u32 64, %s17
      %p224 = scmp.lt.s32.totalorder %s223, 255
      %s225 = scalar_select %p224, %s223, 255
      %s226 = smul.addr %s225, 4
      %s227 = scalar_lea.vmem %s0, %s226
      %s228 = smul.u32 64, %s17
      %s229 = smul.u32 64, %s17
      %p230 = scmp.lt.s32.totalorder %s229, 255
      %s231 = scalar_select %p230, %s229, 255
      %s232 = smul.addr %s231, 4
      %s233 = scalar_lea.vmem %s4, %s232
      %s234 = smul.u32 64, %s17
      %p235 = scmp.lt.s32.totalorder %s17, 3
      %s236 = scalar_select %p235, %s17, 3
      %s237 = smul.addr %s236, 8
      %s238 = scalar_lea.vmem %s5, %s237
      %v240 = vld [vmem:[%s227] sm:$0xf]
      %v241 = vld [vmem:[%s227 + $0x4] sm:$0xf]
      %v242 = vld [vmem:[%s227 + $0x8] sm:$0xf]
      %v243 = vld [vmem:[%s227 + $0xc] sm:$0xf]
      %v244 = vld [vmem:[%s227 + $0x10] sm:$0xf]
      %v245 = vld [vmem:[%s227 + $0x14] sm:$0xf]
      %v246 = vld [vmem:[%s227 + $0x18] sm:$0xf]
      %v247 = vld [vmem:[%s227 + $0x1c] sm:$0xf]
      %v248 = vld [vmem:[%s227 + $0x20] sm:$0xf]
      %v249 = vld [vmem:[%s227 + $0x24] sm:$0xf]
      %v250 = vld [vmem:[%s227 + $0x28] sm:$0xf]
      %v251 = vld [vmem:[%s227 + $0x2c] sm:$0xf]
      %v252 = vld [vmem:[%s227 + $0x30] sm:$0xf]
      %v253 = vld [vmem:[%s227 + $0x34] sm:$0xf]
      %v254 = vld [vmem:[%s227 + $0x38] sm:$0xf]
      %v255 = vld [vmem:[%s227 + $0x3c] sm:$0xf]
      %v256 = vld [vmem:[%s227 + $0x40] sm:$0xf]
      %v257 = vld [vmem:[%s227 + $0x44] sm:$0xf]
      %v258 = vld [vmem:[%s227 + $0x48] sm:$0xf]
      %v259 = vld [vmem:[%s227 + $0x4c] sm:$0xf]
      %v260 = vld [vmem:[%s227 + $0x50] sm:$0xf]
      %v261 = vld [vmem:[%s227 + $0x54] sm:$0xf]
      %v262 = vld [vmem:[%s227 + $0x58] sm:$0xf]
      %v263 = vld [vmem:[%s227 + $0x5c] sm:$0xf]
      %v264 = vld [vmem:[%s227 + $0x60] sm:$0xf]
      %v265 = vld [vmem:[%s227 + $0x64] sm:$0xf]
      %v266 = vld [vmem:[%s227 + $0x68] sm:$0xf]
      %v267 = vld [vmem:[%s227 + $0x6c] sm:$0xf]
      %v268 = vld [vmem:[%s227 + $0x70] sm:$0xf]
      %v269 = vld [vmem:[%s227 + $0x74] sm:$0xf]
      %v270 = vld [vmem:[%s227 + $0x78] sm:$0xf]
      %v271 = vld [vmem:[%s227 + $0x7c] sm:$0xf]
      %v272 = vld [vmem:[%s227 + $0x80] sm:$0xf]
      %v273 = vld [vmem:[%s227 + $0x84] sm:$0xf]
      %v274 = vld [vmem:[%s227 + $0x88] sm:$0xf]
      %v275 = vld [vmem:[%s227 + $0x8c] sm:$0xf]
      %v276 = vld [vmem:[%s227 + $0x90] sm:$0xf]
      %v277 = vld [vmem:[%s227 + $0x94] sm:$0xf]
      %v278 = vld [vmem:[%s227 + $0x98] sm:$0xf]
      %v279 = vld [vmem:[%s227 + $0x9c] sm:$0xf]
      %v280 = vld [vmem:[%s227 + $0xa0] sm:$0xf]
      %v281 = vld [vmem:[%s227 + $0xa4] sm:$0xf]
      %v282 = vld [vmem:[%s227 + $0xa8] sm:$0xf]
      %v283 = vld [vmem:[%s227 + $0xac] sm:$0xf]
      %v284 = vld [vmem:[%s227 + $0xb0] sm:$0xf]
      %v285 = vld [vmem:[%s227 + $0xb4] sm:$0xf]
      %v286 = vld [vmem:[%s227 + $0xb8] sm:$0xf]
      %v287 = vld [vmem:[%s227 + $0xbc] sm:$0xf]
      %v288 = vld [vmem:[%s227 + $0xc0] sm:$0xf]
      %v289 = vld [vmem:[%s227 + $0xc4] sm:$0xf]
      %v290 = vld [vmem:[%s227 + $0xc8] sm:$0xf]
      %v291 = vld [vmem:[%s227 + $0xcc] sm:$0xf]
      %v292 = vld [vmem:[%s227 + $0xd0] sm:$0xf]
      %v293 = vld [vmem:[%s227 + $0xd4] sm:$0xf]
      %v294 = vld [vmem:[%s227 + $0xd8] sm:$0xf]
      %v295 = vld [vmem:[%s227 + $0xdc] sm:$0xf]
      %v296 = vld [vmem:[%s227 + $0xe0] sm:$0xf]
      %v297 = vld [vmem:[%s227 + $0xe4] sm:$0xf]
      %v298 = vld [vmem:[%s227 + $0xe8] sm:$0xf]
      %v299 = vld [vmem:[%s227 + $0xec] sm:$0xf]
      %v300 = vld [vmem:[%s227 + $0xf0] sm:$0xf]
      %v301 = vld [vmem:[%s227 + $0xf4] sm:$0xf]
      %v302 = vld [vmem:[%s227 + $0xf8] sm:$0xf]
      %v303 = vld [vmem:[%s227 + $0xfc] sm:$0xf]
      %v304 = vunpack.c.l.bf16 %v240
      %v305 = vunpack.c.l.bf16 %v241
      %v306 = vunpack.c.l.bf16 %v242
      %v307 = vunpack.c.l.bf16 %v243
      %v308 = vunpack.c.l.bf16 %v244
      %v309 = vunpack.c.l.bf16 %v245
      %v310 = vunpack.c.l.bf16 %v246
      %v311 = vunpack.c.l.bf16 %v247
      %v312 = vunpack.c.l.bf16 %v248
      %v313 = vunpack.c.l.bf16 %v249
      %v314 = vunpack.c.l.bf16 %v250
      %v315 = vunpack.c.l.bf16 %v251
      %v316 = vunpack.c.l.bf16 %v252
      %v317 = vunpack.c.l.bf16 %v253
      %v318 = vunpack.c.l.bf16 %v254
      %v319 = vunpack.c.l.bf16 %v255
      %v320 = vunpack.c.l.bf16 %v256
      %v321 = vunpack.c.l.bf16 %v257
      %v322 = vunpack.c.l.bf16 %v258
      %v323 = vunpack.c.l.bf16 %v259
      %v324 = vunpack.c.l.bf16 %v260
      %v325 = vunpack.c.l.bf16 %v261
      %v326 = vunpack.c.l.bf16 %v262
      %v327 = vunpack.c.l.bf16 %v263
      %v328 = vunpack.c.l.bf16 %v264
      %v329 = vunpack.c.l.bf16 %v265
      %v330 = vunpack.c.l.bf16 %v266
      %v331 = vunpack.c.l.bf16 %v267
      %v332 = vunpack.c.l.bf16 %v268
      %v333 = vunpack.c.l.bf16 %v269
      %v334 = vunpack.c.l.bf16 %v270
      %v335 = vunpack.c.l.bf16 %v271
      %v336 = vunpack.c.l.bf16 %v272
      %v337 = vunpack.c.l.bf16 %v273
      %v338 = vunpack.c.l.bf16 %v274
      %v339 = vunpack.c.l.bf16 %v275
      %v340 = vunpack.c.l.bf16 %v276
      %v341 = vunpack.c.l.bf16 %v277
      %v342 = vunpack.c.l.bf16 %v278
      %v343 = vunpack.c.l.bf16 %v279
      %v344 = vunpack.c.l.bf16 %v280
      %v345 = vunpack.c.l.bf16 %v281
      %v346 = vunpack.c.l.bf16 %v282
      %v347 = vunpack.c.l.bf16 %v283
      %v348 = vunpack.c.l.bf16 %v284
      %v349 = vunpack.c.l.bf16 %v285
      %v350 = vunpack.c.l.bf16 %v286
      %v351 = vunpack.c.l.bf16 %v287
      %v352 = vunpack.c.l.bf16 %v288
      %v353 = vunpack.c.l.bf16 %v289
      %v354 = vunpack.c.l.bf16 %v290
      %v355 = vunpack.c.l.bf16 %v291
      %v356 = vunpack.c.l.bf16 %v292
      %v357 = vunpack.c.l.bf16 %v293
      %v358 = vunpack.c.l.bf16 %v294
      %v359 = vunpack.c.l.bf16 %v295
      %v360 = vunpack.c.l.bf16 %v296
      %v361 = vunpack.c.l.bf16 %v297
      %v362 = vunpack.c.l.bf16 %v298
      %v363 = vunpack.c.l.bf16 %v299
      %v364 = vunpack.c.l.bf16 %v300
      %v365 = vunpack.c.l.bf16 %v301
      %v366 = vunpack.c.l.bf16 %v302
      %v367 = vunpack.c.l.bf16 %v303
      %v368 = vld [vmem:[%s1] sm:$0x1]
      %v370 = vlaneseq
      %v371 = vshrl.u32 %v370, 7
      %v372 = vsub.s32 0, %v371
      %v373 = vrot.slane %v368, %v372
      %v375 = vmul.f32 %v304, %v373
      %v376 = vmul.f32 %v305, %v373
      %v377 = vmul.f32 %v306, %v373
      %v378 = vmul.f32 %v307, %v373
      %v379 = vmul.f32 %v308, %v373
      %v380 = vmul.f32 %v309, %v373
      %v381 = vmul.f32 %v310, %v373
      %v382 = vmul.f32 %v311, %v373
      %v383 = vmul.f32 %v312, %v373
      %v384 = vmul.f32 %v313, %v373
      %v385 = vmul.f32 %v314, %v373
      %v386 = vmul.f32 %v315, %v373
      %v387 = vmul.f32 %v316, %v373
      %v388 = vmul.f32 %v317, %v373
      %v389 = vmul.f32 %v318, %v373
      %v390 = vmul.f32 %v319, %v373
      %v391 = vmul.f32 %v320, %v373
      %v392 = vmul.f32 %v321, %v373
      %v393 = vmul.f32 %v322, %v373
      %v394 = vmul.f32 %v323, %v373
      %v395 = vmul.f32 %v324, %v373
      %v396 = vmul.f32 %v325, %v373
      %v397 = vmul.f32 %v326, %v373
      %v398 = vmul.f32 %v327, %v373
      %v399 = vmul.f32 %v328, %v373
      %v400 = vmul.f32 %v329, %v373
      %v401 = vmul.f32 %v330, %v373
      %v402 = vmul.f32 %v331, %v373
      %v403 = vmul.f32 %v332, %v373
      %v404 = vmul.f32 %v333, %v373
      %v405 = vmul.f32 %v334, %v373
      %v406 = vmul.f32 %v335, %v373
      %v407 = vmul.f32 %v336, %v373
      %v408 = vmul.f32 %v337, %v373
      %v409 = vmul.f32 %v338, %v373
      %v410 = vmul.f32 %v339, %v373
      %v411 = vmul.f32 %v340, %v373
      %v412 = vmul.f32 %v341, %v373
      %v413 = vmul.f32 %v342, %v373
      %v414 = vmul.f32 %v343, %v373
      %v415 = vmul.f32 %v344, %v373
      %v416 = vmul.f32 %v345, %v373
      %v417 = vmul.f32 %v346, %v373
      %v418 = vmul.f32 %v347, %v373
      %v419 = vmul.f32 %v348, %v373
      %v420 = vmul.f32 %v349, %v373
      %v421 = vmul.f32 %v350, %v373
      %v422 = vmul.f32 %v351, %v373
      %v423 = vmul.f32 %v352, %v373
      %v424 = vmul.f32 %v353, %v373
      %v425 = vmul.f32 %v354, %v373
      %v426 = vmul.f32 %v355, %v373
      %v427 = vmul.f32 %v356, %v373
      %v428 = vmul.f32 %v357, %v373
      %v429 = vmul.f32 %v358, %v373
      %v430 = vmul.f32 %v359, %v373
      %v431 = vmul.f32 %v360, %v373
      %v432 = vmul.f32 %v361, %v373
      %v433 = vmul.f32 %v362, %v373
      %v434 = vmul.f32 %v363, %v373
      %v435 = vmul.f32 %v364, %v373
      %v436 = vmul.f32 %v365, %v373
      %v437 = vmul.f32 %v366, %v373
      %v438 = vmul.f32 %v367, %v373
      %v439 = vld [vmem:[%s2] sm:$0x1]
      %v441 = vlaneseq
      %v442 = vshrl.u32 %v441, 7
      %v443 = vsub.s32 0, %v442
      %v444 = vrot.slane %v439, %v443
      %v446 = vadd.f32 %v375, %v444
      %v447 = vadd.f32 %v376, %v444
      %v448 = vadd.f32 %v377, %v444
      %v449 = vadd.f32 %v378, %v444
      %v450 = vadd.f32 %v379, %v444
      %v451 = vadd.f32 %v380, %v444
      %v452 = vadd.f32 %v381, %v444
      %v453 = vadd.f32 %v382, %v444
      %v454 = vadd.f32 %v383, %v444
      %v455 = vadd.f32 %v384, %v444
      %v456 = vadd.f32 %v385, %v444
      %v457 = vadd.f32 %v386, %v444
      %v458 = vadd.f32 %v387, %v444
      %v459 = vadd.f32 %v388, %v444
      %v460 = vadd.f32 %v389, %v444
      %v461 = vadd.f32 %v390, %v444
      %v462 = vadd.f32 %v391, %v444
      %v463 = vadd.f32 %v392, %v444
      %v464 = vadd.f32 %v393, %v444
      %v465 = vadd.f32 %v394, %v444
      %v466 = vadd.f32 %v395, %v444
      %v467 = vadd.f32 %v396, %v444
      %v468 = vadd.f32 %v397, %v444
      %v469 = vadd.f32 %v398, %v444
      %v470 = vadd.f32 %v399, %v444
      %v471 = vadd.f32 %v400, %v444
      %v472 = vadd.f32 %v401, %v444
      %v473 = vadd.f32 %v402, %v444
      %v474 = vadd.f32 %v403, %v444
      %v475 = vadd.f32 %v404, %v444
      %v476 = vadd.f32 %v405, %v444
      %v477 = vadd.f32 %v406, %v444
      %v478 = vadd.f32 %v407, %v444
      %v479 = vadd.f32 %v408, %v444
      %v480 = vadd.f32 %v409, %v444
      %v481 = vadd.f32 %v410, %v444
      %v482 = vadd.f32 %v411, %v444
      %v483 = vadd.f32 %v412, %v444
      %v484 = vadd.f32 %v413, %v444
      %v485 = vadd.f32 %v414, %v444
      %v486 = vadd.f32 %v415, %v444
      %v487 = vadd.f32 %v416, %v444
      %v488 = vadd.f32 %v417, %v444
      %v489 = vadd.f32 %v418, %v444
      %v490 = vadd.f32 %v419, %v444
      %v491 = vadd.f32 %v420, %v444
      %v492 = vadd.f32 %v421, %v444
      %v493 = vadd.f32 %v422, %v444
      %v494 = vadd.f32 %v423, %v444
      %v495 = vadd.f32 %v424, %v444
      %v496 = vadd.f32 %v425, %v444
      %v497 = vadd.f32 %v426, %v444
      %v498 = vadd.f32 %v427, %v444
      %v499 = vadd.f32 %v428, %v444
      %v500 = vadd.f32 %v429, %v444
      %v501 = vadd.f32 %v430, %v444
      %v502 = vadd.f32 %v431, %v444
      %v503 = vadd.f32 %v432, %v444
      %v504 = vadd.f32 %v433, %v444
      %v505 = vadd.f32 %v434, %v444
      %v506 = vadd.f32 %v435, %v444
      %v507 = vadd.f32 %v436, %v444
      %v508 = vadd.f32 %v437, %v444
      %v509 = vadd.f32 %v438, %v444
      %v510 = vmax.f32 %v446, 0.0
      %v511 = vmax.f32 %v447, 0.0
      %v512 = vmax.f32 %v448, 0.0
      %v513 = vmax.f32 %v449, 0.0
      %v514 = vmax.f32 %v450, 0.0
      %v515 = vmax.f32 %v451, 0.0
      %v516 = vmax.f32 %v452, 0.0
      %v517 = vmax.f32 %v453, 0.0
      %v518 = vmax.f32 %v454, 0.0
      %v519 = vmax.f32 %v455, 0.0
      %v520 = vmax.f32 %v456, 0.0
      %v521 = vmax.f32 %v457, 0.0
      %v522 = vmax.f32 %v458, 0.0
      %v523 = vmax.f32 %v459, 0.0
      %v524 = vmax.f32 %v460, 0.0
      %v525 = vmax.f32 %v461, 0.0
      %v526 = vmax.f32 %v462, 0.0
      %v527 = vmax.f32 %v463, 0.0
      %v528 = vmax.f32 %v464, 0.0
      %v529 = vmax.f32 %v465, 0.0
      %v530 = vmax.f32 %v466, 0.0
      %v531 = vmax.f32 %v467, 0.0
      %v532 = vmax.f32 %v468, 0.0
      %v533 = vmax.f32 %v469, 0.0
      %v534 = vmax.f32 %v470, 0.0
      %v535 = vmax.f32 %v471, 0.0
      %v536 = vmax.f32 %v472, 0.0
      %v537 = vmax.f32 %v473, 0.0
      %v538 = vmax.f32 %v474, 0.0
      %v539 = vmax.f32 %v475, 0.0
      %v540 = vmax.f32 %v476, 0.0
      %v541 = vmax.f32 %v477, 0.0
      %v542 = vmax.f32 %v478, 0.0
      %v543 = vmax.f32 %v479, 0.0
      %v544 = vmax.f32 %v480, 0.0
      %v545 = vmax.f32 %v481, 0.0
      %v546 = vmax.f32 %v482, 0.0
      %v547 = vmax.f32 %v483, 0.0
      %v548 = vmax.f32 %v484, 0.0
      %v549 = vmax.f32 %v485, 0.0
      %v550 = vmax.f32 %v486, 0.0
      %v551 = vmax.f32 %v487, 0.0
      %v552 = vmax.f32 %v488, 0.0
      %v553 = vmax.f32 %v489, 0.0
      %v554 = vmax.f32 %v490, 0.0
      %v555 = vmax.f32 %v491, 0.0
      %v556 = vmax.f32 %v492, 0.0
      %v557 = vmax.f32 %v493, 0.0
      %v558 = vmax.f32 %v494, 0.0
      %v559 = vmax.f32 %v495, 0.0
      %v560 = vmax.f32 %v496, 0.0
      %v561 = vmax.f32 %v497, 0.0
      %v562 = vmax.f32 %v498, 0.0
      %v563 = vmax.f32 %v499, 0.0
      %v564 = vmax.f32 %v500, 0.0
      %v565 = vmax.f32 %v501, 0.0
      %v566 = vmax.f32 %v502, 0.0
      %v567 = vmax.f32 %v503, 0.0
      %v568 = vmax.f32 %v504, 0.0
      %v569 = vmax.f32 %v505, 0.0
      %v570 = vmax.f32 %v506, 0.0
      %v571 = vmax.f32 %v507, 0.0
      %v572 = vmax.f32 %v508, 0.0
      %v573 = vmax.f32 %v509, 0.0
      %v574 = vpack.c.bf16 %v511, %v510
      %v575 = vpack.c.bf16 %v513, %v512
      %v576 = vpack.c.bf16 %v515, %v514
      %v577 = vpack.c.bf16 %v517, %v516
      %v578 = vpack.c.bf16 %v519, %v518
      %v579 = vpack.c.bf16 %v521, %v520
      %v580 = vpack.c.bf16 %v523, %v522
      %v581 = vpack.c.bf16 %v525, %v524
      %v582 = vpack.c.bf16 %v527, %v526
      %v583 = vpack.c.bf16 %v529, %v528
      %v584 = vpack.c.bf16 %v531, %v530
      %v585 = vpack.c.bf16 %v533, %v532
      %v586 = vpack.c.bf16 %v535, %v534
      %v587 = vpack.c.bf16 %v537, %v536
      %v588 = vpack.c.bf16 %v539, %v538
      %v589 = vpack.c.bf16 %v541, %v540
      %v590 = vpack.c.bf16 %v543, %v542
      %v591 = vpack.c.bf16 %v545, %v544
      %v592 = vpack.c.bf16 %v547, %v546
      %v593 = vpack.c.bf16 %v549, %v548
      %v594 = vpack.c.bf16 %v551, %v550
      %v595 = vpack.c.bf16 %v553, %v552
      %v596 = vpack.c.bf16 %v555, %v554
      %v597 = vpack.c.bf16 %v557, %v556
      %v598 = vpack.c.bf16 %v559, %v558
      %v599 = vpack.c.bf16 %v561, %v560
      %v600 = vpack.c.bf16 %v563, %v562
      %v601 = vpack.c.bf16 %v565, %v564
      %v602 = vpack.c.bf16 %v567, %v566
      %v603 = vpack.c.bf16 %v569, %v568
      %v604 = vpack.c.bf16 %v571, %v570
      %v605 = vpack.c.bf16 %v573, %v572
      %v606 = vld [vmem:[%s3] sm:$0xf]
      %v607 = vld [vmem:[%s3 + $0x4] sm:$0xf]
      %v608 = vld [vmem:[%s3 + $0x8] sm:$0xf]
      %v609 = vld [vmem:[%s3 + $0xc] sm:$0xf]
      %v610 = vld [vmem:[%s3 + $0x10] sm:$0xf]
      %v611 = vld [vmem:[%s3 + $0x14] sm:$0xf]
      %v612 = vld [vmem:[%s3 + $0x18] sm:$0xf]
      %v613 = vld [vmem:[%s3 + $0x1c] sm:$0xf]
      %v614 = vld [vmem:[%s3 + $0x20] sm:$0xf]
      %v615 = vld [vmem:[%s3 + $0x24] sm:$0xf]
      %v616 = vld [vmem:[%s3 + $0x28] sm:$0xf]
      %v617 = vld [vmem:[%s3 + $0x2c] sm:$0xf]
      %v618 = vld [vmem:[%s3 + $0x30] sm:$0xf]
      %v619 = vld [vmem:[%s3 + $0x34] sm:$0xf]
      %v620 = vld [vmem:[%s3 + $0x38] sm:$0xf]
      %v621 = vld [vmem:[%s3 + $0x3c] sm:$0xf]
      %v638 = vunpack.c.l.b16 %v606
      %v639 = vunpack.c.l.b16 %v607
      %v640 = vunpack.c.l.b16 %v608
      %v641 = vunpack.c.l.b16 %v609
      %v642 = vunpack.c.l.b16 %v610
      %v643 = vunpack.c.l.b16 %v611
      %v644 = vunpack.c.l.b16 %v612
      %v645 = vunpack.c.l.b16 %v613
      %v646 = vunpack.c.l.b16 %v614
      %v647 = vunpack.c.l.b16 %v615
      %v648 = vunpack.c.l.b16 %v616
      %v649 = vunpack.c.l.b16 %v617
      %v650 = vunpack.c.l.b16 %v618
      %v651 = vunpack.c.l.b16 %v619
      %v652 = vunpack.c.l.b16 %v620
      %v653 = vunpack.c.l.b16 %v621
      %v654 = vpack.c.b16 %v639, %v638
      %v655 = vpack.c.b16 %v641, %v640
      %v656 = vpack.c.b16 %v643, %v642
      %v657 = vpack.c.b16 %v645, %v644
      %v658 = vpack.c.b16 %v647, %v646
      %v659 = vpack.c.b16 %v649, %v648
      %v660 = vpack.c.b16 %v651, %v650
      %v661 = vpack.c.b16 %v653, %v652
      %670 = vmatprep.subr.bf16.mxu0 0
      %671 = vmatpush1.bf16.msra.mxu0 %v654
      %672 = vmatprep.subr.bf16.mxu0 0
      %673 = vmatpush1.bf16.msra.mxu0 %v655
      %674 = vmatprep.subr.bf16.mxu0 0
      %675 = vmatpush1.bf16.msra.mxu0 %v656
      %676 = vmatprep.subr.bf16.mxu0 0
      %677 = vmatpush1.bf16.msra.mxu0 %v657
      %678 = vmatprep.subr.bf16.mxu0 0
      %679 = vmatpush1.bf16.msra.mxu0 %v658
      %680 = vmatprep.subr.bf16.mxu0 0
      %681 = vmatpush1.bf16.msra.mxu0 %v659
      %682 = vmatprep.subr.bf16.mxu0 0
      %683 = vmatpush1.bf16.msra.mxu0 %v660
      %684 = vmatprep.subr.bf16.mxu0 0
      %685 = vmatpush1.bf16.msra.mxu0 %v661
      %686 = vmatprep.subr.bf16.mxu0 0
      %687 = vmatpush1.bf16.msra.mxu0 0
      %688 = vmatprep.subr.bf16.mxu0 0
      %689 = vmatpush1.bf16.msra.mxu0 0
      %690 = vmatprep.subr.bf16.mxu0 0
      %691 = vmatpush1.bf16.msra.mxu0 0
      %692 = vmatprep.subr.bf16.mxu0 0
      %693 = vmatpush1.bf16.msra.mxu0 0
      %694 = vmatprep.subr.bf16.mxu0 0
      %695 = vmatpush1.bf16.msra.mxu0 0
      %696 = vmatprep.subr.bf16.mxu0 0
      %697 = vmatpush1.bf16.msra.mxu0 0
      %698 = vmatprep.subr.bf16.mxu0 0
      %699 = vmatpush1.bf16.msra.mxu0 0
      %700 = vmatprep.subr.bf16.mxu0 0
      %701 = vmatpush1.bf16.msra.mxu0 0
      %702 = vmatprep.mubr.bf16.mxu0 0
      %703 = vmatmul.mubr.bf16.gmra.mrb[0].mxu0 %v574
      %v704 = vpop.f32.mrb[0].mxu0
      %v705 = vadd.f32 0.0, %v704
      %v706 = vpop.f32.mrb[0].mxu0
      %v707 = vpop.f32.mrb[0].mxu0
      %v708 = vadd.f32 0.0, %v707
      %v709 = vpop.f32.mrb[0].mxu0
      %710 = vmatprep.mubr.bf16.mxu0 0
      %711 = vmatmul.mubr.bf16.gmra.mrb[0].mxu0 %v575
      %v712 = vpop.f32.mrb[0].mxu0
      %v713 = vadd.f32 0.0, %v712
      %v714 = vpop.f32.mrb[0].mxu0
      %v715 = vpop.f32.mrb[0].mxu0
      %v716 = vadd.f32 0.0, %v715
      %v717 = vpop.f32.mrb[0].mxu0
      %718 = vmatprep.mubr.bf16.mxu0 0
      %719 = vmatmul.mubr.bf16.gmra.mrb[0].mxu0 %v576
      %v720 = vpop.f32.mrb[0].mxu0
      %v721 = vadd.f32 0.0, %v720
      %v722 = vpop.f32.mrb[0].mxu0
      %v723 = vpop.f32.mrb[0].mxu0
      %v724 = vadd.f32 0.0, %v723
      %v725 = vpop.f32.mrb[0].mxu0
      %726 = vmatprep.mubr.bf16.mxu0 0
      %727 = vmatmul.mubr.bf16.gmra.mrb[0].mxu0 %v577
      %v728 = vpop.f32.mrb[0].mxu0
      %v729 = vadd.f32 0.0, %v728
      %v730 = vpop.f32.mrb[0].mxu0
      %v731 = vpop.f32.mrb[0].mxu0
      %v732 = vadd.f32 0.0, %v731
      %v733 = vpop.f32.mrb[0].mxu0
      %734 = vmatprep.mubr.bf16.mxu0 0
      %735 = vmatmul.mubr.bf16.gmra.mrb[0].mxu0 %v578
      %v736 = vpop.f32.mrb[0].mxu0
      %v737 = vadd.f32 0.0, %v736
      %v738 = vpop.f32.mrb[0].mxu0
      %v739 = vpop.f32.mrb[0].mxu0
      %v740 = vadd.f32 0.0, %v739
      %v741 = vpop.f32.mrb[0].mxu0
      %742 = vmatprep.mubr.bf16.mxu0 0
      %743 = vmatmul.mubr.bf16.gmra.mrb[0].mxu0 %v579
      %v744 = vpop.f32.mrb[0].mxu0
      %v745 = vadd.f32 0.0, %v744
      %v746 = vpop.f32.mrb[0].mxu0
      %v747 = vpop.f32.mrb[0].mxu0
      %v748 = vadd.f32 0.0, %v747
      %v749 = vpop.f32.mrb[0].mxu0
      %750 = vmatprep.mubr.bf16.mxu0 0
      %751 = vmatmul.mubr.bf16.gmra.mrb[0].mxu0 %v580
      %v752 = vpop.f32.mrb[0].mxu0
      %v753 = vadd.f32 0.0, %v752
      %v754 = vpop.f32.mrb[0].mxu0
      %v755 = vpop.f32.mrb[0].mxu0
      %v756 = vadd.f32 0.0, %v755
      %v757 = vpop.f32.mrb[0].mxu0
      %758 = vmatprep.mubr.bf16.mxu0 0
      %759 = vmatmul.mubr.bf16.gmra.mrb[0].mxu0 %v581
      %v760 = vpop.f32.mrb[0].mxu0
      %v761 = vadd.f32 0.0, %v760
      %v762 = vpop.f32.mrb[0].mxu0
      %v763 = vpop.f32.mrb[0].mxu0
      %v764 = vadd.f32 0.0, %v763
      %v765 = vpop.f32.mrb[0].mxu0
      %766 = vmatprep.mubr.bf16.mxu0 0
      %767 = vmatmul.mubr.bf16.gmra.mrb[0].mxu0 %v582
      %v768 = vpop.f32.mrb[0].mxu0
      %v769 = vadd.f32 0.0, %v768
      %v770 = vpop.f32.mrb[0].mxu0
      %v771 = vpop.f32.mrb[0].mxu0
      %v772 = vadd.f32 0.0, %v771
      %v773 = vpop.f32.mrb[0].mxu0
      %774 = vmatprep.mubr.bf16.mxu0 0
      %775 = vmatmul.mubr.bf16.gmra.mrb[0].mxu0 %v583
      %v776 = vpop.f32.mrb[0].mxu0
      %v777 = vadd.f32 0.0, %v776
      %v778 = vpop.f32.mrb[0].mxu0
      %v779 = vpop.f32.mrb[0].mxu0
      %v780 = vadd.f32 0.0, %v779
      %v781 = vpop.f32.mrb[0].mxu0
      %782 = vmatprep.mubr.bf16.mxu0 0
      %783 = vmatmul.mubr.bf16.gmra.mrb[0].mxu0 %v584
      %v784 = vpop.f32.mrb[0].mxu0
      %v785 = vadd.f32 0.0, %v784
      %v786 = vpop.f32.mrb[0].mxu0
      %v787 = vpop.f32.mrb[0].mxu0
      %v788 = vadd.f32 0.0, %v787
      %v789 = vpop.f32.mrb[0].mxu0
      %790 = vmatprep.mubr.bf16.mxu0 0
      %791 = vmatmul.mubr.bf16.gmra.mrb[0].mxu0 %v585
      %v792 = vpop.f32.mrb[0].mxu0
      %v793 = vadd.f32 0.0, %v792
      %v794 = vpop.f32.mrb[0].mxu0
      %v795 = vpop.f32.mrb[0].mxu0
      %v796 = vadd.f32 0.0, %v795
      %v797 = vpop.f32.mrb[0].mxu0
      %798 = vmatprep.mubr.bf16.mxu0 0
      %799 = vmatmul.mubr.bf16.gmra.mrb[0].mxu0 %v586
      %v800 = vpop.f32.mrb[0].mxu0
      %v801 = vadd.f32 0.0, %v800
      %v802 = vpop.f32.mrb[0].mxu0
      %v803 = vpop.f32.mrb[0].mxu0
      %v804 = vadd.f32 0.0, %v803
      %v805 = vpop.f32.mrb[0].mxu0
      %806 = vmatprep.mubr.bf16.mxu0 0
      %807 = vmatmul.mubr.bf16.gmra.mrb[0].mxu0 %v587
      %v808 = vpop.f32.mrb[0].mxu0
      %v809 = vadd.f32 0.0, %v808
      %v810 = vpop.f32.mrb[0].mxu0
      %v811 = vpop.f32.mrb[0].mxu0
      %v812 = vadd.f32 0.0, %v811
      %v813 = vpop.f32.mrb[0].mxu0
      %814 = vmatprep.mubr.bf16.mxu0 0
      %815 = vmatmul.mubr.bf16.gmra.mrb[0].mxu0 %v588
      %v816 = vpop.f32.mrb[0].mxu0
      %v817 = vadd.f32 0.0, %v816
      %v818 = vpop.f32.mrb[0].mxu0
      %v819 = vpop.f32.mrb[0].mxu0
      %v820 = vadd.f32 0.0, %v819
      %v821 = vpop.f32.mrb[0].mxu0
      %822 = vmatprep.mubr.bf16.mxu0 0
      %823 = vmatmul.mubr.bf16.gmra.mrb[0].mxu0 %v589
      %v824 = vpop.f32.mrb[0].mxu0
      %v825 = vadd.f32 0.0, %v824
      %v826 = vpop.f32.mrb[0].mxu0
      %v827 = vpop.f32.mrb[0].mxu0
      %v828 = vadd.f32 0.0, %v827
      %v829 = vpop.f32.mrb[0].mxu0
      %830 = vmatprep.mubr.bf16.mxu0 0
      %831 = vmatmul.mubr.bf16.gmra.mrb[0].mxu0 %v590
      %v832 = vpop.f32.mrb[0].mxu0
      %v833 = vadd.f32 0.0, %v832
      %v834 = vpop.f32.mrb[0].mxu0
      %v835 = vpop.f32.mrb[0].mxu0
      %v836 = vadd.f32 0.0, %v835
      %v837 = vpop.f32.mrb[0].mxu0
      %838 = vmatprep.mubr.bf16.mxu0 0
      %839 = vmatmul.mubr.bf16.gmra.mrb[0].mxu0 %v591
      %v840 = vpop.f32.mrb[0].mxu0
      %v841 = vadd.f32 0.0, %v840
      %v842 = vpop.f32.mrb[0].mxu0
      %v843 = vpop.f32.mrb[0].mxu0
      %v844 = vadd.f32 0.0, %v843
      %v845 = vpop.f32.mrb[0].mxu0
      %846 = vmatprep.mubr.bf16.mxu0 0
      %847 = vmatmul.mubr.bf16.gmra.mrb[0].mxu0 %v592
      %v848 = vpop.f32.mrb[0].mxu0
      %v849 = vadd.f32 0.0, %v848
      %v850 = vpop.f32.mrb[0].mxu0
      %v851 = vpop.f32.mrb[0].mxu0
      %v852 = vadd.f32 0.0, %v851
      %v853 = vpop.f32.mrb[0].mxu0
      %854 = vmatprep.mubr.bf16.mxu0 0
      %855 = vmatmul.mubr.bf16.gmra.mrb[0].mxu0 %v593
      %v856 = vpop.f32.mrb[0].mxu0
      %v857 = vadd.f32 0.0, %v856
      %v858 = vpop.f32.mrb[0].mxu0
      %v859 = vpop.f32.mrb[0].mxu0
      %v860 = vadd.f32 0.0, %v859
      %v861 = vpop.f32.mrb[0].mxu0
      %862 = vmatprep.mubr.bf16.mxu0 0
      %863 = vmatmul.mubr.bf16.gmra.mrb[0].mxu0 %v594
      %v864 = vpop.f32.mrb[0].mxu0
      %v865 = vadd.f32 0.0, %v864
      %v866 = vpop.f32.mrb[0].mxu0
      %v867 = vpop.f32.mrb[0].mxu0
      %v868 = vadd.f32 0.0, %v867
      %v869 = vpop.f32.mrb[0].mxu0
      %870 = vmatprep.mubr.bf16.mxu0 0
      %871 = vmatmul.mubr.bf16.gmra.mrb[0].mxu0 %v595
      %v872 = vpop.f32.mrb[0].mxu0
      %v873 = vadd.f32 0.0, %v872
      %v874 = vpop.f32.mrb[0].mxu0
      %v875 = vpop.f32.mrb[0].mxu0
      %v876 = vadd.f32 0.0, %v875
      %v877 = vpop.f32.mrb[0].mxu0
      %878 = vmatprep.mubr.bf16.mxu0 0
      %879 = vmatmul.mubr.bf16.gmra.mrb[0].mxu0 %v596
      %v880 = vpop.f32.mrb[0].mxu0
      %v881 = vadd.f32 0.0, %v880
      %v882 = vpop.f32.mrb[0].mxu0
      %v883 = vpop.f32.mrb[0].mxu0
      %v884 = vadd.f32 0.0, %v883
      %v885 = vpop.f32.mrb[0].mxu0
      %886 = vmatprep.mubr.bf16.mxu0 0
      %887 = vmatmul.mubr.bf16.gmra.mrb[0].mxu0 %v597
      %v888 = vpop.f32.mrb[0].mxu0
      %v889 = vadd.f32 0.0, %v888
      %v890 = vpop.f32.mrb[0].mxu0
      %v891 = vpop.f32.mrb[0].mxu0
      %v892 = vadd.f32 0.0, %v891
      %v893 = vpop.f32.mrb[0].mxu0
      %894 = vmatprep.mubr.bf16.mxu0 0
      %895 = vmatmul.mubr.bf16.gmra.mrb[0].mxu0 %v598
      %v896 = vpop.f32.mrb[0].mxu0
      %v897 = vadd.f32 0.0, %v896
      %v898 = vpop.f32.mrb[0].mxu0
      %v899 = vpop.f32.mrb[0].mxu0
      %v900 = vadd.f32 0.0, %v899
      %v901 = vpop.f32.mrb[0].mxu0
      %902 = vmatprep.mubr.bf16.mxu0 0
      %903 = vmatmul.mubr.bf16.gmra.mrb[0].mxu0 %v599
      %v904 = vpop.f32.mrb[0].mxu0
      %v905 = vadd.f32 0.0, %v904
      %v906 = vpop.f32.mrb[0].mxu0
      %v907 = vpop.f32.mrb[0].mxu0
      %v908 = vadd.f32 0.0, %v907
      %v909 = vpop.f32.mrb[0].mxu0
      %910 = vmatprep.mubr.bf16.mxu0 0
      %911 = vmatmul.mubr.bf16.gmra.mrb[0].mxu0 %v600
      %v912 = vpop.f32.mrb[0].mxu0
      %v913 = vadd.f32 0.0, %v912
      %v914 = vpop.f32.mrb[0].mxu0
      %v915 = vpop.f32.mrb[0].mxu0
      %v916 = vadd.f32 0.0, %v915
      %v917 = vpop.f32.mrb[0].mxu0
      %918 = vmatprep.mubr.bf16.mxu0 0
      %919 = vmatmul.mubr.bf16.gmra.mrb[0].mxu0 %v601
      %v920 = vpop.f32.mrb[0].mxu0
      %v921 = vadd.f32 0.0, %v920
      %v922 = vpop.f32.mrb[0].mxu0
      %v923 = vpop.f32.mrb[0].mxu0
      %v924 = vadd.f32 0.0, %v923
      %v925 = vpop.f32.mrb[0].mxu0
      %926 = vmatprep.mubr.bf16.mxu0 0
      %927 = vmatmul.mubr.bf16.gmra.mrb[0].mxu0 %v602
      %v928 = vpop.f32.mrb[0].mxu0
      %v929 = vadd.f32 0.0, %v928
      %v930 = vpop.f32.mrb[0].mxu0
      %v931 = vpop.f32.mrb[0].mxu0
      %v932 = vadd.f32 0.0, %v931
      %v933 = vpop.f32.mrb[0].mxu0
      %934 = vmatprep.mubr.bf16.mxu0 0
      %935 = vmatmul.mubr.bf16.gmra.mrb[0].mxu0 %v603
      %v936 = vpop.f32.mrb[0].mxu0
      %v937 = vadd.f32 0.0, %v936
      %v938 = vpop.f32.mrb[0].mxu0
      %v939 = vpop.f32.mrb[0].mxu0
      %v940 = vadd.f32 0.0, %v939
      %v941 = vpop.f32.mrb[0].mxu0
      %942 = vmatprep.mubr.bf16.mxu0 0
      %943 = vmatmul.mubr.bf16.gmra.mrb[0].mxu0 %v604
      %v944 = vpop.f32.mrb[0].mxu0
      %v945 = vadd.f32 0.0, %v944
      %v946 = vpop.f32.mrb[0].mxu0
      %v947 = vpop.f32.mrb[0].mxu0
      %v948 = vadd.f32 0.0, %v947
      %v949 = vpop.f32.mrb[0].mxu0
      %950 = vmatprep.mubr.bf16.mxu0 0
      %951 = vmatmul.mubr.bf16.gmra.mrb[0].mxu0 %v605
      %v952 = vpop.f32.mrb[0].mxu0
      %v953 = vadd.f32 0.0, %v952
      %v954 = vpop.f32.mrb[0].mxu0
      %v955 = vpop.f32.mrb[0].mxu0
      %v956 = vadd.f32 0.0, %v955
      %v957 = vpop.f32.mrb[0].mxu0
      %958 = vdwg.mxu0
      %v959 = vadd.f32 %v705, %v708
      %v960 = vadd.f32 %v959, %v713
      %v961 = vadd.f32 %v960, %v716
      %v962 = vadd.f32 %v961, %v721
      %v963 = vadd.f32 %v962, %v724
      %v964 = vadd.f32 %v963, %v729
      %v965 = vadd.f32 %v964, %v732
      %v966 = vadd.f32 %v965, %v737
      %v967 = vadd.f32 %v966, %v740
      %v968 = vadd.f32 %v967, %v745
      %v969 = vadd.f32 %v968, %v748
      %v970 = vadd.f32 %v969, %v753
      %v971 = vadd.f32 %v970, %v756
      %v972 = vadd.f32 %v971, %v761
      %v973 = vadd.f32 %v972, %v764
      %v974 = vadd.f32 %v973, %v769
      %v975 = vadd.f32 %v974, %v772
      %v976 = vadd.f32 %v975, %v777
      %v977 = vadd.f32 %v976, %v780
      %v978 = vadd.f32 %v977, %v785
      %v979 = vadd.f32 %v978, %v788
      %v980 = vadd.f32 %v979, %v793
      %v981 = vadd.f32 %v980, %v796
      %v982 = vadd.f32 %v981, %v801
      %v983 = vadd.f32 %v982, %v804
      %v984 = vadd.f32 %v983, %v809
      %v985 = vadd.f32 %v984, %v812
      %v986 = vadd.f32 %v985, %v817
      %v987 = vadd.f32 %v986, %v820
      %v988 = vadd.f32 %v987, %v825
      %v989 = vadd.f32 %v988, %v828
      %v990 = vadd.f32 %v989, %v833
      %v991 = vadd.f32 %v990, %v836
      %v992 = vadd.f32 %v991, %v841
      %v993 = vadd.f32 %v992, %v844
      %v994 = vadd.f32 %v993, %v849
      %v995 = vadd.f32 %v994, %v852
      %v996 = vadd.f32 %v995, %v857
      %v997 = vadd.f32 %v996, %v860
      %v998 = vadd.f32 %v997, %v865
      %v999 = vadd.f32 %v998, %v868
      %v1000 = vadd.f32 %v999, %v873
      %v1001 = vadd.f32 %v1000, %v876
      %v1002 = vadd.f32 %v1001, %v881
      %v1003 = vadd.f32 %v1002, %v884
      %v1004 = vadd.f32 %v1003, %v889
      %v1005 = vadd.f32 %v1004, %v892
      %v1006 = vadd.f32 %v1005, %v897
      %v1007 = vadd.f32 %v1006, %v900
      %v1008 = vadd.f32 %v1007, %v905
      %v1009 = vadd.f32 %v1008, %v908
      %v1010 = vadd.f32 %v1009, %v913
      %v1011 = vadd.f32 %v1010, %v916
      %v1012 = vadd.f32 %v1011, %v921
      %v1013 = vadd.f32 %v1012, %v924
      %v1014 = vadd.f32 %v1013, %v929
      %v1015 = vadd.f32 %v1014, %v932
      %v1016 = vadd.f32 %v1015, %v937
      %v1017 = vadd.f32 %v1016, %v940
      %v1018 = vadd.f32 %v1017, %v945
      %v1019 = vadd.f32 %v1018, %v948
      %v1020 = vadd.f32 %v1019, %v953
      %v1021 = vadd.f32 %v1020, %v956
      %v1022 = vrot.slane %v1021, 4
      %v1023 = vadd.f32 %v1021, %v1022
      %v1024 = vrot.slane %v1023, 2
      %v1025 = vadd.f32 %v1023, %v1024
      %v1026 = vrot.slane %v1025, 1
      %v1027 = vadd.f32 %v1025, %v1026
      %v1028 = vmul.f32 %v705, %v705
      %v1029 = vmul.f32 %v708, %v708
      %v1030 = vmul.f32 %v713, %v713
      %v1031 = vmul.f32 %v716, %v716
      %v1032 = vmul.f32 %v721, %v721
      %v1033 = vmul.f32 %v724, %v724
      %v1034 = vmul.f32 %v729, %v729
      %v1035 = vmul.f32 %v732, %v732
      %v1036 = vmul.f32 %v737, %v737
      %v1037 = vmul.f32 %v740, %v740
      %v1038 = vmul.f32 %v745, %v745
      %v1039 = vmul.f32 %v748, %v748
      %v1040 = vmul.f32 %v753, %v753
      %v1041 = vmul.f32 %v756, %v756
      %v1042 = vmul.f32 %v761, %v761
      %v1043 = vmul.f32 %v764, %v764
      %v1044 = vmul.f32 %v769, %v769
      %v1045 = vmul.f32 %v772, %v772
      %v1046 = vmul.f32 %v777, %v777
      %v1047 = vmul.f32 %v780, %v780
      %v1048 = vmul.f32 %v785, %v785
      %v1049 = vmul.f32 %v788, %v788
      %v1050 = vmul.f32 %v793, %v793
      %v1051 = vmul.f32 %v796, %v796
      %v1052 = vmul.f32 %v801, %v801
      %v1053 = vmul.f32 %v804, %v804
      %v1054 = vmul.f32 %v809, %v809
      %v1055 = vmul.f32 %v812, %v812
      %v1056 = vmul.f32 %v817, %v817
      %v1057 = vmul.f32 %v820, %v820
      %v1058 = vmul.f32 %v825, %v825
      %v1059 = vmul.f32 %v828, %v828
      %v1060 = vmul.f32 %v833, %v833
      %v1061 = vmul.f32 %v836, %v836
      %v1062 = vmul.f32 %v841, %v841
      %v1063 = vmul.f32 %v844, %v844
      %v1064 = vmul.f32 %v849, %v849
      %v1065 = vmul.f32 %v852, %v852
      %v1066 = vmul.f32 %v857, %v857
      %v1067 = vmul.f32 %v860, %v860
      %v1068 = vmul.f32 %v865, %v865
      %v1069 = vmul.f32 %v868, %v868
      %v1070 = vmul.f32 %v873, %v873
      %v1071 = vmul.f32 %v876, %v876
      %v1072 = vmul.f32 %v881, %v881
      %v1073 = vmul.f32 %v884, %v884
      %v1074 = vmul.f32 %v889, %v889
      %v1075 = vmul.f32 %v892, %v892
      %v1076 = vmul.f32 %v897, %v897
      %v1077 = vmul.f32 %v900, %v900
      %v1078 = vmul.f32 %v905, %v905
      %v1079 = vmul.f32 %v908, %v908
      %v1080 = vmul.f32 %v913, %v913
      %v1081 = vmul.f32 %v916, %v916
      %v1082 = vmul.f32 %v921, %v921
      %v1083 = vmul.f32 %v924, %v924
      %v1084 = vmul.f32 %v929, %v929
      %v1085 = vmul.f32 %v932, %v932
      %v1086 = vmul.f32 %v937, %v937
      %v1087 = vmul.f32 %v940, %v940
      %v1088 = vmul.f32 %v945, %v945
      %v1089 = vmul.f32 %v948, %v948
      %v1090 = vmul.f32 %v953, %v953
      %v1091 = vmul.f32 %v956, %v956
      %v1092 = vadd.f32 %v1028, %v1029
      %v1093 = vadd.f32 %v1092, %v1030
      %v1094 = vadd.f32 %v1093, %v1031
      %v1095 = vadd.f32 %v1094, %v1032
      %v1096 = vadd.f32 %v1095, %v1033
      %v1097 = vadd.f32 %v1096, %v1034
      %v1098 = vadd.f32 %v1097, %v1035
      %v1099 = vadd.f32 %v1098, %v1036
      %v1100 = vadd.f32 %v1099, %v1037
      %v1101 = vadd.f32 %v1100, %v1038
      %v1102 = vadd.f32 %v1101, %v1039
      %v1103 = vadd.f32 %v1102, %v1040
      %v1104 = vadd.f32 %v1103, %v1041
      %v1105 = vadd.f32 %v1104, %v1042
      %v1106 = vadd.f32 %v1105, %v1043
      %v1107 = vadd.f32 %v1106, %v1044
      %v1108 = vadd.f32 %v1107, %v1045
      %v1109 = vadd.f32 %v1108, %v1046
      %v1110 = vadd.f32 %v1109, %v1047
      %v1111 = vadd.f32 %v1110, %v1048
      %v1112 = vadd.f32 %v1111, %v1049
      %v1113 = vadd.f32 %v1112, %v1050
      %v1114 = vadd.f32 %v1113, %v1051
      %v1115 = vadd.f32 %v1114, %v1052
      %v1116 = vadd.f32 %v1115, %v1053
      %v1117 = vadd.f32 %v1116, %v1054
      %v1118 = vadd.f32 %v1117, %v1055
      %v1119 = vadd.f32 %v1118, %v1056
      %v1120 = vadd.f32 %v1119, %v1057
      %v1121 = vadd.f32 %v1120, %v1058
      %v1122 = vadd.f32 %v1121, %v1059
      %v1123 = vadd.f32 %v1122, %v1060
      %v1124 = vadd.f32 %v1123, %v1061
      %v1125 = vadd.f32 %v1124, %v1062
      %v1126 = vadd.f32 %v1125, %v1063
      %v1127 = vadd.f32 %v1126, %v1064
      %v1128 = vadd.f32 %v1127, %v1065
      %v1129 = vadd.f32 %v1128, %v1066
      %v1130 = vadd.f32 %v1129, %v1067
      %v1131 = vadd.f32 %v1130, %v1068
      %v1132 = vadd.f32 %v1131, %v1069
      %v1133 = vadd.f32 %v1132, %v1070
      %v1134 = vadd.f32 %v1133, %v1071
      %v1135 = vadd.f32 %v1134, %v1072
      %v1136 = vadd.f32 %v1135, %v1073
      %v1137 = vadd.f32 %v1136, %v1074
      %v1138 = vadd.f32 %v1137, %v1075
      %v1139 = vadd.f32 %v1138, %v1076
      %v1140 = vadd.f32 %v1139, %v1077
      %v1141 = vadd.f32 %v1140, %v1078
      %v1142 = vadd.f32 %v1141, %v1079
      %v1143 = vadd.f32 %v1142, %v1080
      %v1144 = vadd.f32 %v1143, %v1081
      %v1145 = vadd.f32 %v1144, %v1082
      %v1146 = vadd.f32 %v1145, %v1083
      %v1147 = vadd.f32 %v1146, %v1084
      %v1148 = vadd.f32 %v1147, %v1085
      %v1149 = vadd.f32 %v1148, %v1086
      %v1150 = vadd.f32 %v1149, %v1087
      %v1151 = vadd.f32 %v1150, %v1088
      %v1152 = vadd.f32 %v1151, %v1089
      %v1153 = vadd.f32 %v1152, %v1090
      %v1154 = vadd.f32 %v1153, %v1091
      %v1155 = vrot.slane %v1154, 4
      %v1156 = vadd.f32 %v1154, %v1155
      %v1157 = vrot.slane %v1156, 2
      %v1158 = vadd.f32 %v1156, %v1157
      %v1159 = vrot.slane %v1158, 1
      %v1160 = vadd.f32 %v1158, %v1159
      %vm1161 = vcmask 1040384
      %v1162 = vsel %vm1161, %v1027, %v1160
      %vm1163 = vcmask 1041408
      %v1164 = vsel %vm1163, %v1162, 0.0
      %1165 = vst [vmem:[%s238] sm:$0xff] %v1164
      %v1166 = vpack.c.bf16 %v708, %v705
      %v1167 = vpack.c.bf16 %v716, %v713
      %v1168 = vpack.c.bf16 %v724, %v721
      %v1169 = vpack.c.bf16 %v732, %v729
      %v1170 = vpack.c.bf16 %v740, %v737
      %v1171 = vpack.c.bf16 %v748, %v745
      %v1172 = vpack.c.bf16 %v756, %v753
      %v1173 = vpack.c.bf16 %v764, %v761
      %v1174 = vpack.c.bf16 %v772, %v769
      %v1175 = vpack.c.bf16 %v780, %v777
      %v1176 = vpack.c.bf16 %v788, %v785
      %v1177 = vpack.c.bf16 %v796, %v793
      %v1178 = vpack.c.bf16 %v804, %v801
      %v1179 = vpack.c.bf16 %v812, %v809
      %v1180 = vpack.c.bf16 %v820, %v817
      %v1181 = vpack.c.bf16 %v828, %v825
      %v1182 = vpack.c.bf16 %v836, %v833
      %v1183 = vpack.c.bf16 %v844, %v841
      %v1184 = vpack.c.bf16 %v852, %v849
      %v1185 = vpack.c.bf16 %v860, %v857
      %v1186 = vpack.c.bf16 %v868, %v865
      %v1187 = vpack.c.bf16 %v876, %v873
      %v1188 = vpack.c.bf16 %v884, %v881
      %v1189 = vpack.c.bf16 %v892, %v889
      %v1190 = vpack.c.bf16 %v900, %v897
      %v1191 = vpack.c.bf16 %v908, %v905
      %v1192 = vpack.c.bf16 %v916, %v913
      %v1193 = vpack.c.bf16 %v924, %v921
      %v1194 = vpack.c.bf16 %v932, %v929
      %v1195 = vpack.c.bf16 %v940, %v937
      %v1196 = vpack.c.bf16 %v948, %v945
      %v1197 = vpack.c.bf16 %v956, %v953
      %v1230 = vunpack.c.l.b16 %v1166
      %v1231 = vunpack.c.h.b16 %v1166
      %v1232 = vunpack.c.l.b16 %v1167
      %v1233 = vunpack.c.h.b16 %v1167
      %v1234 = vunpack.c.l.b16 %v1168
      %v1235 = vunpack.c.h.b16 %v1168
      %v1236 = vunpack.c.l.b16 %v1169
      %v1237 = vunpack.c.h.b16 %v1169
      %v1238 = vunpack.c.l.b16 %v1170
      %v1239 = vunpack.c.h.b16 %v1170
      %v1240 = vunpack.c.l.b16 %v1171
      %v1241 = vunpack.c.h.b16 %v1171
      %v1242 = vunpack.c.l.b16 %v1172
      %v1243 = vunpack.c.h.b16 %v1172
      %v1244 = vunpack.c.l.b16 %v1173
      %v1245 = vunpack.c.h.b16 %v1173
      %v1246 = vunpack.c.l.b16 %v1174
      %v1247 = vunpack.c.h.b16 %v1174
      %v1248 = vunpack.c.l.b16 %v1175
      %v1249 = vunpack.c.h.b16 %v1175
      %v1250 = vunpack.c.l.b16 %v1176
      %v1251 = vunpack.c.h.b16 %v1176
      %v1252 = vunpack.c.l.b16 %v1177
      %v1253 = vunpack.c.h.b16 %v1177
      %v1254 = vunpack.c.l.b16 %v1178
      %v1255 = vunpack.c.h.b16 %v1178
      %v1256 = vunpack.c.l.b16 %v1179
      %v1257 = vunpack.c.h.b16 %v1179
      %v1258 = vunpack.c.l.b16 %v1180
      %v1259 = vunpack.c.h.b16 %v1180
      %v1260 = vunpack.c.l.b16 %v1181
      %v1261 = vunpack.c.h.b16 %v1181
      %v1262 = vunpack.c.l.b16 %v1182
      %v1263 = vunpack.c.h.b16 %v1182
      %v1264 = vunpack.c.l.b16 %v1183
      %v1265 = vunpack.c.h.b16 %v1183
      %v1266 = vunpack.c.l.b16 %v1184
      %v1267 = vunpack.c.h.b16 %v1184
      %v1268 = vunpack.c.l.b16 %v1185
      %v1269 = vunpack.c.h.b16 %v1185
      %v1270 = vunpack.c.l.b16 %v1186
      %v1271 = vunpack.c.h.b16 %v1186
      %v1272 = vunpack.c.l.b16 %v1187
      %v1273 = vunpack.c.h.b16 %v1187
      %v1274 = vunpack.c.l.b16 %v1188
      %v1275 = vunpack.c.h.b16 %v1188
      %v1276 = vunpack.c.l.b16 %v1189
      %v1277 = vunpack.c.h.b16 %v1189
      %v1278 = vunpack.c.l.b16 %v1190
      %v1279 = vunpack.c.h.b16 %v1190
      %v1280 = vunpack.c.l.b16 %v1191
      %v1281 = vunpack.c.h.b16 %v1191
      %v1282 = vunpack.c.l.b16 %v1192
      %v1283 = vunpack.c.h.b16 %v1192
      %v1284 = vunpack.c.l.b16 %v1193
      %v1285 = vunpack.c.h.b16 %v1193
      %v1286 = vunpack.c.l.b16 %v1194
      %v1287 = vunpack.c.h.b16 %v1194
      %v1288 = vunpack.c.l.b16 %v1195
      %v1289 = vunpack.c.h.b16 %v1195
      %v1290 = vunpack.c.l.b16 %v1196
      %v1291 = vunpack.c.h.b16 %v1196
      %v1292 = vunpack.c.l.b16 %v1197
      %v1293 = vunpack.c.h.b16 %v1197
      %v1294 = vpack.c.b16 %v1230, %v1230
      %v1295 = vpack.c.b16 %v1231, %v1231
      %v1296 = vpack.c.b16 %v1232, %v1232
      %v1297 = vpack.c.b16 %v1233, %v1233
      %v1298 = vpack.c.b16 %v1234, %v1234
      %v1299 = vpack.c.b16 %v1235, %v1235
      %v1300 = vpack.c.b16 %v1236, %v1236
      %v1301 = vpack.c.b16 %v1237, %v1237
      %v1302 = vpack.c.b16 %v1238, %v1238
      %v1303 = vpack.c.b16 %v1239, %v1239
      %v1304 = vpack.c.b16 %v1240, %v1240
      %v1305 = vpack.c.b16 %v1241, %v1241
      %v1306 = vpack.c.b16 %v1242, %v1242
      %v1307 = vpack.c.b16 %v1243, %v1243
      %v1308 = vpack.c.b16 %v1244, %v1244
      %v1309 = vpack.c.b16 %v1245, %v1245
      %v1310 = vpack.c.b16 %v1246, %v1246
      %v1311 = vpack.c.b16 %v1247, %v1247
      %v1312 = vpack.c.b16 %v1248, %v1248
      %v1313 = vpack.c.b16 %v1249, %v1249
      %v1314 = vpack.c.b16 %v1250, %v1250
      %v1315 = vpack.c.b16 %v1251, %v1251
      %v1316 = vpack.c.b16 %v1252, %v1252
      %v1317 = vpack.c.b16 %v1253, %v1253
      %v1318 = vpack.c.b16 %v1254, %v1254
      %v1319 = vpack.c.b16 %v1255, %v1255
      %v1320 = vpack.c.b16 %v1256, %v1256
      %v1321 = vpack.c.b16 %v1257, %v1257
      %v1322 = vpack.c.b16 %v1258, %v1258
      %v1323 = vpack.c.b16 %v1259, %v1259
      %v1324 = vpack.c.b16 %v1260, %v1260
      %v1325 = vpack.c.b16 %v1261, %v1261
      %v1326 = vpack.c.b16 %v1262, %v1262
      %v1327 = vpack.c.b16 %v1263, %v1263
      %v1328 = vpack.c.b16 %v1264, %v1264
      %v1329 = vpack.c.b16 %v1265, %v1265
      %v1330 = vpack.c.b16 %v1266, %v1266
      %v1331 = vpack.c.b16 %v1267, %v1267
      %v1332 = vpack.c.b16 %v1268, %v1268
      %v1333 = vpack.c.b16 %v1269, %v1269
      %v1334 = vpack.c.b16 %v1270, %v1270
      %v1335 = vpack.c.b16 %v1271, %v1271
      %v1336 = vpack.c.b16 %v1272, %v1272
      %v1337 = vpack.c.b16 %v1273, %v1273
      %v1338 = vpack.c.b16 %v1274, %v1274
      %v1339 = vpack.c.b16 %v1275, %v1275
      %v1340 = vpack.c.b16 %v1276, %v1276
      %v1341 = vpack.c.b16 %v1277, %v1277
      %v1342 = vpack.c.b16 %v1278, %v1278
      %v1343 = vpack.c.b16 %v1279, %v1279
      %v1344 = vpack.c.b16 %v1280, %v1280
      %v1345 = vpack.c.b16 %v1281, %v1281
      %v1346 = vpack.c.b16 %v1282, %v1282
      %v1347 = vpack.c.b16 %v1283, %v1283
      %v1348 = vpack.c.b16 %v1284, %v1284
      %v1349 = vpack.c.b16 %v1285, %v1285
      %v1350 = vpack.c.b16 %v1286, %v1286
      %v1351 = vpack.c.b16 %v1287, %v1287
      %v1352 = vpack.c.b16 %v1288, %v1288
      %v1353 = vpack.c.b16 %v1289, %v1289
      %v1354 = vpack.c.b16 %v1290, %v1290
      %v1355 = vpack.c.b16 %v1291, %v1291
      %v1356 = vpack.c.b16 %v1292, %v1292
      %v1357 = vpack.c.b16 %v1293, %v1293
      %1422 = vst [vmem:[%s233] sm:$0xf] %v1294
      %1423 = vst [vmem:[%s233 + $0x4] sm:$0xf] %v1295
      %1424 = vst [vmem:[%s233 + $0x8] sm:$0xf] %v1296
      %1425 = vst [vmem:[%s233 + $0xc] sm:$0xf] %v1297
      %1426 = vst [vmem:[%s233 + $0x10] sm:$0xf] %v1298
      %1427 = vst [vmem:[%s233 + $0x14] sm:$0xf] %v1299
      %1428 = vst [vmem:[%s233 + $0x18] sm:$0xf] %v1300
      %1429 = vst [vmem:[%s233 + $0x1c] sm:$0xf] %v1301
      %1430 = vst [vmem:[%s233 + $0x20] sm:$0xf] %v1302
      %1431 = vst [vmem:[%s233 + $0x24] sm:$0xf] %v1303
      %1432 = vst [vmem:[%s233 + $0x28] sm:$0xf] %v1304
      %1433 = vst [vmem:[%s233 + $0x2c] sm:$0xf] %v1305
      %1434 = vst [vmem:[%s233 + $0x30] sm:$0xf] %v1306
      %1435 = vst [vmem:[%s233 + $0x34] sm:$0xf] %v1307
      %1436 = vst [vmem:[%s233 + $0x38] sm:$0xf] %v1308
      %1437 = vst [vmem:[%s233 + $0x3c] sm:$0xf] %v1309
      %1438 = vst [vmem:[%s233 + $0x40] sm:$0xf] %v1310
      %1439 = vst [vmem:[%s233 + $0x44] sm:$0xf] %v1311
      %1440 = vst [vmem:[%s233 + $0x48] sm:$0xf] %v1312
      %1441 = vst [vmem:[%s233 + $0x4c] sm:$0xf] %v1313
      %1442 = vst [vmem:[%s233 + $0x50] sm:$0xf] %v1314
      %1443 = vst [vmem:[%s233 + $0x54] sm:$0xf] %v1315
      %1444 = vst [vmem:[%s233 + $0x58] sm:$0xf] %v1316
      %1445 = vst [vmem:[%s233 + $0x5c] sm:$0xf] %v1317
      %1446 = vst [vmem:[%s233 + $0x60] sm:$0xf] %v1318
      %1447 = vst [vmem:[%s233 + $0x64] sm:$0xf] %v1319
      %1448 = vst [vmem:[%s233 + $0x68] sm:$0xf] %v1320
      %1449 = vst [vmem:[%s233 + $0x6c] sm:$0xf] %v1321
      %1450 = vst [vmem:[%s233 + $0x70] sm:$0xf] %v1322
      %1451 = vst [vmem:[%s233 + $0x74] sm:$0xf] %v1323
      %1452 = vst [vmem:[%s233 + $0x78] sm:$0xf] %v1324
      %1453 = vst [vmem:[%s233 + $0x7c] sm:$0xf] %v1325
      %1454 = vst [vmem:[%s233 + $0x80] sm:$0xf] %v1326
      %1455 = vst [vmem:[%s233 + $0x84] sm:$0xf] %v1327
      %1456 = vst [vmem:[%s233 + $0x88] sm:$0xf] %v1328
      %1457 = vst [vmem:[%s233 + $0x8c] sm:$0xf] %v1329
      %1458 = vst [vmem:[%s233 + $0x90] sm:$0xf] %v1330
      %1459 = vst [vmem:[%s233 + $0x94] sm:$0xf] %v1331
      %1460 = vst [vmem:[%s233 + $0x98] sm:$0xf] %v1332
      %1461 = vst [vmem:[%s233 + $0x9c] sm:$0xf] %v1333
      %1462 = vst [vmem:[%s233 + $0xa0] sm:$0xf] %v1334
      %1463 = vst [vmem:[%s233 + $0xa4] sm:$0xf] %v1335
      %1464 = vst [vmem:[%s233 + $0xa8] sm:$0xf] %v1336
      %1465 = vst [vmem:[%s233 + $0xac] sm:$0xf] %v1337
      %1466 = vst [vmem:[%s233 + $0xb0] sm:$0xf] %v1338
      %1467 = vst [vmem:[%s233 + $0xb4] sm:$0xf] %v1339
      %1468 = vst [vmem:[%s233 + $0xb8] sm:$0xf] %v1340
      %1469 = vst [vmem:[%s233 + $0xbc] sm:$0xf] %v1341
      %1470 = vst [vmem:[%s233 + $0xc0] sm:$0xf] %v1342
      %1471 = vst [vmem:[%s233 + $0xc4] sm:$0xf] %v1343
      %1472 = vst [vmem:[%s233 + $0xc8] sm:$0xf] %v1344
      %1473 = vst [vmem:[%s233 + $0xcc] sm:$0xf] %v1345
      %1474 = vst [vmem:[%s233 + $0xd0] sm:$0xf] %v1346
      %1475 = vst [vmem:[%s233 + $0xd4] sm:$0xf] %v1347
      %1476 = vst [vmem:[%s233 + $0xd8] sm:$0xf] %v1348
      %1477 = vst [vmem:[%s233 + $0xdc] sm:$0xf] %v1349
      %1478 = vst [vmem:[%s233 + $0xe0] sm:$0xf] %v1350
      %1479 = vst [vmem:[%s233 + $0xe4] sm:$0xf] %v1351
      %1480 = vst [vmem:[%s233 + $0xe8] sm:$0xf] %v1352
      %1481 = vst [vmem:[%s233 + $0xec] sm:$0xf] %v1353
      %1482 = vst [vmem:[%s233 + $0xf0] sm:$0xf] %v1354
      %1483 = vst [vmem:[%s233 + $0xf4] sm:$0xf] %v1355
      %1484 = vst [vmem:[%s233 + $0xf8] sm:$0xf] %v1356
      %1485 = vst [vmem:[%s233 + $0xfc] sm:$0xf] %v1357
      %s1486 = smul.u32 64, %s17
      %p1487 = scmp.lt.s32.totalorder %s1486, 255
      %s1488 = scalar_select %p1487, %s1486, 255
      %s1489 = smul.addr %s1488, 4
      %s1490 = scalar_lea.vmem %s4, %s1489
      %p1491 = scmp.lt.s32.totalorder %s17, 3
      %s1492 = scalar_select %p1491, %s17, 3
      %s1493 = smul.addr %s1492, 8
      %s1494 = scalar_lea.vmem %s5, %s1493
      // Predicated region
      $region37: #{_forward_impl.12} parent=35 // pred_check
        %p1495 = pneg %p124
      $region38: #{_forward_impl.12} parent=35 // pred_check_branch
        %1497 = sbr.rel (%p1495) target = $region40
      $region39: #{_forward_impl.12} parent=35 // pred_region
        %s1498 = smul.u32 64, %s17
      $region40: #{_forward_impl.12} parent=35 // pred_fallthru
        _
      // Predicated region
      $region41: #{_forward_impl.12} parent=35 // pred_check
        %p1499 = pneg %p150
      $region42: #{_forward_impl.12} parent=35 // pred_check_branch
        %1501 = sbr.rel (%p1499) target = $region44
      $region43: #{_forward_impl.12} parent=35 // pred_region
        _
      $region44: #{_forward_impl.12} parent=35 // pred_fallthru
        _
    $region36: #{_forward_impl.12} parent=5 // pred_fallthru
      _
    %p1502 = scmp.le.s32.totalorder 2, %s12
    // Predicated region
    $region45: #{_forward_impl.12} parent=5 // pred_check
      %p1503 = pneg %p1502
    $region46: #{_forward_impl.12} parent=5 // pred_check_branch
      %1505 = sbr.rel (%p1503) target = $region48
    $region47: #{_forward_impl.12} parent=5 // pred_region
      %s1506 = ssub.s32 %s12, 2
      // Predicated region
      $region49: #{_forward_impl.12} parent=47 // pred_check
        %p1507 = pneg %p130
      $region50: #{_forward_impl.12} parent=47 // pred_check_branch
        %1509 = sbr.rel (%p1507) target = $region52
      $region51: #{_forward_impl.12} parent=47 // pred_region
        %s1510 = smul.u32 64, %s18
        %p1511 = scmp.lt.s32.totalorder %s1510, 255
        %s1512 = scalar_select %p1511, %s1510, 255
        %s1513 = smul.addr %s1512, 4
        %s1514 = scalar_lea.vmem %s4, %s1513
      $region52: #{_forward_impl.12} parent=47 // pred_fallthru
        _
      // Predicated region
      $region53: #{_forward_impl.12} parent=47 // pred_check
        %p1515 = pneg %p156
      $region54: #{_forward_impl.12} parent=47 // pred_check_branch
        %1517 = sbr.rel (%p1515) target = $region56
      $region55: #{_forward_impl.12} parent=47 // pred_region
        %p1518 = scmp.lt.s32.totalorder %s18, 3
        %s1519 = scalar_select %p1518, %s18, 3
        %s1520 = smul.addr %s1519, 8
        %s1521 = scalar_lea.vmem %s5, %s1520
      $region56: #{_forward_impl.12} parent=47 // pred_fallthru
        _
    $region48: #{_forward_impl.12} parent=5 // pred_fallthru
      _
  $region6: #{_forward_impl.12} parent=0 // loop_footer
    %s16 = sadd.s32 1, %s12
  $region7: #{_forward_impl.12} parent=0 // loop_footer_branch
    %11 = sbr.rel target = $region3
  $region8: #{_forward_impl.12} parent=0 // loop_exit
    _

// kernel: _forward_impl.13
$region0: #{_forward_impl.13}
  #allocation0 [shape = 'u32[]', space=smem, size = 0x4, offset = 0x4, fixed_abs, tag = 'smem constant byte address 0x4 - core index']
  #allocation1 [shape = 'u32[144,128]{1,0:T(1,128)}', space=vmem, size = 0x12000, scoped, tag = 'internal scratch']
  %s0 = inlined_call_operand.vmem [shape: bf16[8192,128], index: 0, kind: input, shape index: {}]
  %s1 = inlined_call_operand.vmem [shape: f32[1,128], index: 1, kind: input, shape index: {}]
  %s2 = inlined_call_operand.vmem [shape: f32[1,128], index: 2, kind: input, shape index: {}]
  %s3 = inlined_call_operand.vmem [shape: bf16[128,128], index: 3, kind: input, shape index: {}]
  %s4 = inlined_call_operand.vmem [shape: bf16[8192,128], index: 4, kind: output, shape index: {0}]
  %s5 = inlined_call_operand.vmem [shape: f32[128,128], index: 5, kind: output, shape index: {1}]
  %6 = xla_tuple %s4, %s5
  %s7 = sld [smem:[#allocation0]]
  $region57: #{_forward_impl.13} parent=0
    _
  %s9 = ssub.s32 1, %s7
  %s10 = scalar_select 0, %s9, %s7
  loop: start=0, step=1, limit=18
  $region2: #{_forward_impl.13} parent=0 // loop_pre_header
    _
  $region3: #{_forward_impl.13} parent=0 // loop_header
    %s12 = sphi 0, %s16
    %p13 = scmp.ge.s32.totalorder %s12, 18
    %s22 = sphi 0, %s24
    %s25 = sphi 0, %s22
    %s26 = sphi 0, %s25
    %s42 = sphi 0, %s26
    %s46 = sphi 0, %s46
    %s48 = sphi 0, %s46
    %s49 = sphi 0, %s48
    %s63 = sphi 0, %s49
    %s67 = sphi 0, %s67
    %s69 = sphi 0, %s67
    %s70 = sphi 0, %s69
    %s84 = sphi 0, %s70
    %s88 = sphi 0, %s88
    %s90 = sphi 0, %s88
    %s91 = sphi 0, %s90
    %s105 = sphi 0, %s91
    %s111 = sphi 0, %s113
    %s114 = sphi 0, %s111
    %s115 = sphi 0, %s114
    %s131 = sphi 0, %s115
    %s137 = sphi 0, %s139
    %s140 = sphi 0, %s137
    %s141 = sphi 0, %s140
    %s157 = sphi 0, %s141
  $region4: #{_forward_impl.13} parent=0 // loop_header_branch
    %15 = sbr.rel (%p13) target = $region8
  $region5: #{_forward_impl.13} parent=0 // loop_body
    %s17 = ssub.s32 %s12, 1
    %s18 = ssub.s32 %s12, 2
    %s19 = sadd.s32 %s12, 1
    %s20 = ssub.s32 %s12, %s19
    %p21 = scmp.eq.s32.totalorder %s20, 0
    %s23 = sadd.s32 %s22, 1
    %s24 = scalar_select %p21, %s22, %s23
    %p27 = pneg %p21
    %p28 = scmp.eq.s32.totalorder %s12, 15
    %p29 = por %p27, %p28
    %p30 = scmp.ne.s32.totalorder %s22, %s25
    %p31 = scmp.eq.s32.totalorder %s12, 0
    %p32 = por %p30, %p31
    %p33 = scmp.ne.s32.totalorder %s22, %s25
    %p34 = scmp.eq.s32.totalorder %s17, 15
    %p35 = por %p33, %p34
    %p36 = scmp.ne.s32.totalorder %s25, %s26
    %p37 = scmp.eq.s32.totalorder %s17, 0
    %p38 = por %p36, %p37
    %p39 = scmp.ne.s32.totalorder %s25, %s26
    %p40 = scmp.eq.s32.totalorder %s18, 15
    %p41 = por %p39, %p40
    %p43 = scmp.ne.s32.totalorder %s26, %s42
    %p44 = scmp.eq.s32.totalorder %s18, 0
    %p45 = por %p43, %p44
    %s47 = sadd.s32 %s46, 1
    %p50 = scmp.eq.s32.totalorder %s12, 15
    %p51 = scmp.ne.s32.totalorder %s46, %s48
    %p52 = scmp.eq.s32.totalorder %s12, 0
    %p53 = por %p51, %p52
    %p54 = scmp.ne.s32.totalorder %s46, %s48
    %p55 = scmp.eq.s32.totalorder %s17, 15
    %p56 = por %p54, %p55
    %p57 = scmp.ne.s32.totalorder %s48, %s49
    %p58 = scmp.eq.s32.totalorder %s17, 0
    %p59 = por %p57, %p58
    %p60 = scmp.ne.s32.totalorder %s48, %s49
    %p61 = scmp.eq.s32.totalorder %s18, 15
    %p62 = por %p60, %p61
    %p64 = scmp.ne.s32.totalorder %s49, %s63
    %p65 = scmp.eq.s32.totalorder %s18, 0
    %p66 = por %p64, %p65
    %s68 = sadd.s32 %s67, 1
    %p71 = scmp.eq.s32.totalorder %s12, 15
    %p72 = scmp.ne.s32.totalorder %s67, %s69
    %p73 = scmp.eq.s32.totalorder %s12, 0
    %p74 = por %p72, %p73
    %p75 = scmp.ne.s32.totalorder %s67, %s69
    %p76 = scmp.eq.s32.totalorder %s17, 15
    %p77 = por %p75, %p76
    %p78 = scmp.ne.s32.totalorder %s69, %s70
    %p79 = scmp.eq.s32.totalorder %s17, 0
    %p80 = por %p78, %p79
    %p81 = scmp.ne.s32.totalorder %s69, %s70
    %p82 = scmp.eq.s32.totalorder %s18, 15
    %p83 = por %p81, %p82
    %p85 = scmp.ne.s32.totalorder %s70, %s84
    %p86 = scmp.eq.s32.totalorder %s18, 0
    %p87 = por %p85, %p86
    %s89 = sadd.s32 %s88, 1
    %p92 = scmp.eq.s32.totalorder %s12, 15
    %p93 = scmp.ne.s32.totalorder %s88, %s90
    %p94 = scmp.eq.s32.totalorder %s12, 0
    %p95 = por %p93, %p94
    %p96 = scmp.ne.s32.totalorder %s88, %s90
    %p97 = scmp.eq.s32.totalorder %s17, 15
    %p98 = por %p96, %p97
    %p99 = scmp.ne.s32.totalorder %s90, %s91
    %p100 = scmp.eq.s32.totalorder %s17, 0
    %p101 = por %p99, %p100
    %p102 = scmp.ne.s32.totalorder %s90, %s91
    %p103 = scmp.eq.s32.totalorder %s18, 15
    %p104 = por %p102, %p103
    %p106 = scmp.ne.s32.totalorder %s91, %s105
    %p107 = scmp.eq.s32.totalorder %s18, 0
    %p108 = por %p106, %p107
    %s109 = ssub.s32 %s12, %s19
    %p110 = scmp.eq.s32.totalorder %s109, 0
    %s112 = sadd.s32 %s111, 1
    %s113 = scalar_select %p110, %s111, %s112
    %p116 = pneg %p110
    %p117 = scmp.eq.s32.totalorder %s12, 15
    %p118 = por %p116, %p117
    %p119 = scmp.ne.s32.totalorder %s111, %s114
    %p120 = scmp.eq.s32.totalorder %s12, 0
    %p121 = por %p119, %p120
    %p122 = scmp.ne.s32.totalorder %s111, %s114
    %p123 = scmp.eq.s32.totalorder %s17, 15
    %p124 = por %p122, %p123
    %p125 = scmp.ne.s32.totalorder %s114, %s115
    %p126 = scmp.eq.s32.totalorder %s17, 0
    %p127 = por %p125, %p126
    %p128 = scmp.ne.s32.totalorder %s114, %s115
    %p129 = scmp.eq.s32.totalorder %s18, 15
    %p130 = por %p128, %p129
    %p132 = scmp.ne.s32.totalorder %s115, %s131
    %p133 = scmp.eq.s32.totalorder %s18, 0
    %p134 = por %p132, %p133
    %s135 = ssub.s32 %s12, %s19
    %p136 = scmp.eq.s32.totalorder %s135, 0
    %s138 = sadd.s32 %s137, 1
    %s139 = scalar_select %p136, %s137, %s138
    %p142 = pneg %p136
    %p143 = scmp.eq.s32.totalorder %s12, 15
    %p144 = por %p142, %p143
    %p145 = scmp.ne.s32.totalorder %s137, %s140
    %p146 = scmp.eq.s32.totalorder %s12, 0
    %p147 = por %p145, %p146
    %p148 = scmp.ne.s32.totalorder %s137, %s140
    %p149 = scmp.eq.s32.totalorder %s17, 15
    %p150 = por %p148, %p149
    %p151 = scmp.ne.s32.totalorder %s140, %s141
    %p152 = scmp.eq.s32.totalorder %s17, 0
    %p153 = por %p151, %p152
    %p154 = scmp.ne.s32.totalorder %s140, %s141
    %p155 = scmp.eq.s32.totalorder %s18, 15
    %p156 = por %p154, %p155
    %p158 = scmp.ne.s32.totalorder %s141, %s157
    %p159 = scmp.eq.s32.totalorder %s18, 0
    %p160 = por %p158, %p159
    %p161 = scmp.le.s32.totalorder 1, %s12
    %p162 = scmp.lt.s32.totalorder %s12, 17
    %p163 = pnand %p161, %p162
    %p164 = pneg %p163
    // Predicated region
    $region9: #{_forward_impl.13} parent=5 // pred_check
      _
    $region10: #{_forward_impl.13} parent=5 // pred_check_branch
      %166 = sbr.rel (%p163) target = $region12
    $region11: #{_forward_impl.13} parent=5 // pred_region
      %s167 = ssub.s32 %s12, 1
      // Predicated region
      $region13: #{_forward_impl.13} parent=11 // pred_check
        %p168 = pneg %p59
      $region14: #{_forward_impl.13} parent=11 // pred_check_branch
        %170 = sbr.rel (%p168) target = $region16
      $region15: #{_forward_impl.13} parent=11 // pred_region
        _
      $region16: #{_forward_impl.13} parent=11 // pred_fallthru
        _
      // Predicated region
      $region17: #{_forward_impl.13} parent=11 // pred_check
        %p171 = pneg %p80
      $region18: #{_forward_impl.13} parent=11 // pred_check_branch
        %173 = sbr.rel (%p171) target = $region20
      $region19: #{_forward_impl.13} parent=11 // pred_region
        _
      $region20: #{_forward_impl.13} parent=11 // pred_fallthru
        _
      // Predicated region
      $region21: #{_forward_impl.13} parent=11 // pred_check
        %p174 = pneg %p101
      $region22: #{_forward_impl.13} parent=11 // pred_check_branch
        %176 = sbr.rel (%p174) target = $region24
      $region23: #{_forward_impl.13} parent=11 // pred_region
        _
      $region24: #{_forward_impl.13} parent=11 // pred_fallthru
        _
    $region12: #{_forward_impl.13} parent=5 // pred_fallthru
      _
    %p177 = scmp.lt.s32.totalorder %s12, 16
    // Predicated region
    $region25: #{_forward_impl.13} parent=5 // pred_check
      %p178 = pneg %p177
    $region26: #{_forward_impl.13} parent=5 // pred_check_branch
      %180 = sbr.rel (%p178) target = $region28
    $region27: #{_forward_impl.13} parent=5 // pred_region
      // Predicated region
      $region29: #{_forward_impl.13} parent=27 // pred_check
        %p181 = pneg %p32
      $region30: #{_forward_impl.13} parent=27 // pred_check_branch
        %183 = sbr.rel (%p181) target = $region32
      $region31: #{_forward_impl.13} parent=27 // pred_region
        %s184 = smul.u32 64, %s12
        %p185 = scmp.lt.s32.totalorder %s184, 1023
        %s186 = scalar_select %p185, %s184, 1023
        %s187 = smul.addr %s186, 4
        %s188 = scalar_lea.vmem %s0, %s187
        %s189 = smul.u32 64, %s12
      $region32: #{_forward_impl.13} parent=27 // pred_fallthru
        _
    $region28: #{_forward_impl.13} parent=5 // pred_fallthru
      _
    %p190 = scmp.le.s32.totalorder 1, %s12
    %p191 = scmp.lt.s32.totalorder %s12, 17
    %p192 = pnand %p190, %p191
    %p193 = pneg %p192
    // Predicated region
    $region33: #{_forward_impl.13} parent=5 // pred_check
      _
    $region34: #{_forward_impl.13} parent=5 // pred_check_branch
      %195 = sbr.rel (%p192) target = $region36
    $region35: #{_forward_impl.13} parent=5 // pred_region
      %s196 = ssub.s32 %s12, 1
      %s197 = smul.u32 64, %s17
      %p198 = scmp.lt.s32.totalorder %s197, 1023
      %s199 = scalar_select %p198, %s197, 1023
      %s200 = smul.addr %s199, 4
      %s201 = scalar_lea.vmem %s0, %s200
      %p202 = pneg %p38
      %p203 = pneg %p35
      %p204 = pneg %p59
      %p205 = pneg %p56
      %p206 = pneg %p80
      %p207 = pneg %p77
      %p208 = pneg %p101
      %p209 = pneg %p98
      %p210 = pneg %p127
      %p211 = pneg %p124
      %s212 = smul.u32 64, %s17
      %p213 = scmp.lt.s32.totalorder %s212, 1023
      %s214 = scalar_select %p213, %s212, 1023
      %s215 = smul.addr %s214, 4
      %s216 = scalar_lea.vmem %s4, %s215
      %p217 = pneg %p153
      %p218 = pneg %p150
      %p219 = scmp.lt.s32.totalorder %s17, 15
      %s220 = scalar_select %p219, %s17, 15
      %s221 = smul.addr %s220, 8
      %s222 = scalar_lea.vmem %s5, %s221
      %s223 = smul.u32 64, %s17
      %p224 = scmp.lt.s32.totalorder %s223, 1023
      %s225 = scalar_select %p224, %s223, 1023
      %s226 = smul.addr %s225, 4
      %s227 = scalar_lea.vmem %s0, %s226
      %s228 = smul.u32 64, %s17
      %s229 = smul.u32 64, %s17
      %p230 = scmp.lt.s32.totalorder %s229, 1023
      %s231 = scalar_select %p230, %s229, 1023
      %s232 = smul.addr %s231, 4
      %s233 = scalar_lea.vmem %s4, %s232
      %s234 = smul.u32 64, %s17
      %p235 = scmp.lt.s32.totalorder %s17, 15
      %s236 = scalar_select %p235, %s17, 15
      %s237 = smul.addr %s236, 8
      %s238 = scalar_lea.vmem %s5, %s237
      %v240 = vld [vmem:[%s227] sm:$0xf]
      %v241 = vld [vmem:[%s227 + $0x4] sm:$0xf]
      %v242 = vld [vmem:[%s227 + $0x8] sm:$0xf]
      %v243 = vld [vmem:[%s227 + $0xc] sm:$0xf]
      %v244 = vld [vmem:[%s227 + $0x10] sm:$0xf]
      %v245 = vld [vmem:[%s227 + $0x14] sm:$0xf]
      %v246 = vld [vmem:[%s227 + $0x18] sm:$0xf]
      %v247 = vld [vmem:[%s227 + $0x1c] sm:$0xf]
      %v248 = vld [vmem:[%s227 + $0x20] sm:$0xf]
      %v249 = vld [vmem:[%s227 + $0x24] sm:$0xf]
      %v250 = vld [vmem:[%s227 + $0x28] sm:$0xf]
      %v251 = vld [vmem:[%s227 + $0x2c] sm:$0xf]
      %v252 = vld [vmem:[%s227 + $0x30] sm:$0xf]
      %v253 = vld [vmem:[%s227 + $0x34] sm:$0xf]
      %v254 = vld [vmem:[%s227 + $0x38] sm:$0xf]
      %v255 = vld [vmem:[%s227 + $0x3c] sm:$0xf]
      %v256 = vld [vmem:[%s227 + $0x40] sm:$0xf]
      %v257 = vld [vmem:[%s227 + $0x44] sm:$0xf]
      %v258 = vld [vmem:[%s227 + $0x48] sm:$0xf]
      %v259 = vld [vmem:[%s227 + $0x4c] sm:$0xf]
      %v260 = vld [vmem:[%s227 + $0x50] sm:$0xf]
      %v261 = vld [vmem:[%s227 + $0x54] sm:$0xf]
      %v262 = vld [vmem:[%s227 + $0x58] sm:$0xf]
      %v263 = vld [vmem:[%s227 + $0x5c] sm:$0xf]
      %v264 = vld [vmem:[%s227 + $0x60] sm:$0xf]
      %v265 = vld [vmem:[%s227 + $0x64] sm:$0xf]
      %v266 = vld [vmem:[%s227 + $0x68] sm:$0xf]
      %v267 = vld [vmem:[%s227 + $0x6c] sm:$0xf]
      %v268 = vld [vmem:[%s227 + $0x70] sm:$0xf]
      %v269 = vld [vmem:[%s227 + $0x74] sm:$0xf]
      %v270 = vld [vmem:[%s227 + $0x78] sm:$0xf]
      %v271 = vld [vmem:[%s227 + $0x7c] sm:$0xf]
      %v272 = vld [vmem:[%s227 + $0x80] sm:$0xf]
      %v273 = vld [vmem:[%s227 + $0x84] sm:$0xf]
      %v274 = vld [vmem:[%s227 + $0x88] sm:$0xf]
      %v275 = vld [vmem:[%s227 + $0x8c] sm:$0xf]
      %v276 = vld [vmem:[%s227 + $0x90] sm:$0xf]
      %v277 = vld [vmem:[%s227 + $0x94] sm:$0xf]
      %v278 = vld [vmem:[%s227 + $0x98] sm:$0xf]
      %v279 = vld [vmem:[%s227 + $0x9c] sm:$0xf]
      %v280 = vld [vmem:[%s227 + $0xa0] sm:$0xf]
      %v281 = vld [vmem:[%s227 + $0xa4] sm:$0xf]
      %v282 = vld [vmem:[%s227 + $0xa8] sm:$0xf]
      %v283 = vld [vmem:[%s227 + $0xac] sm:$0xf]
      %v284 = vld [vmem:[%s227 + $0xb0] sm:$0xf]
      %v285 = vld [vmem:[%s227 + $0xb4] sm:$0xf]
      %v286 = vld [vmem:[%s227 + $0xb8] sm:$0xf]
      %v287 = vld [vmem:[%s227 + $0xbc] sm:$0xf]
      %v288 = vld [vmem:[%s227 + $0xc0] sm:$0xf]
      %v289 = vld [vmem:[%s227 + $0xc4] sm:$0xf]
      %v290 = vld [vmem:[%s227 + $0xc8] sm:$0xf]
      %v291 = vld [vmem:[%s227 + $0xcc] sm:$0xf]
      %v292 = vld [vmem:[%s227 + $0xd0] sm:$0xf]
      %v293 = vld [vmem:[%s227 + $0xd4] sm:$0xf]
      %v294 = vld [vmem:[%s227 + $0xd8] sm:$0xf]
      %v295 = vld [vmem:[%s227 + $0xdc] sm:$0xf]
      %v296 = vld [vmem:[%s227 + $0xe0] sm:$0xf]
      %v297 = vld [vmem:[%s227 + $0xe4] sm:$0xf]
      %v298 = vld [vmem:[%s227 + $0xe8] sm:$0xf]
      %v299 = vld [vmem:[%s227 + $0xec] sm:$0xf]
      %v300 = vld [vmem:[%s227 + $0xf0] sm:$0xf]
      %v301 = vld [vmem:[%s227 + $0xf4] sm:$0xf]
      %v302 = vld [vmem:[%s227 + $0xf8] sm:$0xf]
      %v303 = vld [vmem:[%s227 + $0xfc] sm:$0xf]
      %v304 = vunpack.c.l.bf16 %v240
      %v305 = vunpack.c.l.bf16 %v241
      %v306 = vunpack.c.l.bf16 %v242
      %v307 = vunpack.c.l.bf16 %v243
      %v308 = vunpack.c.l.bf16 %v244
      %v309 = vunpack.c.l.bf16 %v245
      %v310 = vunpack.c.l.bf16 %v246
      %v311 = vunpack.c.l.bf16 %v247
      %v312 = vunpack.c.l.bf16 %v248
      %v313 = vunpack.c.l.bf16 %v249
      %v314 = vunpack.c.l.bf16 %v250
      %v315 = vunpack.c.l.bf16 %v251
      %v316 = vunpack.c.l.bf16 %v252
      %v317 = vunpack.c.l.bf16 %v253
      %v318 = vunpack.c.l.bf16 %v254
      %v319 = vunpack.c.l.bf16 %v255
      %v320 = vunpack.c.l.bf16 %v256
      %v321 = vunpack.c.l.bf16 %v257
      %v322 = vunpack.c.l.bf16 %v258
      %v323 = vunpack.c.l.bf16 %v259
      %v324 = vunpack.c.l.bf16 %v260
      %v325 = vunpack.c.l.bf16 %v261
      %v326 = vunpack.c.l.bf16 %v262
      %v327 = vunpack.c.l.bf16 %v263
      %v328 = vunpack.c.l.bf16 %v264
      %v329 = vunpack.c.l.bf16 %v265
      %v330 = vunpack.c.l.bf16 %v266
      %v331 = vunpack.c.l.bf16 %v267
      %v332 = vunpack.c.l.bf16 %v268
      %v333 = vunpack.c.l.bf16 %v269
      %v334 = vunpack.c.l.bf16 %v270
      %v335 = vunpack.c.l.bf16 %v271
      %v336 = vunpack.c.l.bf16 %v272
      %v337 = vunpack.c.l.bf16 %v273
      %v338 = vunpack.c.l.bf16 %v274
      %v339 = vunpack.c.l.bf16 %v275
      %v340 = vunpack.c.l.bf16 %v276
      %v341 = vunpack.c.l.bf16 %v277
      %v342 = vunpack.c.l.bf16 %v278
      %v343 = vunpack.c.l.bf16 %v279
      %v344 = vunpack.c.l.bf16 %v280
      %v345 = vunpack.c.l.bf16 %v281
      %v346 = vunpack.c.l.bf16 %v282
      %v347 = vunpack.c.l.bf16 %v283
      %v348 = vunpack.c.l.bf16 %v284
      %v349 = vunpack.c.l.bf16 %v285
      %v350 = vunpack.c.l.bf16 %v286
      %v351 = vunpack.c.l.bf16 %v287
      %v352 = vunpack.c.l.bf16 %v288
      %v353 = vunpack.c.l.bf16 %v289
      %v354 = vunpack.c.l.bf16 %v290
      %v355 = vunpack.c.l.bf16 %v291
      %v356 = vunpack.c.l.bf16 %v292
      %v357 = vunpack.c.l.bf16 %v293
      %v358 = vunpack.c.l.bf16 %v294
      %v359 = vunpack.c.l.bf16 %v295
      %v360 = vunpack.c.l.bf16 %v296
      %v361 = vunpack.c.l.bf16 %v297
      %v362 = vunpack.c.l.bf16 %v298
      %v363 = vunpack.c.l.bf16 %v299
      %v364 = vunpack.c.l.bf16 %v300
      %v365 = vunpack.c.l.bf16 %v301
      %v366 = vunpack.c.l.bf16 %v302
      %v367 = vunpack.c.l.bf16 %v303
      %v368 = vld [vmem:[%s1] sm:$0x1]
      %v370 = vlaneseq
      %v371 = vshrl.u32 %v370, 7
      %v372 = vsub.s32 0, %v371
      %v373 = vrot.slane %v368, %v372
      %v375 = vmul.f32 %v304, %v373
      %v376 = vmul.f32 %v305, %v373
      %v377 = vmul.f32 %v306, %v373
      %v378 = vmul.f32 %v307, %v373
      %v379 = vmul.f32 %v308, %v373
      %v380 = vmul.f32 %v309, %v373
      %v381 = vmul.f32 %v310, %v373
      %v382 = vmul.f32 %v311, %v373
      %v383 = vmul.f32 %v312, %v373
      %v384 = vmul.f32 %v313, %v373
      %v385 = vmul.f32 %v314, %v373
      %v386 = vmul.f32 %v315, %v373
      %v387 = vmul.f32 %v316, %v373
      %v388 = vmul.f32 %v317, %v373
      %v389 = vmul.f32 %v318, %v373
      %v390 = vmul.f32 %v319, %v373
      %v391 = vmul.f32 %v320, %v373
      %v392 = vmul.f32 %v321, %v373
      %v393 = vmul.f32 %v322, %v373
      %v394 = vmul.f32 %v323, %v373
      %v395 = vmul.f32 %v324, %v373
      %v396 = vmul.f32 %v325, %v373
      %v397 = vmul.f32 %v326, %v373
      %v398 = vmul.f32 %v327, %v373
      %v399 = vmul.f32 %v328, %v373
      %v400 = vmul.f32 %v329, %v373
      %v401 = vmul.f32 %v330, %v373
      %v402 = vmul.f32 %v331, %v373
      %v403 = vmul.f32 %v332, %v373
      %v404 = vmul.f32 %v333, %v373
      %v405 = vmul.f32 %v334, %v373
      %v406 = vmul.f32 %v335, %v373
      %v407 = vmul.f32 %v336, %v373
      %v408 = vmul.f32 %v337, %v373
      %v409 = vmul.f32 %v338, %v373
      %v410 = vmul.f32 %v339, %v373
      %v411 = vmul.f32 %v340, %v373
      %v412 = vmul.f32 %v341, %v373
      %v413 = vmul.f32 %v342, %v373
      %v414 = vmul.f32 %v343, %v373
      %v415 = vmul.f32 %v344, %v373
      %v416 = vmul.f32 %v345, %v373
      %v417 = vmul.f32 %v346, %v373
      %v418 = vmul.f32 %v347, %v373
      %v419 = vmul.f32 %v348, %v373
      %v420 = vmul.f32 %v349, %v373
      %v421 = vmul.f32 %v350, %v373
      %v422 = vmul.f32 %v351, %v373
      %v423 = vmul.f32 %v352, %v373
      %v424 = vmul.f32 %v353, %v373
      %v425 = vmul.f32 %v354, %v373
      %v426 = vmul.f32 %v355, %v373
      %v427 = vmul.f32 %v356, %v373
      %v428 = vmul.f32 %v357, %v373
      %v429 = vmul.f32 %v358, %v373
      %v430 = vmul.f32 %v359, %v373
      %v431 = vmul.f32 %v360, %v373
      %v432 = vmul.f32 %v361, %v373
      %v433 = vmul.f32 %v362, %v373
      %v434 = vmul.f32 %v363, %v373
      %v435 = vmul.f32 %v364, %v373
      %v436 = vmul.f32 %v365, %v373
      %v437 = vmul.f32 %v366, %v373
      %v438 = vmul.f32 %v367, %v373
      %v439 = vld [vmem:[%s2] sm:$0x1]
      %v441 = vlaneseq
      %v442 = vshrl.u32 %v441, 7
      %v443 = vsub.s32 0, %v442
      %v444 = vrot.slane %v439, %v443
      %v446 = vadd.f32 %v375, %v444
      %v447 = vadd.f32 %v376, %v444
      %v448 = vadd.f32 %v377, %v444
      %v449 = vadd.f32 %v378, %v444
      %v450 = vadd.f32 %v379, %v444
      %v451 = vadd.f32 %v380, %v444
      %v452 = vadd.f32 %v381, %v444
      %v453 = vadd.f32 %v382, %v444
      %v454 = vadd.f32 %v383, %v444
      %v455 = vadd.f32 %v384, %v444
      %v456 = vadd.f32 %v385, %v444
      %v457 = vadd.f32 %v386, %v444
      %v458 = vadd.f32 %v387, %v444
      %v459 = vadd.f32 %v388, %v444
      %v460 = vadd.f32 %v389, %v444
      %v461 = vadd.f32 %v390, %v444
      %v462 = vadd.f32 %v391, %v444
      %v463 = vadd.f32 %v392, %v444
      %v464 = vadd.f32 %v393, %v444
      %v465 = vadd.f32 %v394, %v444
      %v466 = vadd.f32 %v395, %v444
      %v467 = vadd.f32 %v396, %v444
      %v468 = vadd.f32 %v397, %v444
      %v469 = vadd.f32 %v398, %v444
      %v470 = vadd.f32 %v399, %v444
      %v471 = vadd.f32 %v400, %v444
      %v472 = vadd.f32 %v401, %v444
      %v473 = vadd.f32 %v402, %v444
      %v474 = vadd.f32 %v403, %v444
      %v475 = vadd.f32 %v404, %v444
      %v476 = vadd.f32 %v405, %v444
      %v477 = vadd.f32 %v406, %v444
      %v478 = vadd.f32 %v407, %v444
      %v479 = vadd.f32 %v408, %v444
      %v480 = vadd.f32 %v409, %v444
      %v481 = vadd.f32 %v410, %v444
      %v482 = vadd.f32 %v411, %v444
      %v483 = vadd.f32 %v412, %v444
      %v484 = vadd.f32 %v413, %v444
      %v485 = vadd.f32 %v414, %v444
      %v486 = vadd.f32 %v415, %v444
      %v487 = vadd.f32 %v416, %v444
      %v488 = vadd.f32 %v417, %v444
      %v489 = vadd.f32 %v418, %v444
      %v490 = vadd.f32 %v419, %v444
      %v491 = vadd.f32 %v420, %v444
      %v492 = vadd.f32 %v421, %v444
      %v493 = vadd.f32 %v422, %v444
      %v494 = vadd.f32 %v423, %v444
      %v495 = vadd.f32 %v424, %v444
      %v496 = vadd.f32 %v425, %v444
      %v497 = vadd.f32 %v426, %v444
      %v498 = vadd.f32 %v427, %v444
      %v499 = vadd.f32 %v428, %v444
      %v500 = vadd.f32 %v429, %v444
      %v501 = vadd.f32 %v430, %v444
      %v502 = vadd.f32 %v431, %v444
      %v503 = vadd.f32 %v432, %v444
      %v504 = vadd.f32 %v433, %v444
      %v505 = vadd.f32 %v434, %v444
      %v506 = vadd.f32 %v435, %v444
      %v507 = vadd.f32 %v436, %v444
      %v508 = vadd.f32 %v437, %v444
      %v509 = vadd.f32 %v438, %v444
      %v510 = vmax.f32 %v446, 0.0
      %v511 = vmax.f32 %v447, 0.0
      %v512 = vmax.f32 %v448, 0.0
      %v513 = vmax.f32 %v449, 0.0
      %v514 = vmax.f32 %v450, 0.0
      %v515 = vmax.f32 %v451, 0.0
      %v516 = vmax.f32 %v452, 0.0
      %v517 = vmax.f32 %v453, 0.0
      %v518 = vmax.f32 %v454, 0.0
      %v519 = vmax.f32 %v455, 0.0
      %v520 = vmax.f32 %v456, 0.0
      %v521 = vmax.f32 %v457, 0.0
      %v522 = vmax.f32 %v458, 0.0
      %v523 = vmax.f32 %v459, 0.0
      %v524 = vmax.f32 %v460, 0.0
      %v525 = vmax.f32 %v461, 0.0
      %v526 = vmax.f32 %v462, 0.0
      %v527 = vmax.f32 %v463, 0.0
      %v528 = vmax.f32 %v464, 0.0
      %v529 = vmax.f32 %v465, 0.0
      %v530 = vmax.f32 %v466, 0.0
      %v531 = vmax.f32 %v467, 0.0
      %v532 = vmax.f32 %v468, 0.0
      %v533 = vmax.f32 %v469, 0.0
      %v534 = vmax.f32 %v470, 0.0
      %v535 = vmax.f32 %v471, 0.0
      %v536 = vmax.f32 %v472, 0.0
      %v537 = vmax.f32 %v473, 0.0
      %v538 = vmax.f32 %v474, 0.0
      %v539 = vmax.f32 %v475, 0.0
      %v540 = vmax.f32 %v476, 0.0
      %v541 = vmax.f32 %v477, 0.0
      %v542 = vmax.f32 %v478, 0.0
      %v543 = vmax.f32 %v479, 0.0
      %v544 = vmax.f32 %v480, 0.0
      %v545 = vmax.f32 %v481, 0.0
      %v546 = vmax.f32 %v482, 0.0
      %v547 = vmax.f32 %v483, 0.0
      %v548 = vmax.f32 %v484, 0.0
      %v549 = vmax.f32 %v485, 0.0
      %v550 = vmax.f32 %v486, 0.0
      %v551 = vmax.f32 %v487, 0.0
      %v552 = vmax.f32 %v488, 0.0
      %v553 = vmax.f32 %v489, 0.0
      %v554 = vmax.f32 %v490, 0.0
      %v555 = vmax.f32 %v491, 0.0
      %v556 = vmax.f32 %v492, 0.0
      %v557 = vmax.f32 %v493, 0.0
      %v558 = vmax.f32 %v494, 0.0
      %v559 = vmax.f32 %v495, 0.0
      %v560 = vmax.f32 %v496, 0.0
      %v561 = vmax.f32 %v497, 0.0
      %v562 = vmax.f32 %v498, 0.0
      %v563 = vmax.f32 %v499, 0.0
      %v564 = vmax.f32 %v500, 0.0
      %v565 = vmax.f32 %v501, 0.0
      %v566 = vmax.f32 %v502, 0.0
      %v567 = vmax.f32 %v503, 0.0
      %v568 = vmax.f32 %v504, 0.0
      %v569 = vmax.f32 %v505, 0.0
      %v570 = vmax.f32 %v506, 0.0
      %v571 = vmax.f32 %v507, 0.0
      %v572 = vmax.f32 %v508, 0.0
      %v573 = vmax.f32 %v509, 0.0
      %v574 = vpack.c.bf16 %v511, %v510
      %v575 = vpack.c.bf16 %v513, %v512
      %v576 = vpack.c.bf16 %v515, %v514
      %v577 = vpack.c.bf16 %v517, %v516
      %v578 = vpack.c.bf16 %v519, %v518
      %v579 = vpack.c.bf16 %v521, %v520
      %v580 = vpack.c.bf16 %v523, %v522
      %v581 = vpack.c.bf16 %v525, %v524
      %v582 = vpack.c.bf16 %v527, %v526
      %v583 = vpack.c.bf16 %v529, %v528
      %v584 = vpack.c.bf16 %v531, %v530
      %v585 = vpack.c.bf16 %v533, %v532
      %v586 = vpack.c.bf16 %v535, %v534
      %v587 = vpack.c.bf16 %v537, %v536
      %v588 = vpack.c.bf16 %v539, %v538
      %v589 = vpack.c.bf16 %v541, %v540
      %v590 = vpack.c.bf16 %v543, %v542
      %v591 = vpack.c.bf16 %v545, %v544
      %v592 = vpack.c.bf16 %v547, %v546
      %v593 = vpack.c.bf16 %v549, %v548
      %v594 = vpack.c.bf16 %v551, %v550
      %v595 = vpack.c.bf16 %v553, %v552
      %v596 = vpack.c.bf16 %v555, %v554
      %v597 = vpack.c.bf16 %v557, %v556
      %v598 = vpack.c.bf16 %v559, %v558
      %v599 = vpack.c.bf16 %v561, %v560
      %v600 = vpack.c.bf16 %v563, %v562
      %v601 = vpack.c.bf16 %v565, %v564
      %v602 = vpack.c.bf16 %v567, %v566
      %v603 = vpack.c.bf16 %v569, %v568
      %v604 = vpack.c.bf16 %v571, %v570
      %v605 = vpack.c.bf16 %v573, %v572
      %v606 = vld [vmem:[%s3] sm:$0xf]
      %v607 = vld [vmem:[%s3 + $0x4] sm:$0xf]
      %v608 = vld [vmem:[%s3 + $0x8] sm:$0xf]
      %v609 = vld [vmem:[%s3 + $0xc] sm:$0xf]
      %v610 = vld [vmem:[%s3 + $0x10] sm:$0xf]
      %v611 = vld [vmem:[%s3 + $0x14] sm:$0xf]
      %v612 = vld [vmem:[%s3 + $0x18] sm:$0xf]
      %v613 = vld [vmem:[%s3 + $0x1c] sm:$0xf]
      %v614 = vld [vmem:[%s3 + $0x20] sm:$0xf]
      %v615 = vld [vmem:[%s3 + $0x24] sm:$0xf]
      %v616 = vld [vmem:[%s3 + $0x28] sm:$0xf]
      %v617 = vld [vmem:[%s3 + $0x2c] sm:$0xf]
      %v618 = vld [vmem:[%s3 + $0x30] sm:$0xf]
      %v619 = vld [vmem:[%s3 + $0x34] sm:$0xf]
      %v620 = vld [vmem:[%s3 + $0x38] sm:$0xf]
      %v621 = vld [vmem:[%s3 + $0x3c] sm:$0xf]
      %v638 = vunpack.c.l.b16 %v606
      %v639 = vunpack.c.l.b16 %v607
      %v640 = vunpack.c.l.b16 %v608
      %v641 = vunpack.c.l.b16 %v609
      %v642 = vunpack.c.l.b16 %v610
      %v643 = vunpack.c.l.b16 %v611
      %v644 = vunpack.c.l.b16 %v612
      %v645 = vunpack.c.l.b16 %v613
      %v646 = vunpack.c.l.b16 %v614
      %v647 = vunpack.c.l.b16 %v615
      %v648 = vunpack.c.l.b16 %v616
      %v649 = vunpack.c.l.b16 %v617
      %v650 = vunpack.c.l.b16 %v618
      %v651 = vunpack.c.l.b16 %v619
      %v652 = vunpack.c.l.b16 %v620
      %v653 = vunpack.c.l.b16 %v621
      %v654 = vpack.c.b16 %v639, %v638
      %v655 = vpack.c.b16 %v641, %v640
      %v656 = vpack.c.b16 %v643, %v642
      %v657 = vpack.c.b16 %v645, %v644
      %v658 = vpack.c.b16 %v647, %v646
      %v659 = vpack.c.b16 %v649, %v648
      %v660 = vpack.c.b16 %v651, %v650
      %v661 = vpack.c.b16 %v653, %v652
      %670 = vmatprep.subr.bf16.mxu0 0
      %671 = vmatpush1.bf16.msra.mxu0 %v654
      %672 = vmatprep.subr.bf16.mxu0 0
      %673 = vmatpush1.bf16.msra.mxu0 %v655
      %674 = vmatprep.subr.bf16.mxu0 0
      %675 = vmatpush1.bf16.msra.mxu0 %v656
      %676 = vmatprep.subr.bf16.mxu0 0
      %677 = vmatpush1.bf16.msra.mxu0 %v657
      %678 = vmatprep.subr.bf16.mxu0 0
      %679 = vmatpush1.bf16.msra.mxu0 %v658
      %680 = vmatprep.subr.bf16.mxu0 0
      %681 = vmatpush1.bf16.msra.mxu0 %v659
      %682 = vmatprep.subr.bf16.mxu0 0
      %683 = vmatpush1.bf16.msra.mxu0 %v660
      %684 = vmatprep.subr.bf16.mxu0 0
      %685 = vmatpush1.bf16.msra.mxu0 %v661
      %686 = vmatprep.subr.bf16.mxu0 0
      %687 = vmatpush1.bf16.msra.mxu0 0
      %688 = vmatprep.subr.bf16.mxu0 0
      %689 = vmatpush1.bf16.msra.mxu0 0
      %690 = vmatprep.subr.bf16.mxu0 0
      %691 = vmatpush1.bf16.msra.mxu0 0
      %692 = vmatprep.subr.bf16.mxu0 0
      %693 = vmatpush1.bf16.msra.mxu0 0
      %694 = vmatprep.subr.bf16.mxu0 0
      %695 = vmatpush1.bf16.msra.mxu0 0
      %696 = vmatprep.subr.bf16.mxu0 0
      %697 = vmatpush1.bf16.msra.mxu0 0
      %698 = vmatprep.subr.bf16.mxu0 0
      %699 = vmatpush1.bf16.msra.mxu0 0
      %700 = vmatprep.subr.bf16.mxu0 0
      %701 = vmatpush1.bf16.msra.mxu0 0
      %702 = vmatprep.mubr.bf16.mxu0 0
      %703 = vmatmul.mubr.bf16.gmra.mrb[0].mxu0 %v574
      %v704 = vpop.f32.mrb[0].mxu0
      %v705 = vadd.f32 0.0, %v704
      %v706 = vpop.f32.mrb[0].mxu0
      %v707 = vpop.f32.mrb[0].mxu0
      %v708 = vadd.f32 0.0, %v707
      %v709 = vpop.f32.mrb[0].mxu0
      %710 = vmatprep.mubr.bf16.mxu0 0
      %711 = vmatmul.mubr.bf16.gmra.mrb[0].mxu0 %v575
      %v712 = vpop.f32.mrb[0].mxu0
      %v713 = vadd.f32 0.0, %v712
      %v714 = vpop.f32.mrb[0].mxu0
      %v715 = vpop.f32.mrb[0].mxu0
      %v716 = vadd.f32 0.0, %v715
      %v717 = vpop.f32.mrb[0].mxu0
      %718 = vmatprep.mubr.bf16.mxu0 0
      %719 = vmatmul.mubr.bf16.gmra.mrb[0].mxu0 %v576
      %v720 = vpop.f32.mrb[0].mxu0
      %v721 = vadd.f32 0.0, %v720
      %v722 = vpop.f32.mrb[0].mxu0
      %v723 = vpop.f32.mrb[0].mxu0
      %v724 = vadd.f32 0.0, %v723
      %v725 = vpop.f32.mrb[0].mxu0
      %726 = vmatprep.mubr.bf16.mxu0 0
      %727 = vmatmul.mubr.bf16.gmra.mrb[0].mxu0 %v577
      %v728 = vpop.f32.mrb[0].mxu0
      %v729 = vadd.f32 0.0, %v728
      %v730 = vpop.f32.mrb[0].mxu0
      %v731 = vpop.f32.mrb[0].mxu0
      %v732 = vadd.f32 0.0, %v731
      %v733 = vpop.f32.mrb[0].mxu0
      %734 = vmatprep.mubr.bf16.mxu0 0
      %735 = vmatmul.mubr.bf16.gmra.mrb[0].mxu0 %v578
      %v736 = vpop.f32.mrb[0].mxu0
      %v737 = vadd.f32 0.0, %v736
      %v738 = vpop.f32.mrb[0].mxu0
      %v739 = vpop.f32.mrb[0].mxu0
      %v740 = vadd.f32 0.0, %v739
      %v741 = vpop.f32.mrb[0].mxu0
      %742 = vmatprep.mubr.bf16.mxu0 0
      %743 = vmatmul.mubr.bf16.gmra.mrb[0].mxu0 %v579
      %v744 = vpop.f32.mrb[0].mxu0
      %v745 = vadd.f32 0.0, %v744
      %v746 = vpop.f32.mrb[0].mxu0
      %v747 = vpop.f32.mrb[0].mxu0
      %v748 = vadd.f32 0.0, %v747
      %v749 = vpop.f32.mrb[0].mxu0
      %750 = vmatprep.mubr.bf16.mxu0 0
      %751 = vmatmul.mubr.bf16.gmra.mrb[0].mxu0 %v580
      %v752 = vpop.f32.mrb[0].mxu0
      %v753 = vadd.f32 0.0, %v752
      %v754 = vpop.f32.mrb[0].mxu0
      %v755 = vpop.f32.mrb[0].mxu0
      %v756 = vadd.f32 0.0, %v755
      %v757 = vpop.f32.mrb[0].mxu0
      %758 = vmatprep.mubr.bf16.mxu0 0
      %759 = vmatmul.mubr.bf16.gmra.mrb[0].mxu0 %v581
      %v760 = vpop.f32.mrb[0].mxu0
      %v761 = vadd.f32 0.0, %v760
      %v762 = vpop.f32.mrb[0].mxu0
      %v763 = vpop.f32.mrb[0].mxu0
      %v764 = vadd.f32 0.0, %v763
      %v765 = vpop.f32.mrb[0].mxu0
      %766 = vmatprep.mubr.bf16.mxu0 0
      %767 = vmatmul.mubr.bf16.gmra.mrb[0].mxu0 %v582
      %v768 = vpop.f32.mrb[0].mxu0
      %v769 = vadd.f32 0.0, %v768
      %v770 = vpop.f32.mrb[0].mxu0
      %v771 = vpop.f32.mrb[0].mxu0
      %v772 = vadd.f32 0.0, %v771
      %v773 = vpop.f32.mrb[0].mxu0
      %774 = vmatprep.mubr.bf16.mxu0 0
      %775 = vmatmul.mubr.bf16.gmra.mrb[0].mxu0 %v583
      %v776 = vpop.f32.mrb[0].mxu0
      %v777 = vadd.f32 0.0, %v776
      %v778 = vpop.f32.mrb[0].mxu0
      %v779 = vpop.f32.mrb[0].mxu0
      %v780 = vadd.f32 0.0, %v779
      %v781 = vpop.f32.mrb[0].mxu0
      %782 = vmatprep.mubr.bf16.mxu0 0
      %783 = vmatmul.mubr.bf16.gmra.mrb[0].mxu0 %v584
      %v784 = vpop.f32.mrb[0].mxu0
      %v785 = vadd.f32 0.0, %v784
      %v786 = vpop.f32.mrb[0].mxu0
      %v787 = vpop.f32.mrb[0].mxu0
      %v788 = vadd.f32 0.0, %v787
      %v789 = vpop.f32.mrb[0].mxu0
      %790 = vmatprep.mubr.bf16.mxu0 0
      %791 = vmatmul.mubr.bf16.gmra.mrb[0].mxu0 %v585
      %v792 = vpop.f32.mrb[0].mxu0
      %v793 = vadd.f32 0.0, %v792
      %v794 = vpop.f32.mrb[0].mxu0
      %v795 = vpop.f32.mrb[0].mxu0
      %v796 = vadd.f32 0.0, %v795
      %v797 = vpop.f32.mrb[0].mxu0
      %798 = vmatprep.mubr.bf16.mxu0 0
      %799 = vmatmul.mubr.bf16.gmra.mrb[0].mxu0 %v586
      %v800 = vpop.f32.mrb[0].mxu0
      %v801 = vadd.f32 0.0, %v800
      %v802 = vpop.f32.mrb[0].mxu0
      %v803 = vpop.f32.mrb[0].mxu0
      %v804 = vadd.f32 0.0, %v803
      %v805 = vpop.f32.mrb[0].mxu0
      %806 = vmatprep.mubr.bf16.mxu0 0
      %807 = vmatmul.mubr.bf16.gmra.mrb[0].mxu0 %v587
      %v808 = vpop.f32.mrb[0].mxu0
      %v809 = vadd.f32 0.0, %v808
      %v810 = vpop.f32.mrb[0].mxu0
      %v811 = vpop.f32.mrb[0].mxu0
      %v812 = vadd.f32 0.0, %v811
      %v813 = vpop.f32.mrb[0].mxu0
      %814 = vmatprep.mubr.bf16.mxu0 0
      %815 = vmatmul.mubr.bf16.gmra.mrb[0].mxu0 %v588
      %v816 = vpop.f32.mrb[0].mxu0
      %v817 = vadd.f32 0.0, %v816
      %v818 = vpop.f32.mrb[0].mxu0
      %v819 = vpop.f32.mrb[0].mxu0
      %v820 = vadd.f32 0.0, %v819
      %v821 = vpop.f32.mrb[0].mxu0
      %822 = vmatprep.mubr.bf16.mxu0 0
      %823 = vmatmul.mubr.bf16.gmra.mrb[0].mxu0 %v589
      %v824 = vpop.f32.mrb[0].mxu0
      %v825 = vadd.f32 0.0, %v824
      %v826 = vpop.f32.mrb[0].mxu0
      %v827 = vpop.f32.mrb[0].mxu0
      %v828 = vadd.f32 0.0, %v827
      %v829 = vpop.f32.mrb[0].mxu0
      %830 = vmatprep.mubr.bf16.mxu0 0
      %831 = vmatmul.mubr.bf16.gmra.mrb[0].mxu0 %v590
      %v832 = vpop.f32.mrb[0].mxu0
      %v833 = vadd.f32 0.0, %v832
      %v834 = vpop.f32.mrb[0].mxu0
      %v835 = vpop.f32.mrb[0].mxu0
      %v836 = vadd.f32 0.0, %v835
      %v837 = vpop.f32.mrb[0].mxu0
      %838 = vmatprep.mubr.bf16.mxu0 0
      %839 = vmatmul.mubr.bf16.gmra.mrb[0].mxu0 %v591
      %v840 = vpop.f32.mrb[0].mxu0
      %v841 = vadd.f32 0.0, %v840
      %v842 = vpop.f32.mrb[0].mxu0
      %v843 = vpop.f32.mrb[0].mxu0
      %v844 = vadd.f32 0.0, %v843
      %v845 = vpop.f32.mrb[0].mxu0
      %846 = vmatprep.mubr.bf16.mxu0 0
      %847 = vmatmul.mubr.bf16.gmra.mrb[0].mxu0 %v592
      %v848 = vpop.f32.mrb[0].mxu0
      %v849 = vadd.f32 0.0, %v848
      %v850 = vpop.f32.mrb[0].mxu0
      %v851 = vpop.f32.mrb[0].mxu0
      %v852 = vadd.f32 0.0, %v851
      %v853 = vpop.f32.mrb[0].mxu0
      %854 = vmatprep.mubr.bf16.mxu0 0
      %855 = vmatmul.mubr.bf16.gmra.mrb[0].mxu0 %v593
      %v856 = vpop.f32.mrb[0].mxu0
      %v857 = vadd.f32 0.0, %v856
      %v858 = vpop.f32.mrb[0].mxu0
      %v859 = vpop.f32.mrb[0].mxu0
      %v860 = vadd.f32 0.0, %v859
      %v861 = vpop.f32.mrb[0].mxu0
      %862 = vmatprep.mubr.bf16.mxu0 0
      %863 = vmatmul.mubr.bf16.gmra.mrb[0].mxu0 %v594
      %v864 = vpop.f32.mrb[0].mxu0
      %v865 = vadd.f32 0.0, %v864
      %v866 = vpop.f32.mrb[0].mxu0
      %v867 = vpop.f32.mrb[0].mxu0
      %v868 = vadd.f32 0.0, %v867
      %v869 = vpop.f32.mrb[0].mxu0
      %870 = vmatprep.mubr.bf16.mxu0 0
      %871 = vmatmul.mubr.bf16.gmra.mrb[0].mxu0 %v595
      %v872 = vpop.f32.mrb[0].mxu0
      %v873 = vadd.f32 0.0, %v872
      %v874 = vpop.f32.mrb[0].mxu0
      %v875 = vpop.f32.mrb[0].mxu0
      %v876 = vadd.f32 0.0, %v875
      %v877 = vpop.f32.mrb[0].mxu0
      %878 = vmatprep.mubr.bf16.mxu0 0
      %879 = vmatmul.mubr.bf16.gmra.mrb[0].mxu0 %v596
      %v880 = vpop.f32.mrb[0].mxu0
      %v881 = vadd.f32 0.0, %v880
      %v882 = vpop.f32.mrb[0].mxu0
      %v883 = vpop.f32.mrb[0].mxu0
      %v884 = vadd.f32 0.0, %v883
      %v885 = vpop.f32.mrb[0].mxu0
      %886 = vmatprep.mubr.bf16.mxu0 0
      %887 = vmatmul.mubr.bf16.gmra.mrb[0].mxu0 %v597
      %v888 = vpop.f32.mrb[0].mxu0
      %v889 = vadd.f32 0.0, %v888
      %v890 = vpop.f32.mrb[0].mxu0
      %v891 = vpop.f32.mrb[0].mxu0
      %v892 = vadd.f32 0.0, %v891
      %v893 = vpop.f32.mrb[0].mxu0
      %894 = vmatprep.mubr.bf16.mxu0 0
      %895 = vmatmul.mubr.bf16.gmra.mrb[0].mxu0 %v598
      %v896 = vpop.f32.mrb[0].mxu0
      %v897 = vadd.f32 0.0, %v896
      %v898 = vpop.f32.mrb[0].mxu0
      %v899 = vpop.f32.mrb[0].mxu0
      %v900 = vadd.f32 0.0, %v899
      %v901 = vpop.f32.mrb[0].mxu0
      %902 = vmatprep.mubr.bf16.mxu0 0
      %903 = vmatmul.mubr.bf16.gmra.mrb[0].mxu0 %v599
      %v904 = vpop.f32.mrb[0].mxu0
      %v905 = vadd.f32 0.0, %v904
      %v906 = vpop.f32.mrb[0].mxu0
      %v907 = vpop.f32.mrb[0].mxu0
      %v908 = vadd.f32 0.0, %v907
      %v909 = vpop.f32.mrb[0].mxu0
      %910 = vmatprep.mubr.bf16.mxu0 0
      %911 = vmatmul.mubr.bf16.gmra.mrb[0].mxu0 %v600
      %v912 = vpop.f32.mrb[0].mxu0
      %v913 = vadd.f32 0.0, %v912
      %v914 = vpop.f32.mrb[0].mxu0
      %v915 = vpop.f32.mrb[0].mxu0
      %v916 = vadd.f32 0.0, %v915
      %v917 = vpop.f32.mrb[0].mxu0
      %918 = vmatprep.mubr.bf16.mxu0 0
      %919 = vmatmul.mubr.bf16.gmra.mrb[0].mxu0 %v601
      %v920 = vpop.f32.mrb[0].mxu0
      %v921 = vadd.f32 0.0, %v920
      %v922 = vpop.f32.mrb[0].mxu0
      %v923 = vpop.f32.mrb[0].mxu0
      %v924 = vadd.f32 0.0, %v923
      %v925 = vpop.f32.mrb[0].mxu0
      %926 = vmatprep.mubr.bf16.mxu0 0
      %927 = vmatmul.mubr.bf16.gmra.mrb[0].mxu0 %v602
      %v928 = vpop.f32.mrb[0].mxu0
      %v929 = vadd.f32 0.0, %v928
      %v930 = vpop.f32.mrb[0].mxu0
      %v931 = vpop.f32.mrb[0].mxu0
      %v932 = vadd.f32 0.0, %v931
      %v933 = vpop.f32.mrb[0].mxu0
      %934 = vmatprep.mubr.bf16.mxu0 0
      %935 = vmatmul.mubr.bf16.gmra.mrb[0].mxu0 %v603
      %v936 = vpop.f32.mrb[0].mxu0
      %v937 = vadd.f32 0.0, %v936
      %v938 = vpop.f32.mrb[0].mxu0
      %v939 = vpop.f32.mrb[0].mxu0
      %v940 = vadd.f32 0.0, %v939
      %v941 = vpop.f32.mrb[0].mxu0
      %942 = vmatprep.mubr.bf16.mxu0 0
      %943 = vmatmul.mubr.bf16.gmra.mrb[0].mxu0 %v604
      %v944 = vpop.f32.mrb[0].mxu0
      %v945 = vadd.f32 0.0, %v944
      %v946 = vpop.f32.mrb[0].mxu0
      %v947 = vpop.f32.mrb[0].mxu0
      %v948 = vadd.f32 0.0, %v947
      %v949 = vpop.f32.mrb[0].mxu0
      %950 = vmatprep.mubr.bf16.mxu0 0
      %951 = vmatmul.mubr.bf16.gmra.mrb[0].mxu0 %v605
      %v952 = vpop.f32.mrb[0].mxu0
      %v953 = vadd.f32 0.0, %v952
      %v954 = vpop.f32.mrb[0].mxu0
      %v955 = vpop.f32.mrb[0].mxu0
      %v956 = vadd.f32 0.0, %v955
      %v957 = vpop.f32.mrb[0].mxu0
      %958 = vdwg.mxu0
      %v959 = vadd.f32 %v705, %v708
      %v960 = vadd.f32 %v959, %v713
      %v961 = vadd.f32 %v960, %v716
      %v962 = vadd.f32 %v961, %v721
      %v963 = vadd.f32 %v962, %v724
      %v964 = vadd.f32 %v963, %v729
      %v965 = vadd.f32 %v964, %v732
      %v966 = vadd.f32 %v965, %v737
      %v967 = vadd.f32 %v966, %v740
      %v968 = vadd.f32 %v967, %v745
      %v969 = vadd.f32 %v968, %v748
      %v970 = vadd.f32 %v969, %v753
      %v971 = vadd.f32 %v970, %v756
      %v972 = vadd.f32 %v971, %v761
      %v973 = vadd.f32 %v972, %v764
      %v974 = vadd.f32 %v973, %v769
      %v975 = vadd.f32 %v974, %v772
      %v976 = vadd.f32 %v975, %v777
      %v977 = vadd.f32 %v976, %v780
      %v978 = vadd.f32 %v977, %v785
      %v979 = vadd.f32 %v978, %v788
      %v980 = vadd.f32 %v979, %v793
      %v981 = vadd.f32 %v980, %v796
      %v982 = vadd.f32 %v981, %v801
      %v983 = vadd.f32 %v982, %v804
      %v984 = vadd.f32 %v983, %v809
      %v985 = vadd.f32 %v984, %v812
      %v986 = vadd.f32 %v985, %v817
      %v987 = vadd.f32 %v986, %v820
      %v988 = vadd.f32 %v987, %v825
      %v989 = vadd.f32 %v988, %v828
      %v990 = vadd.f32 %v989, %v833
      %v991 = vadd.f32 %v990, %v836
      %v992 = vadd.f32 %v991, %v841
      %v993 = vadd.f32 %v992, %v844
      %v994 = vadd.f32 %v993, %v849
      %v995 = vadd.f32 %v994, %v852
      %v996 = vadd.f32 %v995, %v857
      %v997 = vadd.f32 %v996, %v860
      %v998 = vadd.f32 %v997, %v865
      %v999 = vadd.f32 %v998, %v868
      %v1000 = vadd.f32 %v999, %v873
      %v1001 = vadd.f32 %v1000, %v876
      %v1002 = vadd.f32 %v1001, %v881
      %v1003 = vadd.f32 %v1002, %v884
      %v1004 = vadd.f32 %v1003, %v889
      %v1005 = vadd.f32 %v1004, %v892
      %v1006 = vadd.f32 %v1005, %v897
      %v1007 = vadd.f32 %v1006, %v900
      %v1008 = vadd.f32 %v1007, %v905
      %v1009 = vadd.f32 %v1008, %v908
      %v1010 = vadd.f32 %v1009, %v913
      %v1011 = vadd.f32 %v1010, %v916
      %v1012 = vadd.f32 %v1011, %v921
      %v1013 = vadd.f32 %v1012, %v924
      %v1014 = vadd.f32 %v1013, %v929
      %v1015 = vadd.f32 %v1014, %v932
      %v1016 = vadd.f32 %v1015, %v937
      %v1017 = vadd.f32 %v1016, %v940
      %v1018 = vadd.f32 %v1017, %v945
      %v1019 = vadd.f32 %v1018, %v948
      %v1020 = vadd.f32 %v1019, %v953
      %v1021 = vadd.f32 %v1020, %v956
      %v1022 = vrot.slane %v1021, 4
      %v1023 = vadd.f32 %v1021, %v1022
      %v1024 = vrot.slane %v1023, 2
      %v1025 = vadd.f32 %v1023, %v1024
      %v1026 = vrot.slane %v1025, 1
      %v1027 = vadd.f32 %v1025, %v1026
      %v1028 = vmul.f32 %v705, %v705
      %v1029 = vmul.f32 %v708, %v708
      %v1030 = vmul.f32 %v713, %v713
      %v1031 = vmul.f32 %v716, %v716
      %v1032 = vmul.f32 %v721, %v721
      %v1033 = vmul.f32 %v724, %v724
      %v1034 = vmul.f32 %v729, %v729
      %v1035 = vmul.f32 %v732, %v732
      %v1036 = vmul.f32 %v737, %v737
      %v1037 = vmul.f32 %v740, %v740
      %v1038 = vmul.f32 %v745, %v745
      %v1039 = vmul.f32 %v748, %v748
      %v1040 = vmul.f32 %v753, %v753
      %v1041 = vmul.f32 %v756, %v756
      %v1042 = vmul.f32 %v761, %v761
      %v1043 = vmul.f32 %v764, %v764
      %v1044 = vmul.f32 %v769, %v769
      %v1045 = vmul.f32 %v772, %v772
      %v1046 = vmul.f32 %v777, %v777
      %v1047 = vmul.f32 %v780, %v780
      %v1048 = vmul.f32 %v785, %v785
      %v1049 = vmul.f32 %v788, %v788
      %v1050 = vmul.f32 %v793, %v793
      %v1051 = vmul.f32 %v796, %v796
      %v1052 = vmul.f32 %v801, %v801
      %v1053 = vmul.f32 %v804, %v804
      %v1054 = vmul.f32 %v809, %v809
      %v1055 = vmul.f32 %v812, %v812
      %v1056 = vmul.f32 %v817, %v817
      %v1057 = vmul.f32 %v820, %v820
      %v1058 = vmul.f32 %v825, %v825
      %v1059 = vmul.f32 %v828, %v828
      %v1060 = vmul.f32 %v833, %v833
      %v1061 = vmul.f32 %v836, %v836
      %v1062 = vmul.f32 %v841, %v841
      %v1063 = vmul.f32 %v844, %v844
      %v1064 = vmul.f32 %v849, %v849
      %v1065 = vmul.f32 %v852, %v852
      %v1066 = vmul.f32 %v857, %v857
      %v1067 = vmul.f32 %v860, %v860
      %v1068 = vmul.f32 %v865, %v865
      %v1069 = vmul.f32 %v868, %v868
      %v1070 = vmul.f32 %v873, %v873
      %v1071 = vmul.f32 %v876, %v876
      %v1072 = vmul.f32 %v881, %v881
      %v1073 = vmul.f32 %v884, %v884
      %v1074 = vmul.f32 %v889, %v889
      %v1075 = vmul.f32 %v892, %v892
      %v1076 = vmul.f32 %v897, %v897
      %v1077 = vmul.f32 %v900, %v900
      %v1078 = vmul.f32 %v905, %v905
      %v1079 = vmul.f32 %v908, %v908
      %v1080 = vmul.f32 %v913, %v913
      %v1081 = vmul.f32 %v916, %v916
      %v1082 = vmul.f32 %v921, %v921
      %v1083 = vmul.f32 %v924, %v924
      %v1084 = vmul.f32 %v929, %v929
      %v1085 = vmul.f32 %v932, %v932
      %v1086 = vmul.f32 %v937, %v937
      %v1087 = vmul.f32 %v940, %v940
      %v1088 = vmul.f32 %v945, %v945
      %v1089 = vmul.f32 %v948, %v948
      %v1090 = vmul.f32 %v953, %v953
      %v1091 = vmul.f32 %v956, %v956
      %v1092 = vadd.f32 %v1028, %v1029
      %v1093 = vadd.f32 %v1092, %v1030
      %v1094 = vadd.f32 %v1093, %v1031
      %v1095 = vadd.f32 %v1094, %v1032
      %v1096 = vadd.f32 %v1095, %v1033
      %v1097 = vadd.f32 %v1096, %v1034
      %v1098 = vadd.f32 %v1097, %v1035
      %v1099 = vadd.f32 %v1098, %v1036
      %v1100 = vadd.f32 %v1099, %v1037
      %v1101 = vadd.f32 %v1100, %v1038
      %v1102 = vadd.f32 %v1101, %v1039
      %v1103 = vadd.f32 %v1102, %v1040
      %v1104 = vadd.f32 %v1103, %v1041
      %v1105 = vadd.f32 %v1104, %v1042
      %v1106 = vadd.f32 %v1105, %v1043
      %v1107 = vadd.f32 %v1106, %v1044
      %v1108 = vadd.f32 %v1107, %v1045
      %v1109 = vadd.f32 %v1108, %v1046
      %v1110 = vadd.f32 %v1109, %v1047
      %v1111 = vadd.f32 %v1110, %v1048
      %v1112 = vadd.f32 %v1111, %v1049
      %v1113 = vadd.f32 %v1112, %v1050
      %v1114 = vadd.f32 %v1113, %v1051
      %v1115 = vadd.f32 %v1114, %v1052
      %v1116 = vadd.f32 %v1115, %v1053
      %v1117 = vadd.f32 %v1116, %v1054
      %v1118 = vadd.f32 %v1117, %v1055
      %v1119 = vadd.f32 %v1118, %v1056
      %v1120 = vadd.f32 %v1119, %v1057
      %v1121 = vadd.f32 %v1120, %v1058
      %v1122 = vadd.f32 %v1121, %v1059
      %v1123 = vadd.f32 %v1122, %v1060
      %v1124 = vadd.f32 %v1123, %v1061
      %v1125 = vadd.f32 %v1124, %v1062
      %v1126 = vadd.f32 %v1125, %v1063
      %v1127 = vadd.f32 %v1126, %v1064
      %v1128 = vadd.f32 %v1127, %v1065
      %v1129 = vadd.f32 %v1128, %v1066
      %v1130 = vadd.f32 %v1129, %v1067
      %v1131 = vadd.f32 %v1130, %v1068
      %v1132 = vadd.f32 %v1131, %v1069
      %v1133 = vadd.f32 %v1132, %v1070
      %v1134 = vadd.f32 %v1133, %v1071
      %v1135 = vadd.f32 %v1134, %v1072
      %v1136 = vadd.f32 %v1135, %v1073
      %v1137 = vadd.f32 %v1136, %v1074
      %v1138 = vadd.f32 %v1137, %v1075
      %v1139 = vadd.f32 %v1138, %v1076
      %v1140 = vadd.f32 %v1139, %v1077
      %v1141 = vadd.f32 %v1140, %v1078
      %v1142 = vadd.f32 %v1141, %v1079
      %v1143 = vadd.f32 %v1142, %v1080
      %v1144 = vadd.f32 %v1143, %v1081
      %v1145 = vadd.f32 %v1144, %v1082
      %v1146 = vadd.f32 %v1145, %v1083
      %v1147 = vadd.f32 %v1146, %v1084
      %v1148 = vadd.f32 %v1147, %v1085
      %v1149 = vadd.f32 %v1148, %v1086
      %v1150 = vadd.f32 %v1149, %v1087
      %v1151 = vadd.f32 %v1150, %v1088
      %v1152 = vadd.f32 %v1151, %v1089
      %v1153 = vadd.f32 %v1152, %v1090
      %v1154 = vadd.f32 %v1153, %v1091
      %v1155 = vrot.slane %v1154, 4
      %v1156 = vadd.f32 %v1154, %v1155
      %v1157 = vrot.slane %v1156, 2
      %v1158 = vadd.f32 %v1156, %v1157
      %v1159 = vrot.slane %v1158, 1
      %v1160 = vadd.f32 %v1158, %v1159
      %vm1161 = vcmask 1040384
      %v1162 = vsel %vm1161, %v1027, %v1160
      %vm1163 = vcmask 1041408
      %v1164 = vsel %vm1163, %v1162, 0.0
      %1165 = vst [vmem:[%s238] sm:$0xff] %v1164
      %v1166 = vpack.c.bf16 %v708, %v705
      %v1167 = vpack.c.bf16 %v716, %v713
      %v1168 = vpack.c.bf16 %v724, %v721
      %v1169 = vpack.c.bf16 %v732, %v729
      %v1170 = vpack.c.bf16 %v740, %v737
      %v1171 = vpack.c.bf16 %v748, %v745
      %v1172 = vpack.c.bf16 %v756, %v753
      %v1173 = vpack.c.bf16 %v764, %v761
      %v1174 = vpack.c.bf16 %v772, %v769
      %v1175 = vpack.c.bf16 %v780, %v777
      %v1176 = vpack.c.bf16 %v788, %v785
      %v1177 = vpack.c.bf16 %v796, %v793
      %v1178 = vpack.c.bf16 %v804, %v801
      %v1179 = vpack.c.bf16 %v812, %v809
      %v1180 = vpack.c.bf16 %v820, %v817
      %v1181 = vpack.c.bf16 %v828, %v825
      %v1182 = vpack.c.bf16 %v836, %v833
      %v1183 = vpack.c.bf16 %v844, %v841
      %v1184 = vpack.c.bf16 %v852, %v849
      %v1185 = vpack.c.bf16 %v860, %v857
      %v1186 = vpack.c.bf16 %v868, %v865
      %v1187 = vpack.c.bf16 %v876, %v873
      %v1188 = vpack.c.bf16 %v884, %v881
      %v1189 = vpack.c.bf16 %v892, %v889
      %v1190 = vpack.c.bf16 %v900, %v897
      %v1191 = vpack.c.bf16 %v908, %v905
      %v1192 = vpack.c.bf16 %v916, %v913
      %v1193 = vpack.c.bf16 %v924, %v921
      %v1194 = vpack.c.bf16 %v932, %v929
      %v1195 = vpack.c.bf16 %v940, %v937
      %v1196 = vpack.c.bf16 %v948, %v945
      %v1197 = vpack.c.bf16 %v956, %v953
      %v1230 = vunpack.c.l.b16 %v1166
      %v1231 = vunpack.c.h.b16 %v1166
      %v1232 = vunpack.c.l.b16 %v1167
      %v1233 = vunpack.c.h.b16 %v1167
      %v1234 = vunpack.c.l.b16 %v1168
      %v1235 = vunpack.c.h.b16 %v1168
      %v1236 = vunpack.c.l.b16 %v1169
      %v1237 = vunpack.c.h.b16 %v1169
      %v1238 = vunpack.c.l.b16 %v1170
      %v1239 = vunpack.c.h.b16 %v1170
      %v1240 = vunpack.c.l.b16 %v1171
      %v1241 = vunpack.c.h.b16 %v1171
      %v1242 = vunpack.c.l.b16 %v1172
      %v1243 = vunpack.c.h.b16 %v1172
      %v1244 = vunpack.c.l.b16 %v1173
      %v1245 = vunpack.c.h.b16 %v1173
      %v1246 = vunpack.c.l.b16 %v1174
      %v1247 = vunpack.c.h.b16 %v1174
      %v1248 = vunpack.c.l.b16 %v1175
      %v1249 = vunpack.c.h.b16 %v1175
      %v1250 = vunpack.c.l.b16 %v1176
      %v1251 = vunpack.c.h.b16 %v1176
      %v1252 = vunpack.c.l.b16 %v1177
      %v1253 = vunpack.c.h.b16 %v1177
      %v1254 = vunpack.c.l.b16 %v1178
      %v1255 = vunpack.c.h.b16 %v1178
      %v1256 = vunpack.c.l.b16 %v1179
      %v1257 = vunpack.c.h.b16 %v1179
      %v1258 = vunpack.c.l.b16 %v1180
      %v1259 = vunpack.c.h.b16 %v1180
      %v1260 = vunpack.c.l.b16 %v1181
      %v1261 = vunpack.c.h.b16 %v1181
      %v1262 = vunpack.c.l.b16 %v1182
      %v1263 = vunpack.c.h.b16 %v1182
      %v1264 = vunpack.c.l.b16 %v1183
      %v1265 = vunpack.c.h.b16 %v1183
      %v1266 = vunpack.c.l.b16 %v1184
      %v1267 = vunpack.c.h.b16 %v1184
      %v1268 = vunpack.c.l.b16 %v1185
      %v1269 = vunpack.c.h.b16 %v1185
      %v1270 = vunpack.c.l.b16 %v1186
      %v1271 = vunpack.c.h.b16 %v1186
      %v1272 = vunpack.c.l.b16 %v1187
      %v1273 = vunpack.c.h.b16 %v1187
      %v1274 = vunpack.c.l.b16 %v1188
      %v1275 = vunpack.c.h.b16 %v1188
      %v1276 = vunpack.c.l.b16 %v1189
      %v1277 = vunpack.c.h.b16 %v1189
      %v1278 = vunpack.c.l.b16 %v1190
      %v1279 = vunpack.c.h.b16 %v1190
      %v1280 = vunpack.c.l.b16 %v1191
      %v1281 = vunpack.c.h.b16 %v1191
      %v1282 = vunpack.c.l.b16 %v1192
      %v1283 = vunpack.c.h.b16 %v1192
      %v1284 = vunpack.c.l.b16 %v1193
      %v1285 = vunpack.c.h.b16 %v1193
      %v1286 = vunpack.c.l.b16 %v1194
      %v1287 = vunpack.c.h.b16 %v1194
      %v1288 = vunpack.c.l.b16 %v1195
      %v1289 = vunpack.c.h.b16 %v1195
      %v1290 = vunpack.c.l.b16 %v1196
      %v1291 = vunpack.c.h.b16 %v1196
      %v1292 = vunpack.c.l.b16 %v1197
      %v1293 = vunpack.c.h.b16 %v1197
      %v1294 = vpack.c.b16 %v1230, %v1230
      %v1295 = vpack.c.b16 %v1231, %v1231
      %v1296 = vpack.c.b16 %v1232, %v1232
      %v1297 = vpack.c.b16 %v1233, %v1233
      %v1298 = vpack.c.b16 %v1234, %v1234
      %v1299 = vpack.c.b16 %v1235, %v1235
      %v1300 = vpack.c.b16 %v1236, %v1236
      %v1301 = vpack.c.b16 %v1237, %v1237
      %v1302 = vpack.c.b16 %v1238, %v1238
      %v1303 = vpack.c.b16 %v1239, %v1239
      %v1304 = vpack.c.b16 %v1240, %v1240
      %v1305 = vpack.c.b16 %v1241, %v1241
      %v1306 = vpack.c.b16 %v1242, %v1242
      %v1307 = vpack.c.b16 %v1243, %v1243
      %v1308 = vpack.c.b16 %v1244, %v1244
      %v1309 = vpack.c.b16 %v1245, %v1245
      %v1310 = vpack.c.b16 %v1246, %v1246
      %v1311 = vpack.c.b16 %v1247, %v1247
      %v1312 = vpack.c.b16 %v1248, %v1248
      %v1313 = vpack.c.b16 %v1249, %v1249
      %v1314 = vpack.c.b16 %v1250, %v1250
      %v1315 = vpack.c.b16 %v1251, %v1251
      %v1316 = vpack.c.b16 %v1252, %v1252
      %v1317 = vpack.c.b16 %v1253, %v1253
      %v1318 = vpack.c.b16 %v1254, %v1254
      %v1319 = vpack.c.b16 %v1255, %v1255
      %v1320 = vpack.c.b16 %v1256, %v1256
      %v1321 = vpack.c.b16 %v1257, %v1257
      %v1322 = vpack.c.b16 %v1258, %v1258
      %v1323 = vpack.c.b16 %v1259, %v1259
      %v1324 = vpack.c.b16 %v1260, %v1260
      %v1325 = vpack.c.b16 %v1261, %v1261
      %v1326 = vpack.c.b16 %v1262, %v1262
      %v1327 = vpack.c.b16 %v1263, %v1263
      %v1328 = vpack.c.b16 %v1264, %v1264
      %v1329 = vpack.c.b16 %v1265, %v1265
      %v1330 = vpack.c.b16 %v1266, %v1266
      %v1331 = vpack.c.b16 %v1267, %v1267
      %v1332 = vpack.c.b16 %v1268, %v1268
      %v1333 = vpack.c.b16 %v1269, %v1269
      %v1334 = vpack.c.b16 %v1270, %v1270
      %v1335 = vpack.c.b16 %v1271, %v1271
      %v1336 = vpack.c.b16 %v1272, %v1272
      %v1337 = vpack.c.b16 %v1273, %v1273
      %v1338 = vpack.c.b16 %v1274, %v1274
      %v1339 = vpack.c.b16 %v1275, %v1275
      %v1340 = vpack.c.b16 %v1276, %v1276
      %v1341 = vpack.c.b16 %v1277, %v1277
      %v1342 = vpack.c.b16 %v1278, %v1278
      %v1343 = vpack.c.b16 %v1279, %v1279
      %v1344 = vpack.c.b16 %v1280, %v1280
      %v1345 = vpack.c.b16 %v1281, %v1281
      %v1346 = vpack.c.b16 %v1282, %v1282
      %v1347 = vpack.c.b16 %v1283, %v1283
      %v1348 = vpack.c.b16 %v1284, %v1284
      %v1349 = vpack.c.b16 %v1285, %v1285
      %v1350 = vpack.c.b16 %v1286, %v1286
      %v1351 = vpack.c.b16 %v1287, %v1287
      %v1352 = vpack.c.b16 %v1288, %v1288
      %v1353 = vpack.c.b16 %v1289, %v1289
      %v1354 = vpack.c.b16 %v1290, %v1290
      %v1355 = vpack.c.b16 %v1291, %v1291
      %v1356 = vpack.c.b16 %v1292, %v1292
      %v1357 = vpack.c.b16 %v1293, %v1293
      %1422 = vst [vmem:[%s233] sm:$0xf] %v1294
      %1423 = vst [vmem:[%s233 + $0x4] sm:$0xf] %v1295
      %1424 = vst [vmem:[%s233 + $0x8] sm:$0xf] %v1296
      %1425 = vst [vmem:[%s233 + $0xc] sm:$0xf] %v1297
      %1426 = vst [vmem:[%s233 + $0x10] sm:$0xf] %v1298
      %1427 = vst [vmem:[%s233 + $0x14] sm:$0xf] %v1299
      %1428 = vst [vmem:[%s233 + $0x18] sm:$0xf] %v1300
      %1429 = vst [vmem:[%s233 + $0x1c] sm:$0xf] %v1301
      %1430 = vst [vmem:[%s233 + $0x20] sm:$0xf] %v1302
      %1431 = vst [vmem:[%s233 + $0x24] sm:$0xf] %v1303
      %1432 = vst [vmem:[%s233 + $0x28] sm:$0xf] %v1304
      %1433 = vst [vmem:[%s233 + $0x2c] sm:$0xf] %v1305
      %1434 = vst [vmem:[%s233 + $0x30] sm:$0xf] %v1306
      %1435 = vst [vmem:[%s233 + $0x34] sm:$0xf] %v1307
      %1436 = vst [vmem:[%s233 + $0x38] sm:$0xf] %v1308
      %1437 = vst [vmem:[%s233 + $0x3c] sm:$0xf] %v1309
      %1438 = vst [vmem:[%s233 + $0x40] sm:$0xf] %v1310
      %1439 = vst [vmem:[%s233 + $0x44] sm:$0xf] %v1311
      %1440 = vst [vmem:[%s233 + $0x48] sm:$0xf] %v1312
      %1441 = vst [vmem:[%s233 + $0x4c] sm:$0xf] %v1313
      %1442 = vst [vmem:[%s233 + $0x50] sm:$0xf] %v1314
      %1443 = vst [vmem:[%s233 + $0x54] sm:$0xf] %v1315
      %1444 = vst [vmem:[%s233 + $0x58] sm:$0xf] %v1316
      %1445 = vst [vmem:[%s233 + $0x5c] sm:$0xf] %v1317
      %1446 = vst [vmem:[%s233 + $0x60] sm:$0xf] %v1318
      %1447 = vst [vmem:[%s233 + $0x64] sm:$0xf] %v1319
      %1448 = vst [vmem:[%s233 + $0x68] sm:$0xf] %v1320
      %1449 = vst [vmem:[%s233 + $0x6c] sm:$0xf] %v1321
      %1450 = vst [vmem:[%s233 + $0x70] sm:$0xf] %v1322
      %1451 = vst [vmem:[%s233 + $0x74] sm:$0xf] %v1323
      %1452 = vst [vmem:[%s233 + $0x78] sm:$0xf] %v1324
      %1453 = vst [vmem:[%s233 + $0x7c] sm:$0xf] %v1325
      %1454 = vst [vmem:[%s233 + $0x80] sm:$0xf] %v1326
      %1455 = vst [vmem:[%s233 + $0x84] sm:$0xf] %v1327
      %1456 = vst [vmem:[%s233 + $0x88] sm:$0xf] %v1328
      %1457 = vst [vmem:[%s233 + $0x8c] sm:$0xf] %v1329
      %1458 = vst [vmem:[%s233 + $0x90] sm:$0xf] %v1330
      %1459 = vst [vmem:[%s233 + $0x94] sm:$0xf] %v1331
      %1460 = vst [vmem:[%s233 + $0x98] sm:$0xf] %v1332
      %1461 = vst [vmem:[%s233 + $0x9c] sm:$0xf] %v1333
      %1462 = vst [vmem:[%s233 + $0xa0] sm:$0xf] %v1334
      %1463 = vst [vmem:[%s233 + $0xa4] sm:$0xf] %v1335
      %1464 = vst [vmem:[%s233 + $0xa8] sm:$0xf] %v1336
      %1465 = vst [vmem:[%s233 + $0xac] sm:$0xf] %v1337
      %1466 = vst [vmem:[%s233 + $0xb0] sm:$0xf] %v1338
      %1467 = vst [vmem:[%s233 + $0xb4] sm:$0xf] %v1339
      %1468 = vst [vmem:[%s233 + $0xb8] sm:$0xf] %v1340
      %1469 = vst [vmem:[%s233 + $0xbc] sm:$0xf] %v1341
      %1470 = vst [vmem:[%s233 + $0xc0] sm:$0xf] %v1342
      %1471 = vst [vmem:[%s233 + $0xc4] sm:$0xf] %v1343
      %1472 = vst [vmem:[%s233 + $0xc8] sm:$0xf] %v1344
      %1473 = vst [vmem:[%s233 + $0xcc] sm:$0xf] %v1345
      %1474 = vst [vmem:[%s233 + $0xd0] sm:$0xf] %v1346
      %1475 = vst [vmem:[%s233 + $0xd4] sm:$0xf] %v1347
      %1476 = vst [vmem:[%s233 + $0xd8] sm:$0xf] %v1348
      %1477 = vst [vmem:[%s233 + $0xdc] sm:$0xf] %v1349
      %1478 = vst [vmem:[%s233 + $0xe0] sm:$0xf] %v1350
      %1479 = vst [vmem:[%s233 + $0xe4] sm:$0xf] %v1351
      %1480 = vst [vmem:[%s233 + $0xe8] sm:$0xf] %v1352
      %1481 = vst [vmem:[%s233 + $0xec] sm:$0xf] %v1353
      %1482 = vst [vmem:[%s233 + $0xf0] sm:$0xf] %v1354
      %1483 = vst [vmem:[%s233 + $0xf4] sm:$0xf] %v1355
      %1484 = vst [vmem:[%s233 + $0xf8] sm:$0xf] %v1356
      %1485 = vst [vmem:[%s233 + $0xfc] sm:$0xf] %v1357
      %s1486 = smul.u32 64, %s17
      %p1487 = scmp.lt.s32.totalorder %s1486, 1023
      %s1488 = scalar_select %p1487, %s1486, 1023
      %s1489 = smul.addr %s1488, 4
      %s1490 = scalar_lea.vmem %s4, %s1489
      %p1491 = scmp.lt.s32.totalorder %s17, 15
      %s1492 = scalar_select %p1491, %s17, 15
      %s1493 = smul.addr %s1492, 8
      %s1494 = scalar_lea.vmem %s5, %s1493
      // Predicated region
      $region37: #{_forward_impl.13} parent=35 // pred_check
        %p1495 = pneg %p124
      $region38: #{_forward_impl.13} parent=35 // pred_check_branch
        %1497 = sbr.rel (%p1495) target = $region40
      $region39: #{_forward_impl.13} parent=35 // pred_region
        %s1498 = smul.u32 64, %s17
      $region40: #{_forward_impl.13} parent=35 // pred_fallthru
        _
      // Predicated region
      $region41: #{_forward_impl.13} parent=35 // pred_check
        %p1499 = pneg %p150
      $region42: #{_forward_impl.13} parent=35 // pred_check_branch
        %1501 = sbr.rel (%p1499) target = $region44
      $region43: #{_forward_impl.13} parent=35 // pred_region
        _
      $region44: #{_forward_impl.13} parent=35 // pred_fallthru
        _
    $region36: #{_forward_impl.13} parent=5 // pred_fallthru
      _
    %p1502 = scmp.le.s32.totalorder 2, %s12
    // Predicated region
    $region45: #{_forward_impl.13} parent=5 // pred_check
      %p1503 = pneg %p1502
    $region46: #{_forward_impl.13} parent=5 // pred_check_branch
      %1505 = sbr.rel (%p1503) target = $region48
    $region47: #{_forward_impl.13} parent=5 // pred_region
      %s1506 = ssub.s32 %s12, 2
      // Predicated region
      $region49: #{_forward_impl.13} parent=47 // pred_check
        %p1507 = pneg %p130
      $region50: #{_forward_impl.13} parent=47 // pred_check_branch
        %1509 = sbr.rel (%p1507) target = $region52
      $region51: #{_forward_impl.13} parent=47 // pred_region
        %s1510 = smul.u32 64, %s18
        %p1511 = scmp.lt.s32.totalorder %s1510, 1023
        %s1512 = scalar_select %p1511, %s1510, 1023
        %s1513 = smul.addr %s1512, 4
        %s1514 = scalar_lea.vmem %s4, %s1513
      $region52: #{_forward_impl.13} parent=47 // pred_fallthru
        _
      // Predicated region
      $region53: #{_forward_impl.13} parent=47 // pred_check
        %p1515 = pneg %p156
      $region54: #{_forward_impl.13} parent=47 // pred_check_branch
        %1517 = sbr.rel (%p1515) target = $region56
      $region55: #{_forward_impl.13} parent=47 // pred_region
        %p1518 = scmp.lt.s32.totalorder %s18, 15
        %s1519 = scalar_select %p1518, %s18, 15
        %s1520 = smul.addr %s1519, 8
        %s1521 = scalar_lea.vmem %s5, %s1520
      $region56: #{_forward_impl.13} parent=47 // pred_fallthru
        _
    $region48: #{_forward_impl.13} parent=5 // pred_fallthru
      _
  $region6: #{_forward_impl.13} parent=0 // loop_footer
    %s16 = sadd.s32 1, %s12
  $region7: #{_forward_impl.13} parent=0 // loop_footer_branch
    %11 = sbr.rel target = $region3
  $region8: #{_forward_impl.13} parent=0 // loop_exit
    _

// kernel: _forward_impl.14
$region0: #{_forward_impl.14}
  #allocation0 [shape = 'u32[]', space=smem, size = 0x4, offset = 0x4, fixed_abs, tag = 'smem constant byte address 0x4 - core index']
  #allocation1 [shape = 'u32[144,128]{1,0:T(1,128)}', space=vmem, size = 0x12000, scoped, tag = 'internal scratch']
  %s0 = inlined_call_operand.vmem [shape: bf16[32768,128], index: 0, kind: input, shape index: {}]
  %s1 = inlined_call_operand.hbm [shape: f32[1,128], index: 1, kind: input, shape index: {}]
  %s2 = inlined_call_operand.hbm [shape: f32[1,128], index: 2, kind: input, shape index: {}]
  %s3 = inlined_call_operand.hbm [shape: bf16[128,128], index: 3, kind: input, shape index: {}]
  %s4 = inlined_call_operand.vmem [shape: bf16[32768,128], index: 4, kind: output, shape index: {0}]
  %s5 = inlined_call_operand.hbm [shape: f32[512,128], index: 5, kind: output, shape index: {1}]
  %6 = xla_tuple %s4, %s5
  %s7 = sld [smem:[#allocation0]]
  $region69: #{_forward_impl.14} parent=0
    _
  %s9 = ssub.s32 1, %s7
  %s10 = scalar_select 0, %s9, %s7
  $region1: #{_forward_impl.14} parent=0
    #allocation2 [shape = 'u8[512]{0}', space=vmem, size = 0x400, scoped, tag = 'input window, operand 1, single buffered']
    #allocation3 [shape = 's32[2]{0}', space=sflag, size = 0x8, scoped, tag = 'scoped memory for _forward_impl.14']
    #allocation4 [shape = 's32[2]{0}', space=sflag, size = 0x8, scoped, tag = 'scoped memory for _forward_impl.14']
    #allocation5 [shape = 'u8[512]{0}', space=vmem, size = 0x400, scoped, tag = 'input window, operand 2, single buffered']
    #allocation6 [shape = 's32[1]{0}', space=sflag, size = 0x4, scoped, tag = 'scoped memory for _forward_impl.14']
    #allocation7 [shape = 'u8[32768]{0}', space=vmem, size = 0x8000, scoped, tag = 'input window, operand 3, single buffered']
    #allocation8 [shape = 'u8[8192]{0}', space=vmem, size = 0x2000, scoped, tag = 'output window, operand 1']
    %11 = vsyncpa [#allocation3], 0
    %12 = vsyncpa [#allocation6], 0
    %13 = vsyncpa [#allocation4], 0
    %s14 = scalar_lea.sflag [#allocation4], 1
    %15 = vsyncpa %s14, 0
    loop: start=0, step=1, limit=66
    $region2: #{_forward_impl.14} parent=1 // loop_pre_header
      _
    $region3: #{_forward_impl.14} parent=1 // loop_header
      %s17 = sphi 0, %s21
      %p18 = scmp.ge.s32.totalorder %s17, 66
      %s27 = sphi 0, %s29
      %s30 = sphi 0, %s27
      %s31 = sphi 0, %s30
      %s47 = sphi 0, %s31
      %s51 = sphi 0, %s51
      %s53 = sphi 0, %s51
      %s54 = sphi 0, %s53
      %s68 = sphi 0, %s54
      %s72 = sphi 0, %s72
      %s74 = sphi 0, %s72
      %s75 = sphi 0, %s74
      %s89 = sphi 0, %s75
      %s93 = sphi 0, %s93
      %s95 = sphi 0, %s93
      %s96 = sphi 0, %s95
      %s110 = sphi 0, %s96
      %s116 = sphi 0, %s118
      %s119 = sphi 0, %s116
      %s120 = sphi 0, %s119
      %s136 = sphi 0, %s120
      %s142 = sphi 0, %s144
      %s145 = sphi 0, %s142
      %s146 = sphi 0, %s145
      %s162 = sphi 0, %s146
    $region4: #{_forward_impl.14} parent=1 // loop_header_branch
      %20 = sbr.rel (%p18) target = $region8
    $region5: #{_forward_impl.14} parent=1 // loop_body
      %s22 = ssub.s32 %s17, 1
      %s23 = ssub.s32 %s17, 2
      %s24 = sadd.s32 %s17, 1
      %s25 = ssub.s32 %s17, %s24
      %p26 = scmp.eq.s32.totalorder %s25, 0
      %s28 = sadd.s32 %s27, 1
      %s29 = scalar_select %p26, %s27, %s28
      %p32 = pneg %p26
      %p33 = scmp.eq.s32.totalorder %s17, 63
      %p34 = por %p32, %p33
      %p35 = scmp.ne.s32.totalorder %s27, %s30
      %p36 = scmp.eq.s32.totalorder %s17, 0
      %p37 = por %p35, %p36
      %p38 = scmp.ne.s32.totalorder %s27, %s30
      %p39 = scmp.eq.s32.totalorder %s22, 63
      %p40 = por %p38, %p39
      %p41 = scmp.ne.s32.totalorder %s30, %s31
      %p42 = scmp.eq.s32.totalorder %s22, 0
      %p43 = por %p41, %p42
      %p44 = scmp.ne.s32.totalorder %s30, %s31
      %p45 = scmp.eq.s32.totalorder %s23, 63
      %p46 = por %p44, %p45
      %p48 = scmp.ne.s32.totalorder %s31, %s47
      %p49 = scmp.eq.s32.totalorder %s23, 0
      %p50 = por %p48, %p49
      %s52 = sadd.s32 %s51, 1
      %p55 = scmp.eq.s32.totalorder %s17, 63
      %p56 = scmp.ne.s32.totalorder %s51, %s53
      %p57 = scmp.eq.s32.totalorder %s17, 0
      %p58 = por %p56, %p57
      %p59 = scmp.ne.s32.totalorder %s51, %s53
      %p60 = scmp.eq.s32.totalorder %s22, 63
      %p61 = por %p59, %p60
      %p62 = scmp.ne.s32.totalorder %s53, %s54
      %p63 = scmp.eq.s32.totalorder %s22, 0
      %p64 = por %p62, %p63
      %p65 = scmp.ne.s32.totalorder %s53, %s54
      %p66 = scmp.eq.s32.totalorder %s23, 63
      %p67 = por %p65, %p66
      %p69 = scmp.ne.s32.totalorder %s54, %s68
      %p70 = scmp.eq.s32.totalorder %s23, 0
      %p71 = por %p69, %p70
      %s73 = sadd.s32 %s72, 1
      %p76 = scmp.eq.s32.totalorder %s17, 63
      %p77 = scmp.ne.s32.totalorder %s72, %s74
      %p78 = scmp.eq.s32.totalorder %s17, 0
      %p79 = por %p77, %p78
      %p80 = scmp.ne.s32.totalorder %s72, %s74
      %p81 = scmp.eq.s32.totalorder %s22, 63
      %p82 = por %p80, %p81
      %p83 = scmp.ne.s32.totalorder %s74, %s75
      %p84 = scmp.eq.s32.totalorder %s22, 0
      %p85 = por %p83, %p84
      %p86 = scmp.ne.s32.totalorder %s74, %s75
      %p87 = scmp.eq.s32.totalorder %s23, 63
      %p88 = por %p86, %p87
      %p90 = scmp.ne.s32.totalorder %s75, %s89
      %p91 = scmp.eq.s32.totalorder %s23, 0
      %p92 = por %p90, %p91
      %s94 = sadd.s32 %s93, 1
      %p97 = scmp.eq.s32.totalorder %s17, 63
      %p98 = scmp.ne.s32.totalorder %s93, %s95
      %p99 = scmp.eq.s32.totalorder %s17, 0
      %p100 = por %p98, %p99
      %p101 = scmp.ne.s32.totalorder %s93, %s95
      %p102 = scmp.eq.s32.totalorder %s22, 63
      %p103 = por %p101, %p102
      %p104 = scmp.ne.s32.totalorder %s95, %s96
      %p105 = scmp.eq.s32.totalorder %s22, 0
      %p106 = por %p104, %p105
      %p107 = scmp.ne.s32.totalorder %s95, %s96
      %p108 = scmp.eq.s32.totalorder %s23, 63
      %p109 = por %p107, %p108
      %p111 = scmp.ne.s32.totalorder %s96, %s110
      %p112 = scmp.eq.s32.totalorder %s23, 0
      %p113 = por %p111, %p112
      %s114 = ssub.s32 %s17, %s24
      %p115 = scmp.eq.s32.totalorder %s114, 0
      %s117 = sadd.s32 %s116, 1
      %s118 = scalar_select %p115, %s116, %s117
      %p121 = pneg %p115
      %p122 = scmp.eq.s32.totalorder %s17, 63
      %p123 = por %p121, %p122
      %p124 = scmp.ne.s32.totalorder %s116, %s119
      %p125 = scmp.eq.s32.totalorder %s17, 0
      %p126 = por %p124, %p125
      %p127 = scmp.ne.s32.totalorder %s116, %s119
      %p128 = scmp.eq.s32.totalorder %s22, 63
      %p129 = por %p127, %p128
      %p130 = scmp.ne.s32.totalorder %s119, %s120
      %p131 = scmp.eq.s32.totalorder %s22, 0
      %p132 = por %p130, %p131
      %p133 = scmp.ne.s32.totalorder %s119, %s120
      %p134 = scmp.eq.s32.totalorder %s23, 63
      %p135 = por %p133, %p134
      %p137 = scmp.ne.s32.totalorder %s120, %s136
      %p138 = scmp.eq.s32.totalorder %s23, 0
      %p139 = por %p137, %p138
      %s140 = ssub.s32 %s17, %s24
      %p141 = scmp.eq.s32.totalorder %s140, 0
      %s143 = sadd.s32 %s142, 1
      %s144 = scalar_select %p141, %s142, %s143
      %p147 = pneg %p141
      %p148 = scmp.eq.s32.totalorder %s17, 63
      %p149 = por %p147, %p148
      %p150 = scmp.ne.s32.totalorder %s142, %s145
      %p151 = scmp.eq.s32.totalorder %s17, 0
      %p152 = por %p150, %p151
      %p153 = scmp.ne.s32.totalorder %s142, %s145
      %p154 = scmp.eq.s32.totalorder %s22, 63
      %p155 = por %p153, %p154
      %p156 = scmp.ne.s32.totalorder %s145, %s146
      %p157 = scmp.eq.s32.totalorder %s22, 0
      %p158 = por %p156, %p157
      %p159 = scmp.ne.s32.totalorder %s145, %s146
      %p160 = scmp.eq.s32.totalorder %s23, 63
      %p161 = por %p159, %p160
      %p163 = scmp.ne.s32.totalorder %s146, %s162
      %p164 = scmp.eq.s32.totalorder %s23, 0
      %p165 = por %p163, %p164
      %p166 = scmp.le.s32.totalorder 1, %s17
      %p167 = scmp.lt.s32.totalorder %s17, 65
      %p168 = pnand %p166, %p167
      %p169 = pneg %p168
      // Predicated region
      $region9: #{_forward_impl.14} parent=5 // pred_check
        _
      $region10: #{_forward_impl.14} parent=5 // pred_check_branch
        %171 = sbr.rel (%p168) target = $region12
      $region11: #{_forward_impl.14} parent=5 // pred_region
        %s172 = ssub.s32 %s17, 1
        // Predicated region
        $region13: #{_forward_impl.14} parent=11 // pred_check
          %p173 = pneg %p64
        $region14: #{_forward_impl.14} parent=11 // pred_check_branch
          %175 = sbr.rel (%p173) target = $region16
        $region15: #{_forward_impl.14} parent=11 // pred_region
          %s177 = ssub.s32 16, 16
          %178 = vsyncadd [#allocation3], %s177
          %s180 = sshll.u32 [#allocation2], 4
          %s181 = int_to_ptr.vmem [resolvable:$true] %s180
          %183 = dma.hbm_to_vmem [thread:$0]  %s1, 16, %s181, [#allocation3]
        $region16: #{_forward_impl.14} parent=11 // pred_fallthru
          _
        // Predicated region
        $region17: #{_forward_impl.14} parent=11 // pred_check
          %p184 = pneg %p85
        $region18: #{_forward_impl.14} parent=11 // pred_check_branch
          %186 = sbr.rel (%p184) target = $region20
        $region19: #{_forward_impl.14} parent=11 // pred_region
          %s188 = ssub.s32 16, 16
          %189 = vsyncadd [#allocation6], %s188
          %s191 = sshll.u32 [#allocation5], 4
          %s192 = int_to_ptr.vmem [resolvable:$true] %s191
          %194 = dma.hbm_to_vmem [thread:$0]  %s2, 16, %s192, [#allocation6]
        $region20: #{_forward_impl.14} parent=11 // pred_fallthru
          _
        // Predicated region
        $region21: #{_forward_impl.14} parent=11 // pred_check
          %p195 = pneg %p106
        $region22: #{_forward_impl.14} parent=11 // pred_check_branch
          %197 = sbr.rel (%p195) target = $region24
        $region23: #{_forward_impl.14} parent=11 // pred_region
          %s199 = ssub.s32 1024, 1024
          %200 = vsyncadd [#allocation6], %s199
          %s201 = sshll.u32 [#allocation7], 4
          %s202 = int_to_ptr.vmem [resolvable:$true] %s201
          %207 = dma.hbm_to_vmem [thread:$0]  %s3, 1024, %s202, [#allocation6], 64, 64, 4
        $region24: #{_forward_impl.14} parent=11 // pred_fallthru
          _
      $region12: #{_forward_impl.14} parent=5 // pred_fallthru
        _
      %p208 = scmp.lt.s32.totalorder %s17, 64
      // Predicated region
      $region25: #{_forward_impl.14} parent=5 // pred_check
        %p209 = pneg %p208
      $region26: #{_forward_impl.14} parent=5 // pred_check_branch
        %211 = sbr.rel (%p209) target = $region28
      $region27: #{_forward_impl.14} parent=5 // pred_region
        // Predicated region
        $region29: #{_forward_impl.14} parent=27 // pred_check
          %p212 = pneg %p37
        $region30: #{_forward_impl.14} parent=27 // pred_check_branch
          %214 = sbr.rel (%p212) target = $region32
        $region31: #{_forward_impl.14} parent=27 // pred_region
          %s215 = smul.u32 64, %s17
          %p216 = scmp.lt.s32.totalorder %s215, 4095
          %s217 = scalar_select %p216, %s215, 4095
          %s218 = smul.addr %s217, 4
          %s219 = scalar_lea.vmem %s0, %s218
          %s220 = smul.u32 64, %s17
        $region32: #{_forward_impl.14} parent=27 // pred_fallthru
          _
      $region28: #{_forward_impl.14} parent=5 // pred_fallthru
        _
      %p221 = scmp.le.s32.totalorder 1, %s17
      %p222 = scmp.lt.s32.totalorder %s17, 65
      %p223 = pnand %p221, %p222
      %p224 = pneg %p223
      // Predicated region
      $region33: #{_forward_impl.14} parent=5 // pred_check
        _
      $region34: #{_forward_impl.14} parent=5 // pred_check_branch
        %226 = sbr.rel (%p223) target = $region36
      $region35: #{_forward_impl.14} parent=5 // pred_region
        %s227 = ssub.s32 %s17, 1
        // Predicated region
        $region37: #{_forward_impl.14} parent=35 // pred_check
          %p228 = pneg %p64
        $region38: #{_forward_impl.14} parent=35 // pred_check_branch
          %230 = sbr.rel (%p228) target = $region40
        $region39: #{_forward_impl.14} parent=35 // pred_region
          %231 = dma.done [#allocation3], 16
        $region40: #{_forward_impl.14} parent=35 // pred_fallthru
          _
        // Predicated region
        $region41: #{_forward_impl.14} parent=35 // pred_check
          %p232 = pneg %p85
        $region42: #{_forward_impl.14} parent=35 // pred_check_branch
          %234 = sbr.rel (%p232) target = $region44
        $region43: #{_forward_impl.14} parent=35 // pred_region
          %235 = dma.done [#allocation6], 16
        $region44: #{_forward_impl.14} parent=35 // pred_fallthru
          _
        // Predicated region
        $region45: #{_forward_impl.14} parent=35 // pred_check
          %p236 = pneg %p106
        $region46: #{_forward_impl.14} parent=35 // pred_check_branch
          %238 = sbr.rel (%p236) target = $region48
        $region47: #{_forward_impl.14} parent=35 // pred_region
          %239 = dma.done [#allocation6], 1024
        $region48: #{_forward_impl.14} parent=35 // pred_fallthru
          _
        %s240 = smul.u32 64, %s22
        %p241 = scmp.lt.s32.totalorder %s240, 4095
        %s242 = scalar_select %p241, %s240, 4095
        %s243 = smul.addr %s242, 4
        %s244 = scalar_lea.vmem %s0, %s243
        %p245 = pneg %p43
        %p246 = pneg %p40
        %p247 = pneg %p64
        %p248 = pneg %p61
        %p249 = pneg %p85
        %p250 = pneg %p82
        %p251 = pneg %p106
        %p252 = pneg %p103
        %p253 = pneg %p132
        %p254 = pneg %p129
        %s255 = smul.u32 64, %s22
        %p256 = scmp.lt.s32.totalorder %s255, 4095
        %s257 = scalar_select %p256, %s255, 4095
        %s258 = smul.addr %s257, 4
        %s259 = scalar_lea.vmem %s4, %s258
        %p260 = pneg %p158
        %p261 = pneg %p155
        %s262 = sand.u32 %s145, 1
        %s263 = scalar_lea.sflag [#allocation4], %s262
        %s264 = sand.u32 %s145, 1
        %s265 = smul.addr %s264, 8
        %s266 = scalar_lea.vmem [#allocation8], %s265
        %s267 = smul.u32 64, %s22
        %p268 = scmp.lt.s32.totalorder %s267, 4095
        %s269 = scalar_select %p268, %s267, 4095
        %s270 = smul.addr %s269, 4
        %s271 = scalar_lea.vmem %s0, %s270
        %s272 = smul.u32 64, %s22
        %s273 = smul.u32 64, %s22
        %p274 = scmp.lt.s32.totalorder %s273, 4095
        %s275 = scalar_select %p274, %s273, 4095
        %s276 = smul.addr %s275, 4
        %s277 = scalar_lea.vmem %s4, %s276
        %s278 = smul.u32 64, %s22
        %v280 = vld [vmem:[%s271] sm:$0xf]
        %v281 = vld [vmem:[%s271 + $0x4] sm:$0xf]
        %v282 = vld [vmem:[%s271 + $0x8] sm:$0xf]
        %v283 = vld [vmem:[%s271 + $0xc] sm:$0xf]
        %v284 = vld [vmem:[%s271 + $0x10] sm:$0xf]
        %v285 = vld [vmem:[%s271 + $0x14] sm:$0xf]
        %v286 = vld [vmem:[%s271 + $0x18] sm:$0xf]
        %v287 = vld [vmem:[%s271 + $0x1c] sm:$0xf]
        %v288 = vld [vmem:[%s271 + $0x20] sm:$0xf]
        %v289 = vld [vmem:[%s271 + $0x24] sm:$0xf]
        %v290 = vld [vmem:[%s271 + $0x28] sm:$0xf]
        %v291 = vld [vmem:[%s271 + $0x2c] sm:$0xf]
        %v292 = vld [vmem:[%s271 + $0x30] sm:$0xf]
        %v293 = vld [vmem:[%s271 + $0x34] sm:$0xf]
        %v294 = vld [vmem:[%s271 + $0x38] sm:$0xf]
        %v295 = vld [vmem:[%s271 + $0x3c] sm:$0xf]
        %v296 = vld [vmem:[%s271 + $0x40] sm:$0xf]
        %v297 = vld [vmem:[%s271 + $0x44] sm:$0xf]
        %v298 = vld [vmem:[%s271 + $0x48] sm:$0xf]
        %v299 = vld [vmem:[%s271 + $0x4c] sm:$0xf]
        %v300 = vld [vmem:[%s271 + $0x50] sm:$0xf]
        %v301 = vld [vmem:[%s271 + $0x54] sm:$0xf]
        %v302 = vld [vmem:[%s271 + $0x58] sm:$0xf]
        %v303 = vld [vmem:[%s271 + $0x5c] sm:$0xf]
        %v304 = vld [vmem:[%s271 + $0x60] sm:$0xf]
        %v305 = vld [vmem:[%s271 + $0x64] sm:$0xf]
        %v306 = vld [vmem:[%s271 + $0x68] sm:$0xf]
        %v307 = vld [vmem:[%s271 + $0x6c] sm:$0xf]
        %v308 = vld [vmem:[%s271 + $0x70] sm:$0xf]
        %v309 = vld [vmem:[%s271 + $0x74] sm:$0xf]
        %v310 = vld [vmem:[%s271 + $0x78] sm:$0xf]
        %v311 = vld [vmem:[%s271 + $0x7c] sm:$0xf]
        %v312 = vld [vmem:[%s271 + $0x80] sm:$0xf]
        %v313 = vld [vmem:[%s271 + $0x84] sm:$0xf]
        %v314 = vld [vmem:[%s271 + $0x88] sm:$0xf]
        %v315 = vld [vmem:[%s271 + $0x8c] sm:$0xf]
        %v316 = vld [vmem:[%s271 + $0x90] sm:$0xf]
        %v317 = vld [vmem:[%s271 + $0x94] sm:$0xf]
        %v318 = vld [vmem:[%s271 + $0x98] sm:$0xf]
        %v319 = vld [vmem:[%s271 + $0x9c] sm:$0xf]
        %v320 = vld [vmem:[%s271 + $0xa0] sm:$0xf]
        %v321 = vld [vmem:[%s271 + $0xa4] sm:$0xf]
        %v322 = vld [vmem:[%s271 + $0xa8] sm:$0xf]
        %v323 = vld [vmem:[%s271 + $0xac] sm:$0xf]
        %v324 = vld [vmem:[%s271 + $0xb0] sm:$0xf]
        %v325 = vld [vmem:[%s271 + $0xb4] sm:$0xf]
        %v326 = vld [vmem:[%s271 + $0xb8] sm:$0xf]
        %v327 = vld [vmem:[%s271 + $0xbc] sm:$0xf]
        %v328 = vld [vmem:[%s271 + $0xc0] sm:$0xf]
        %v329 = vld [vmem:[%s271 + $0xc4] sm:$0xf]
        %v330 = vld [vmem:[%s271 + $0xc8] sm:$0xf]
        %v331 = vld [vmem:[%s271 + $0xcc] sm:$0xf]
        %v332 = vld [vmem:[%s271 + $0xd0] sm:$0xf]
        %v333 = vld [vmem:[%s271 + $0xd4] sm:$0xf]
        %v334 = vld [vmem:[%s271 + $0xd8] sm:$0xf]
        %v335 = vld [vmem:[%s271 + $0xdc] sm:$0xf]
        %v336 = vld [vmem:[%s271 + $0xe0] sm:$0xf]
        %v337 = vld [vmem:[%s271 + $0xe4] sm:$0xf]
        %v338 = vld [vmem:[%s271 + $0xe8] sm:$0xf]
        %v339 = vld [vmem:[%s271 + $0xec] sm:$0xf]
        %v340 = vld [vmem:[%s271 + $0xf0] sm:$0xf]
        %v341 = vld [vmem:[%s271 + $0xf4] sm:$0xf]
        %v342 = vld [vmem:[%s271 + $0xf8] sm:$0xf]
        %v343 = vld [vmem:[%s271 + $0xfc] sm:$0xf]
        %v344 = vunpack.c.l.bf16 %v280
        %v345 = vunpack.c.l.bf16 %v281
        %v346 = vunpack.c.l.bf16 %v282
        %v347 = vunpack.c.l.bf16 %v283
        %v348 = vunpack.c.l.bf16 %v284
        %v349 = vunpack.c.l.bf16 %v285
        %v350 = vunpack.c.l.bf16 %v286
        %v351 = vunpack.c.l.bf16 %v287
        %v352 = vunpack.c.l.bf16 %v288
        %v353 = vunpack.c.l.bf16 %v289
        %v354 = vunpack.c.l.bf16 %v290
        %v355 = vunpack.c.l.bf16 %v291
        %v356 = vunpack.c.l.bf16 %v292
        %v357 = vunpack.c.l.bf16 %v293
        %v358 = vunpack.c.l.bf16 %v294
        %v359 = vunpack.c.l.bf16 %v295
        %v360 = vunpack.c.l.bf16 %v296
        %v361 = vunpack.c.l.bf16 %v297
        %v362 = vunpack.c.l.bf16 %v298
        %v363 = vunpack.c.l.bf16 %v299
        %v364 = vunpack.c.l.bf16 %v300
        %v365 = vunpack.c.l.bf16 %v301
        %v366 = vunpack.c.l.bf16 %v302
        %v367 = vunpack.c.l.bf16 %v303
        %v368 = vunpack.c.l.bf16 %v304
        %v369 = vunpack.c.l.bf16 %v305
        %v370 = vunpack.c.l.bf16 %v306
        %v371 = vunpack.c.l.bf16 %v307
        %v372 = vunpack.c.l.bf16 %v308
        %v373 = vunpack.c.l.bf16 %v309
        %v374 = vunpack.c.l.bf16 %v310
        %v375 = vunpack.c.l.bf16 %v311
        %v376 = vunpack.c.l.bf16 %v312
        %v377 = vunpack.c.l.bf16 %v313
        %v378 = vunpack.c.l.bf16 %v314
        %v379 = vunpack.c.l.bf16 %v315
        %v380 = vunpack.c.l.bf16 %v316
        %v381 = vunpack.c.l.bf16 %v317
        %v382 = vunpack.c.l.bf16 %v318
        %v383 = vunpack.c.l.bf16 %v319
        %v384 = vunpack.c.l.bf16 %v320
        %v385 = vunpack.c.l.bf16 %v321
        %v386 = vunpack.c.l.bf16 %v322
        %v387 = vunpack.c.l.bf16 %v323
        %v388 = vunpack.c.l.bf16 %v324
        %v389 = vunpack.c.l.bf16 %v325
        %v390 = vunpack.c.l.bf16 %v326
        %v391 = vunpack.c.l.bf16 %v327
        %v392 = vunpack.c.l.bf16 %v328
        %v393 = vunpack.c.l.bf16 %v329
        %v394 = vunpack.c.l.bf16 %v330
        %v395 = vunpack.c.l.bf16 %v331
        %v396 = vunpack.c.l.bf16 %v332
        %v397 = vunpack.c.l.bf16 %v333
        %v398 = vunpack.c.l.bf16 %v334
        %v399 = vunpack.c.l.bf16 %v335
        %v400 = vunpack.c.l.bf16 %v336
        %v401 = vunpack.c.l.bf16 %v337
        %v402 = vunpack.c.l.bf16 %v338
        %v403 = vunpack.c.l.bf16 %v339
        %v404 = vunpack.c.l.bf16 %v340
        %v405 = vunpack.c.l.bf16 %v341
        %v406 = vunpack.c.l.bf16 %v342
        %v407 = vunpack.c.l.bf16 %v343
        %v408 = vld [vmem:[#allocation2] sm:$0x1]
        %v410 = vlaneseq
        %v411 = vshrl.u32 %v410, 7
        %v412 = vsub.s32 0, %v411
        %v413 = vrot.slane %v408, %v412
        %v415 = vmul.f32 %v344, %v413
        %v416 = vmul.f32 %v345, %v413
        %v417 = vmul.f32 %v346, %v413
        %v418 = vmul.f32 %v347, %v413
        %v419 = vmul.f32 %v348, %v413
        %v420 = vmul.f32 %v349, %v413
        %v421 = vmul.f32 %v350, %v413
        %v422 = vmul.f32 %v351, %v413
        %v423 = vmul.f32 %v352, %v413
        %v424 = vmul.f32 %v353, %v413
        %v425 = vmul.f32 %v354, %v413
        %v426 = vmul.f32 %v355, %v413
        %v427 = vmul.f32 %v356, %v413
        %v428 = vmul.f32 %v357, %v413
        %v429 = vmul.f32 %v358, %v413
        %v430 = vmul.f32 %v359, %v413
        %v431 = vmul.f32 %v360, %v413
        %v432 = vmul.f32 %v361, %v413
        %v433 = vmul.f32 %v362, %v413
        %v434 = vmul.f32 %v363, %v413
        %v435 = vmul.f32 %v364, %v413
        %v436 = vmul.f32 %v365, %v413
        %v437 = vmul.f32 %v366, %v413
        %v438 = vmul.f32 %v367, %v413
        %v439 = vmul.f32 %v368, %v413
        %v440 = vmul.f32 %v369, %v413
        %v441 = vmul.f32 %v370, %v413
        %v442 = vmul.f32 %v371, %v413
        %v443 = vmul.f32 %v372, %v413
        %v444 = vmul.f32 %v373, %v413
        %v445 = vmul.f32 %v374, %v413
        %v446 = vmul.f32 %v375, %v413
        %v447 = vmul.f32 %v376, %v413
        %v448 = vmul.f32 %v377, %v413
        %v449 = vmul.f32 %v378, %v413
        %v450 = vmul.f32 %v379, %v413
        %v451 = vmul.f32 %v380, %v413
        %v452 = vmul.f32 %v381, %v413
        %v453 = vmul.f32 %v382, %v413
        %v454 = vmul.f32 %v383, %v413
        %v455 = vmul.f32 %v384, %v413
        %v456 = vmul.f32 %v385, %v413
        %v457 = vmul.f32 %v386, %v413
        %v458 = vmul.f32 %v387, %v413
        %v459 = vmul.f32 %v388, %v413
        %v460 = vmul.f32 %v389, %v413
        %v461 = vmul.f32 %v390, %v413
        %v462 = vmul.f32 %v391, %v413
        %v463 = vmul.f32 %v392, %v413
        %v464 = vmul.f32 %v393, %v413
        %v465 = vmul.f32 %v394, %v413
        %v466 = vmul.f32 %v395, %v413
        %v467 = vmul.f32 %v396, %v413
        %v468 = vmul.f32 %v397, %v413
        %v469 = vmul.f32 %v398, %v413
        %v470 = vmul.f32 %v399, %v413
        %v471 = vmul.f32 %v400, %v413
        %v472 = vmul.f32 %v401, %v413
        %v473 = vmul.f32 %v402, %v413
        %v474 = vmul.f32 %v403, %v413
        %v475 = vmul.f32 %v404, %v413
        %v476 = vmul.f32 %v405, %v413
        %v477 = vmul.f32 %v406, %v413
        %v478 = vmul.f32 %v407, %v413
        %v479 = vld [vmem:[#allocation5] sm:$0x1]
        %v481 = vlaneseq
        %v482 = vshrl.u32 %v481, 7
        %v483 = vsub.s32 0, %v482
        %v484 = vrot.slane %v479, %v483
        %v486 = vadd.f32 %v415, %v484
        %v487 = vadd.f32 %v416, %v484
        %v488 = vadd.f32 %v417, %v484
        %v489 = vadd.f32 %v418, %v484
        %v490 = vadd.f32 %v419, %v484
        %v491 = vadd.f32 %v420, %v484
        %v492 = vadd.f32 %v421, %v484
        %v493 = vadd.f32 %v422, %v484
        %v494 = vadd.f32 %v423, %v484
        %v495 = vadd.f32 %v424, %v484
        %v496 = vadd.f32 %v425, %v484
        %v497 = vadd.f32 %v426, %v484
        %v498 = vadd.f32 %v427, %v484
        %v499 = vadd.f32 %v428, %v484
        %v500 = vadd.f32 %v429, %v484
        %v501 = vadd.f32 %v430, %v484
        %v502 = vadd.f32 %v431, %v484
        %v503 = vadd.f32 %v432, %v484
        %v504 = vadd.f32 %v433, %v484
        %v505 = vadd.f32 %v434, %v484
        %v506 = vadd.f32 %v435, %v484
        %v507 = vadd.f32 %v436, %v484
        %v508 = vadd.f32 %v437, %v484
        %v509 = vadd.f32 %v438, %v484
        %v510 = vadd.f32 %v439, %v484
        %v511 = vadd.f32 %v440, %v484
        %v512 = vadd.f32 %v441, %v484
        %v513 = vadd.f32 %v442, %v484
        %v514 = vadd.f32 %v443, %v484
        %v515 = vadd.f32 %v444, %v484
        %v516 = vadd.f32 %v445, %v484
        %v517 = vadd.f32 %v446, %v484
        %v518 = vadd.f32 %v447, %v484
        %v519 = vadd.f32 %v448, %v484
        %v520 = vadd.f32 %v449, %v484
        %v521 = vadd.f32 %v450, %v484
        %v522 = vadd.f32 %v451, %v484
        %v523 = vadd.f32 %v452, %v484
        %v524 = vadd.f32 %v453, %v484
        %v525 = vadd.f32 %v454, %v484
        %v526 = vadd.f32 %v455, %v484
        %v527 = vadd.f32 %v456, %v484
        %v528 = vadd.f32 %v457, %v484
        %v529 = vadd.f32 %v458, %v484
        %v530 = vadd.f32 %v459, %v484
        %v531 = vadd.f32 %v460, %v484
        %v532 = vadd.f32 %v461, %v484
        %v533 = vadd.f32 %v462, %v484
        %v534 = vadd.f32 %v463, %v484
        %v535 = vadd.f32 %v464, %v484
        %v536 = vadd.f32 %v465, %v484
        %v537 = vadd.f32 %v466, %v484
        %v538 = vadd.f32 %v467, %v484
        %v539 = vadd.f32 %v468, %v484
        %v540 = vadd.f32 %v469, %v484
        %v541 = vadd.f32 %v470, %v484
        %v542 = vadd.f32 %v471, %v484
        %v543 = vadd.f32 %v472, %v484
        %v544 = vadd.f32 %v473, %v484
        %v545 = vadd.f32 %v474, %v484
        %v546 = vadd.f32 %v475, %v484
        %v547 = vadd.f32 %v476, %v484
        %v548 = vadd.f32 %v477, %v484
        %v549 = vadd.f32 %v478, %v484
        %v550 = vmax.f32 %v486, 0.0
        %v551 = vmax.f32 %v487, 0.0
        %v552 = vmax.f32 %v488, 0.0
        %v553 = vmax.f32 %v489, 0.0
        %v554 = vmax.f32 %v490, 0.0
        %v555 = vmax.f32 %v491, 0.0
        %v556 = vmax.f32 %v492, 0.0
        %v557 = vmax.f32 %v493, 0.0
        %v558 = vmax.f32 %v494, 0.0
        %v559 = vmax.f32 %v495, 0.0
        %v560 = vmax.f32 %v496, 0.0
        %v561 = vmax.f32 %v497, 0.0
        %v562 = vmax.f32 %v498, 0.0
        %v563 = vmax.f32 %v499, 0.0
        %v564 = vmax.f32 %v500, 0.0
        %v565 = vmax.f32 %v501, 0.0
        %v566 = vmax.f32 %v502, 0.0
        %v567 = vmax.f32 %v503, 0.0
        %v568 = vmax.f32 %v504, 0.0
        %v569 = vmax.f32 %v505, 0.0
        %v570 = vmax.f32 %v506, 0.0
        %v571 = vmax.f32 %v507, 0.0
        %v572 = vmax.f32 %v508, 0.0
        %v573 = vmax.f32 %v509, 0.0
        %v574 = vmax.f32 %v510, 0.0
        %v575 = vmax.f32 %v511, 0.0
        %v576 = vmax.f32 %v512, 0.0
        %v577 = vmax.f32 %v513, 0.0
        %v578 = vmax.f32 %v514, 0.0
        %v579 = vmax.f32 %v515, 0.0
        %v580 = vmax.f32 %v516, 0.0
        %v581 = vmax.f32 %v517, 0.0
        %v582 = vmax.f32 %v518, 0.0
        %v583 = vmax.f32 %v519, 0.0
        %v584 = vmax.f32 %v520, 0.0
        %v585 = vmax.f32 %v521, 0.0
        %v586 = vmax.f32 %v522, 0.0
        %v587 = vmax.f32 %v523, 0.0
        %v588 = vmax.f32 %v524, 0.0
        %v589 = vmax.f32 %v525, 0.0
        %v590 = vmax.f32 %v526, 0.0
        %v591 = vmax.f32 %v527, 0.0
        %v592 = vmax.f32 %v528, 0.0
        %v593 = vmax.f32 %v529, 0.0
        %v594 = vmax.f32 %v530, 0.0
        %v595 = vmax.f32 %v531, 0.0
        %v596 = vmax.f32 %v532, 0.0
        %v597 = vmax.f32 %v533, 0.0
        %v598 = vmax.f32 %v534, 0.0
        %v599 = vmax.f32 %v535, 0.0
        %v600 = vmax.f32 %v536, 0.0
        %v601 = vmax.f32 %v537, 0.0
        %v602 = vmax.f32 %v538, 0.0
        %v603 = vmax.f32 %v539, 0.0
        %v604 = vmax.f32 %v540, 0.0
        %v605 = vmax.f32 %v541, 0.0
        %v606 = vmax.f32 %v542, 0.0
        %v607 = vmax.f32 %v543, 0.0
        %v608 = vmax.f32 %v544, 0.0
        %v609 = vmax.f32 %v545, 0.0
        %v610 = vmax.f32 %v546, 0.0
        %v611 = vmax.f32 %v547, 0.0
        %v612 = vmax.f32 %v548, 0.0
        %v613 = vmax.f32 %v549, 0.0
        %v614 = vpack.c.bf16 %v551, %v550
        %v615 = vpack.c.bf16 %v553, %v552
        %v616 = vpack.c.bf16 %v555, %v554
        %v617 = vpack.c.bf16 %v557, %v556
        %v618 = vpack.c.bf16 %v559, %v558
        %v619 = vpack.c.bf16 %v561, %v560
        %v620 = vpack.c.bf16 %v563, %v562
        %v621 = vpack.c.bf16 %v565, %v564
        %v622 = vpack.c.bf16 %v567, %v566
        %v623 = vpack.c.bf16 %v569, %v568
        %v624 = vpack.c.bf16 %v571, %v570
        %v625 = vpack.c.bf16 %v573, %v572
        %v626 = vpack.c.bf16 %v575, %v574
        %v627 = vpack.c.bf16 %v577, %v576
        %v628 = vpack.c.bf16 %v579, %v578
        %v629 = vpack.c.bf16 %v581, %v580
        %v630 = vpack.c.bf16 %v583, %v582
        %v631 = vpack.c.bf16 %v585, %v584
        %v632 = vpack.c.bf16 %v587, %v586
        %v633 = vpack.c.bf16 %v589, %v588
        %v634 = vpack.c.bf16 %v591, %v590
        %v635 = vpack.c.bf16 %v593, %v592
        %v636 = vpack.c.bf16 %v595, %v594
        %v637 = vpack.c.bf16 %v597, %v596
        %v638 = vpack.c.bf16 %v599, %v598
        %v639 = vpack.c.bf16 %v601, %v600
        %v640 = vpack.c.bf16 %v603, %v602
        %v641 = vpack.c.bf16 %v605, %v604
        %v642 = vpack.c.bf16 %v607, %v606
        %v643 = vpack.c.bf16 %v609, %v608
        %v644 = vpack.c.bf16 %v611, %v610
        %v645 = vpack.c.bf16 %v613, %v612
        %v646 = vld [vmem:[#allocation7] sm:$0xf]
        %v647 = vld [vmem:[#allocation7 + $0x4] sm:$0xf]
        %v648 = vld [vmem:[#allocation7 + $0x8] sm:$0xf]
        %v649 = vld [vmem:[#allocation7 + $0xc] sm:$0xf]
        %v650 = vld [vmem:[#allocation7 + $0x10] sm:$0xf]
        %v651 = vld [vmem:[#allocation7 + $0x14] sm:$0xf]
        %v652 = vld [vmem:[#allocation7 + $0x18] sm:$0xf]
        %v653 = vld [vmem:[#allocation7 + $0x1c] sm:$0xf]
        %v654 = vld [vmem:[#allocation7 + $0x20] sm:$0xf]
        %v655 = vld [vmem:[#allocation7 + $0x24] sm:$0xf]
        %v656 = vld [vmem:[#allocation7 + $0x28] sm:$0xf]
        %v657 = vld [vmem:[#allocation7 + $0x2c] sm:$0xf]
        %v658 = vld [vmem:[#allocation7 + $0x30] sm:$0xf]
        %v659 = vld [vmem:[#allocation7 + $0x34] sm:$0xf]
        %v660 = vld [vmem:[#allocation7 + $0x38] sm:$0xf]
        %v661 = vld [vmem:[#allocation7 + $0x3c] sm:$0xf]
        %v678 = vunpack.c.l.b16 %v646
        %v679 = vunpack.c.l.b16 %v647
        %v680 = vunpack.c.l.b16 %v648
        %v681 = vunpack.c.l.b16 %v649
        %v682 = vunpack.c.l.b16 %v650
        %v683 = vunpack.c.l.b16 %v651
        %v684 = vunpack.c.l.b16 %v652
        %v685 = vunpack.c.l.b16 %v653
        %v686 = vunpack.c.l.b16 %v654
        %v687 = vunpack.c.l.b16 %v655
        %v688 = vunpack.c.l.b16 %v656
        %v689 = vunpack.c.l.b16 %v657
        %v690 = vunpack.c.l.b16 %v658
        %v691 = vunpack.c.l.b16 %v659
        %v692 = vunpack.c.l.b16 %v660
        %v693 = vunpack.c.l.b16 %v661
        %v694 = vpack.c.b16 %v679, %v678
        %v695 = vpack.c.b16 %v681, %v680
        %v696 = vpack.c.b16 %v683, %v682
        %v697 = vpack.c.b16 %v685, %v684
        %v698 = vpack.c.b16 %v687, %v686
        %v699 = vpack.c.b16 %v689, %v688
        %v700 = vpack.c.b16 %v691, %v690
        %v701 = vpack.c.b16 %v693, %v692
        %710 = vmatprep.subr.bf16.mxu0 0
        %711 = vmatpush1.bf16.msra.mxu0 %v694
        %712 = vmatprep.subr.bf16.mxu0 0
        %713 = vmatpush1.bf16.msra.mxu0 %v695
        %714 = vmatprep.subr.bf16.mxu0 0
        %715 = vmatpush1.bf16.msra.mxu0 %v696
        %716 = vmatprep.subr.bf16.mxu0 0
        %717 = vmatpush1.bf16.msra.mxu0 %v697
        %718 = vmatprep.subr.bf16.mxu0 0
        %719 = vmatpush1.bf16.msra.mxu0 %v698
        %720 = vmatprep.subr.bf16.mxu0 0
        %721 = vmatpush1.bf16.msra.mxu0 %v699
        %722 = vmatprep.subr.bf16.mxu0 0
        %723 = vmatpush1.bf16.msra.mxu0 %v700
        %724 = vmatprep.subr.bf16.mxu0 0
        %725 = vmatpush1.bf16.msra.mxu0 %v701
        %726 = vmatprep.subr.bf16.mxu0 0
        %727 = vmatpush1.bf16.msra.mxu0 0
        %728 = vmatprep.subr.bf16.mxu0 0
        %729 = vmatpush1.bf16.msra.mxu0 0
        %730 = vmatprep.subr.bf16.mxu0 0
        %731 = vmatpush1.bf16.msra.mxu0 0
        %732 = vmatprep.subr.bf16.mxu0 0
        %733 = vmatpush1.bf16.msra.mxu0 0
        %734 = vmatprep.subr.bf16.mxu0 0
        %735 = vmatpush1.bf16.msra.mxu0 0
        %736 = vmatprep.subr.bf16.mxu0 0
        %737 = vmatpush1.bf16.msra.mxu0 0
        %738 = vmatprep.subr.bf16.mxu0 0
        %739 = vmatpush1.bf16.msra.mxu0 0
        %740 = vmatprep.subr.bf16.mxu0 0
        %741 = vmatpush1.bf16.msra.mxu0 0
        %742 = vmatprep.mubr.bf16.mxu0 0
        %743 = vmatmul.mubr.bf16.gmra.mrb[0].mxu0 %v614
        %v744 = vpop.f32.mrb[0].mxu0
        %v745 = vadd.f32 0.0, %v744
        %v746 = vpop.f32.mrb[0].mxu0
        %v747 = vpop.f32.mrb[0].mxu0
        %v748 = vadd.f32 0.0, %v747
        %v749 = vpop.f32.mrb[0].mxu0
        %750 = vmatprep.mubr.bf16.mxu0 0
        %751 = vmatmul.mubr.bf16.gmra.mrb[0].mxu0 %v615
        %v752 = vpop.f32.mrb[0].mxu0
        %v753 = vadd.f32 0.0, %v752
        %v754 = vpop.f32.mrb[0].mxu0
        %v755 = vpop.f32.mrb[0].mxu0
        %v756 = vadd.f32 0.0, %v755
        %v757 = vpop.f32.mrb[0].mxu0
        %758 = vmatprep.mubr.bf16.mxu0 0
        %759 = vmatmul.mubr.bf16.gmra.mrb[0].mxu0 %v616
        %v760 = vpop.f32.mrb[0].mxu0
        %v761 = vadd.f32 0.0, %v760
        %v762 = vpop.f32.mrb[0].mxu0
        %v763 = vpop.f32.mrb[0].mxu0
        %v764 = vadd.f32 0.0, %v763
        %v765 = vpop.f32.mrb[0].mxu0
        %766 = vmatprep.mubr.bf16.mxu0 0
        %767 = vmatmul.mubr.bf16.gmra.mrb[0].mxu0 %v617
        %v768 = vpop.f32.mrb[0].mxu0
        %v769 = vadd.f32 0.0, %v768
        %v770 = vpop.f32.mrb[0].mxu0
        %v771 = vpop.f32.mrb[0].mxu0
        %v772 = vadd.f32 0.0, %v771
        %v773 = vpop.f32.mrb[0].mxu0
        %774 = vmatprep.mubr.bf16.mxu0 0
        %775 = vmatmul.mubr.bf16.gmra.mrb[0].mxu0 %v618
        %v776 = vpop.f32.mrb[0].mxu0
        %v777 = vadd.f32 0.0, %v776
        %v778 = vpop.f32.mrb[0].mxu0
        %v779 = vpop.f32.mrb[0].mxu0
        %v780 = vadd.f32 0.0, %v779
        %v781 = vpop.f32.mrb[0].mxu0
        %782 = vmatprep.mubr.bf16.mxu0 0
        %783 = vmatmul.mubr.bf16.gmra.mrb[0].mxu0 %v619
        %v784 = vpop.f32.mrb[0].mxu0
        %v785 = vadd.f32 0.0, %v784
        %v786 = vpop.f32.mrb[0].mxu0
        %v787 = vpop.f32.mrb[0].mxu0
        %v788 = vadd.f32 0.0, %v787
        %v789 = vpop.f32.mrb[0].mxu0
        %790 = vmatprep.mubr.bf16.mxu0 0
        %791 = vmatmul.mubr.bf16.gmra.mrb[0].mxu0 %v620
        %v792 = vpop.f32.mrb[0].mxu0
        %v793 = vadd.f32 0.0, %v792
        %v794 = vpop.f32.mrb[0].mxu0
        %v795 = vpop.f32.mrb[0].mxu0
        %v796 = vadd.f32 0.0, %v795
        %v797 = vpop.f32.mrb[0].mxu0
        %798 = vmatprep.mubr.bf16.mxu0 0
        %799 = vmatmul.mubr.bf16.gmra.mrb[0].mxu0 %v621
        %v800 = vpop.f32.mrb[0].mxu0
        %v801 = vadd.f32 0.0, %v800
        %v802 = vpop.f32.mrb[0].mxu0
        %v803 = vpop.f32.mrb[0].mxu0
        %v804 = vadd.f32 0.0, %v803
        %v805 = vpop.f32.mrb[0].mxu0
        %806 = vmatprep.mubr.bf16.mxu0 0
        %807 = vmatmul.mubr.bf16.gmra.mrb[0].mxu0 %v622
        %v808 = vpop.f32.mrb[0].mxu0
        %v809 = vadd.f32 0.0, %v808
        %v810 = vpop.f32.mrb[0].mxu0
        %v811 = vpop.f32.mrb[0].mxu0
        %v812 = vadd.f32 0.0, %v811
        %v813 = vpop.f32.mrb[0].mxu0
        %814 = vmatprep.mubr.bf16.mxu0 0
        %815 = vmatmul.mubr.bf16.gmra.mrb[0].mxu0 %v623
        %v816 = vpop.f32.mrb[0].mxu0
        %v817 = vadd.f32 0.0, %v816
        %v818 = vpop.f32.mrb[0].mxu0
        %v819 = vpop.f32.mrb[0].mxu0
        %v820 = vadd.f32 0.0, %v819
        %v821 = vpop.f32.mrb[0].mxu0
        %822 = vmatprep.mubr.bf16.mxu0 0
        %823 = vmatmul.mubr.bf16.gmra.mrb[0].mxu0 %v624
        %v824 = vpop.f32.mrb[0].mxu0
        %v825 = vadd.f32 0.0, %v824
        %v826 = vpop.f32.mrb[0].mxu0
        %v827 = vpop.f32.mrb[0].mxu0
        %v828 = vadd.f32 0.0, %v827
        %v829 = vpop.f32.mrb[0].mxu0
        %830 = vmatprep.mubr.bf16.mxu0 0
        %831 = vmatmul.mubr.bf16.gmra.mrb[0].mxu0 %v625
        %v832 = vpop.f32.mrb[0].mxu0
        %v833 = vadd.f32 0.0, %v832
        %v834 = vpop.f32.mrb[0].mxu0
        %v835 = vpop.f32.mrb[0].mxu0
        %v836 = vadd.f32 0.0, %v835
        %v837 = vpop.f32.mrb[0].mxu0
        %838 = vmatprep.mubr.bf16.mxu0 0
        %839 = vmatmul.mubr.bf16.gmra.mrb[0].mxu0 %v626
        %v840 = vpop.f32.mrb[0].mxu0
        %v841 = vadd.f32 0.0, %v840
        %v842 = vpop.f32.mrb[0].mxu0
        %v843 = vpop.f32.mrb[0].mxu0
        %v844 = vadd.f32 0.0, %v843
        %v845 = vpop.f32.mrb[0].mxu0
        %846 = vmatprep.mubr.bf16.mxu0 0
        %847 = vmatmul.mubr.bf16.gmra.mrb[0].mxu0 %v627
        %v848 = vpop.f32.mrb[0].mxu0
        %v849 = vadd.f32 0.0, %v848
        %v850 = vpop.f32.mrb[0].mxu0
        %v851 = vpop.f32.mrb[0].mxu0
        %v852 = vadd.f32 0.0, %v851
        %v853 = vpop.f32.mrb[0].mxu0
        %854 = vmatprep.mubr.bf16.mxu0 0
        %855 = vmatmul.mubr.bf16.gmra.mrb[0].mxu0 %v628
        %v856 = vpop.f32.mrb[0].mxu0
        %v857 = vadd.f32 0.0, %v856
        %v858 = vpop.f32.mrb[0].mxu0
        %v859 = vpop.f32.mrb[0].mxu0
        %v860 = vadd.f32 0.0, %v859
        %v861 = vpop.f32.mrb[0].mxu0
        %862 = vmatprep.mubr.bf16.mxu0 0
        %863 = vmatmul.mubr.bf16.gmra.mrb[0].mxu0 %v629
        %v864 = vpop.f32.mrb[0].mxu0
        %v865 = vadd.f32 0.0, %v864
        %v866 = vpop.f32.mrb[0].mxu0
        %v867 = vpop.f32.mrb[0].mxu0
        %v868 = vadd.f32 0.0, %v867
        %v869 = vpop.f32.mrb[0].mxu0
        %870 = vmatprep.mubr.bf16.mxu0 0
        %871 = vmatmul.mubr.bf16.gmra.mrb[0].mxu0 %v630
        %v872 = vpop.f32.mrb[0].mxu0
        %v873 = vadd.f32 0.0, %v872
        %v874 = vpop.f32.mrb[0].mxu0
        %v875 = vpop.f32.mrb[0].mxu0
        %v876 = vadd.f32 0.0, %v875
        %v877 = vpop.f32.mrb[0].mxu0
        %878 = vmatprep.mubr.bf16.mxu0 0
        %879 = vmatmul.mubr.bf16.gmra.mrb[0].mxu0 %v631
        %v880 = vpop.f32.mrb[0].mxu0
        %v881 = vadd.f32 0.0, %v880
        %v882 = vpop.f32.mrb[0].mxu0
        %v883 = vpop.f32.mrb[0].mxu0
        %v884 = vadd.f32 0.0, %v883
        %v885 = vpop.f32.mrb[0].mxu0
        %886 = vmatprep.mubr.bf16.mxu0 0
        %887 = vmatmul.mubr.bf16.gmra.mrb[0].mxu0 %v632
        %v888 = vpop.f32.mrb[0].mxu0
        %v889 = vadd.f32 0.0, %v888
        %v890 = vpop.f32.mrb[0].mxu0
        %v891 = vpop.f32.mrb[0].mxu0
        %v892 = vadd.f32 0.0, %v891
        %v893 = vpop.f32.mrb[0].mxu0
        %894 = vmatprep.mubr.bf16.mxu0 0
        %895 = vmatmul.mubr.bf16.gmra.mrb[0].mxu0 %v633
        %v896 = vpop.f32.mrb[0].mxu0
        %v897 = vadd.f32 0.0, %v896
        %v898 = vpop.f32.mrb[0].mxu0
        %v899 = vpop.f32.mrb[0].mxu0
        %v900 = vadd.f32 0.0, %v899
        %v901 = vpop.f32.mrb[0].mxu0
        %902 = vmatprep.mubr.bf16.mxu0 0
        %903 = vmatmul.mubr.bf16.gmra.mrb[0].mxu0 %v634
        %v904 = vpop.f32.mrb[0].mxu0
        %v905 = vadd.f32 0.0, %v904
        %v906 = vpop.f32.mrb[0].mxu0
        %v907 = vpop.f32.mrb[0].mxu0
        %v908 = vadd.f32 0.0, %v907
        %v909 = vpop.f32.mrb[0].mxu0
        %910 = vmatprep.mubr.bf16.mxu0 0
        %911 = vmatmul.mubr.bf16.gmra.mrb[0].mxu0 %v635
        %v912 = vpop.f32.mrb[0].mxu0
        %v913 = vadd.f32 0.0, %v912
        %v914 = vpop.f32.mrb[0].mxu0
        %v915 = vpop.f32.mrb[0].mxu0
        %v916 = vadd.f32 0.0, %v915
        %v917 = vpop.f32.mrb[0].mxu0
        %918 = vmatprep.mubr.bf16.mxu0 0
        %919 = vmatmul.mubr.bf16.gmra.mrb[0].mxu0 %v636
        %v920 = vpop.f32.mrb[0].mxu0
        %v921 = vadd.f32 0.0, %v920
        %v922 = vpop.f32.mrb[0].mxu0
        %v923 = vpop.f32.mrb[0].mxu0
        %v924 = vadd.f32 0.0, %v923
        %v925 = vpop.f32.mrb[0].mxu0
        %926 = vmatprep.mubr.bf16.mxu0 0
        %927 = vmatmul.mubr.bf16.gmra.mrb[0].mxu0 %v637
        %v928 = vpop.f32.mrb[0].mxu0
        %v929 = vadd.f32 0.0, %v928
        %v930 = vpop.f32.mrb[0].mxu0
        %v931 = vpop.f32.mrb[0].mxu0
        %v932 = vadd.f32 0.0, %v931
        %v933 = vpop.f32.mrb[0].mxu0
        %934 = vmatprep.mubr.bf16.mxu0 0
        %935 = vmatmul.mubr.bf16.gmra.mrb[0].mxu0 %v638
        %v936 = vpop.f32.mrb[0].mxu0
        %v937 = vadd.f32 0.0, %v936
        %v938 = vpop.f32.mrb[0].mxu0
        %v939 = vpop.f32.mrb[0].mxu0
        %v940 = vadd.f32 0.0, %v939
        %v941 = vpop.f32.mrb[0].mxu0
        %942 = vmatprep.mubr.bf16.mxu0 0
        %943 = vmatmul.mubr.bf16.gmra.mrb[0].mxu0 %v639
        %v944 = vpop.f32.mrb[0].mxu0
        %v945 = vadd.f32 0.0, %v944
        %v946 = vpop.f32.mrb[0].mxu0
        %v947 = vpop.f32.mrb[0].mxu0
        %v948 = vadd.f32 0.0, %v947
        %v949 = vpop.f32.mrb[0].mxu0
        %950 = vmatprep.mubr.bf16.mxu0 0
        %951 = vmatmul.mubr.bf16.gmra.mrb[0].mxu0 %v640
        %v952 = vpop.f32.mrb[0].mxu0
        %v953 = vadd.f32 0.0, %v952
        %v954 = vpop.f32.mrb[0].mxu0
        %v955 = vpop.f32.mrb[0].mxu0
        %v956 = vadd.f32 0.0, %v955
        %v957 = vpop.f32.mrb[0].mxu0
        %958 = vmatprep.mubr.bf16.mxu0 0
        %959 = vmatmul.mubr.bf16.gmra.mrb[0].mxu0 %v641
        %v960 = vpop.f32.mrb[0].mxu0
        %v961 = vadd.f32 0.0, %v960
        %v962 = vpop.f32.mrb[0].mxu0
        %v963 = vpop.f32.mrb[0].mxu0
        %v964 = vadd.f32 0.0, %v963
        %v965 = vpop.f32.mrb[0].mxu0
        %966 = vmatprep.mubr.bf16.mxu0 0
        %967 = vmatmul.mubr.bf16.gmra.mrb[0].mxu0 %v642
        %v968 = vpop.f32.mrb[0].mxu0
        %v969 = vadd.f32 0.0, %v968
        %v970 = vpop.f32.mrb[0].mxu0
        %v971 = vpop.f32.mrb[0].mxu0
        %v972 = vadd.f32 0.0, %v971
        %v973 = vpop.f32.mrb[0].mxu0
        %974 = vmatprep.mubr.bf16.mxu0 0
        %975 = vmatmul.mubr.bf16.gmra.mrb[0].mxu0 %v643
        %v976 = vpop.f32.mrb[0].mxu0
        %v977 = vadd.f32 0.0, %v976
        %v978 = vpop.f32.mrb[0].mxu0
        %v979 = vpop.f32.mrb[0].mxu0
        %v980 = vadd.f32 0.0, %v979
        %v981 = vpop.f32.mrb[0].mxu0
        %982 = vmatprep.mubr.bf16.mxu0 0
        %983 = vmatmul.mubr.bf16.gmra.mrb[0].mxu0 %v644
        %v984 = vpop.f32.mrb[0].mxu0
        %v985 = vadd.f32 0.0, %v984
        %v986 = vpop.f32.mrb[0].mxu0
        %v987 = vpop.f32.mrb[0].mxu0
        %v988 = vadd.f32 0.0, %v987
        %v989 = vpop.f32.mrb[0].mxu0
        %990 = vmatprep.mubr.bf16.mxu0 0
        %991 = vmatmul.mubr.bf16.gmra.mrb[0].mxu0 %v645
        %v992 = vpop.f32.mrb[0].mxu0
        %v993 = vadd.f32 0.0, %v992
        %v994 = vpop.f32.mrb[0].mxu0
        %v995 = vpop.f32.mrb[0].mxu0
        %v996 = vadd.f32 0.0, %v995
        %v997 = vpop.f32.mrb[0].mxu0
        %998 = vdwg.mxu0
        %v999 = vadd.f32 %v745, %v748
        %v1000 = vadd.f32 %v999, %v753
        %v1001 = vadd.f32 %v1000, %v756
        %v1002 = vadd.f32 %v1001, %v761
        %v1003 = vadd.f32 %v1002, %v764
        %v1004 = vadd.f32 %v1003, %v769
        %v1005 = vadd.f32 %v1004, %v772
        %v1006 = vadd.f32 %v1005, %v777
        %v1007 = vadd.f32 %v1006, %v780
        %v1008 = vadd.f32 %v1007, %v785
        %v1009 = vadd.f32 %v1008, %v788
        %v1010 = vadd.f32 %v1009, %v793
        %v1011 = vadd.f32 %v1010, %v796
        %v1012 = vadd.f32 %v1011, %v801
        %v1013 = vadd.f32 %v1012, %v804
        %v1014 = vadd.f32 %v1013, %v809
        %v1015 = vadd.f32 %v1014, %v812
        %v1016 = vadd.f32 %v1015, %v817
        %v1017 = vadd.f32 %v1016, %v820
        %v1018 = vadd.f32 %v1017, %v825
        %v1019 = vadd.f32 %v1018, %v828
        %v1020 = vadd.f32 %v1019, %v833
        %v1021 = vadd.f32 %v1020, %v836
        %v1022 = vadd.f32 %v1021, %v841
        %v1023 = vadd.f32 %v1022, %v844
        %v1024 = vadd.f32 %v1023, %v849
        %v1025 = vadd.f32 %v1024, %v852
        %v1026 = vadd.f32 %v1025, %v857
        %v1027 = vadd.f32 %v1026, %v860
        %v1028 = vadd.f32 %v1027, %v865
        %v1029 = vadd.f32 %v1028, %v868
        %v1030 = vadd.f32 %v1029, %v873
        %v1031 = vadd.f32 %v1030, %v876
        %v1032 = vadd.f32 %v1031, %v881
        %v1033 = vadd.f32 %v1032, %v884
        %v1034 = vadd.f32 %v1033, %v889
        %v1035 = vadd.f32 %v1034, %v892
        %v1036 = vadd.f32 %v1035, %v897
        %v1037 = vadd.f32 %v1036, %v900
        %v1038 = vadd.f32 %v1037, %v905
        %v1039 = vadd.f32 %v1038, %v908
        %v1040 = vadd.f32 %v1039, %v913
        %v1041 = vadd.f32 %v1040, %v916
        %v1042 = vadd.f32 %v1041, %v921
        %v1043 = vadd.f32 %v1042, %v924
        %v1044 = vadd.f32 %v1043, %v929
        %v1045 = vadd.f32 %v1044, %v932
        %v1046 = vadd.f32 %v1045, %v937
        %v1047 = vadd.f32 %v1046, %v940
        %v1048 = vadd.f32 %v1047, %v945
        %v1049 = vadd.f32 %v1048, %v948
        %v1050 = vadd.f32 %v1049, %v953
        %v1051 = vadd.f32 %v1050, %v956
        %v1052 = vadd.f32 %v1051, %v961
        %v1053 = vadd.f32 %v1052, %v964
        %v1054 = vadd.f32 %v1053, %v969
        %v1055 = vadd.f32 %v1054, %v972
        %v1056 = vadd.f32 %v1055, %v977
        %v1057 = vadd.f32 %v1056, %v980
        %v1058 = vadd.f32 %v1057, %v985
        %v1059 = vadd.f32 %v1058, %v988
        %v1060 = vadd.f32 %v1059, %v993
        %v1061 = vadd.f32 %v1060, %v996
        %v1062 = vrot.slane %v1061, 4
        %v1063 = vadd.f32 %v1061, %v1062
        %v1064 = vrot.slane %v1063, 2
        %v1065 = vadd.f32 %v1063, %v1064
        %v1066 = vrot.slane %v1065, 1
        %v1067 = vadd.f32 %v1065, %v1066
        %v1068 = vmul.f32 %v745, %v745
        %v1069 = vmul.f32 %v748, %v748
        %v1070 = vmul.f32 %v753, %v753
        %v1071 = vmul.f32 %v756, %v756
        %v1072 = vmul.f32 %v761, %v761
        %v1073 = vmul.f32 %v764, %v764
        %v1074 = vmul.f32 %v769, %v769
        %v1075 = vmul.f32 %v772, %v772
        %v1076 = vmul.f32 %v777, %v777
        %v1077 = vmul.f32 %v780, %v780
        %v1078 = vmul.f32 %v785, %v785
        %v1079 = vmul.f32 %v788, %v788
        %v1080 = vmul.f32 %v793, %v793
        %v1081 = vmul.f32 %v796, %v796
        %v1082 = vmul.f32 %v801, %v801
        %v1083 = vmul.f32 %v804, %v804
        %v1084 = vmul.f32 %v809, %v809
        %v1085 = vmul.f32 %v812, %v812
        %v1086 = vmul.f32 %v817, %v817
        %v1087 = vmul.f32 %v820, %v820
        %v1088 = vmul.f32 %v825, %v825
        %v1089 = vmul.f32 %v828, %v828
        %v1090 = vmul.f32 %v833, %v833
        %v1091 = vmul.f32 %v836, %v836
        %v1092 = vmul.f32 %v841, %v841
        %v1093 = vmul.f32 %v844, %v844
        %v1094 = vmul.f32 %v849, %v849
        %v1095 = vmul.f32 %v852, %v852
        %v1096 = vmul.f32 %v857, %v857
        %v1097 = vmul.f32 %v860, %v860
        %v1098 = vmul.f32 %v865, %v865
        %v1099 = vmul.f32 %v868, %v868
        %v1100 = vmul.f32 %v873, %v873
        %v1101 = vmul.f32 %v876, %v876
        %v1102 = vmul.f32 %v881, %v881
        %v1103 = vmul.f32 %v884, %v884
        %v1104 = vmul.f32 %v889, %v889
        %v1105 = vmul.f32 %v892, %v892
        %v1106 = vmul.f32 %v897, %v897
        %v1107 = vmul.f32 %v900, %v900
        %v1108 = vmul.f32 %v905, %v905
        %v1109 = vmul.f32 %v908, %v908
        %v1110 = vmul.f32 %v913, %v913
        %v1111 = vmul.f32 %v916, %v916
        %v1112 = vmul.f32 %v921, %v921
        %v1113 = vmul.f32 %v924, %v924
        %v1114 = vmul.f32 %v929, %v929
        %v1115 = vmul.f32 %v932, %v932
        %v1116 = vmul.f32 %v937, %v937
        %v1117 = vmul.f32 %v940, %v940
        %v1118 = vmul.f32 %v945, %v945
        %v1119 = vmul.f32 %v948, %v948
        %v1120 = vmul.f32 %v953, %v953
        %v1121 = vmul.f32 %v956, %v956
        %v1122 = vmul.f32 %v961, %v961
        %v1123 = vmul.f32 %v964, %v964
        %v1124 = vmul.f32 %v969, %v969
        %v1125 = vmul.f32 %v972, %v972
        %v1126 = vmul.f32 %v977, %v977
        %v1127 = vmul.f32 %v980, %v980
        %v1128 = vmul.f32 %v985, %v985
        %v1129 = vmul.f32 %v988, %v988
        %v1130 = vmul.f32 %v993, %v993
        %v1131 = vmul.f32 %v996, %v996
        %v1132 = vadd.f32 %v1068, %v1069
        %v1133 = vadd.f32 %v1132, %v1070
        %v1134 = vadd.f32 %v1133, %v1071
        %v1135 = vadd.f32 %v1134, %v1072
        %v1136 = vadd.f32 %v1135, %v1073
        %v1137 = vadd.f32 %v1136, %v1074
        %v1138 = vadd.f32 %v1137, %v1075
        %v1139 = vadd.f32 %v1138, %v1076
        %v1140 = vadd.f32 %v1139, %v1077
        %v1141 = vadd.f32 %v1140, %v1078
        %v1142 = vadd.f32 %v1141, %v1079
        %v1143 = vadd.f32 %v1142, %v1080
        %v1144 = vadd.f32 %v1143, %v1081
        %v1145 = vadd.f32 %v1144, %v1082
        %v1146 = vadd.f32 %v1145, %v1083
        %v1147 = vadd.f32 %v1146, %v1084
        %v1148 = vadd.f32 %v1147, %v1085
        %v1149 = vadd.f32 %v1148, %v1086
        %v1150 = vadd.f32 %v1149, %v1087
        %v1151 = vadd.f32 %v1150, %v1088
        %v1152 = vadd.f32 %v1151, %v1089
        %v1153 = vadd.f32 %v1152, %v1090
        %v1154 = vadd.f32 %v1153, %v1091
        %v1155 = vadd.f32 %v1154, %v1092
        %v1156 = vadd.f32 %v1155, %v1093
        %v1157 = vadd.f32 %v1156, %v1094
        %v1158 = vadd.f32 %v1157, %v1095
        %v1159 = vadd.f32 %v1158, %v1096
        %v1160 = vadd.f32 %v1159, %v1097
        %v1161 = vadd.f32 %v1160, %v1098
        %v1162 = vadd.f32 %v1161, %v1099
        %v1163 = vadd.f32 %v1162, %v1100
        %v1164 = vadd.f32 %v1163, %v1101
        %v1165 = vadd.f32 %v1164, %v1102
        %v1166 = vadd.f32 %v1165, %v1103
        %v1167 = vadd.f32 %v1166, %v1104
        %v1168 = vadd.f32 %v1167, %v1105
        %v1169 = vadd.f32 %v1168, %v1106
        %v1170 = vadd.f32 %v1169, %v1107
        %v1171 = vadd.f32 %v1170, %v1108
        %v1172 = vadd.f32 %v1171, %v1109
        %v1173 = vadd.f32 %v1172, %v1110
        %v1174 = vadd.f32 %v1173, %v1111
        %v1175 = vadd.f32 %v1174, %v1112
        %v1176 = vadd.f32 %v1175, %v1113
        %v1177 = vadd.f32 %v1176, %v1114
        %v1178 = vadd.f32 %v1177, %v1115
        %v1179 = vadd.f32 %v1178, %v1116
        %v1180 = vadd.f32 %v1179, %v1117
        %v1181 = vadd.f32 %v1180, %v1118
        %v1182 = vadd.f32 %v1181, %v1119
        %v1183 = vadd.f32 %v1182, %v1120
        %v1184 = vadd.f32 %v1183, %v1121
        %v1185 = vadd.f32 %v1184, %v1122
        %v1186 = vadd.f32 %v1185, %v1123
        %v1187 = vadd.f32 %v1186, %v1124
        %v1188 = vadd.f32 %v1187, %v1125
        %v1189 = vadd.f32 %v1188, %v1126
        %v1190 = vadd.f32 %v1189, %v1127
        %v1191 = vadd.f32 %v1190, %v1128
        %v1192 = vadd.f32 %v1191, %v1129
        %v1193 = vadd.f32 %v1192, %v1130
        %v1194 = vadd.f32 %v1193, %v1131
        %v1195 = vrot.slane %v1194, 4
        %v1196 = vadd.f32 %v1194, %v1195
        %v1197 = vrot.slane %v1196, 2
        %v1198 = vadd.f32 %v1196, %v1197
        %v1199 = vrot.slane %v1198, 1
        %v1200 = vadd.f32 %v1198, %v1199
        %vm1201 = vcmask 1040384
        %v1202 = vsel %vm1201, %v1067, %v1200
        %vm1203 = vcmask 1041408
        %v1204 = vsel %vm1203, %v1202, 0.0
        %1205 = vst [vmem:[%s266] sm:$0xff] %v1204
        %v1206 = vpack.c.bf16 %v748, %v745
        %v1207 = vpack.c.bf16 %v756, %v753
        %v1208 = vpack.c.bf16 %v764, %v761
        %v1209 = vpack.c.bf16 %v772, %v769
        %v1210 = vpack.c.bf16 %v780, %v777
        %v1211 = vpack.c.bf16 %v788, %v785
        %v1212 = vpack.c.bf16 %v796, %v793
        %v1213 = vpack.c.bf16 %v804, %v801
        %v1214 = vpack.c.bf16 %v812, %v809
        %v1215 = vpack.c.bf16 %v820, %v817
        %v1216 = vpack.c.bf16 %v828, %v825
        %v1217 = vpack.c.bf16 %v836, %v833
        %v1218 = vpack.c.bf16 %v844, %v841
        %v1219 = vpack.c.bf16 %v852, %v849
        %v1220 = vpack.c.bf16 %v860, %v857
        %v1221 = vpack.c.bf16 %v868, %v865
        %v1222 = vpack.c.bf16 %v876, %v873
        %v1223 = vpack.c.bf16 %v884, %v881
        %v1224 = vpack.c.bf16 %v892, %v889
        %v1225 = vpack.c.bf16 %v900, %v897
        %v1226 = vpack.c.bf16 %v908, %v905
        %v1227 = vpack.c.bf16 %v916, %v913
        %v1228 = vpack.c.bf16 %v924, %v921
        %v1229 = vpack.c.bf16 %v932, %v929
        %v1230 = vpack.c.bf16 %v940, %v937
        %v1231 = vpack.c.bf16 %v948, %v945
        %v1232 = vpack.c.bf16 %v956, %v953
        %v1233 = vpack.c.bf16 %v964, %v961
        %v1234 = vpack.c.bf16 %v972, %v969
        %v1235 = vpack.c.bf16 %v980, %v977
        %v1236 = vpack.c.bf16 %v988, %v985
        %v1237 = vpack.c.bf16 %v996, %v993
        %v1270 = vunpack.c.l.b16 %v1206
        %v1271 = vunpack.c.h.b16 %v1206
        %v1272 = vunpack.c.l.b16 %v1207
        %v1273 = vunpack.c.h.b16 %v1207
        %v1274 = vunpack.c.l.b16 %v1208
        %v1275 = vunpack.c.h.b16 %v1208
        %v1276 = vunpack.c.l.b16 %v1209
        %v1277 = vunpack.c.h.b16 %v1209
        %v1278 = vunpack.c.l.b16 %v1210
        %v1279 = vunpack.c.h.b16 %v1210
        %v1280 = vunpack.c.l.b16 %v1211
        %v1281 = vunpack.c.h.b16 %v1211
        %v1282 = vunpack.c.l.b16 %v1212
        %v1283 = vunpack.c.h.b16 %v1212
        %v1284 = vunpack.c.l.b16 %v1213
        %v1285 = vunpack.c.h.b16 %v1213
        %v1286 = vunpack.c.l.b16 %v1214
        %v1287 = vunpack.c.h.b16 %v1214
        %v1288 = vunpack.c.l.b16 %v1215
        %v1289 = vunpack.c.h.b16 %v1215
        %v1290 = vunpack.c.l.b16 %v1216
        %v1291 = vunpack.c.h.b16 %v1216
        %v1292 = vunpack.c.l.b16 %v1217
        %v1293 = vunpack.c.h.b16 %v1217
        %v1294 = vunpack.c.l.b16 %v1218
        %v1295 = vunpack.c.h.b16 %v1218
        %v1296 = vunpack.c.l.b16 %v1219
        %v1297 = vunpack.c.h.b16 %v1219
        %v1298 = vunpack.c.l.b16 %v1220
        %v1299 = vunpack.c.h.b16 %v1220
        %v1300 = vunpack.c.l.b16 %v1221
        %v1301 = vunpack.c.h.b16 %v1221
        %v1302 = vunpack.c.l.b16 %v1222
        %v1303 = vunpack.c.h.b16 %v1222
        %v1304 = vunpack.c.l.b16 %v1223
        %v1305 = vunpack.c.h.b16 %v1223
        %v1306 = vunpack.c.l.b16 %v1224
        %v1307 = vunpack.c.h.b16 %v1224
        %v1308 = vunpack.c.l.b16 %v1225
        %v1309 = vunpack.c.h.b16 %v1225
        %v1310 = vunpack.c.l.b16 %v1226
        %v1311 = vunpack.c.h.b16 %v1226
        %v1312 = vunpack.c.l.b16 %v1227
        %v1313 = vunpack.c.h.b16 %v1227
        %v1314 = vunpack.c.l.b16 %v1228
        %v1315 = vunpack.c.h.b16 %v1228
        %v1316 = vunpack.c.l.b16 %v1229
        %v1317 = vunpack.c.h.b16 %v1229
        %v1318 = vunpack.c.l.b16 %v1230
        %v1319 = vunpack.c.h.b16 %v1230
        %v1320 = vunpack.c.l.b16 %v1231
        %v1321 = vunpack.c.h.b16 %v1231
        %v1322 = vunpack.c.l.b16 %v1232
        %v1323 = vunpack.c.h.b16 %v1232
        %v1324 = vunpack.c.l.b16 %v1233
        %v1325 = vunpack.c.h.b16 %v1233
        %v1326 = vunpack.c.l.b16 %v1234
        %v1327 = vunpack.c.h.b16 %v1234
        %v1328 = vunpack.c.l.b16 %v1235
        %v1329 = vunpack.c.h.b16 %v1235
        %v1330 = vunpack.c.l.b16 %v1236
        %v1331 = vunpack.c.h.b16 %v1236
        %v1332 = vunpack.c.l.b16 %v1237
        %v1333 = vunpack.c.h.b16 %v1237
        %v1334 = vpack.c.b16 %v1270, %v1270
        %v1335 = vpack.c.b16 %v1271, %v1271
        %v1336 = vpack.c.b16 %v1272, %v1272
        %v1337 = vpack.c.b16 %v1273, %v1273
        %v1338 = vpack.c.b16 %v1274, %v1274
        %v1339 = vpack.c.b16 %v1275, %v1275
        %v1340 = vpack.c.b16 %v1276, %v1276
        %v1341 = vpack.c.b16 %v1277, %v1277
        %v1342 = vpack.c.b16 %v1278, %v1278
        %v1343 = vpack.c.b16 %v1279, %v1279
        %v1344 = vpack.c.b16 %v1280, %v1280
        %v1345 = vpack.c.b16 %v1281, %v1281
        %v1346 = vpack.c.b16 %v1282, %v1282
        %v1347 = vpack.c.b16 %v1283, %v1283
        %v1348 = vpack.c.b16 %v1284, %v1284
        %v1349 = vpack.c.b16 %v1285, %v1285
        %v1350 = vpack.c.b16 %v1286, %v1286
        %v1351 = vpack.c.b16 %v1287, %v1287
        %v1352 = vpack.c.b16 %v1288, %v1288
        %v1353 = vpack.c.b16 %v1289, %v1289
        %v1354 = vpack.c.b16 %v1290, %v1290
        %v1355 = vpack.c.b16 %v1291, %v1291
        %v1356 = vpack.c.b16 %v1292, %v1292
        %v1357 = vpack.c.b16 %v1293, %v1293
        %v1358 = vpack.c.b16 %v1294, %v1294
        %v1359 = vpack.c.b16 %v1295, %v1295
        %v1360 = vpack.c.b16 %v1296, %v1296
        %v1361 = vpack.c.b16 %v1297, %v1297
        %v1362 = vpack.c.b16 %v1298, %v1298
        %v1363 = vpack.c.b16 %v1299, %v1299
        %v1364 = vpack.c.b16 %v1300, %v1300
        %v1365 = vpack.c.b16 %v1301, %v1301
        %v1366 = vpack.c.b16 %v1302, %v1302
        %v1367 = vpack.c.b16 %v1303, %v1303
        %v1368 = vpack.c.b16 %v1304, %v1304
        %v1369 = vpack.c.b16 %v1305, %v1305
        %v1370 = vpack.c.b16 %v1306, %v1306
        %v1371 = vpack.c.b16 %v1307, %v1307
        %v1372 = vpack.c.b16 %v1308, %v1308
        %v1373 = vpack.c.b16 %v1309, %v1309
        %v1374 = vpack.c.b16 %v1310, %v1310
        %v1375 = vpack.c.b16 %v1311, %v1311
        %v1376 = vpack.c.b16 %v1312, %v1312
        %v1377 = vpack.c.b16 %v1313, %v1313
        %v1378 = vpack.c.b16 %v1314, %v1314
        %v1379 = vpack.c.b16 %v1315, %v1315
        %v1380 = vpack.c.b16 %v1316, %v1316
        %v1381 = vpack.c.b16 %v1317, %v1317
        %v1382 = vpack.c.b16 %v1318, %v1318
        %v1383 = vpack.c.b16 %v1319, %v1319
        %v1384 = vpack.c.b16 %v1320, %v1320
        %v1385 = vpack.c.b16 %v1321, %v1321
        %v1386 = vpack.c.b16 %v1322, %v1322
        %v1387 = vpack.c.b16 %v1323, %v1323
        %v1388 = vpack.c.b16 %v1324, %v1324
        %v1389 = vpack.c.b16 %v1325, %v1325
        %v1390 = vpack.c.b16 %v1326, %v1326
        %v1391 = vpack.c.b16 %v1327, %v1327
        %v1392 = vpack.c.b16 %v1328, %v1328
        %v1393 = vpack.c.b16 %v1329, %v1329
        %v1394 = vpack.c.b16 %v1330, %v1330
        %v1395 = vpack.c.b16 %v1331, %v1331
        %v1396 = vpack.c.b16 %v1332, %v1332
        %v1397 = vpack.c.b16 %v1333, %v1333
        %1462 = vst [vmem:[%s277] sm:$0xf] %v1334
        %1463 = vst [vmem:[%s277 + $0x4] sm:$0xf] %v1335
        %1464 = vst [vmem:[%s277 + $0x8] sm:$0xf] %v1336
        %1465 = vst [vmem:[%s277 + $0xc] sm:$0xf] %v1337
        %1466 = vst [vmem:[%s277 + $0x10] sm:$0xf] %v1338
        %1467 = vst [vmem:[%s277 + $0x14] sm:$0xf] %v1339
        %1468 = vst [vmem:[%s277 + $0x18] sm:$0xf] %v1340
        %1469 = vst [vmem:[%s277 + $0x1c] sm:$0xf] %v1341
        %1470 = vst [vmem:[%s277 + $0x20] sm:$0xf] %v1342
        %1471 = vst [vmem:[%s277 + $0x24] sm:$0xf] %v1343
        %1472 = vst [vmem:[%s277 + $0x28] sm:$0xf] %v1344
        %1473 = vst [vmem:[%s277 + $0x2c] sm:$0xf] %v1345
        %1474 = vst [vmem:[%s277 + $0x30] sm:$0xf] %v1346
        %1475 = vst [vmem:[%s277 + $0x34] sm:$0xf] %v1347
        %1476 = vst [vmem:[%s277 + $0x38] sm:$0xf] %v1348
        %1477 = vst [vmem:[%s277 + $0x3c] sm:$0xf] %v1349
        %1478 = vst [vmem:[%s277 + $0x40] sm:$0xf] %v1350
        %1479 = vst [vmem:[%s277 + $0x44] sm:$0xf] %v1351
        %1480 = vst [vmem:[%s277 + $0x48] sm:$0xf] %v1352
        %1481 = vst [vmem:[%s277 + $0x4c] sm:$0xf] %v1353
        %1482 = vst [vmem:[%s277 + $0x50] sm:$0xf] %v1354
        %1483 = vst [vmem:[%s277 + $0x54] sm:$0xf] %v1355
        %1484 = vst [vmem:[%s277 + $0x58] sm:$0xf] %v1356
        %1485 = vst [vmem:[%s277 + $0x5c] sm:$0xf] %v1357
        %1486 = vst [vmem:[%s277 + $0x60] sm:$0xf] %v1358
        %1487 = vst [vmem:[%s277 + $0x64] sm:$0xf] %v1359
        %1488 = vst [vmem:[%s277 + $0x68] sm:$0xf] %v1360
        %1489 = vst [vmem:[%s277 + $0x6c] sm:$0xf] %v1361
        %1490 = vst [vmem:[%s277 + $0x70] sm:$0xf] %v1362
        %1491 = vst [vmem:[%s277 + $0x74] sm:$0xf] %v1363
        %1492 = vst [vmem:[%s277 + $0x78] sm:$0xf] %v1364
        %1493 = vst [vmem:[%s277 + $0x7c] sm:$0xf] %v1365
        %1494 = vst [vmem:[%s277 + $0x80] sm:$0xf] %v1366
        %1495 = vst [vmem:[%s277 + $0x84] sm:$0xf] %v1367
        %1496 = vst [vmem:[%s277 + $0x88] sm:$0xf] %v1368
        %1497 = vst [vmem:[%s277 + $0x8c] sm:$0xf] %v1369
        %1498 = vst [vmem:[%s277 + $0x90] sm:$0xf] %v1370
        %1499 = vst [vmem:[%s277 + $0x94] sm:$0xf] %v1371
        %1500 = vst [vmem:[%s277 + $0x98] sm:$0xf] %v1372
        %1501 = vst [vmem:[%s277 + $0x9c] sm:$0xf] %v1373
        %1502 = vst [vmem:[%s277 + $0xa0] sm:$0xf] %v1374
        %1503 = vst [vmem:[%s277 + $0xa4] sm:$0xf] %v1375
        %1504 = vst [vmem:[%s277 + $0xa8] sm:$0xf] %v1376
        %1505 = vst [vmem:[%s277 + $0xac] sm:$0xf] %v1377
        %1506 = vst [vmem:[%s277 + $0xb0] sm:$0xf] %v1378
        %1507 = vst [vmem:[%s277 + $0xb4] sm:$0xf] %v1379
        %1508 = vst [vmem:[%s277 + $0xb8] sm:$0xf] %v1380
        %1509 = vst [vmem:[%s277 + $0xbc] sm:$0xf] %v1381
        %1510 = vst [vmem:[%s277 + $0xc0] sm:$0xf] %v1382
        %1511 = vst [vmem:[%s277 + $0xc4] sm:$0xf] %v1383
        %1512 = vst [vmem:[%s277 + $0xc8] sm:$0xf] %v1384
        %1513 = vst [vmem:[%s277 + $0xcc] sm:$0xf] %v1385
        %1514 = vst [vmem:[%s277 + $0xd0] sm:$0xf] %v1386
        %1515 = vst [vmem:[%s277 + $0xd4] sm:$0xf] %v1387
        %1516 = vst [vmem:[%s277 + $0xd8] sm:$0xf] %v1388
        %1517 = vst [vmem:[%s277 + $0xdc] sm:$0xf] %v1389
        %1518 = vst [vmem:[%s277 + $0xe0] sm:$0xf] %v1390
        %1519 = vst [vmem:[%s277 + $0xe4] sm:$0xf] %v1391
        %1520 = vst [vmem:[%s277 + $0xe8] sm:$0xf] %v1392
        %1521 = vst [vmem:[%s277 + $0xec] sm:$0xf] %v1393
        %1522 = vst [vmem:[%s277 + $0xf0] sm:$0xf] %v1394
        %1523 = vst [vmem:[%s277 + $0xf4] sm:$0xf] %v1395
        %1524 = vst [vmem:[%s277 + $0xf8] sm:$0xf] %v1396
        %1525 = vst [vmem:[%s277 + $0xfc] sm:$0xf] %v1397
        %s1526 = smul.u32 64, %s22
        %p1527 = scmp.lt.s32.totalorder %s1526, 4095
        %s1528 = scalar_select %p1527, %s1526, 4095
        %s1529 = smul.addr %s1528, 4
        %s1530 = scalar_lea.vmem %s4, %s1529
        %s1531 = sand.u32 %s145, 1
        %s1532 = scalar_lea.sflag [#allocation4], %s1531
        %s1533 = sand.u32 %s145, 1
        %s1534 = smul.addr %s1533, 8
        %s1535 = scalar_lea.vmem [#allocation8], %s1534
        // Predicated region
        $region49: #{_forward_impl.14} parent=35 // pred_check
          %p1536 = pneg %p129
        $region50: #{_forward_impl.14} parent=35 // pred_check_branch
          %1538 = sbr.rel (%p1536) target = $region52
        $region51: #{_forward_impl.14} parent=35 // pred_region
          %s1539 = smul.u32 64, %s22
        $region52: #{_forward_impl.14} parent=35 // pred_fallthru
          _
        // Predicated region
        $region53: #{_forward_impl.14} parent=35 // pred_check
          %p1540 = pneg %p155
        $region54: #{_forward_impl.14} parent=35 // pred_check_branch
          %1542 = sbr.rel (%p1540) target = $region56
        $region55: #{_forward_impl.14} parent=35 // pred_region
          %s1544 = ssub.s32 128, 128
          %1545 = vsyncadd %s1532, %s1544
          %s1546 = smul.addr %s22, 128
          %s1547 = scalar_lea.hbm %s5, %s1546
          %s1549 = sshll.u32 %s1535, 4
          %s1550 = int_to_ptr.vmem [resolvable:$true] %s1549
          %1552 = dma.vmem_to_hbm [thread:$0]  %s1550, 128, %s1547, %s1532
        $region56: #{_forward_impl.14} parent=35 // pred_fallthru
          _
      $region36: #{_forward_impl.14} parent=5 // pred_fallthru
        _
      %p1553 = scmp.le.s32.totalorder 2, %s17
      // Predicated region
      $region57: #{_forward_impl.14} parent=5 // pred_check
        %p1554 = pneg %p1553
      $region58: #{_forward_impl.14} parent=5 // pred_check_branch
        %1556 = sbr.rel (%p1554) target = $region60
      $region59: #{_forward_impl.14} parent=5 // pred_region
        %s1557 = ssub.s32 %s17, 2
        // Predicated region
        $region61: #{_forward_impl.14} parent=59 // pred_check
          %p1558 = pneg %p135
        $region62: #{_forward_impl.14} parent=59 // pred_check_branch
          %1560 = sbr.rel (%p1558) target = $region64
        $region63: #{_forward_impl.14} parent=59 // pred_region
          %s1561 = smul.u32 64, %s23
          %p1562 = scmp.lt.s32.totalorder %s1561, 4095
          %s1563 = scalar_select %p1562, %s1561, 4095
          %s1564 = smul.addr %s1563, 4
          %s1565 = scalar_lea.vmem %s4, %s1564
        $region64: #{_forward_impl.14} parent=59 // pred_fallthru
          _
        // Predicated region
        $region65: #{_forward_impl.14} parent=59 // pred_check
          %p1566 = pneg %p161
        $region66: #{_forward_impl.14} parent=59 // pred_check_branch
          %1568 = sbr.rel (%p1566) target = $region68
        $region67: #{_forward_impl.14} parent=59 // pred_region
          %s1569 = sand.u32 %s146, 1
          %s1570 = scalar_lea.sflag [#allocation4], %s1569
          %s1571 = sand.u32 %s146, 1
          %s1572 = smul.addr %s1571, 8
          %s1573 = scalar_lea.vmem [#allocation8], %s1572
          %1574 = dma.done %s1570, 128
        $region68: #{_forward_impl.14} parent=59 // pred_fallthru
          _
      $region60: #{_forward_impl.14} parent=5 // pred_fallthru
        _
    $region6: #{_forward_impl.14} parent=1 // loop_footer
      %s21 = sadd.s32 1, %s17
    $region7: #{_forward_impl.14} parent=1 // loop_footer_branch
      %16 = sbr.rel target = $region3
    $region8: #{_forward_impl.14} parent=1 // loop_exit
      _
    %1575 = vsyncpa [#allocation3], 1
    %s1576 = scalar_lea.sflag [#allocation3], 1
    %1577 = vsyncpa %s1576, 1
    %1578 = vsyncpa [#allocation6], 1
    %1579 = vsyncpa [#allocation4], 1
    %s1580 = scalar_lea.sflag [#allocation4], 1
    %1581 = vsyncpa %s1580, 1

// kernel: _forward_impl.15
$region0: #{_forward_impl.15}
  #allocation0 [shape = 'u32[]', space=smem, size = 0x4, offset = 0x4, fixed_abs, tag = 'smem constant byte address 0x4 - core index']
  #allocation1 [shape = 'u32[144,128]{1,0:T(1,128)}', space=vmem, size = 0x12000, scoped, tag = 'internal scratch']
  %s0 = inlined_call_operand.hbm [shape: bf16[131072,128], index: 0, kind: input, shape index: {}]
  %s1 = inlined_call_operand.hbm [shape: f32[1,128], index: 1, kind: input, shape index: {}]
  %s2 = inlined_call_operand.hbm [shape: f32[1,128], index: 2, kind: input, shape index: {}]
  %s3 = inlined_call_operand.hbm [shape: bf16[128,128], index: 3, kind: input, shape index: {}]
  %s4 = inlined_call_operand.hbm [shape: bf16[131072,128], index: 4, kind: output, shape index: {}]
  %s5 = sld [smem:[#allocation0]]
  $region65: #{_forward_impl.15} parent=0
    _
  %s7 = ssub.s32 1, %s5
  %s8 = scalar_select 0, %s7, %s5
  $region1: #{_forward_impl.15} parent=0
    #allocation2 [shape = 'u8[262144]{0}', space=vmem, size = 0x40000, scoped, tag = 'input window, operand 0']
    #allocation3 [shape = 's32[2]{0}', space=sflag, size = 0x8, scoped, tag = 'scoped memory for _forward_impl.15']
    #allocation4 [shape = 's32[2]{0}', space=sflag, size = 0x8, scoped, tag = 'scoped memory for _forward_impl.15']
    #allocation5 [shape = 'u8[512]{0}', space=vmem, size = 0x400, scoped, tag = 'input window, operand 1, single buffered']
    #allocation6 [shape = 's32[1]{0}', space=sflag, size = 0x4, scoped, tag = 'scoped memory for _forward_impl.15']
    #allocation7 [shape = 'u8[512]{0}', space=vmem, size = 0x400, scoped, tag = 'input window, operand 2, single buffered']
    #allocation8 [shape = 'u8[32768]{0}', space=vmem, size = 0x8000, scoped, tag = 'input window, operand 3, single buffered']
    #allocation9 [shape = 's32[1]{0}', space=sflag, size = 0x4, scoped, tag = 'scoped memory for _forward_impl.15']
    #allocation10 [shape = 'u8[262144]{0}', space=vmem, size = 0x40000, scoped, tag = 'output window, operand 0']
    %9 = vsyncpa [#allocation3], 0
    %s10 = scalar_lea.sflag [#allocation3], 1
    %11 = vsyncpa %s10, 0
    %12 = vsyncpa [#allocation6], 0
    %13 = vsyncpa [#allocation9], 0
    %14 = vsyncpa [#allocation4], 0
    %s15 = scalar_lea.sflag [#allocation4], 1
    %16 = vsyncpa %s15, 0
    loop: start=0, step=1, limit=258
    $region2: #{_forward_impl.15} parent=1 // loop_pre_header
      _
    $region3: #{_forward_impl.15} parent=1 // loop_header
      %s18 = sphi 0, %s22
      %p19 = scmp.ge.s32.totalorder %s18, 258
      %s28 = sphi 0, %s30
      %s31 = sphi 0, %s28
      %s32 = sphi 0, %s31
      %s48 = sphi 0, %s32
      %s52 = sphi 0, %s52
      %s54 = sphi 0, %s52
      %s55 = sphi 0, %s54
      %s69 = sphi 0, %s55
      %s73 = sphi 0, %s73
      %s75 = sphi 0, %s73
      %s76 = sphi 0, %s75
      %s90 = sphi 0, %s76
      %s94 = sphi 0, %s94
      %s96 = sphi 0, %s94
      %s97 = sphi 0, %s96
      %s111 = sphi 0, %s97
      %s117 = sphi 0, %s119
      %s120 = sphi 0, %s117
      %s121 = sphi 0, %s120
      %s137 = sphi 0, %s121
    $region4: #{_forward_impl.15} parent=1 // loop_header_branch
      %21 = sbr.rel (%p19) target = $region8
    $region5: #{_forward_impl.15} parent=1 // loop_body
      %s23 = ssub.s32 %s18, 1
      %s24 = ssub.s32 %s18, 2
      %s25 = sadd.s32 %s18, 1
      %s26 = ssub.s32 %s18, %s25
      %p27 = scmp.eq.s32.totalorder %s26, 0
      %s29 = sadd.s32 %s28, 1
      %s30 = scalar_select %p27, %s28, %s29
      %p33 = pneg %p27
      %p34 = scmp.eq.s32.totalorder %s18, 255
      %p35 = por %p33, %p34
      %p36 = scmp.ne.s32.totalorder %s28, %s31
      %p37 = scmp.eq.s32.totalorder %s18, 0
      %p38 = por %p36, %p37
      %p39 = scmp.ne.s32.totalorder %s28, %s31
      %p40 = scmp.eq.s32.totalorder %s23, 255
      %p41 = por %p39, %p40
      %p42 = scmp.ne.s32.totalorder %s31, %s32
      %p43 = scmp.eq.s32.totalorder %s23, 0
      %p44 = por %p42, %p43
      %p45 = scmp.ne.s32.totalorder %s31, %s32
      %p46 = scmp.eq.s32.totalorder %s24, 255
      %p47 = por %p45, %p46
      %p49 = scmp.ne.s32.totalorder %s32, %s48
      %p50 = scmp.eq.s32.totalorder %s24, 0
      %p51 = por %p49, %p50
      %s53 = sadd.s32 %s52, 1
      %p56 = scmp.eq.s32.totalorder %s18, 255
      %p57 = scmp.ne.s32.totalorder %s52, %s54
      %p58 = scmp.eq.s32.totalorder %s18, 0
      %p59 = por %p57, %p58
      %p60 = scmp.ne.s32.totalorder %s52, %s54
      %p61 = scmp.eq.s32.totalorder %s23, 255
      %p62 = por %p60, %p61
      %p63 = scmp.ne.s32.totalorder %s54, %s55
      %p64 = scmp.eq.s32.totalorder %s23, 0
      %p65 = por %p63, %p64
      %p66 = scmp.ne.s32.totalorder %s54, %s55
      %p67 = scmp.eq.s32.totalorder %s24, 255
      %p68 = por %p66, %p67
      %p70 = scmp.ne.s32.totalorder %s55, %s69
      %p71 = scmp.eq.s32.totalorder %s24, 0
      %p72 = por %p70, %p71
      %s74 = sadd.s32 %s73, 1
      %p77 = scmp.eq.s32.totalorder %s18, 255
      %p78 = scmp.ne.s32.totalorder %s73, %s75
      %p79 = scmp.eq.s32.totalorder %s18, 0
      %p80 = por %p78, %p79
      %p81 = scmp.ne.s32.totalorder %s73, %s75
      %p82 = scmp.eq.s32.totalorder %s23, 255
      %p83 = por %p81, %p82
      %p84 = scmp.ne.s32.totalorder %s75, %s76
      %p85 = scmp.eq.s32.totalorder %s23, 0
      %p86 = por %p84, %p85
      %p87 = scmp.ne.s32.totalorder %s75, %s76
      %p88 = scmp.eq.s32.totalorder %s24, 255
      %p89 = por %p87, %p88
      %p91 = scmp.ne.s32.totalorder %s76, %s90
      %p92 = scmp.eq.s32.totalorder %s24, 0
      %p93 = por %p91, %p92
      %s95 = sadd.s32 %s94, 1
      %p98 = scmp.eq.s32.totalorder %s18, 255
      %p99 = scmp.ne.s32.totalorder %s94, %s96
      %p100 = scmp.eq.s32.totalorder %s18, 0
      %p101 = por %p99, %p100
      %p102 = scmp.ne.s32.totalorder %s94, %s96
      %p103 = scmp.eq.s32.totalorder %s23, 255
      %p104 = por %p102, %p103
      %p105 = scmp.ne.s32.totalorder %s96, %s97
      %p106 = scmp.eq.s32.totalorder %s23, 0
      %p107 = por %p105, %p106
      %p108 = scmp.ne.s32.totalorder %s96, %s97
      %p109 = scmp.eq.s32.totalorder %s24, 255
      %p110 = por %p108, %p109
      %p112 = scmp.ne.s32.totalorder %s97, %s111
      %p113 = scmp.eq.s32.totalorder %s24, 0
      %p114 = por %p112, %p113
      %s115 = ssub.s32 %s18, %s25
      %p116 = scmp.eq.s32.totalorder %s115, 0
      %s118 = sadd.s32 %s117, 1
      %s119 = scalar_select %p116, %s117, %s118
      %p122 = pneg %p116
      %p123 = scmp.eq.s32.totalorder %s18, 255
      %p124 = por %p122, %p123
      %p125 = scmp.ne.s32.totalorder %s117, %s120
      %p126 = scmp.eq.s32.totalorder %s18, 0
      %p127 = por %p125, %p126
      %p128 = scmp.ne.s32.totalorder %s117, %s120
      %p129 = scmp.eq.s32.totalorder %s23, 255
      %p130 = por %p128, %p129
      %p131 = scmp.ne.s32.totalorder %s120, %s121
      %p132 = scmp.eq.s32.totalorder %s23, 0
      %p133 = por %p131, %p132
      %p134 = scmp.ne.s32.totalorder %s120, %s121
      %p135 = scmp.eq.s32.totalorder %s24, 255
      %p136 = por %p134, %p135
      %p138 = scmp.ne.s32.totalorder %s121, %s137
      %p139 = scmp.eq.s32.totalorder %s24, 0
      %p140 = por %p138, %p139
      %p141 = scmp.le.s32.totalorder 1, %s18
      %p142 = scmp.lt.s32.totalorder %s18, 257
      %p143 = pnand %p141, %p142
      %p144 = pneg %p143
      // Predicated region
      $region9: #{_forward_impl.15} parent=5 // pred_check
        _
      $region10: #{_forward_impl.15} parent=5 // pred_check_branch
        %146 = sbr.rel (%p143) target = $region12
      $region11: #{_forward_impl.15} parent=5 // pred_region
        %s147 = ssub.s32 %s18, 1
        // Predicated region
        $region13: #{_forward_impl.15} parent=11 // pred_check
          %p148 = pneg %p65
        $region14: #{_forward_impl.15} parent=11 // pred_check_branch
          %150 = sbr.rel (%p148) target = $region16
        $region15: #{_forward_impl.15} parent=11 // pred_region
          %s152 = ssub.s32 16, 16
          %153 = vsyncadd [#allocation6], %s152
          %s155 = sshll.u32 [#allocation5], 4
          %s156 = int_to_ptr.vmem [resolvable:$true] %s155
          %158 = dma.hbm_to_vmem [thread:$0]  %s1, 16, %s156, [#allocation6]
        $region16: #{_forward_impl.15} parent=11 // pred_fallthru
          _
        // Predicated region
        $region17: #{_forward_impl.15} parent=11 // pred_check
          %p159 = pneg %p86
        $region18: #{_forward_impl.15} parent=11 // pred_check_branch
          %161 = sbr.rel (%p159) target = $region20
        $region19: #{_forward_impl.15} parent=11 // pred_region
          %s163 = ssub.s32 16, 16
          %164 = vsyncadd [#allocation6], %s163
          %s166 = sshll.u32 [#allocation7], 4
          %s167 = int_to_ptr.vmem [resolvable:$true] %s166
          %169 = dma.hbm_to_vmem [thread:$0]  %s2, 16, %s167, [#allocation6]
        $region20: #{_forward_impl.15} parent=11 // pred_fallthru
          _
        // Predicated region
        $region21: #{_forward_impl.15} parent=11 // pred_check
          %p170 = pneg %p107
        $region22: #{_forward_impl.15} parent=11 // pred_check_branch
          %172 = sbr.rel (%p170) target = $region24
        $region23: #{_forward_impl.15} parent=11 // pred_region
          %s174 = ssub.s32 1024, 1024
          %175 = vsyncadd [#allocation9], %s174
          %s176 = sshll.u32 [#allocation8], 4
          %s177 = int_to_ptr.vmem [resolvable:$true] %s176
          %182 = dma.hbm_to_vmem [thread:$0]  %s3, 1024, %s177, [#allocation9], 64, 64, 4
        $region24: #{_forward_impl.15} parent=11 // pred_fallthru
          _
      $region12: #{_forward_impl.15} parent=5 // pred_fallthru
        _
      %p183 = scmp.lt.s32.totalorder %s18, 256
      // Predicated region
      $region25: #{_forward_impl.15} parent=5 // pred_check
        %p184 = pneg %p183
      $region26: #{_forward_impl.15} parent=5 // pred_check_branch
        %186 = sbr.rel (%p184) target = $region28
      $region27: #{_forward_impl.15} parent=5 // pred_region
        // Predicated region
        $region29: #{_forward_impl.15} parent=27 // pred_check
          %p187 = pneg %p38
        $region30: #{_forward_impl.15} parent=27 // pred_check_branch
          %189 = sbr.rel (%p187) target = $region32
        $region31: #{_forward_impl.15} parent=27 // pred_region
          %s190 = sand.u32 %s28, 1
          %s191 = scalar_lea.sflag [#allocation3], %s190
          %s192 = sand.u32 %s28, 1
          %s193 = smul.addr %s192, 256
          %s194 = scalar_lea.vmem [#allocation2], %s193
          %s195 = smul.u32 64, %s18
          %s197 = ssub.s32 4096, 4096
          %198 = vsyncadd %s191, %s197
          %s199 = smul.addr %s195, 64
          %s200 = scalar_lea.hbm %s0, %s199
          %s201 = sshll.u32 %s194, 4
          %s202 = int_to_ptr.vmem [resolvable:$true] %s201
          %207 = dma.hbm_to_vmem [thread:$0]  %s200, 4096, %s202, %s191, 64, 64, 4
        $region32: #{_forward_impl.15} parent=27 // pred_fallthru
          _
      $region28: #{_forward_impl.15} parent=5 // pred_fallthru
        _
      %p208 = scmp.le.s32.totalorder 1, %s18
      %p209 = scmp.lt.s32.totalorder %s18, 257
      %p210 = pnand %p208, %p209
      %p211 = pneg %p210
      // Predicated region
      $region33: #{_forward_impl.15} parent=5 // pred_check
        _
      $region34: #{_forward_impl.15} parent=5 // pred_check_branch
        %213 = sbr.rel (%p210) target = $region36
      $region35: #{_forward_impl.15} parent=5 // pred_region
        %s214 = ssub.s32 %s18, 1
        %s215 = sand.u32 %s31, 1
        %s216 = scalar_lea.sflag [#allocation3], %s215
        %s217 = sand.u32 %s31, 1
        %s218 = smul.addr %s217, 256
        %s219 = scalar_lea.vmem [#allocation2], %s218
        // Predicated region
        $region37: #{_forward_impl.15} parent=35 // pred_check
          %p220 = pneg %p44
        $region38: #{_forward_impl.15} parent=35 // pred_check_branch
          %222 = sbr.rel (%p220) target = $region40
        $region39: #{_forward_impl.15} parent=35 // pred_region
          %223 = dma.done %s216, 4096
        $region40: #{_forward_impl.15} parent=35 // pred_fallthru
          _
        // Predicated region
        $region41: #{_forward_impl.15} parent=35 // pred_check
          %p224 = pneg %p65
        $region42: #{_forward_impl.15} parent=35 // pred_check_branch
          %226 = sbr.rel (%p224) target = $region44
        $region43: #{_forward_impl.15} parent=35 // pred_region
          %227 = dma.done [#allocation6], 16
        $region44: #{_forward_impl.15} parent=35 // pred_fallthru
          _
        // Predicated region
        $region45: #{_forward_impl.15} parent=35 // pred_check
          %p228 = pneg %p86
        $region46: #{_forward_impl.15} parent=35 // pred_check_branch
          %230 = sbr.rel (%p228) target = $region48
        $region47: #{_forward_impl.15} parent=35 // pred_region
          %231 = dma.done [#allocation6], 16
        $region48: #{_forward_impl.15} parent=35 // pred_fallthru
          _
        // Predicated region
        $region49: #{_forward_impl.15} parent=35 // pred_check
          %p232 = pneg %p107
        $region50: #{_forward_impl.15} parent=35 // pred_check_branch
          %234 = sbr.rel (%p232) target = $region52
        $region51: #{_forward_impl.15} parent=35 // pred_region
          %235 = dma.done [#allocation9], 1024
        $region52: #{_forward_impl.15} parent=35 // pred_fallthru
          _
        %s236 = sand.u32 %s31, 1
        %s237 = scalar_lea.sflag [#allocation3], %s236
        %s238 = sand.u32 %s31, 1
        %s239 = smul.addr %s238, 256
        %s240 = scalar_lea.vmem [#allocation2], %s239
        %p241 = pneg %p44
        %p242 = pneg %p41
        %p243 = pneg %p65
        %p244 = pneg %p62
        %p245 = pneg %p86
        %p246 = pneg %p83
        %p247 = pneg %p107
        %p248 = pneg %p104
        %p249 = pneg %p133
        %p250 = pneg %p130
        %s251 = sand.u32 %s120, 1
        %s252 = scalar_lea.sflag [#allocation4], %s251
        %s253 = sand.u32 %s120, 1
        %s254 = smul.addr %s253, 256
        %s255 = scalar_lea.vmem [#allocation10], %s254
        %s256 = smul.u32 64, %s23
        %s257 = smul.u32 64, %s23
        %v259 = vld [vmem:[%s219] sm:$0xf]
        %v260 = vld [vmem:[%s219 + $0x4] sm:$0xf]
        %v261 = vld [vmem:[%s219 + $0x8] sm:$0xf]
        %v262 = vld [vmem:[%s219 + $0xc] sm:$0xf]
        %v263 = vld [vmem:[%s219 + $0x10] sm:$0xf]
        %v264 = vld [vmem:[%s219 + $0x14] sm:$0xf]
        %v265 = vld [vmem:[%s219 + $0x18] sm:$0xf]
        %v266 = vld [vmem:[%s219 + $0x1c] sm:$0xf]
        %v267 = vld [vmem:[%s219 + $0x20] sm:$0xf]
        %v268 = vld [vmem:[%s219 + $0x24] sm:$0xf]
        %v269 = vld [vmem:[%s219 + $0x28] sm:$0xf]
        %v270 = vld [vmem:[%s219 + $0x2c] sm:$0xf]
        %v271 = vld [vmem:[%s219 + $0x30] sm:$0xf]
        %v272 = vld [vmem:[%s219 + $0x34] sm:$0xf]
        %v273 = vld [vmem:[%s219 + $0x38] sm:$0xf]
        %v274 = vld [vmem:[%s219 + $0x3c] sm:$0xf]
        %v275 = vld [vmem:[%s219 + $0x40] sm:$0xf]
        %v276 = vld [vmem:[%s219 + $0x44] sm:$0xf]
        %v277 = vld [vmem:[%s219 + $0x48] sm:$0xf]
        %v278 = vld [vmem:[%s219 + $0x4c] sm:$0xf]
        %v279 = vld [vmem:[%s219 + $0x50] sm:$0xf]
        %v280 = vld [vmem:[%s219 + $0x54] sm:$0xf]
        %v281 = vld [vmem:[%s219 + $0x58] sm:$0xf]
        %v282 = vld [vmem:[%s219 + $0x5c] sm:$0xf]
        %v283 = vld [vmem:[%s219 + $0x60] sm:$0xf]
        %v284 = vld [vmem:[%s219 + $0x64] sm:$0xf]
        %v285 = vld [vmem:[%s219 + $0x68] sm:$0xf]
        %v286 = vld [vmem:[%s219 + $0x6c] sm:$0xf]
        %v287 = vld [vmem:[%s219 + $0x70] sm:$0xf]
        %v288 = vld [vmem:[%s219 + $0x74] sm:$0xf]
        %v289 = vld [vmem:[%s219 + $0x78] sm:$0xf]
        %v290 = vld [vmem:[%s219 + $0x7c] sm:$0xf]
        %v291 = vld [vmem:[%s219 + $0x80] sm:$0xf]
        %v292 = vld [vmem:[%s219 + $0x84] sm:$0xf]
        %v293 = vld [vmem:[%s219 + $0x88] sm:$0xf]
        %v294 = vld [vmem:[%s219 + $0x8c] sm:$0xf]
        %v295 = vld [vmem:[%s219 + $0x90] sm:$0xf]
        %v296 = vld [vmem:[%s219 + $0x94] sm:$0xf]
        %v297 = vld [vmem:[%s219 + $0x98] sm:$0xf]
        %v298 = vld [vmem:[%s219 + $0x9c] sm:$0xf]
        %v299 = vld [vmem:[%s219 + $0xa0] sm:$0xf]
        %v300 = vld [vmem:[%s219 + $0xa4] sm:$0xf]
        %v301 = vld [vmem:[%s219 + $0xa8] sm:$0xf]
        %v302 = vld [vmem:[%s219 + $0xac] sm:$0xf]
        %v303 = vld [vmem:[%s219 + $0xb0] sm:$0xf]
        %v304 = vld [vmem:[%s219 + $0xb4] sm:$0xf]
        %v305 = vld [vmem:[%s219 + $0xb8] sm:$0xf]
        %v306 = vld [vmem:[%s219 + $0xbc] sm:$0xf]
        %v307 = vld [vmem:[%s219 + $0xc0] sm:$0xf]
        %v308 = vld [vmem:[%s219 + $0xc4] sm:$0xf]
        %v309 = vld [vmem:[%s219 + $0xc8] sm:$0xf]
        %v310 = vld [vmem:[%s219 + $0xcc] sm:$0xf]
        %v311 = vld [vmem:[%s219 + $0xd0] sm:$0xf]
        %v312 = vld [vmem:[%s219 + $0xd4] sm:$0xf]
        %v313 = vld [vmem:[%s219 + $0xd8] sm:$0xf]
        %v314 = vld [vmem:[%s219 + $0xdc] sm:$0xf]
        %v315 = vld [vmem:[%s219 + $0xe0] sm:$0xf]
        %v316 = vld [vmem:[%s219 + $0xe4] sm:$0xf]
        %v317 = vld [vmem:[%s219 + $0xe8] sm:$0xf]
        %v318 = vld [vmem:[%s219 + $0xec] sm:$0xf]
        %v319 = vld [vmem:[%s219 + $0xf0] sm:$0xf]
        %v320 = vld [vmem:[%s219 + $0xf4] sm:$0xf]
        %v321 = vld [vmem:[%s219 + $0xf8] sm:$0xf]
        %v322 = vld [vmem:[%s219 + $0xfc] sm:$0xf]
        %v323 = vunpack.c.l.bf16 %v259
        %v324 = vunpack.c.l.bf16 %v260
        %v325 = vunpack.c.l.bf16 %v261
        %v326 = vunpack.c.l.bf16 %v262
        %v327 = vunpack.c.l.bf16 %v263
        %v328 = vunpack.c.l.bf16 %v264
        %v329 = vunpack.c.l.bf16 %v265
        %v330 = vunpack.c.l.bf16 %v266
        %v331 = vunpack.c.l.bf16 %v267
        %v332 = vunpack.c.l.bf16 %v268
        %v333 = vunpack.c.l.bf16 %v269
        %v334 = vunpack.c.l.bf16 %v270
        %v335 = vunpack.c.l.bf16 %v271
        %v336 = vunpack.c.l.bf16 %v272
        %v337 = vunpack.c.l.bf16 %v273
        %v338 = vunpack.c.l.bf16 %v274
        %v339 = vunpack.c.l.bf16 %v275
        %v340 = vunpack.c.l.bf16 %v276
        %v341 = vunpack.c.l.bf16 %v277
        %v342 = vunpack.c.l.bf16 %v278
        %v343 = vunpack.c.l.bf16 %v279
        %v344 = vunpack.c.l.bf16 %v280
        %v345 = vunpack.c.l.bf16 %v281
        %v346 = vunpack.c.l.bf16 %v282
        %v347 = vunpack.c.l.bf16 %v283
        %v348 = vunpack.c.l.bf16 %v284
        %v349 = vunpack.c.l.bf16 %v285
        %v350 = vunpack.c.l.bf16 %v286
        %v351 = vunpack.c.l.bf16 %v287
        %v352 = vunpack.c.l.bf16 %v288
        %v353 = vunpack.c.l.bf16 %v289
        %v354 = vunpack.c.l.bf16 %v290
        %v355 = vunpack.c.l.bf16 %v291
        %v356 = vunpack.c.l.bf16 %v292
        %v357 = vunpack.c.l.bf16 %v293
        %v358 = vunpack.c.l.bf16 %v294
        %v359 = vunpack.c.l.bf16 %v295
        %v360 = vunpack.c.l.bf16 %v296
        %v361 = vunpack.c.l.bf16 %v297
        %v362 = vunpack.c.l.bf16 %v298
        %v363 = vunpack.c.l.bf16 %v299
        %v364 = vunpack.c.l.bf16 %v300
        %v365 = vunpack.c.l.bf16 %v301
        %v366 = vunpack.c.l.bf16 %v302
        %v367 = vunpack.c.l.bf16 %v303
        %v368 = vunpack.c.l.bf16 %v304
        %v369 = vunpack.c.l.bf16 %v305
        %v370 = vunpack.c.l.bf16 %v306
        %v371 = vunpack.c.l.bf16 %v307
        %v372 = vunpack.c.l.bf16 %v308
        %v373 = vunpack.c.l.bf16 %v309
        %v374 = vunpack.c.l.bf16 %v310
        %v375 = vunpack.c.l.bf16 %v311
        %v376 = vunpack.c.l.bf16 %v312
        %v377 = vunpack.c.l.bf16 %v313
        %v378 = vunpack.c.l.bf16 %v314
        %v379 = vunpack.c.l.bf16 %v315
        %v380 = vunpack.c.l.bf16 %v316
        %v381 = vunpack.c.l.bf16 %v317
        %v382 = vunpack.c.l.bf16 %v318
        %v383 = vunpack.c.l.bf16 %v319
        %v384 = vunpack.c.l.bf16 %v320
        %v385 = vunpack.c.l.bf16 %v321
        %v386 = vunpack.c.l.bf16 %v322
        %v387 = vld [vmem:[#allocation5] sm:$0x1]
        %v389 = vlaneseq
        %v390 = vshrl.u32 %v389, 7
        %v391 = vsub.s32 0, %v390
        %v392 = vrot.slane %v387, %v391
        %v394 = vmul.f32 %v323, %v392
        %v395 = vmul.f32 %v324, %v392
        %v396 = vmul.f32 %v325, %v392
        %v397 = vmul.f32 %v326, %v392
        %v398 = vmul.f32 %v327, %v392
        %v399 = vmul.f32 %v328, %v392
        %v400 = vmul.f32 %v329, %v392
        %v401 = vmul.f32 %v330, %v392
        %v402 = vmul.f32 %v331, %v392
        %v403 = vmul.f32 %v332, %v392
        %v404 = vmul.f32 %v333, %v392
        %v405 = vmul.f32 %v334, %v392
        %v406 = vmul.f32 %v335, %v392
        %v407 = vmul.f32 %v336, %v392
        %v408 = vmul.f32 %v337, %v392
        %v409 = vmul.f32 %v338, %v392
        %v410 = vmul.f32 %v339, %v392
        %v411 = vmul.f32 %v340, %v392
        %v412 = vmul.f32 %v341, %v392
        %v413 = vmul.f32 %v342, %v392
        %v414 = vmul.f32 %v343, %v392
        %v415 = vmul.f32 %v344, %v392
        %v416 = vmul.f32 %v345, %v392
        %v417 = vmul.f32 %v346, %v392
        %v418 = vmul.f32 %v347, %v392
        %v419 = vmul.f32 %v348, %v392
        %v420 = vmul.f32 %v349, %v392
        %v421 = vmul.f32 %v350, %v392
        %v422 = vmul.f32 %v351, %v392
        %v423 = vmul.f32 %v352, %v392
        %v424 = vmul.f32 %v353, %v392
        %v425 = vmul.f32 %v354, %v392
        %v426 = vmul.f32 %v355, %v392
        %v427 = vmul.f32 %v356, %v392
        %v428 = vmul.f32 %v357, %v392
        %v429 = vmul.f32 %v358, %v392
        %v430 = vmul.f32 %v359, %v392
        %v431 = vmul.f32 %v360, %v392
        %v432 = vmul.f32 %v361, %v392
        %v433 = vmul.f32 %v362, %v392
        %v434 = vmul.f32 %v363, %v392
        %v435 = vmul.f32 %v364, %v392
        %v436 = vmul.f32 %v365, %v392
        %v437 = vmul.f32 %v366, %v392
        %v438 = vmul.f32 %v367, %v392
        %v439 = vmul.f32 %v368, %v392
        %v440 = vmul.f32 %v369, %v392
        %v441 = vmul.f32 %v370, %v392
        %v442 = vmul.f32 %v371, %v392
        %v443 = vmul.f32 %v372, %v392
        %v444 = vmul.f32 %v373, %v392
        %v445 = vmul.f32 %v374, %v392
        %v446 = vmul.f32 %v375, %v392
        %v447 = vmul.f32 %v376, %v392
        %v448 = vmul.f32 %v377, %v392
        %v449 = vmul.f32 %v378, %v392
        %v450 = vmul.f32 %v379, %v392
        %v451 = vmul.f32 %v380, %v392
        %v452 = vmul.f32 %v381, %v392
        %v453 = vmul.f32 %v382, %v392
        %v454 = vmul.f32 %v383, %v392
        %v455 = vmul.f32 %v384, %v392
        %v456 = vmul.f32 %v385, %v392
        %v457 = vmul.f32 %v386, %v392
        %v458 = vld [vmem:[#allocation7] sm:$0x1]
        %v460 = vlaneseq
        %v461 = vshrl.u32 %v460, 7
        %v462 = vsub.s32 0, %v461
        %v463 = vrot.slane %v458, %v462
        %v465 = vadd.f32 %v394, %v463
        %v466 = vadd.f32 %v395, %v463
        %v467 = vadd.f32 %v396, %v463
        %v468 = vadd.f32 %v397, %v463
        %v469 = vadd.f32 %v398, %v463
        %v470 = vadd.f32 %v399, %v463
        %v471 = vadd.f32 %v400, %v463
        %v472 = vadd.f32 %v401, %v463
        %v473 = vadd.f32 %v402, %v463
        %v474 = vadd.f32 %v403, %v463
        %v475 = vadd.f32 %v404, %v463
        %v476 = vadd.f32 %v405, %v463
        %v477 = vadd.f32 %v406, %v463
        %v478 = vadd.f32 %v407, %v463
        %v479 = vadd.f32 %v408, %v463
        %v480 = vadd.f32 %v409, %v463
        %v481 = vadd.f32 %v410, %v463
        %v482 = vadd.f32 %v411, %v463
        %v483 = vadd.f32 %v412, %v463
        %v484 = vadd.f32 %v413, %v463
        %v485 = vadd.f32 %v414, %v463
        %v486 = vadd.f32 %v415, %v463
        %v487 = vadd.f32 %v416, %v463
        %v488 = vadd.f32 %v417, %v463
        %v489 = vadd.f32 %v418, %v463
        %v490 = vadd.f32 %v419, %v463
        %v491 = vadd.f32 %v420, %v463
        %v492 = vadd.f32 %v421, %v463
        %v493 = vadd.f32 %v422, %v463
        %v494 = vadd.f32 %v423, %v463
        %v495 = vadd.f32 %v424, %v463
        %v496 = vadd.f32 %v425, %v463
        %v497 = vadd.f32 %v426, %v463
        %v498 = vadd.f32 %v427, %v463
        %v499 = vadd.f32 %v428, %v463
        %v500 = vadd.f32 %v429, %v463
        %v501 = vadd.f32 %v430, %v463
        %v502 = vadd.f32 %v431, %v463
        %v503 = vadd.f32 %v432, %v463
        %v504 = vadd.f32 %v433, %v463
        %v505 = vadd.f32 %v434, %v463
        %v506 = vadd.f32 %v435, %v463
        %v507 = vadd.f32 %v436, %v463
        %v508 = vadd.f32 %v437, %v463
        %v509 = vadd.f32 %v438, %v463
        %v510 = vadd.f32 %v439, %v463
        %v511 = vadd.f32 %v440, %v463
        %v512 = vadd.f32 %v441, %v463
        %v513 = vadd.f32 %v442, %v463
        %v514 = vadd.f32 %v443, %v463
        %v515 = vadd.f32 %v444, %v463
        %v516 = vadd.f32 %v445, %v463
        %v517 = vadd.f32 %v446, %v463
        %v518 = vadd.f32 %v447, %v463
        %v519 = vadd.f32 %v448, %v463
        %v520 = vadd.f32 %v449, %v463
        %v521 = vadd.f32 %v450, %v463
        %v522 = vadd.f32 %v451, %v463
        %v523 = vadd.f32 %v452, %v463
        %v524 = vadd.f32 %v453, %v463
        %v525 = vadd.f32 %v454, %v463
        %v526 = vadd.f32 %v455, %v463
        %v527 = vadd.f32 %v456, %v463
        %v528 = vadd.f32 %v457, %v463
        %v529 = vmax.f32 %v465, 0.0
        %v530 = vmax.f32 %v466, 0.0
        %v531 = vmax.f32 %v467, 0.0
        %v532 = vmax.f32 %v468, 0.0
        %v533 = vmax.f32 %v469, 0.0
        %v534 = vmax.f32 %v470, 0.0
        %v535 = vmax.f32 %v471, 0.0
        %v536 = vmax.f32 %v472, 0.0
        %v537 = vmax.f32 %v473, 0.0
        %v538 = vmax.f32 %v474, 0.0
        %v539 = vmax.f32 %v475, 0.0
        %v540 = vmax.f32 %v476, 0.0
        %v541 = vmax.f32 %v477, 0.0
        %v542 = vmax.f32 %v478, 0.0
        %v543 = vmax.f32 %v479, 0.0
        %v544 = vmax.f32 %v480, 0.0
        %v545 = vmax.f32 %v481, 0.0
        %v546 = vmax.f32 %v482, 0.0
        %v547 = vmax.f32 %v483, 0.0
        %v548 = vmax.f32 %v484, 0.0
        %v549 = vmax.f32 %v485, 0.0
        %v550 = vmax.f32 %v486, 0.0
        %v551 = vmax.f32 %v487, 0.0
        %v552 = vmax.f32 %v488, 0.0
        %v553 = vmax.f32 %v489, 0.0
        %v554 = vmax.f32 %v490, 0.0
        %v555 = vmax.f32 %v491, 0.0
        %v556 = vmax.f32 %v492, 0.0
        %v557 = vmax.f32 %v493, 0.0
        %v558 = vmax.f32 %v494, 0.0
        %v559 = vmax.f32 %v495, 0.0
        %v560 = vmax.f32 %v496, 0.0
        %v561 = vmax.f32 %v497, 0.0
        %v562 = vmax.f32 %v498, 0.0
        %v563 = vmax.f32 %v499, 0.0
        %v564 = vmax.f32 %v500, 0.0
        %v565 = vmax.f32 %v501, 0.0
        %v566 = vmax.f32 %v502, 0.0
        %v567 = vmax.f32 %v503, 0.0
        %v568 = vmax.f32 %v504, 0.0
        %v569 = vmax.f32 %v505, 0.0
        %v570 = vmax.f32 %v506, 0.0
        %v571 = vmax.f32 %v507, 0.0
        %v572 = vmax.f32 %v508, 0.0
        %v573 = vmax.f32 %v509, 0.0
        %v574 = vmax.f32 %v510, 0.0
        %v575 = vmax.f32 %v511, 0.0
        %v576 = vmax.f32 %v512, 0.0
        %v577 = vmax.f32 %v513, 0.0
        %v578 = vmax.f32 %v514, 0.0
        %v579 = vmax.f32 %v515, 0.0
        %v580 = vmax.f32 %v516, 0.0
        %v581 = vmax.f32 %v517, 0.0
        %v582 = vmax.f32 %v518, 0.0
        %v583 = vmax.f32 %v519, 0.0
        %v584 = vmax.f32 %v520, 0.0
        %v585 = vmax.f32 %v521, 0.0
        %v586 = vmax.f32 %v522, 0.0
        %v587 = vmax.f32 %v523, 0.0
        %v588 = vmax.f32 %v524, 0.0
        %v589 = vmax.f32 %v525, 0.0
        %v590 = vmax.f32 %v526, 0.0
        %v591 = vmax.f32 %v527, 0.0
        %v592 = vmax.f32 %v528, 0.0
        %v593 = vpack.c.bf16 %v530, %v529
        %v594 = vpack.c.bf16 %v532, %v531
        %v595 = vpack.c.bf16 %v534, %v533
        %v596 = vpack.c.bf16 %v536, %v535
        %v597 = vpack.c.bf16 %v538, %v537
        %v598 = vpack.c.bf16 %v540, %v539
        %v599 = vpack.c.bf16 %v542, %v541
        %v600 = vpack.c.bf16 %v544, %v543
        %v601 = vpack.c.bf16 %v546, %v545
        %v602 = vpack.c.bf16 %v548, %v547
        %v603 = vpack.c.bf16 %v550, %v549
        %v604 = vpack.c.bf16 %v552, %v551
        %v605 = vpack.c.bf16 %v554, %v553
        %v606 = vpack.c.bf16 %v556, %v555
        %v607 = vpack.c.bf16 %v558, %v557
        %v608 = vpack.c.bf16 %v560, %v559
        %v609 = vpack.c.bf16 %v562, %v561
        %v610 = vpack.c.bf16 %v564, %v563
        %v611 = vpack.c.bf16 %v566, %v565
        %v612 = vpack.c.bf16 %v568, %v567
        %v613 = vpack.c.bf16 %v570, %v569
        %v614 = vpack.c.bf16 %v572, %v571
        %v615 = vpack.c.bf16 %v574, %v573
        %v616 = vpack.c.bf16 %v576, %v575
        %v617 = vpack.c.bf16 %v578, %v577
        %v618 = vpack.c.bf16 %v580, %v579
        %v619 = vpack.c.bf16 %v582, %v581
        %v620 = vpack.c.bf16 %v584, %v583
        %v621 = vpack.c.bf16 %v586, %v585
        %v622 = vpack.c.bf16 %v588, %v587
        %v623 = vpack.c.bf16 %v590, %v589
        %v624 = vpack.c.bf16 %v592, %v591
        %v625 = vld [vmem:[#allocation8] sm:$0xf]
        %v626 = vld [vmem:[#allocation8 + $0x4] sm:$0xf]
        %v627 = vld [vmem:[#allocation8 + $0x8] sm:$0xf]
        %v628 = vld [vmem:[#allocation8 + $0xc] sm:$0xf]
        %v629 = vld [vmem:[#allocation8 + $0x10] sm:$0xf]
        %v630 = vld [vmem:[#allocation8 + $0x14] sm:$0xf]
        %v631 = vld [vmem:[#allocation8 + $0x18] sm:$0xf]
        %v632 = vld [vmem:[#allocation8 + $0x1c] sm:$0xf]
        %v633 = vld [vmem:[#allocation8 + $0x20] sm:$0xf]
        %v634 = vld [vmem:[#allocation8 + $0x24] sm:$0xf]
        %v635 = vld [vmem:[#allocation8 + $0x28] sm:$0xf]
        %v636 = vld [vmem:[#allocation8 + $0x2c] sm:$0xf]
        %v637 = vld [vmem:[#allocation8 + $0x30] sm:$0xf]
        %v638 = vld [vmem:[#allocation8 + $0x34] sm:$0xf]
        %v639 = vld [vmem:[#allocation8 + $0x38] sm:$0xf]
        %v640 = vld [vmem:[#allocation8 + $0x3c] sm:$0xf]
        %v657 = vunpack.c.l.b16 %v625
        %v658 = vunpack.c.l.b16 %v626
        %v659 = vunpack.c.l.b16 %v627
        %v660 = vunpack.c.l.b16 %v628
        %v661 = vunpack.c.l.b16 %v629
        %v662 = vunpack.c.l.b16 %v630
        %v663 = vunpack.c.l.b16 %v631
        %v664 = vunpack.c.l.b16 %v632
        %v665 = vunpack.c.l.b16 %v633
        %v666 = vunpack.c.l.b16 %v634
        %v667 = vunpack.c.l.b16 %v635
        %v668 = vunpack.c.l.b16 %v636
        %v669 = vunpack.c.l.b16 %v637
        %v670 = vunpack.c.l.b16 %v638
        %v671 = vunpack.c.l.b16 %v639
        %v672 = vunpack.c.l.b16 %v640
        %v673 = vpack.c.b16 %v658, %v657
        %v674 = vpack.c.b16 %v660, %v659
        %v675 = vpack.c.b16 %v662, %v661
        %v676 = vpack.c.b16 %v664, %v663
        %v677 = vpack.c.b16 %v666, %v665
        %v678 = vpack.c.b16 %v668, %v667
        %v679 = vpack.c.b16 %v670, %v669
        %v680 = vpack.c.b16 %v672, %v671
        %689 = vmatprep.subr.bf16.mxu0 0
        %690 = vmatpush1.bf16.msra.mxu0 %v673
        %691 = vmatprep.subr.bf16.mxu0 0
        %692 = vmatpush1.bf16.msra.mxu0 %v674
        %693 = vmatprep.subr.bf16.mxu0 0
        %694 = vmatpush1.bf16.msra.mxu0 %v675
        %695 = vmatprep.subr.bf16.mxu0 0
        %696 = vmatpush1.bf16.msra.mxu0 %v676
        %697 = vmatprep.subr.bf16.mxu0 0
        %698 = vmatpush1.bf16.msra.mxu0 %v677
        %699 = vmatprep.subr.bf16.mxu0 0
        %700 = vmatpush1.bf16.msra.mxu0 %v678
        %701 = vmatprep.subr.bf16.mxu0 0
        %702 = vmatpush1.bf16.msra.mxu0 %v679
        %703 = vmatprep.subr.bf16.mxu0 0
        %704 = vmatpush1.bf16.msra.mxu0 %v680
        %705 = vmatprep.subr.bf16.mxu0 0
        %706 = vmatpush1.bf16.msra.mxu0 0
        %707 = vmatprep.subr.bf16.mxu0 0
        %708 = vmatpush1.bf16.msra.mxu0 0
        %709 = vmatprep.subr.bf16.mxu0 0
        %710 = vmatpush1.bf16.msra.mxu0 0
        %711 = vmatprep.subr.bf16.mxu0 0
        %712 = vmatpush1.bf16.msra.mxu0 0
        %713 = vmatprep.subr.bf16.mxu0 0
        %714 = vmatpush1.bf16.msra.mxu0 0
        %715 = vmatprep.subr.bf16.mxu0 0
        %716 = vmatpush1.bf16.msra.mxu0 0
        %717 = vmatprep.subr.bf16.mxu0 0
        %718 = vmatpush1.bf16.msra.mxu0 0
        %719 = vmatprep.subr.bf16.mxu0 0
        %720 = vmatpush1.bf16.msra.mxu0 0
        %721 = vmatprep.mubr.bf16.mxu0 0
        %722 = vmatmul.mubr.bf16.gmra.mrb[0].mxu0 %v593
        %v723 = vpop.f32.mrb[0].mxu0
        %v724 = vadd.f32 0.0, %v723
        %v725 = vpop.f32.mrb[0].mxu0
        %v726 = vpop.f32.mrb[0].mxu0
        %v727 = vadd.f32 0.0, %v726
        %v728 = vpop.f32.mrb[0].mxu0
        %729 = vmatprep.mubr.bf16.mxu0 0
        %730 = vmatmul.mubr.bf16.gmra.mrb[0].mxu0 %v594
        %v731 = vpop.f32.mrb[0].mxu0
        %v732 = vadd.f32 0.0, %v731
        %v733 = vpop.f32.mrb[0].mxu0
        %v734 = vpop.f32.mrb[0].mxu0
        %v735 = vadd.f32 0.0, %v734
        %v736 = vpop.f32.mrb[0].mxu0
        %737 = vmatprep.mubr.bf16.mxu0 0
        %738 = vmatmul.mubr.bf16.gmra.mrb[0].mxu0 %v595
        %v739 = vpop.f32.mrb[0].mxu0
        %v740 = vadd.f32 0.0, %v739
        %v741 = vpop.f32.mrb[0].mxu0
        %v742 = vpop.f32.mrb[0].mxu0
        %v743 = vadd.f32 0.0, %v742
        %v744 = vpop.f32.mrb[0].mxu0
        %745 = vmatprep.mubr.bf16.mxu0 0
        %746 = vmatmul.mubr.bf16.gmra.mrb[0].mxu0 %v596
        %v747 = vpop.f32.mrb[0].mxu0
        %v748 = vadd.f32 0.0, %v747
        %v749 = vpop.f32.mrb[0].mxu0
        %v750 = vpop.f32.mrb[0].mxu0
        %v751 = vadd.f32 0.0, %v750
        %v752 = vpop.f32.mrb[0].mxu0
        %753 = vmatprep.mubr.bf16.mxu0 0
        %754 = vmatmul.mubr.bf16.gmra.mrb[0].mxu0 %v597
        %v755 = vpop.f32.mrb[0].mxu0
        %v756 = vadd.f32 0.0, %v755
        %v757 = vpop.f32.mrb[0].mxu0
        %v758 = vpop.f32.mrb[0].mxu0
        %v759 = vadd.f32 0.0, %v758
        %v760 = vpop.f32.mrb[0].mxu0
        %761 = vmatprep.mubr.bf16.mxu0 0
        %762 = vmatmul.mubr.bf16.gmra.mrb[0].mxu0 %v598
        %v763 = vpop.f32.mrb[0].mxu0
        %v764 = vadd.f32 0.0, %v763
        %v765 = vpop.f32.mrb[0].mxu0
        %v766 = vpop.f32.mrb[0].mxu0
        %v767 = vadd.f32 0.0, %v766
        %v768 = vpop.f32.mrb[0].mxu0
        %769 = vmatprep.mubr.bf16.mxu0 0
        %770 = vmatmul.mubr.bf16.gmra.mrb[0].mxu0 %v599
        %v771 = vpop.f32.mrb[0].mxu0
        %v772 = vadd.f32 0.0, %v771
        %v773 = vpop.f32.mrb[0].mxu0
        %v774 = vpop.f32.mrb[0].mxu0
        %v775 = vadd.f32 0.0, %v774
        %v776 = vpop.f32.mrb[0].mxu0
        %777 = vmatprep.mubr.bf16.mxu0 0
        %778 = vmatmul.mubr.bf16.gmra.mrb[0].mxu0 %v600
        %v779 = vpop.f32.mrb[0].mxu0
        %v780 = vadd.f32 0.0, %v779
        %v781 = vpop.f32.mrb[0].mxu0
        %v782 = vpop.f32.mrb[0].mxu0
        %v783 = vadd.f32 0.0, %v782
        %v784 = vpop.f32.mrb[0].mxu0
        %785 = vmatprep.mubr.bf16.mxu0 0
        %786 = vmatmul.mubr.bf16.gmra.mrb[0].mxu0 %v601
        %v787 = vpop.f32.mrb[0].mxu0
        %v788 = vadd.f32 0.0, %v787
        %v789 = vpop.f32.mrb[0].mxu0
        %v790 = vpop.f32.mrb[0].mxu0
        %v791 = vadd.f32 0.0, %v790
        %v792 = vpop.f32.mrb[0].mxu0
        %793 = vmatprep.mubr.bf16.mxu0 0
        %794 = vmatmul.mubr.bf16.gmra.mrb[0].mxu0 %v602
        %v795 = vpop.f32.mrb[0].mxu0
        %v796 = vadd.f32 0.0, %v795
        %v797 = vpop.f32.mrb[0].mxu0
        %v798 = vpop.f32.mrb[0].mxu0
        %v799 = vadd.f32 0.0, %v798
        %v800 = vpop.f32.mrb[0].mxu0
        %801 = vmatprep.mubr.bf16.mxu0 0
        %802 = vmatmul.mubr.bf16.gmra.mrb[0].mxu0 %v603
        %v803 = vpop.f32.mrb[0].mxu0
        %v804 = vadd.f32 0.0, %v803
        %v805 = vpop.f32.mrb[0].mxu0
        %v806 = vpop.f32.mrb[0].mxu0
        %v807 = vadd.f32 0.0, %v806
        %v808 = vpop.f32.mrb[0].mxu0
        %809 = vmatprep.mubr.bf16.mxu0 0
        %810 = vmatmul.mubr.bf16.gmra.mrb[0].mxu0 %v604
        %v811 = vpop.f32.mrb[0].mxu0
        %v812 = vadd.f32 0.0, %v811
        %v813 = vpop.f32.mrb[0].mxu0
        %v814 = vpop.f32.mrb[0].mxu0
        %v815 = vadd.f32 0.0, %v814
        %v816 = vpop.f32.mrb[0].mxu0
        %817 = vmatprep.mubr.bf16.mxu0 0
        %818 = vmatmul.mubr.bf16.gmra.mrb[0].mxu0 %v605
        %v819 = vpop.f32.mrb[0].mxu0
        %v820 = vadd.f32 0.0, %v819
        %v821 = vpop.f32.mrb[0].mxu0
        %v822 = vpop.f32.mrb[0].mxu0
        %v823 = vadd.f32 0.0, %v822
        %v824 = vpop.f32.mrb[0].mxu0
        %825 = vmatprep.mubr.bf16.mxu0 0
        %826 = vmatmul.mubr.bf16.gmra.mrb[0].mxu0 %v606
        %v827 = vpop.f32.mrb[0].mxu0
        %v828 = vadd.f32 0.0, %v827
        %v829 = vpop.f32.mrb[0].mxu0
        %v830 = vpop.f32.mrb[0].mxu0
        %v831 = vadd.f32 0.0, %v830
        %v832 = vpop.f32.mrb[0].mxu0
        %833 = vmatprep.mubr.bf16.mxu0 0
        %834 = vmatmul.mubr.bf16.gmra.mrb[0].mxu0 %v607
        %v835 = vpop.f32.mrb[0].mxu0
        %v836 = vadd.f32 0.0, %v835
        %v837 = vpop.f32.mrb[0].mxu0
        %v838 = vpop.f32.mrb[0].mxu0
        %v839 = vadd.f32 0.0, %v838
        %v840 = vpop.f32.mrb[0].mxu0
        %841 = vmatprep.mubr.bf16.mxu0 0
        %842 = vmatmul.mubr.bf16.gmra.mrb[0].mxu0 %v608
        %v843 = vpop.f32.mrb[0].mxu0
        %v844 = vadd.f32 0.0, %v843
        %v845 = vpop.f32.mrb[0].mxu0
        %v846 = vpop.f32.mrb[0].mxu0
        %v847 = vadd.f32 0.0, %v846
        %v848 = vpop.f32.mrb[0].mxu0
        %849 = vmatprep.mubr.bf16.mxu0 0
        %850 = vmatmul.mubr.bf16.gmra.mrb[0].mxu0 %v609
        %v851 = vpop.f32.mrb[0].mxu0
        %v852 = vadd.f32 0.0, %v851
        %v853 = vpop.f32.mrb[0].mxu0
        %v854 = vpop.f32.mrb[0].mxu0
        %v855 = vadd.f32 0.0, %v854
        %v856 = vpop.f32.mrb[0].mxu0
        %857 = vmatprep.mubr.bf16.mxu0 0
        %858 = vmatmul.mubr.bf16.gmra.mrb[0].mxu0 %v610
        %v859 = vpop.f32.mrb[0].mxu0
        %v860 = vadd.f32 0.0, %v859
        %v861 = vpop.f32.mrb[0].mxu0
        %v862 = vpop.f32.mrb[0].mxu0
        %v863 = vadd.f32 0.0, %v862
        %v864 = vpop.f32.mrb[0].mxu0
        %865 = vmatprep.mubr.bf16.mxu0 0
        %866 = vmatmul.mubr.bf16.gmra.mrb[0].mxu0 %v611
        %v867 = vpop.f32.mrb[0].mxu0
        %v868 = vadd.f32 0.0, %v867
        %v869 = vpop.f32.mrb[0].mxu0
        %v870 = vpop.f32.mrb[0].mxu0
        %v871 = vadd.f32 0.0, %v870
        %v872 = vpop.f32.mrb[0].mxu0
        %873 = vmatprep.mubr.bf16.mxu0 0
        %874 = vmatmul.mubr.bf16.gmra.mrb[0].mxu0 %v612
        %v875 = vpop.f32.mrb[0].mxu0
        %v876 = vadd.f32 0.0, %v875
        %v877 = vpop.f32.mrb[0].mxu0
        %v878 = vpop.f32.mrb[0].mxu0
        %v879 = vadd.f32 0.0, %v878
        %v880 = vpop.f32.mrb[0].mxu0
        %881 = vmatprep.mubr.bf16.mxu0 0
        %882 = vmatmul.mubr.bf16.gmra.mrb[0].mxu0 %v613
        %v883 = vpop.f32.mrb[0].mxu0
        %v884 = vadd.f32 0.0, %v883
        %v885 = vpop.f32.mrb[0].mxu0
        %v886 = vpop.f32.mrb[0].mxu0
        %v887 = vadd.f32 0.0, %v886
        %v888 = vpop.f32.mrb[0].mxu0
        %889 = vmatprep.mubr.bf16.mxu0 0
        %890 = vmatmul.mubr.bf16.gmra.mrb[0].mxu0 %v614
        %v891 = vpop.f32.mrb[0].mxu0
        %v892 = vadd.f32 0.0, %v891
        %v893 = vpop.f32.mrb[0].mxu0
        %v894 = vpop.f32.mrb[0].mxu0
        %v895 = vadd.f32 0.0, %v894
        %v896 = vpop.f32.mrb[0].mxu0
        %897 = vmatprep.mubr.bf16.mxu0 0
        %898 = vmatmul.mubr.bf16.gmra.mrb[0].mxu0 %v615
        %v899 = vpop.f32.mrb[0].mxu0
        %v900 = vadd.f32 0.0, %v899
        %v901 = vpop.f32.mrb[0].mxu0
        %v902 = vpop.f32.mrb[0].mxu0
        %v903 = vadd.f32 0.0, %v902
        %v904 = vpop.f32.mrb[0].mxu0
        %905 = vmatprep.mubr.bf16.mxu0 0
        %906 = vmatmul.mubr.bf16.gmra.mrb[0].mxu0 %v616
        %v907 = vpop.f32.mrb[0].mxu0
        %v908 = vadd.f32 0.0, %v907
        %v909 = vpop.f32.mrb[0].mxu0
        %v910 = vpop.f32.mrb[0].mxu0
        %v911 = vadd.f32 0.0, %v910
        %v912 = vpop.f32.mrb[0].mxu0
        %913 = vmatprep.mubr.bf16.mxu0 0
        %914 = vmatmul.mubr.bf16.gmra.mrb[0].mxu0 %v617
        %v915 = vpop.f32.mrb[0].mxu0
        %v916 = vadd.f32 0.0, %v915
        %v917 = vpop.f32.mrb[0].mxu0
        %v918 = vpop.f32.mrb[0].mxu0
        %v919 = vadd.f32 0.0, %v918
        %v920 = vpop.f32.mrb[0].mxu0
        %921 = vmatprep.mubr.bf16.mxu0 0
        %922 = vmatmul.mubr.bf16.gmra.mrb[0].mxu0 %v618
        %v923 = vpop.f32.mrb[0].mxu0
        %v924 = vadd.f32 0.0, %v923
        %v925 = vpop.f32.mrb[0].mxu0
        %v926 = vpop.f32.mrb[0].mxu0
        %v927 = vadd.f32 0.0, %v926
        %v928 = vpop.f32.mrb[0].mxu0
        %929 = vmatprep.mubr.bf16.mxu0 0
        %930 = vmatmul.mubr.bf16.gmra.mrb[0].mxu0 %v619
        %v931 = vpop.f32.mrb[0].mxu0
        %v932 = vadd.f32 0.0, %v931
        %v933 = vpop.f32.mrb[0].mxu0
        %v934 = vpop.f32.mrb[0].mxu0
        %v935 = vadd.f32 0.0, %v934
        %v936 = vpop.f32.mrb[0].mxu0
        %937 = vmatprep.mubr.bf16.mxu0 0
        %938 = vmatmul.mubr.bf16.gmra.mrb[0].mxu0 %v620
        %v939 = vpop.f32.mrb[0].mxu0
        %v940 = vadd.f32 0.0, %v939
        %v941 = vpop.f32.mrb[0].mxu0
        %v942 = vpop.f32.mrb[0].mxu0
        %v943 = vadd.f32 0.0, %v942
        %v944 = vpop.f32.mrb[0].mxu0
        %945 = vmatprep.mubr.bf16.mxu0 0
        %946 = vmatmul.mubr.bf16.gmra.mrb[0].mxu0 %v621
        %v947 = vpop.f32.mrb[0].mxu0
        %v948 = vadd.f32 0.0, %v947
        %v949 = vpop.f32.mrb[0].mxu0
        %v950 = vpop.f32.mrb[0].mxu0
        %v951 = vadd.f32 0.0, %v950
        %v952 = vpop.f32.mrb[0].mxu0
        %953 = vmatprep.mubr.bf16.mxu0 0
        %954 = vmatmul.mubr.bf16.gmra.mrb[0].mxu0 %v622
        %v955 = vpop.f32.mrb[0].mxu0
        %v956 = vadd.f32 0.0, %v955
        %v957 = vpop.f32.mrb[0].mxu0
        %v958 = vpop.f32.mrb[0].mxu0
        %v959 = vadd.f32 0.0, %v958
        %v960 = vpop.f32.mrb[0].mxu0
        %961 = vmatprep.mubr.bf16.mxu0 0
        %962 = vmatmul.mubr.bf16.gmra.mrb[0].mxu0 %v623
        %v963 = vpop.f32.mrb[0].mxu0
        %v964 = vadd.f32 0.0, %v963
        %v965 = vpop.f32.mrb[0].mxu0
        %v966 = vpop.f32.mrb[0].mxu0
        %v967 = vadd.f32 0.0, %v966
        %v968 = vpop.f32.mrb[0].mxu0
        %969 = vmatprep.mubr.bf16.mxu0 0
        %970 = vmatmul.mubr.bf16.gmra.mrb[0].mxu0 %v624
        %v971 = vpop.f32.mrb[0].mxu0
        %v972 = vadd.f32 0.0, %v971
        %v973 = vpop.f32.mrb[0].mxu0
        %v974 = vpop.f32.mrb[0].mxu0
        %v975 = vadd.f32 0.0, %v974
        %v976 = vpop.f32.mrb[0].mxu0
        %977 = vdwg.mxu0
        %v978 = vxor.u32 %v724, 2147483648
        %v979 = vxor.u32 %v727, 2147483648
        %v980 = vxor.u32 %v732, 2147483648
        %v981 = vxor.u32 %v735, 2147483648
        %v982 = vxor.u32 %v740, 2147483648
        %v983 = vxor.u32 %v743, 2147483648
        %v984 = vxor.u32 %v748, 2147483648
        %v985 = vxor.u32 %v751, 2147483648
        %v986 = vxor.u32 %v756, 2147483648
        %v987 = vxor.u32 %v759, 2147483648
        %v988 = vxor.u32 %v764, 2147483648
        %v989 = vxor.u32 %v767, 2147483648
        %v990 = vxor.u32 %v772, 2147483648
        %v991 = vxor.u32 %v775, 2147483648
        %v992 = vxor.u32 %v780, 2147483648
        %v993 = vxor.u32 %v783, 2147483648
        %v994 = vxor.u32 %v788, 2147483648
        %v995 = vxor.u32 %v791, 2147483648
        %v996 = vxor.u32 %v796, 2147483648
        %v997 = vxor.u32 %v799, 2147483648
        %v998 = vxor.u32 %v804, 2147483648
        %v999 = vxor.u32 %v807, 2147483648
        %v1000 = vxor.u32 %v812, 2147483648
        %v1001 = vxor.u32 %v815, 2147483648
        %v1002 = vxor.u32 %v820, 2147483648
        %v1003 = vxor.u32 %v823, 2147483648
        %v1004 = vxor.u32 %v828, 2147483648
        %v1005 = vxor.u32 %v831, 2147483648
        %v1006 = vxor.u32 %v836, 2147483648
        %v1007 = vxor.u32 %v839, 2147483648
        %v1008 = vxor.u32 %v844, 2147483648
        %v1009 = vxor.u32 %v847, 2147483648
        %v1010 = vxor.u32 %v852, 2147483648
        %v1011 = vxor.u32 %v855, 2147483648
        %v1012 = vxor.u32 %v860, 2147483648
        %v1013 = vxor.u32 %v863, 2147483648
        %v1014 = vxor.u32 %v868, 2147483648
        %v1015 = vxor.u32 %v871, 2147483648
        %v1016 = vxor.u32 %v876, 2147483648
        %v1017 = vxor.u32 %v879, 2147483648
        %v1018 = vxor.u32 %v884, 2147483648
        %v1019 = vxor.u32 %v887, 2147483648
        %v1020 = vxor.u32 %v892, 2147483648
        %v1021 = vxor.u32 %v895, 2147483648
        %v1022 = vxor.u32 %v900, 2147483648
        %v1023 = vxor.u32 %v903, 2147483648
        %v1024 = vxor.u32 %v908, 2147483648
        %v1025 = vxor.u32 %v911, 2147483648
        %v1026 = vxor.u32 %v916, 2147483648
        %v1027 = vxor.u32 %v919, 2147483648
        %v1028 = vxor.u32 %v924, 2147483648
        %v1029 = vxor.u32 %v927, 2147483648
        %v1030 = vxor.u32 %v932, 2147483648
        %v1031 = vxor.u32 %v935, 2147483648
        %v1032 = vxor.u32 %v940, 2147483648
        %v1033 = vxor.u32 %v943, 2147483648
        %v1034 = vxor.u32 %v948, 2147483648
        %v1035 = vxor.u32 %v951, 2147483648
        %v1036 = vxor.u32 %v956, 2147483648
        %v1037 = vxor.u32 %v959, 2147483648
        %v1038 = vxor.u32 %v964, 2147483648
        %v1039 = vxor.u32 %v967, 2147483648
        %v1040 = vxor.u32 %v972, 2147483648
        %v1041 = vxor.u32 %v975, 2147483648
        %v1042 = vmul.f32 %v978, 1.442695
        %v1043 = vpow.pop %v1042
        %v1044 = vmul.f32 %v979, 1.442695
        %v1045 = vpow.pop %v1044
        %v1046 = vmul.f32 %v980, 1.442695
        %v1047 = vpow.pop %v1046
        %v1048 = vmul.f32 %v981, 1.442695
        %v1049 = vpow.pop %v1048
        %v1050 = vmul.f32 %v982, 1.442695
        %v1051 = vpow.pop %v1050
        %v1052 = vmul.f32 %v983, 1.442695
        %v1053 = vpow.pop %v1052
        %v1054 = vmul.f32 %v984, 1.442695
        %v1055 = vpow.pop %v1054
        %v1056 = vmul.f32 %v985, 1.442695
        %v1057 = vpow.pop %v1056
        %v1058 = vmul.f32 %v986, 1.442695
        %v1059 = vpow.pop %v1058
        %v1060 = vmul.f32 %v987, 1.442695
        %v1061 = vpow.pop %v1060
        %v1062 = vmul.f32 %v988, 1.442695
        %v1063 = vpow.pop %v1062
        %v1064 = vmul.f32 %v989, 1.442695
        %v1065 = vpow.pop %v1064
        %v1066 = vmul.f32 %v990, 1.442695
        %v1067 = vpow.pop %v1066
        %v1068 = vmul.f32 %v991, 1.442695
        %v1069 = vpow.pop %v1068
        %v1070 = vmul.f32 %v992, 1.442695
        %v1071 = vpow.pop %v1070
        %v1072 = vmul.f32 %v993, 1.442695
        %v1073 = vpow.pop %v1072
        %v1074 = vmul.f32 %v994, 1.442695
        %v1075 = vpow.pop %v1074
        %v1076 = vmul.f32 %v995, 1.442695
        %v1077 = vpow.pop %v1076
        %v1078 = vmul.f32 %v996, 1.442695
        %v1079 = vpow.pop %v1078
        %v1080 = vmul.f32 %v997, 1.442695
        %v1081 = vpow.pop %v1080
        %v1082 = vmul.f32 %v998, 1.442695
        %v1083 = vpow.pop %v1082
        %v1084 = vmul.f32 %v999, 1.442695
        %v1085 = vpow.pop %v1084
        %v1086 = vmul.f32 %v1000, 1.442695
        %v1087 = vpow.pop %v1086
        %v1088 = vmul.f32 %v1001, 1.442695
        %v1089 = vpow.pop %v1088
        %v1090 = vmul.f32 %v1002, 1.442695
        %v1091 = vpow.pop %v1090
        %v1092 = vmul.f32 %v1003, 1.442695
        %v1093 = vpow.pop %v1092
        %v1094 = vmul.f32 %v1004, 1.442695
        %v1095 = vpow.pop %v1094
        %v1096 = vmul.f32 %v1005, 1.442695
        %v1097 = vpow.pop %v1096
        %v1098 = vmul.f32 %v1006, 1.442695
        %v1099 = vpow.pop %v1098
        %v1100 = vmul.f32 %v1007, 1.442695
        %v1101 = vpow.pop %v1100
        %v1102 = vmul.f32 %v1008, 1.442695
        %v1103 = vpow.pop %v1102
        %v1104 = vmul.f32 %v1009, 1.442695
        %v1105 = vpow.pop %v1104
        %v1106 = vmul.f32 %v1010, 1.442695
        %v1107 = vpow.pop %v1106
        %v1108 = vmul.f32 %v1011, 1.442695
        %v1109 = vpow.pop %v1108
        %v1110 = vmul.f32 %v1012, 1.442695
        %v1111 = vpow.pop %v1110
        %v1112 = vmul.f32 %v1013, 1.442695
        %v1113 = vpow.pop %v1112
        %v1114 = vmul.f32 %v1014, 1.442695
        %v1115 = vpow.pop %v1114
        %v1116 = vmul.f32 %v1015, 1.442695
        %v1117 = vpow.pop %v1116
        %v1118 = vmul.f32 %v1016, 1.442695
        %v1119 = vpow.pop %v1118
        %v1120 = vmul.f32 %v1017, 1.442695
        %v1121 = vpow.pop %v1120
        %v1122 = vmul.f32 %v1018, 1.442695
        %v1123 = vpow.pop %v1122
        %v1124 = vmul.f32 %v1019, 1.442695
        %v1125 = vpow.pop %v1124
        %v1126 = vmul.f32 %v1020, 1.442695
        %v1127 = vpow.pop %v1126
        %v1128 = vmul.f32 %v1021, 1.442695
        %v1129 = vpow.pop %v1128
        %v1130 = vmul.f32 %v1022, 1.442695
        %v1131 = vpow.pop %v1130
        %v1132 = vmul.f32 %v1023, 1.442695
        %v1133 = vpow.pop %v1132
        %v1134 = vmul.f32 %v1024, 1.442695
        %v1135 = vpow.pop %v1134
        %v1136 = vmul.f32 %v1025, 1.442695
        %v1137 = vpow.pop %v1136
        %v1138 = vmul.f32 %v1026, 1.442695
        %v1139 = vpow.pop %v1138
        %v1140 = vmul.f32 %v1027, 1.442695
        %v1141 = vpow.pop %v1140
        %v1142 = vmul.f32 %v1028, 1.442695
        %v1143 = vpow.pop %v1142
        %v1144 = vmul.f32 %v1029, 1.442695
        %v1145 = vpow.pop %v1144
        %v1146 = vmul.f32 %v1030, 1.442695
        %v1147 = vpow.pop %v1146
        %v1148 = vmul.f32 %v1031, 1.442695
        %v1149 = vpow.pop %v1148
        %v1150 = vmul.f32 %v1032, 1.442695
        %v1151 = vpow.pop %v1150
        %v1152 = vmul.f32 %v1033, 1.442695
        %v1153 = vpow.pop %v1152
        %v1154 = vmul.f32 %v1034, 1.442695
        %v1155 = vpow.pop %v1154
        %v1156 = vmul.f32 %v1035, 1.442695
        %v1157 = vpow.pop %v1156
        %v1158 = vmul.f32 %v1036, 1.442695
        %v1159 = vpow.pop %v1158
        %v1160 = vmul.f32 %v1037, 1.442695
        %v1161 = vpow.pop %v1160
        %v1162 = vmul.f32 %v1038, 1.442695
        %v1163 = vpow.pop %v1162
        %v1164 = vmul.f32 %v1039, 1.442695
        %v1165 = vpow.pop %v1164
        %v1166 = vmul.f32 %v1040, 1.442695
        %v1167 = vpow.pop %v1166
        %v1168 = vmul.f32 %v1041, 1.442695
        %v1169 = vpow.pop %v1168
        %v1170 = vadd.f32 %v1043, 1.0
        %v1171 = vadd.f32 %v1045, 1.0
        %v1172 = vadd.f32 %v1047, 1.0
        %v1173 = vadd.f32 %v1049, 1.0
        %v1174 = vadd.f32 %v1051, 1.0
        %v1175 = vadd.f32 %v1053, 1.0
        %v1176 = vadd.f32 %v1055, 1.0
        %v1177 = vadd.f32 %v1057, 1.0
        %v1178 = vadd.f32 %v1059, 1.0
        %v1179 = vadd.f32 %v1061, 1.0
        %v1180 = vadd.f32 %v1063, 1.0
        %v1181 = vadd.f32 %v1065, 1.0
        %v1182 = vadd.f32 %v1067, 1.0
        %v1183 = vadd.f32 %v1069, 1.0
        %v1184 = vadd.f32 %v1071, 1.0
        %v1185 = vadd.f32 %v1073, 1.0
        %v1186 = vadd.f32 %v1075, 1.0
        %v1187 = vadd.f32 %v1077, 1.0
        %v1188 = vadd.f32 %v1079, 1.0
        %v1189 = vadd.f32 %v1081, 1.0
        %v1190 = vadd.f32 %v1083, 1.0
        %v1191 = vadd.f32 %v1085, 1.0
        %v1192 = vadd.f32 %v1087, 1.0
        %v1193 = vadd.f32 %v1089, 1.0
        %v1194 = vadd.f32 %v1091, 1.0
        %v1195 = vadd.f32 %v1093, 1.0
        %v1196 = vadd.f32 %v1095, 1.0
        %v1197 = vadd.f32 %v1097, 1.0
        %v1198 = vadd.f32 %v1099, 1.0
        %v1199 = vadd.f32 %v1101, 1.0
        %v1200 = vadd.f32 %v1103, 1.0
        %v1201 = vadd.f32 %v1105, 1.0
        %v1202 = vadd.f32 %v1107, 1.0
        %v1203 = vadd.f32 %v1109, 1.0
        %v1204 = vadd.f32 %v1111, 1.0
        %v1205 = vadd.f32 %v1113, 1.0
        %v1206 = vadd.f32 %v1115, 1.0
        %v1207 = vadd.f32 %v1117, 1.0
        %v1208 = vadd.f32 %v1119, 1.0
        %v1209 = vadd.f32 %v1121, 1.0
        %v1210 = vadd.f32 %v1123, 1.0
        %v1211 = vadd.f32 %v1125, 1.0
        %v1212 = vadd.f32 %v1127, 1.0
        %v1213 = vadd.f32 %v1129, 1.0
        %v1214 = vadd.f32 %v1131, 1.0
        %v1215 = vadd.f32 %v1133, 1.0
        %v1216 = vadd.f32 %v1135, 1.0
        %v1217 = vadd.f32 %v1137, 1.0
        %v1218 = vadd.f32 %v1139, 1.0
        %v1219 = vadd.f32 %v1141, 1.0
        %v1220 = vadd.f32 %v1143, 1.0
        %v1221 = vadd.f32 %v1145, 1.0
        %v1222 = vadd.f32 %v1147, 1.0
        %v1223 = vadd.f32 %v1149, 1.0
        %v1224 = vadd.f32 %v1151, 1.0
        %v1225 = vadd.f32 %v1153, 1.0
        %v1226 = vadd.f32 %v1155, 1.0
        %v1227 = vadd.f32 %v1157, 1.0
        %v1228 = vadd.f32 %v1159, 1.0
        %v1229 = vadd.f32 %v1161, 1.0
        %v1230 = vadd.f32 %v1163, 1.0
        %v1231 = vadd.f32 %v1165, 1.0
        %v1232 = vadd.f32 %v1167, 1.0
        %v1233 = vadd.f32 %v1169, 1.0
        %v1234 = vrcp.pop %v1170
        %v1235 = vmul.f32 1.0, %v1234
        %v1236 = vrcp.pop %v1171
        %v1237 = vmul.f32 1.0, %v1236
        %v1238 = vrcp.pop %v1172
        %v1239 = vmul.f32 1.0, %v1238
        %v1240 = vrcp.pop %v1173
        %v1241 = vmul.f32 1.0, %v1240
        %v1242 = vrcp.pop %v1174
        %v1243 = vmul.f32 1.0, %v1242
        %v1244 = vrcp.pop %v1175
        %v1245 = vmul.f32 1.0, %v1244
        %v1246 = vrcp.pop %v1176
        %v1247 = vmul.f32 1.0, %v1246
        %v1248 = vrcp.pop %v1177
        %v1249 = vmul.f32 1.0, %v1248
        %v1250 = vrcp.pop %v1178
        %v1251 = vmul.f32 1.0, %v1250
        %v1252 = vrcp.pop %v1179
        %v1253 = vmul.f32 1.0, %v1252
        %v1254 = vrcp.pop %v1180
        %v1255 = vmul.f32 1.0, %v1254
        %v1256 = vrcp.pop %v1181
        %v1257 = vmul.f32 1.0, %v1256
        %v1258 = vrcp.pop %v1182
        %v1259 = vmul.f32 1.0, %v1258
        %v1260 = vrcp.pop %v1183
        %v1261 = vmul.f32 1.0, %v1260
        %v1262 = vrcp.pop %v1184
        %v1263 = vmul.f32 1.0, %v1262
        %v1264 = vrcp.pop %v1185
        %v1265 = vmul.f32 1.0, %v1264
        %v1266 = vrcp.pop %v1186
        %v1267 = vmul.f32 1.0, %v1266
        %v1268 = vrcp.pop %v1187
        %v1269 = vmul.f32 1.0, %v1268
        %v1270 = vrcp.pop %v1188
        %v1271 = vmul.f32 1.0, %v1270
        %v1272 = vrcp.pop %v1189
        %v1273 = vmul.f32 1.0, %v1272
        %v1274 = vrcp.pop %v1190
        %v1275 = vmul.f32 1.0, %v1274
        %v1276 = vrcp.pop %v1191
        %v1277 = vmul.f32 1.0, %v1276
        %v1278 = vrcp.pop %v1192
        %v1279 = vmul.f32 1.0, %v1278
        %v1280 = vrcp.pop %v1193
        %v1281 = vmul.f32 1.0, %v1280
        %v1282 = vrcp.pop %v1194
        %v1283 = vmul.f32 1.0, %v1282
        %v1284 = vrcp.pop %v1195
        %v1285 = vmul.f32 1.0, %v1284
        %v1286 = vrcp.pop %v1196
        %v1287 = vmul.f32 1.0, %v1286
        %v1288 = vrcp.pop %v1197
        %v1289 = vmul.f32 1.0, %v1288
        %v1290 = vrcp.pop %v1198
        %v1291 = vmul.f32 1.0, %v1290
        %v1292 = vrcp.pop %v1199
        %v1293 = vmul.f32 1.0, %v1292
        %v1294 = vrcp.pop %v1200
        %v1295 = vmul.f32 1.0, %v1294
        %v1296 = vrcp.pop %v1201
        %v1297 = vmul.f32 1.0, %v1296
        %v1298 = vrcp.pop %v1202
        %v1299 = vmul.f32 1.0, %v1298
        %v1300 = vrcp.pop %v1203
        %v1301 = vmul.f32 1.0, %v1300
        %v1302 = vrcp.pop %v1204
        %v1303 = vmul.f32 1.0, %v1302
        %v1304 = vrcp.pop %v1205
        %v1305 = vmul.f32 1.0, %v1304
        %v1306 = vrcp.pop %v1206
        %v1307 = vmul.f32 1.0, %v1306
        %v1308 = vrcp.pop %v1207
        %v1309 = vmul.f32 1.0, %v1308
        %v1310 = vrcp.pop %v1208
        %v1311 = vmul.f32 1.0, %v1310
        %v1312 = vrcp.pop %v1209
        %v1313 = vmul.f32 1.0, %v1312
        %v1314 = vrcp.pop %v1210
        %v1315 = vmul.f32 1.0, %v1314
        %v1316 = vrcp.pop %v1211
        %v1317 = vmul.f32 1.0, %v1316
        %v1318 = vrcp.pop %v1212
        %v1319 = vmul.f32 1.0, %v1318
        %v1320 = vrcp.pop %v1213
        %v1321 = vmul.f32 1.0, %v1320
        %v1322 = vrcp.pop %v1214
        %v1323 = vmul.f32 1.0, %v1322
        %v1324 = vrcp.pop %v1215
        %v1325 = vmul.f32 1.0, %v1324
        %v1326 = vrcp.pop %v1216
        %v1327 = vmul.f32 1.0, %v1326
        %v1328 = vrcp.pop %v1217
        %v1329 = vmul.f32 1.0, %v1328
        %v1330 = vrcp.pop %v1218
        %v1331 = vmul.f32 1.0, %v1330
        %v1332 = vrcp.pop %v1219
        %v1333 = vmul.f32 1.0, %v1332
        %v1334 = vrcp.pop %v1220
        %v1335 = vmul.f32 1.0, %v1334
        %v1336 = vrcp.pop %v1221
        %v1337 = vmul.f32 1.0, %v1336
        %v1338 = vrcp.pop %v1222
        %v1339 = vmul.f32 1.0, %v1338
        %v1340 = vrcp.pop %v1223
        %v1341 = vmul.f32 1.0, %v1340
        %v1342 = vrcp.pop %v1224
        %v1343 = vmul.f32 1.0, %v1342
        %v1344 = vrcp.pop %v1225
        %v1345 = vmul.f32 1.0, %v1344
        %v1346 = vrcp.pop %v1226
        %v1347 = vmul.f32 1.0, %v1346
        %v1348 = vrcp.pop %v1227
        %v1349 = vmul.f32 1.0, %v1348
        %v1350 = vrcp.pop %v1228
        %v1351 = vmul.f32 1.0, %v1350
        %v1352 = vrcp.pop %v1229
        %v1353 = vmul.f32 1.0, %v1352
        %v1354 = vrcp.pop %v1230
        %v1355 = vmul.f32 1.0, %v1354
        %v1356 = vrcp.pop %v1231
        %v1357 = vmul.f32 1.0, %v1356
        %v1358 = vrcp.pop %v1232
        %v1359 = vmul.f32 1.0, %v1358
        %v1360 = vrcp.pop %v1233
        %v1361 = vmul.f32 1.0, %v1360
        %v1362 = vpack.c.bf16 %v1237, %v1235
        %v1363 = vpack.c.bf16 %v1241, %v1239
        %v1364 = vpack.c.bf16 %v1245, %v1243
        %v1365 = vpack.c.bf16 %v1249, %v1247
        %v1366 = vpack.c.bf16 %v1253, %v1251
        %v1367 = vpack.c.bf16 %v1257, %v1255
        %v1368 = vpack.c.bf16 %v1261, %v1259
        %v1369 = vpack.c.bf16 %v1265, %v1263
        %v1370 = vpack.c.bf16 %v1269, %v1267
        %v1371 = vpack.c.bf16 %v1273, %v1271
        %v1372 = vpack.c.bf16 %v1277, %v1275
        %v1373 = vpack.c.bf16 %v1281, %v1279
        %v1374 = vpack.c.bf16 %v1285, %v1283
        %v1375 = vpack.c.bf16 %v1289, %v1287
        %v1376 = vpack.c.bf16 %v1293, %v1291
        %v1377 = vpack.c.bf16 %v1297, %v1295
        %v1378 = vpack.c.bf16 %v1301, %v1299
        %v1379 = vpack.c.bf16 %v1305, %v1303
        %v1380 = vpack.c.bf16 %v1309, %v1307
        %v1381 = vpack.c.bf16 %v1313, %v1311
        %v1382 = vpack.c.bf16 %v1317, %v1315
        %v1383 = vpack.c.bf16 %v1321, %v1319
        %v1384 = vpack.c.bf16 %v1325, %v1323
        %v1385 = vpack.c.bf16 %v1329, %v1327
        %v1386 = vpack.c.bf16 %v1333, %v1331
        %v1387 = vpack.c.bf16 %v1337, %v1335
        %v1388 = vpack.c.bf16 %v1341, %v1339
        %v1389 = vpack.c.bf16 %v1345, %v1343
        %v1390 = vpack.c.bf16 %v1349, %v1347
        %v1391 = vpack.c.bf16 %v1353, %v1351
        %v1392 = vpack.c.bf16 %v1357, %v1355
        %v1393 = vpack.c.bf16 %v1361, %v1359
        %v1426 = vunpack.c.l.b16 %v1362
        %v1427 = vunpack.c.h.b16 %v1362
        %v1428 = vunpack.c.l.b16 %v1363
        %v1429 = vunpack.c.h.b16 %v1363
        %v1430 = vunpack.c.l.b16 %v1364
        %v1431 = vunpack.c.h.b16 %v1364
        %v1432 = vunpack.c.l.b16 %v1365
        %v1433 = vunpack.c.h.b16 %v1365
        %v1434 = vunpack.c.l.b16 %v1366
        %v1435 = vunpack.c.h.b16 %v1366
        %v1436 = vunpack.c.l.b16 %v1367
        %v1437 = vunpack.c.h.b16 %v1367
        %v1438 = vunpack.c.l.b16 %v1368
        %v1439 = vunpack.c.h.b16 %v1368
        %v1440 = vunpack.c.l.b16 %v1369
        %v1441 = vunpack.c.h.b16 %v1369
        %v1442 = vunpack.c.l.b16 %v1370
        %v1443 = vunpack.c.h.b16 %v1370
        %v1444 = vunpack.c.l.b16 %v1371
        %v1445 = vunpack.c.h.b16 %v1371
        %v1446 = vunpack.c.l.b16 %v1372
        %v1447 = vunpack.c.h.b16 %v1372
        %v1448 = vunpack.c.l.b16 %v1373
        %v1449 = vunpack.c.h.b16 %v1373
        %v1450 = vunpack.c.l.b16 %v1374
        %v1451 = vunpack.c.h.b16 %v1374
        %v1452 = vunpack.c.l.b16 %v1375
        %v1453 = vunpack.c.h.b16 %v1375
        %v1454 = vunpack.c.l.b16 %v1376
        %v1455 = vunpack.c.h.b16 %v1376
        %v1456 = vunpack.c.l.b16 %v1377
        %v1457 = vunpack.c.h.b16 %v1377
        %v1458 = vunpack.c.l.b16 %v1378
        %v1459 = vunpack.c.h.b16 %v1378
        %v1460 = vunpack.c.l.b16 %v1379
        %v1461 = vunpack.c.h.b16 %v1379
        %v1462 = vunpack.c.l.b16 %v1380
        %v1463 = vunpack.c.h.b16 %v1380
        %v1464 = vunpack.c.l.b16 %v1381
        %v1465 = vunpack.c.h.b16 %v1381
        %v1466 = vunpack.c.l.b16 %v1382
        %v1467 = vunpack.c.h.b16 %v1382
        %v1468 = vunpack.c.l.b16 %v1383
        %v1469 = vunpack.c.h.b16 %v1383
        %v1470 = vunpack.c.l.b16 %v1384
        %v1471 = vunpack.c.h.b16 %v1384
        %v1472 = vunpack.c.l.b16 %v1385
        %v1473 = vunpack.c.h.b16 %v1385
        %v1474 = vunpack.c.l.b16 %v1386
        %v1475 = vunpack.c.h.b16 %v1386
        %v1476 = vunpack.c.l.b16 %v1387
        %v1477 = vunpack.c.h.b16 %v1387
        %v1478 = vunpack.c.l.b16 %v1388
        %v1479 = vunpack.c.h.b16 %v1388
        %v1480 = vunpack.c.l.b16 %v1389
        %v1481 = vunpack.c.h.b16 %v1389
        %v1482 = vunpack.c.l.b16 %v1390
        %v1483 = vunpack.c.h.b16 %v1390
        %v1484 = vunpack.c.l.b16 %v1391
        %v1485 = vunpack.c.h.b16 %v1391
        %v1486 = vunpack.c.l.b16 %v1392
        %v1487 = vunpack.c.h.b16 %v1392
        %v1488 = vunpack.c.l.b16 %v1393
        %v1489 = vunpack.c.h.b16 %v1393
        %v1490 = vpack.c.b16 %v1426, %v1426
        %v1491 = vpack.c.b16 %v1427, %v1427
        %v1492 = vpack.c.b16 %v1428, %v1428
        %v1493 = vpack.c.b16 %v1429, %v1429
        %v1494 = vpack.c.b16 %v1430, %v1430
        %v1495 = vpack.c.b16 %v1431, %v1431
        %v1496 = vpack.c.b16 %v1432, %v1432
        %v1497 = vpack.c.b16 %v1433, %v1433
        %v1498 = vpack.c.b16 %v1434, %v1434
        %v1499 = vpack.c.b16 %v1435, %v1435
        %v1500 = vpack.c.b16 %v1436, %v1436
        %v1501 = vpack.c.b16 %v1437, %v1437
        %v1502 = vpack.c.b16 %v1438, %v1438
        %v1503 = vpack.c.b16 %v1439, %v1439
        %v1504 = vpack.c.b16 %v1440, %v1440
        %v1505 = vpack.c.b16 %v1441, %v1441
        %v1506 = vpack.c.b16 %v1442, %v1442
        %v1507 = vpack.c.b16 %v1443, %v1443
        %v1508 = vpack.c.b16 %v1444, %v1444
        %v1509 = vpack.c.b16 %v1445, %v1445
        %v1510 = vpack.c.b16 %v1446, %v1446
        %v1511 = vpack.c.b16 %v1447, %v1447
        %v1512 = vpack.c.b16 %v1448, %v1448
        %v1513 = vpack.c.b16 %v1449, %v1449
        %v1514 = vpack.c.b16 %v1450, %v1450
        %v1515 = vpack.c.b16 %v1451, %v1451
        %v1516 = vpack.c.b16 %v1452, %v1452
        %v1517 = vpack.c.b16 %v1453, %v1453
        %v1518 = vpack.c.b16 %v1454, %v1454
        %v1519 = vpack.c.b16 %v1455, %v1455
        %v1520 = vpack.c.b16 %v1456, %v1456
        %v1521 = vpack.c.b16 %v1457, %v1457
        %v1522 = vpack.c.b16 %v1458, %v1458
        %v1523 = vpack.c.b16 %v1459, %v1459
        %v1524 = vpack.c.b16 %v1460, %v1460
        %v1525 = vpack.c.b16 %v1461, %v1461
        %v1526 = vpack.c.b16 %v1462, %v1462
        %v1527 = vpack.c.b16 %v1463, %v1463
        %v1528 = vpack.c.b16 %v1464, %v1464
        %v1529 = vpack.c.b16 %v1465, %v1465
        %v1530 = vpack.c.b16 %v1466, %v1466
        %v1531 = vpack.c.b16 %v1467, %v1467
        %v1532 = vpack.c.b16 %v1468, %v1468
        %v1533 = vpack.c.b16 %v1469, %v1469
        %v1534 = vpack.c.b16 %v1470, %v1470
        %v1535 = vpack.c.b16 %v1471, %v1471
        %v1536 = vpack.c.b16 %v1472, %v1472
        %v1537 = vpack.c.b16 %v1473, %v1473
        %v1538 = vpack.c.b16 %v1474, %v1474
        %v1539 = vpack.c.b16 %v1475, %v1475
        %v1540 = vpack.c.b16 %v1476, %v1476
        %v1541 = vpack.c.b16 %v1477, %v1477
        %v1542 = vpack.c.b16 %v1478, %v1478
        %v1543 = vpack.c.b16 %v1479, %v1479
        %v1544 = vpack.c.b16 %v1480, %v1480
        %v1545 = vpack.c.b16 %v1481, %v1481
        %v1546 = vpack.c.b16 %v1482, %v1482
        %v1547 = vpack.c.b16 %v1483, %v1483
        %v1548 = vpack.c.b16 %v1484, %v1484
        %v1549 = vpack.c.b16 %v1485, %v1485
        %v1550 = vpack.c.b16 %v1486, %v1486
        %v1551 = vpack.c.b16 %v1487, %v1487
        %v1552 = vpack.c.b16 %v1488, %v1488
        %v1553 = vpack.c.b16 %v1489, %v1489
        %1618 = vst [vmem:[%s255] sm:$0xf] %v1490
        %1619 = vst [vmem:[%s255 + $0x4] sm:$0xf] %v1491
        %1620 = vst [vmem:[%s255 + $0x8] sm:$0xf] %v1492
        %1621 = vst [vmem:[%s255 + $0xc] sm:$0xf] %v1493
        %1622 = vst [vmem:[%s255 + $0x10] sm:$0xf] %v1494
        %1623 = vst [vmem:[%s255 + $0x14] sm:$0xf] %v1495
        %1624 = vst [vmem:[%s255 + $0x18] sm:$0xf] %v1496
        %1625 = vst [vmem:[%s255 + $0x1c] sm:$0xf] %v1497
        %1626 = vst [vmem:[%s255 + $0x20] sm:$0xf] %v1498
        %1627 = vst [vmem:[%s255 + $0x24] sm:$0xf] %v1499
        %1628 = vst [vmem:[%s255 + $0x28] sm:$0xf] %v1500
        %1629 = vst [vmem:[%s255 + $0x2c] sm:$0xf] %v1501
        %1630 = vst [vmem:[%s255 + $0x30] sm:$0xf] %v1502
        %1631 = vst [vmem:[%s255 + $0x34] sm:$0xf] %v1503
        %1632 = vst [vmem:[%s255 + $0x38] sm:$0xf] %v1504
        %1633 = vst [vmem:[%s255 + $0x3c] sm:$0xf] %v1505
        %1634 = vst [vmem:[%s255 + $0x40] sm:$0xf] %v1506
        %1635 = vst [vmem:[%s255 + $0x44] sm:$0xf] %v1507
        %1636 = vst [vmem:[%s255 + $0x48] sm:$0xf] %v1508
        %1637 = vst [vmem:[%s255 + $0x4c] sm:$0xf] %v1509
        %1638 = vst [vmem:[%s255 + $0x50] sm:$0xf] %v1510
        %1639 = vst [vmem:[%s255 + $0x54] sm:$0xf] %v1511
        %1640 = vst [vmem:[%s255 + $0x58] sm:$0xf] %v1512
        %1641 = vst [vmem:[%s255 + $0x5c] sm:$0xf] %v1513
        %1642 = vst [vmem:[%s255 + $0x60] sm:$0xf] %v1514
        %1643 = vst [vmem:[%s255 + $0x64] sm:$0xf] %v1515
        %1644 = vst [vmem:[%s255 + $0x68] sm:$0xf] %v1516
        %1645 = vst [vmem:[%s255 + $0x6c] sm:$0xf] %v1517
        %1646 = vst [vmem:[%s255 + $0x70] sm:$0xf] %v1518
        %1647 = vst [vmem:[%s255 + $0x74] sm:$0xf] %v1519
        %1648 = vst [vmem:[%s255 + $0x78] sm:$0xf] %v1520
        %1649 = vst [vmem:[%s255 + $0x7c] sm:$0xf] %v1521
        %1650 = vst [vmem:[%s255 + $0x80] sm:$0xf] %v1522
        %1651 = vst [vmem:[%s255 + $0x84] sm:$0xf] %v1523
        %1652 = vst [vmem:[%s255 + $0x88] sm:$0xf] %v1524
        %1653 = vst [vmem:[%s255 + $0x8c] sm:$0xf] %v1525
        %1654 = vst [vmem:[%s255 + $0x90] sm:$0xf] %v1526
        %1655 = vst [vmem:[%s255 + $0x94] sm:$0xf] %v1527
        %1656 = vst [vmem:[%s255 + $0x98] sm:$0xf] %v1528
        %1657 = vst [vmem:[%s255 + $0x9c] sm:$0xf] %v1529
        %1658 = vst [vmem:[%s255 + $0xa0] sm:$0xf] %v1530
        %1659 = vst [vmem:[%s255 + $0xa4] sm:$0xf] %v1531
        %1660 = vst [vmem:[%s255 + $0xa8] sm:$0xf] %v1532
        %1661 = vst [vmem:[%s255 + $0xac] sm:$0xf] %v1533
        %1662 = vst [vmem:[%s255 + $0xb0] sm:$0xf] %v1534
        %1663 = vst [vmem:[%s255 + $0xb4] sm:$0xf] %v1535
        %1664 = vst [vmem:[%s255 + $0xb8] sm:$0xf] %v1536
        %1665 = vst [vmem:[%s255 + $0xbc] sm:$0xf] %v1537
        %1666 = vst [vmem:[%s255 + $0xc0] sm:$0xf] %v1538
        %1667 = vst [vmem:[%s255 + $0xc4] sm:$0xf] %v1539
        %1668 = vst [vmem:[%s255 + $0xc8] sm:$0xf] %v1540
        %1669 = vst [vmem:[%s255 + $0xcc] sm:$0xf] %v1541
        %1670 = vst [vmem:[%s255 + $0xd0] sm:$0xf] %v1542
        %1671 = vst [vmem:[%s255 + $0xd4] sm:$0xf] %v1543
        %1672 = vst [vmem:[%s255 + $0xd8] sm:$0xf] %v1544
        %1673 = vst [vmem:[%s255 + $0xdc] sm:$0xf] %v1545
        %1674 = vst [vmem:[%s255 + $0xe0] sm:$0xf] %v1546
        %1675 = vst [vmem:[%s255 + $0xe4] sm:$0xf] %v1547
        %1676 = vst [vmem:[%s255 + $0xe8] sm:$0xf] %v1548
        %1677 = vst [vmem:[%s255 + $0xec] sm:$0xf] %v1549
        %1678 = vst [vmem:[%s255 + $0xf0] sm:$0xf] %v1550
        %1679 = vst [vmem:[%s255 + $0xf4] sm:$0xf] %v1551
        %1680 = vst [vmem:[%s255 + $0xf8] sm:$0xf] %v1552
        %1681 = vst [vmem:[%s255 + $0xfc] sm:$0xf] %v1553
        %s1682 = sand.u32 %s120, 1
        %s1683 = scalar_lea.sflag [#allocation4], %s1682
        %s1684 = sand.u32 %s120, 1
        %s1685 = smul.addr %s1684, 256
        %s1686 = scalar_lea.vmem [#allocation10], %s1685
        // Predicated region
        $region53: #{_forward_impl.15} parent=35 // pred_check
          %p1687 = pneg %p130
        $region54: #{_forward_impl.15} parent=35 // pred_check_branch
          %1689 = sbr.rel (%p1687) target = $region56
        $region55: #{_forward_impl.15} parent=35 // pred_region
          %s1690 = smul.u32 64, %s23
          %s1692 = ssub.s32 4096, 4096
          %1693 = vsyncadd %s1683, %s1692
          %s1694 = smul.addr %s1690, 64
          %s1695 = scalar_lea.hbm %s4, %s1694
          %s1696 = sshll.u32 %s1686, 4
          %s1697 = int_to_ptr.vmem [resolvable:$true] %s1696
          %1702 = dma.vmem_to_hbm [thread:$0]  %s1697, 4096, %s1695, %s1683, 64, 64, 4
        $region56: #{_forward_impl.15} parent=35 // pred_fallthru
          _
      $region36: #{_forward_impl.15} parent=5 // pred_fallthru
        _
      %p1703 = scmp.le.s32.totalorder 2, %s18
      // Predicated region
      $region57: #{_forward_impl.15} parent=5 // pred_check
        %p1704 = pneg %p1703
      $region58: #{_forward_impl.15} parent=5 // pred_check_branch
        %1706 = sbr.rel (%p1704) target = $region60
      $region59: #{_forward_impl.15} parent=5 // pred_region
        %s1707 = ssub.s32 %s18, 2
        // Predicated region
        $region61: #{_forward_impl.15} parent=59 // pred_check
          %p1708 = pneg %p136
        $region62: #{_forward_impl.15} parent=59 // pred_check_branch
          %1710 = sbr.rel (%p1708) target = $region64
        $region63: #{_forward_impl.15} parent=59 // pred_region
          %s1711 = sand.u32 %s121, 1
          %s1712 = scalar_lea.sflag [#allocation4], %s1711
          %s1713 = sand.u32 %s121, 1
          %s1714 = smul.addr %s1713, 256
          %s1715 = scalar_lea.vmem [#allocation10], %s1714
          %1716 = dma.done %s1712, 4096
        $region64: #{_forward_impl.15} parent=59 // pred_fallthru
          _
      $region60: #{_forward_impl.15} parent=5 // pred_fallthru
        _
    $region6: #{_forward_impl.15} parent=1 // loop_footer
      %s22 = sadd.s32 1, %s18
    $region7: #{_forward_impl.15} parent=1 // loop_footer_branch
      %17 = sbr.rel target = $region3
    $region8: #{_forward_impl.15} parent=1 // loop_exit
      _
    %1717 = vsyncpa [#allocation3], 1
    %s1718 = scalar_lea.sflag [#allocation3], 1
    %1719 = vsyncpa %s1718, 1
    %1720 = vsyncpa [#allocation6], 1
    %1721 = vsyncpa [#allocation9], 1
    %1722 = vsyncpa [#allocation4], 1
    %s1723 = scalar_lea.sflag [#allocation4], 1
    %1724 = vsyncpa %s1723, 1

</llo_original>
